<compile_context>
chip_gen: v7x
topology: tpu7x:2x2x1
jax: 0.10.0
libtpu: 0.0.40
codegen_flags: <defaults>
</compile_context>

<pallas_src>
import functools
import math

import numpy as np
import jax
import jax.numpy as jnp
from jax.experimental import pallas as pl

_OUT_LANES = 128


# ------------------------------ math helpers -------------------------------

def _erf(x):
    # Abramowitz & Stegun 7.1.26 (max abs error ~1.5e-7): exact-erf GELU
    # without relying on a hardware erf lowering.
    a1, a2, a3, a4, a5 = 0.254829592, -0.284496736, 1.421413741, -1.453152027, 1.061405429
    p = 0.3275911
    sgn = jnp.where(x >= 0.0, 1.0, -1.0)
    ax = jnp.abs(x)
    t = 1.0 / (1.0 + p * ax)
    poly = ((((a5 * t + a4) * t + a3) * t + a2) * t + a1) * t
    return sgn * (1.0 - poly * jnp.exp(-ax * ax))


def _gelu_exact(x):
    return 0.5 * x * (1.0 + _erf(x * 0.7071067811865476))


# ------------------------------ fused kernel -------------------------------

def _lcf_kernel(ids_ref, mask_ref,
                wemb_ref, pt_ref, emb_g_ref, emb_b_ref,
                wq_ref, bq_ref, wk_ref, bk_ref, wv_ref, bv_ref,
                wo_ref, bo_ref, ln1_g_ref, ln1_b_ref,
                w1_ref, b1_ref, w2_ref, b2_ref, ln2_g_ref, ln2_b_ref,
                ls_w_ref, ls_b_ref,
                sa_wq_ref, sa_bq_ref, sa_wk_ref, sa_bk_ref, sa_wv_ref, sa_bv_ref,
                bp_w_ref, bp_b_ref, dn_w_ref, dn_b_ref,
                out_ref,
                *, batch, seq, num_heads, num_layers, eps):
    BS, D = pt_ref.shape                       # stacked [B*S, D]
    Vp = wemb_ref.shape[0]
    P = dn_w_ref.shape[1]
    H = num_heads
    dh = D // H
    scale = 1.0 / math.sqrt(dh)

    def layer_norm(x, g, b):
        mu = jnp.mean(x, axis=-1, keepdims=True)
        var = jnp.mean((x - mu) ** 2, axis=-1, keepdims=True)
        return (x - mu) * jax.lax.rsqrt(var + eps) * g + b

    def softmax_rows(s):
        s = s - jnp.max(s, axis=-1, keepdims=True)       # stable softmax
        p = jnp.exp(s)
        return p * pl.reciprocal(jnp.sum(p, axis=-1, keepdims=True), approx=True)

    # ---- fused embedding lookup (one-hot MXU gather) + embedding LayerNorm ----
    ids = ids_ref[...]                                              # [BS, 1] int32
    iota_v = jax.lax.broadcasted_iota(jnp.int32, (BS, Vp), 1)
    one_hot = (iota_v == ids).astype(jnp.float32)                   # [BS, Vp]
    emb = (jnp.dot(one_hot, wemb_ref[...], preferred_element_type=jnp.float32)
           + pt_ref[...])                                           # + pos + type(=0)
    h_st = layer_norm(emb, emb_g_ref[...], emb_b_ref[...])

    # ---- synthetic BERT encoder on stacked [B*S, D] activations ----
    # Additive attention mask is all-zeros in the reference and is omitted.
    for l in range(num_layers):
        q = jnp.dot(h_st, wq_ref[l], preferred_element_type=jnp.float32) + bq_ref[l]
        k = jnp.dot(h_st, wk_ref[l], preferred_element_type=jnp.float32) + bk_ref[l]
        v = jnp.dot(h_st, wv_ref[l], preferred_element_type=jnp.float32) + bv_ref[l]
        kT = k.T                                                    # one transpose / layer
        wo_l = wo_ref[l]
        attn = None
        for h in range(H):
            hs = slice(h * dh, (h + 1) * dh)
            ctx_rows = []
            for b in range(batch):                                  # per-sequence attention
                rs = slice(b * seq, (b + 1) * seq)
                s = jnp.dot(q[rs, hs], kT[hs, rs],
                            preferred_element_type=jnp.float32) * scale
                p = softmax_rows(s)
                ctx_rows.append(jnp.dot(p, v[rs, hs],
                                        preferred_element_type=jnp.float32))
            ctx_h = jnp.concatenate(ctx_rows, axis=0)               # [BS, dh] (sublane cat)
            part = jnp.dot(ctx_h, wo_l[hs, :], preferred_element_type=jnp.float32)
            attn = part if attn is None else attn + part            # head-accumulated W_o
        attn_out = attn + bo_ref[l]
        h_st = layer_norm(attn_out + h_st, ln1_g_ref[l], ln1_b_ref[l])
        ffn = _gelu_exact(jnp.dot(h_st, w1_ref[l],
                                  preferred_element_type=jnp.float32) + b1_ref[l])
        ffn_out = jnp.dot(ffn, w2_ref[l], preferred_element_type=jnp.float32) + b2_ref[l]
        h_st = layer_norm(ffn_out + h_st, ln2_g_ref[l], ln2_b_ref[l])

    # ---- LCF head (dropout = identity in eval mode) ----
    local = h_st * mask_ref[...]                       # CDM/CDW mask, broadcast once
    mean_pool = (jnp.dot(local, ls_w_ref[...], preferred_element_type=jnp.float32)
                 + ls_b_ref[...])                      # linear_single

    # SelfAttention head: only the [CLS] query row per batch is consumed downstream.
    sk = jnp.dot(mean_pool, sa_wk_ref[...], preferred_element_type=jnp.float32) + sa_bk_ref[...]
    sv = jnp.dot(mean_pool, sa_wv_ref[...], preferred_element_type=jnp.float32) + sa_bv_ref[...]
    skT = sk.T
    mp_cls = jnp.concatenate(
        [mean_pool[b * seq:b * seq + 1, :] for b in range(batch)], axis=0)   # [B, D]
    sq_cls = jnp.dot(mp_cls, sa_wq_ref[...], preferred_element_type=jnp.float32) + sa_bq_ref[...]

    pooled_rows = []
    for b in range(batch):
        rs = slice(b * seq, (b + 1) * seq)
        acc = None
        for h in range(H):
            hs = slice(h * dh, (h + 1) * dh)
            s = jnp.dot(sq_cls[b:b + 1, hs], skT[hs, rs],
                        preferred_element_type=jnp.float32) * scale          # [1, S]
            p = softmax_rows(s)
            ctx = jnp.dot(p, sv[rs, hs], preferred_element_type=jnp.float32)  # [1, dh]
            # SelfAttention wrapper tanh (elementwise) + BertPooler dense,
            # accumulated per head through sublane row-slices of bp_w.
            part = jnp.dot(jnp.tanh(ctx), bp_w_ref[hs, :],
                           preferred_element_type=jnp.float32)               # [1, D]
            acc = part if acc is None else acc + part
        pooled_rows.append(jnp.tanh(acc + bp_b_ref[...]))                    # BertPooler tanh
    pooled = jnp.concatenate(pooled_rows, axis=0)                            # [B, D]
    dense = (jnp.dot(pooled, dn_w_ref[...], preferred_element_type=jnp.float32)
             + dn_b_ref[...])                                                # [B, P]

    # single lane-dense packed output: [ pooled | logits | zero pad ]
    pad = jnp.zeros((batch, out_ref.shape[1] - D - P), jnp.float32)
    out_ref[...] = jnp.concatenate([pooled, dense, pad], axis=-1)


def _fused_forward(text_local_indices, local_mask_2d, params, cfg):
    B, S = text_local_indices.shape
    D, H, L = cfg["hidden"], cfg["heads"], cfg["layers"]
    P, V = cfg["polarities"], cfg["vocab"]
    BS = B * S
    Vp = ((V + 7) // 8) * 8                                  # sublane-align vocab

    ids2 = text_local_indices.reshape(BS, 1).astype(jnp.int32)
    mask2 = local_mask_2d.reshape(BS, 1).astype(jnp.float32)

    wemb = jnp.pad(params["word_emb"], ((0, Vp - V), (0, 0)))
    # pos + type(=0) embeddings, pre-tiled to the stacked [B*S, D] layout.
    pos_type = (jnp.tile(params["pos_emb"][:S], (B, 1))
                + params["type_emb"][0:1, :]).astype(jnp.float32)

    args = [
        ids2, mask2, wemb, pos_type,
        params["emb_ln_g"], params["emb_ln_b"],
        params["wq"], params["bq"], params["wk"], params["bk"],
        params["wv"], params["bv"], params["wo"], params["bo"],
        params["ln1_g"], params["ln1_b"],
        params["w1"], params["b1"], params["w2"], params["b2"],
        params["ln2_g"], params["ln2_b"],
        params["linear_single_w"], params["linear_single_b"],
        params["sa_wq"], params["sa_bq"], params["sa_wk"], params["sa_bk"],
        params["sa_wv"], params["sa_bv"],
        params["bert_pooler_w"], params["bert_pooler_b"],
        params["dense_w"], params["dense_b"],
    ]

    kernel = functools.partial(_lcf_kernel, batch=B, seq=S, num_heads=H,
                               num_layers=L, eps=1e-12)
    # Single grid step: every operand is a whole-array VMEM block (weights
    # ~85 KB + activations ~3 KB fit trivially on every TPU generation).
    packed = pl.pallas_call(
        kernel,
        out_shape=jax.ShapeDtypeStruct((B, _OUT_LANES), jnp.float32),
    )(*args)
    pooled = packed[:, :D]
    dense = packed[:, D:D + P]
    return dense, pooled


# ------------------------- parameter initialization ------------------------

def init_params(key, cfg):
    D, V, S = cfg["hidden"], cfg["vocab"], cfg["max_seq_len"]
    I, L, P = cfg["intermediate"], cfg["layers"], cfg["polarities"]
    keys = iter(jax.random.split(key, 64))

    def w(shape, scale=0.02):
        return scale * jax.random.normal(next(keys), shape, jnp.float32)

    return dict(
        word_emb=w((V, D)), pos_emb=w((S, D)), type_emb=w((2, D)),
        emb_ln_g=jnp.ones((1, D), jnp.float32), emb_ln_b=jnp.zeros((1, D), jnp.float32),
        # per-layer encoder weights stacked along a leading layer axis;
        # Q/K/V kept as separate tensors so in-kernel slices are whole tiles.
        wq=w((L, D, D)), bq=jnp.zeros((L, 1, D), jnp.float32),
        wk=w((L, D, D)), bk=jnp.zeros((L, 1, D), jnp.float32),
        wv=w((L, D, D)), bv=jnp.zeros((L, 1, D), jnp.float32),
        wo=w((L, D, D)), bo=jnp.zeros((L, 1, D), jnp.float32),
        ln1_g=jnp.ones((L, 1, D), jnp.float32), ln1_b=jnp.zeros((L, 1, D), jnp.float32),
        w1=w((L, D, I)), b1=jnp.zeros((L, 1, I), jnp.float32),
        w2=w((L, I, D)), b2=jnp.zeros((L, 1, D), jnp.float32),
        ln2_g=jnp.ones((L, 1, D), jnp.float32), ln2_b=jnp.zeros((L, 1, D), jnp.float32),
        # LCF head
        linear_single_w=w((D, D)), linear_single_b=jnp.zeros((1, D), jnp.float32),
        sa_wq=w((D, D)), sa_bq=jnp.zeros((1, D), jnp.float32),
        sa_wk=w((D, D)), sa_bk=jnp.zeros((1, D), jnp.float32),
        sa_wv=w((D, D)), sa_bv=jnp.zeros((1, D), jnp.float32),
        bert_pooler_w=w((D, D)), bert_pooler_b=jnp.zeros((1, D), jnp.float32),
        dense_w=w((D, P)), dense_b=jnp.zeros((1, P), jnp.float32),
    )


# --------------------- CDM / CDW masks (host-side numpy) --------------------
# TODO(synk): feature_dynamic_mask/weighted stay as host numpy loops (data-
# dependent python control flow, exactly as in the reference); they are
# computed BEFORE the jitted device forward; only the per-token scalar
# (constant across the hidden dim) is shipped to the device.

def feature_dynamic_mask(texts, asps, max_seq_len, bert_dim, SRD):
    mask = np.ones((texts.shape[0], max_seq_len, bert_dim), dtype=np.float32)
    for text_i, asp_i in zip(range(len(texts)), range(len(asps))):
        asp_len = np.count_nonzero(asps[asp_i]) - 2
        hits = np.argwhere(texts[text_i] == asps[asp_i][1])
        if hits.size == 0:
            continue
        asp_begin = int(hits[0][0])
        mask_begin = asp_begin - SRD if asp_begin >= SRD else 0
        for i in range(mask_begin):
            mask[text_i][i] = 0.0
        for j in range(asp_begin + asp_len + SRD, max_seq_len):
            mask[text_i][j] = 0.0
    return mask


def feature_dynamic_weighted(texts, asps, max_seq_len, bert_dim, SRD):
    out = np.ones((texts.shape[0], max_seq_len, bert_dim), dtype=np.float32)
    for text_i, asp_i in zip(range(len(texts)), range(len(asps))):
        asp_len = np.count_nonzero(asps[asp_i]) - 2
        hits = np.argwhere(texts[text_i] == asps[asp_i][1])
        if hits.size == 0:
            continue
        asp_begin = int(hits[0][0])
        asp_avg_index = (asp_begin * 2 + asp_len) / 2
        n_tok = np.count_nonzero(texts[text_i])
        distances = np.zeros(n_tok, dtype=np.float32)
        for i in range(1, n_tok - 1):
            if abs(i - asp_avg_index) + asp_len / 2 > SRD:
                distances[i] = 1 - (abs(i - asp_avg_index) + asp_len / 2 - SRD) / n_tok
            else:
                distances[i] = 1
        for i in range(len(distances)):
            out[text_i][i] = out[text_i][i] * distances[i]
    return out


# -------------------------- LCF_BERT_ONLY_LOCAL -----------------------------

def lcf_bert_only_local_forward(params, text_bert_indices, bert_segments_ids,
                                text_local_indices, local_mask_2d, *, cfg):
    """Forward of LCF_BERT_ONLY_LOCAL.

    The reference computes bert_spc(text_bert_indices, bert_segments_ids) but
    never consumes its output; that branch is pure dead code and is omitted
    here (numerically identical).  Dropout layers are identity in eval mode.
    The whole device forward (embedding gather included) is one pallas_call.
    """
    del text_bert_indices, bert_segments_ids   # dead bert_spc branch
    return _fused_forward(text_local_indices, local_mask_2d, params, cfg)


# ----------------------------------- main -----------------------------------

if __name__ == "__main__":
    cfg = dict(vocab=50, hidden=32, heads=4, intermediate=64, layers=2,
               max_seq_len=8, polarities=3, SRD=3, local_context_focus="cdm")

    key = jax.random.PRNGKey(0)
    pkey, dkey = jax.random.split(key)
    params = init_params(pkey, cfg)

    B, S, D = 2, cfg["max_seq_len"], cfg["hidden"]
    # deterministic token ids; last two positions are padding (0)
    text_local = jax.random.randint(dkey, (B, S), 3, cfg["vocab"], dtype=jnp.int32)
    text_local = text_local.at[:, -2:].set(0)
    text_bert = text_local                      # SPC input (same tokens; branch is dead)
    segments = jnp.zeros((B, S), dtype=jnp.int32)
    # aspect indices: [CLS]=2, one aspect token (copied from text position 3), [SEP]=3
    aspect = jnp.zeros((B, S), dtype=jnp.int32)
    aspect = aspect.at[:, 0].set(2)
    aspect = aspect.at[:, 1].set(text_local[:, 3])
    aspect = aspect.at[:, 2].set(3)

    # Host-side CDM/CDW mask, hoisted BEFORE any device forward. The reference
    # mask is constant across the hidden dim, so only (B, S) values are shipped.
    tl_np, asp_np = np.asarray(text_local), np.asarray(aspect)
    if cfg["local_context_focus"] == "cdm":
        m = feature_dynamic_mask(tl_np, asp_np, S, D, cfg["SRD"])
    elif cfg["local_context_focus"] == "cdw":
        m = feature_dynamic_weighted(tl_np, asp_np, S, D, cfg["SRD"])
    else:
        m = np.ones((B, S, D), np.float32)
    local_mask_2d = jnp.asarray(m[:, :, 0])     # (B, S)

    fwd = jax.jit(functools.partial(lcf_bert_only_local_forward, cfg=cfg))
    dense_out, pooled_out = fwd(params, text_bert, segments, text_local, local_mask_2d)
    jax.block_until_ready((dense_out, pooled_out))

    assert dense_out.shape == (B, cfg["polarities"])
    assert pooled_out.shape == (B, cfg["hidden"])
    assert jnp.all(jnp.isfinite(dense_out)) and jnp.all(jnp.isfinite(pooled_out))
    print("KERNEL_OK")
</pallas_src>

<mosaic_0001>
module attributes {stable_mosaic.version = 11 : i64} {
  func.func @_lcf_kernel(%arg0: memref<16x1xi32, #tpu.memory_space<vmem>>, %arg1: memref<16x1xf32, #tpu.memory_space<vmem>>, %arg2: memref<56x32xf32, #tpu.memory_space<vmem>>, %arg3: memref<16x32xf32, #tpu.memory_space<vmem>>, %arg4: memref<1x32xf32, #tpu.memory_space<vmem>>, %arg5: memref<1x32xf32, #tpu.memory_space<vmem>>, %arg6: memref<2x32x32xf32, #tpu.memory_space<vmem>>, %arg7: memref<2x1x32xf32, #tpu.memory_space<vmem>>, %arg8: memref<2x32x32xf32, #tpu.memory_space<vmem>>, %arg9: memref<2x1x32xf32, #tpu.memory_space<vmem>>, %arg10: memref<2x32x32xf32, #tpu.memory_space<vmem>>, %arg11: memref<2x1x32xf32, #tpu.memory_space<vmem>>, %arg12: memref<2x32x32xf32, #tpu.memory_space<vmem>>, %arg13: memref<2x1x32xf32, #tpu.memory_space<vmem>>, %arg14: memref<2x1x32xf32, #tpu.memory_space<vmem>>, %arg15: memref<2x1x32xf32, #tpu.memory_space<vmem>>, %arg16: memref<2x32x64xf32, #tpu.memory_space<vmem>>, %arg17: memref<2x1x64xf32, #tpu.memory_space<vmem>>, %arg18: memref<2x64x32xf32, #tpu.memory_space<vmem>>, %arg19: memref<2x1x32xf32, #tpu.memory_space<vmem>>, %arg20: memref<2x1x32xf32, #tpu.memory_space<vmem>>, %arg21: memref<2x1x32xf32, #tpu.memory_space<vmem>>, %arg22: memref<32x32xf32, #tpu.memory_space<vmem>>, %arg23: memref<1x32xf32, #tpu.memory_space<vmem>>, %arg24: memref<32x32xf32, #tpu.memory_space<vmem>>, %arg25: memref<1x32xf32, #tpu.memory_space<vmem>>, %arg26: memref<32x32xf32, #tpu.memory_space<vmem>>, %arg27: memref<1x32xf32, #tpu.memory_space<vmem>>, %arg28: memref<32x32xf32, #tpu.memory_space<vmem>>, %arg29: memref<1x32xf32, #tpu.memory_space<vmem>>, %arg30: memref<32x32xf32, #tpu.memory_space<vmem>>, %arg31: memref<1x32xf32, #tpu.memory_space<vmem>>, %arg32: memref<32x3xf32, #tpu.memory_space<vmem>>, %arg33: memref<1x3xf32, #tpu.memory_space<vmem>>, %arg34: memref<2x128xf32, #tpu.memory_space<vmem>>) attributes {dimension_semantics = [], scalar_prefetch = 0 : i64, scratch_operands = 0 : i64, tpu.core_type = #tpu.core_type<tc>} {
    %c0 = arith.constant 0 : index
    %c0_0 = arith.constant 0 : index
    %0 = vector.load %arg0[%c0, %c0_0] : memref<16x1xi32, #tpu.memory_space<vmem>>, vector<16x1xi32>
    %1 = tpu.iota {dimensions = array<i32: 1>} : vector<16x56xi32>
    %2 = vector.broadcast %0 : vector<16x1xi32> to vector<16x56xi32>
    %3 = arith.cmpi eq, %1, %2 : vector<16x56xi32>
    %4 = arith.extui %3 : vector<16x56xi1> to vector<16x56xi32>
    %5 = arith.sitofp %4 : vector<16x56xi32> to vector<16x56xf32>
    %c0_1 = arith.constant 0 : index
    %c0_2 = arith.constant 0 : index
    %6 = vector.load %arg2[%c0_1, %c0_2] : memref<56x32xf32, #tpu.memory_space<vmem>>, vector<56x32xf32>
    %cst = arith.constant dense<0.000000e+00> : vector<16x32xf32>
    %7 = tpu.matmul %5, %6, %cst {dimension_numbers = #tpu.dot_dimension_numbers<[1], [0], [0], [1], [0, 0, 1, 1], [], []>} : vector<16x56xf32>, vector<56x32xf32>, vector<16x32xf32> -> vector<16x32xf32>
    %c0_3 = arith.constant 0 : index
    %c0_4 = arith.constant 0 : index
    %8 = vector.load %arg3[%c0_3, %c0_4] : memref<16x32xf32, #tpu.memory_space<vmem>>, vector<16x32xf32>
    %9 = arith.addf %7, %8 : vector<16x32xf32>
    %c0_5 = arith.constant 0 : index
    %c0_6 = arith.constant 0 : index
    %10 = vector.load %arg4[%c0_5, %c0_6] : memref<1x32xf32, #tpu.memory_space<vmem>>, vector<1x32xf32>
    %c0_7 = arith.constant 0 : index
    %c0_8 = arith.constant 0 : index
    %11 = vector.load %arg5[%c0_7, %c0_8] : memref<1x32xf32, #tpu.memory_space<vmem>>, vector<1x32xf32>
    %cst_9 = arith.constant dense<0.000000e+00> : vector<16xf32>
    %12 = vector.multi_reduction <add>, %9, %cst_9 [1] : vector<16x32xf32> to vector<16xf32>
    %13 = vector.shape_cast %12 : vector<16xf32> to vector<16x1xf32>
    %cst_10 = arith.constant 3.200000e+01 : f32
    %14 = vector.broadcast %cst_10 : f32 to vector<16x1xf32>
    %15 = arith.divf %13, %14 : vector<16x1xf32>
    %16 = vector.broadcast %15 : vector<16x1xf32> to vector<16x32xf32>
    %17 = arith.subf %9, %16 : vector<16x32xf32>
    %18 = arith.mulf %17, %17 : vector<16x32xf32>
    %cst_11 = arith.constant dense<0.000000e+00> : vector<16xf32>
    %19 = vector.multi_reduction <add>, %18, %cst_11 [1] : vector<16x32xf32> to vector<16xf32>
    %20 = vector.shape_cast %19 : vector<16xf32> to vector<16x1xf32>
    %cst_12 = arith.constant 3.200000e+01 : f32
    %21 = vector.broadcast %cst_12 : f32 to vector<16x1xf32>
    %22 = arith.divf %20, %21 : vector<16x1xf32>
    %23 = vector.broadcast %15 : vector<16x1xf32> to vector<16x32xf32>
    %24 = arith.subf %9, %23 : vector<16x32xf32>
    %cst_13 = arith.constant 9.99999996E-13 : f32
    %25 = vector.broadcast %cst_13 : f32 to vector<16x1xf32>
    %26 = arith.addf %22, %25 : vector<16x1xf32>
    %27 = math.rsqrt %26 : vector<16x1xf32>
    %28 = vector.broadcast %27 : vector<16x1xf32> to vector<16x32xf32>
    %29 = arith.mulf %24, %28 : vector<16x32xf32>
    %30 = vector.broadcast %10 : vector<1x32xf32> to vector<16x32xf32>
    %31 = arith.mulf %29, %30 : vector<16x32xf32>
    %32 = vector.broadcast %11 : vector<1x32xf32> to vector<16x32xf32>
    %33 = arith.addf %31, %32 : vector<16x32xf32>
    %c0_14 = arith.constant 0 : index
    %c0_15 = arith.constant 0 : index
    %c0_16 = arith.constant 0 : index
    %34 = vector.load %arg6[%c0_14, %c0_15, %c0_16] : memref<2x32x32xf32, #tpu.memory_space<vmem>>, vector<1x32x32xf32>
    %35 = vector.shape_cast %34 : vector<1x32x32xf32> to vector<32x32xf32>
    %cst_17 = arith.constant dense<0.000000e+00> : vector<16x32xf32>
    %36 = tpu.matmul %33, %35, %cst_17 {dimension_numbers = #tpu.dot_dimension_numbers<[1], [0], [0], [1], [0, 0, 1, 1], [], []>} : vector<16x32xf32>, vector<32x32xf32>, vector<16x32xf32> -> vector<16x32xf32>
    %c0_18 = arith.constant 0 : index
    %c0_19 = arith.constant 0 : index
    %c0_20 = arith.constant 0 : index
    %37 = vector.load %arg7[%c0_18, %c0_19, %c0_20] : memref<2x1x32xf32, #tpu.memory_space<vmem>>, vector<1x1x32xf32>
    %38 = vector.shape_cast %37 : vector<1x1x32xf32> to vector<1x32xf32>
    %39 = vector.broadcast %38 : vector<1x32xf32> to vector<16x32xf32>
    %40 = arith.addf %36, %39 : vector<16x32xf32>
    %c0_21 = arith.constant 0 : index
    %c0_22 = arith.constant 0 : index
    %c0_23 = arith.constant 0 : index
    %41 = vector.load %arg8[%c0_21, %c0_22, %c0_23] : memref<2x32x32xf32, #tpu.memory_space<vmem>>, vector<1x32x32xf32>
    %42 = vector.shape_cast %41 : vector<1x32x32xf32> to vector<32x32xf32>
    %cst_24 = arith.constant dense<0.000000e+00> : vector<16x32xf32>
    %43 = tpu.matmul %33, %42, %cst_24 {dimension_numbers = #tpu.dot_dimension_numbers<[1], [0], [0], [1], [0, 0, 1, 1], [], []>} : vector<16x32xf32>, vector<32x32xf32>, vector<16x32xf32> -> vector<16x32xf32>
    %c0_25 = arith.constant 0 : index
    %c0_26 = arith.constant 0 : index
    %c0_27 = arith.constant 0 : index
    %44 = vector.load %arg9[%c0_25, %c0_26, %c0_27] : memref<2x1x32xf32, #tpu.memory_space<vmem>>, vector<1x1x32xf32>
    %45 = vector.shape_cast %44 : vector<1x1x32xf32> to vector<1x32xf32>
    %46 = vector.broadcast %45 : vector<1x32xf32> to vector<16x32xf32>
    %47 = arith.addf %43, %46 : vector<16x32xf32>
    %c0_28 = arith.constant 0 : index
    %c0_29 = arith.constant 0 : index
    %c0_30 = arith.constant 0 : index
    %48 = vector.load %arg10[%c0_28, %c0_29, %c0_30] : memref<2x32x32xf32, #tpu.memory_space<vmem>>, vector<1x32x32xf32>
    %49 = vector.shape_cast %48 : vector<1x32x32xf32> to vector<32x32xf32>
    %cst_31 = arith.constant dense<0.000000e+00> : vector<16x32xf32>
    %50 = tpu.matmul %33, %49, %cst_31 {dimension_numbers = #tpu.dot_dimension_numbers<[1], [0], [0], [1], [0, 0, 1, 1], [], []>} : vector<16x32xf32>, vector<32x32xf32>, vector<16x32xf32> -> vector<16x32xf32>
    %c0_32 = arith.constant 0 : index
    %c0_33 = arith.constant 0 : index
    %c0_34 = arith.constant 0 : index
    %51 = vector.load %arg11[%c0_32, %c0_33, %c0_34] : memref<2x1x32xf32, #tpu.memory_space<vmem>>, vector<1x1x32xf32>
    %52 = vector.shape_cast %51 : vector<1x1x32xf32> to vector<1x32xf32>
    %53 = vector.broadcast %52 : vector<1x32xf32> to vector<16x32xf32>
    %54 = arith.addf %50, %53 : vector<16x32xf32>
    %55 = tpu.transpose %47, [1, 0] : vector<16x32xf32> -> vector<32x16xf32>
    %c0_35 = arith.constant 0 : index
    %c0_36 = arith.constant 0 : index
    %c0_37 = arith.constant 0 : index
    %56 = vector.load %arg12[%c0_35, %c0_36, %c0_37] : memref<2x32x32xf32, #tpu.memory_space<vmem>>, vector<1x32x32xf32>
    %57 = vector.shape_cast %56 : vector<1x32x32xf32> to vector<32x32xf32>
    %58 = vector.extract_strided_slice %40 {offsets = [0, 0], sizes = [8, 8], strides = [1, 1]} : vector<16x32xf32> to vector<8x8xf32>
    %59 = vector.extract_strided_slice %55 {offsets = [0, 0], sizes = [8, 8], strides = [1, 1]} : vector<32x16xf32> to vector<8x8xf32>
    %cst_38 = arith.constant dense<0.000000e+00> : vector<8x8xf32>
    %60 = tpu.matmul %58, %59, %cst_38 {dimension_numbers = #tpu.dot_dimension_numbers<[1], [0], [0], [1], [0, 0, 1, 1], [], []>} : vector<8x8xf32>, vector<8x8xf32>, vector<8x8xf32> -> vector<8x8xf32>
    %cst_39 = arith.constant 0.353553385 : f32
    %61 = vector.broadcast %cst_39 : f32 to vector<8x8xf32>
    %62 = arith.mulf %60, %61 : vector<8x8xf32>
    %cst_40 = arith.constant dense<0xFF800000> : vector<8xf32>
    %63 = vector.multi_reduction <maximumf>, %62, %cst_40 [1] : vector<8x8xf32> to vector<8xf32>
    %64 = vector.shape_cast %63 : vector<8xf32> to vector<8x1xf32>
    %65 = vector.broadcast %64 : vector<8x1xf32> to vector<8x8xf32>
    %66 = arith.subf %62, %65 : vector<8x8xf32>
    %67 = math.exp %66 : vector<8x8xf32>
    %cst_41 = arith.constant dense<0.000000e+00> : vector<8xf32>
    %68 = vector.multi_reduction <add>, %67, %cst_41 [1] : vector<8x8xf32> to vector<8xf32>
    %69 = vector.shape_cast %68 : vector<8xf32> to vector<8x1xf32>
    %70 = tpu.reciprocal %69 {approx = true} : vector<8x1xf32> -> vector<8x1xf32>
    %71 = vector.broadcast %70 : vector<8x1xf32> to vector<8x8xf32>
    %72 = arith.mulf %67, %71 : vector<8x8xf32>
    %73 = vector.extract_strided_slice %54 {offsets = [0, 0], sizes = [8, 8], strides = [1, 1]} : vector<16x32xf32> to vector<8x8xf32>
    %cst_42 = arith.constant dense<0.000000e+00> : vector<8x8xf32>
    %74 = tpu.matmul %72, %73, %cst_42 {dimension_numbers = #tpu.dot_dimension_numbers<[1], [0], [0], [1], [0, 0, 1, 1], [], []>} : vector<8x8xf32>, vector<8x8xf32>, vector<8x8xf32> -> vector<8x8xf32>
    %75 = vector.extract_strided_slice %40 {offsets = [8, 0], sizes = [8, 8], strides = [1, 1]} : vector<16x32xf32> to vector<8x8xf32>
    %76 = vector.extract_strided_slice %55 {offsets = [0, 8], sizes = [8, 8], strides = [1, 1]} : vector<32x16xf32> to vector<8x8xf32>
    %cst_43 = arith.constant dense<0.000000e+00> : vector<8x8xf32>
    %77 = tpu.matmul %75, %76, %cst_43 {dimension_numbers = #tpu.dot_dimension_numbers<[1], [0], [0], [1], [0, 0, 1, 1], [], []>} : vector<8x8xf32>, vector<8x8xf32>, vector<8x8xf32> -> vector<8x8xf32>
    %cst_44 = arith.constant 0.353553385 : f32
    %78 = vector.broadcast %cst_44 : f32 to vector<8x8xf32>
    %79 = arith.mulf %77, %78 : vector<8x8xf32>
    %cst_45 = arith.constant dense<0xFF800000> : vector<8xf32>
    %80 = vector.multi_reduction <maximumf>, %79, %cst_45 [1] : vector<8x8xf32> to vector<8xf32>
    %81 = vector.shape_cast %80 : vector<8xf32> to vector<8x1xf32>
    %82 = vector.broadcast %81 : vector<8x1xf32> to vector<8x8xf32>
    %83 = arith.subf %79, %82 : vector<8x8xf32>
    %84 = math.exp %83 : vector<8x8xf32>
    %cst_46 = arith.constant dense<0.000000e+00> : vector<8xf32>
    %85 = vector.multi_reduction <add>, %84, %cst_46 [1] : vector<8x8xf32> to vector<8xf32>
    %86 = vector.shape_cast %85 : vector<8xf32> to vector<8x1xf32>
    %87 = tpu.reciprocal %86 {approx = true} : vector<8x1xf32> -> vector<8x1xf32>
    %88 = vector.broadcast %87 : vector<8x1xf32> to vector<8x8xf32>
    %89 = arith.mulf %84, %88 : vector<8x8xf32>
    %90 = vector.extract_strided_slice %54 {offsets = [8, 0], sizes = [8, 8], strides = [1, 1]} : vector<16x32xf32> to vector<8x8xf32>
    %cst_47 = arith.constant dense<0.000000e+00> : vector<8x8xf32>
    %91 = tpu.matmul %89, %90, %cst_47 {dimension_numbers = #tpu.dot_dimension_numbers<[1], [0], [0], [1], [0, 0, 1, 1], [], []>} : vector<8x8xf32>, vector<8x8xf32>, vector<8x8xf32> -> vector<8x8xf32>
    %92 = tpu.concatenate %74, %91 in 0 : vector<8x8xf32>, vector<8x8xf32> -> vector<16x8xf32>
    %93 = vector.extract_strided_slice %57 {offsets = [0, 0], sizes = [8, 32], strides = [1, 1]} : vector<32x32xf32> to vector<8x32xf32>
    %cst_48 = arith.constant dense<0.000000e+00> : vector<16x32xf32>
    %94 = tpu.matmul %92, %93, %cst_48 {dimension_numbers = #tpu.dot_dimension_numbers<[1], [0], [0], [1], [0, 0, 1, 1], [], []>} : vector<16x8xf32>, vector<8x32xf32>, vector<16x32xf32> -> vector<16x32xf32>
    %95 = vector.extract_strided_slice %40 {offsets = [0, 8], sizes = [8, 8], strides = [1, 1]} : vector<16x32xf32> to vector<8x8xf32>
    %96 = vector.extract_strided_slice %55 {offsets = [8, 0], sizes = [8, 8], strides = [1, 1]} : vector<32x16xf32> to vector<8x8xf32>
    %cst_49 = arith.constant dense<0.000000e+00> : vector<8x8xf32>
    %97 = tpu.matmul %95, %96, %cst_49 {dimension_numbers = #tpu.dot_dimension_numbers<[1], [0], [0], [1], [0, 0, 1, 1], [], []>} : vector<8x8xf32>, vector<8x8xf32>, vector<8x8xf32> -> vector<8x8xf32>
    %cst_50 = arith.constant 0.353553385 : f32
    %98 = vector.broadcast %cst_50 : f32 to vector<8x8xf32>
    %99 = arith.mulf %97, %98 : vector<8x8xf32>
    %cst_51 = arith.constant dense<0xFF800000> : vector<8xf32>
    %100 = vector.multi_reduction <maximumf>, %99, %cst_51 [1] : vector<8x8xf32> to vector<8xf32>
    %101 = vector.shape_cast %100 : vector<8xf32> to vector<8x1xf32>
    %102 = vector.broadcast %101 : vector<8x1xf32> to vector<8x8xf32>
    %103 = arith.subf %99, %102 : vector<8x8xf32>
    %104 = math.exp %103 : vector<8x8xf32>
    %cst_52 = arith.constant dense<0.000000e+00> : vector<8xf32>
    %105 = vector.multi_reduction <add>, %104, %cst_52 [1] : vector<8x8xf32> to vector<8xf32>
    %106 = vector.shape_cast %105 : vector<8xf32> to vector<8x1xf32>
    %107 = tpu.reciprocal %106 {approx = true} : vector<8x1xf32> -> vector<8x1xf32>
    %108 = vector.broadcast %107 : vector<8x1xf32> to vector<8x8xf32>
    %109 = arith.mulf %104, %108 : vector<8x8xf32>
    %110 = vector.extract_strided_slice %54 {offsets = [0, 8], sizes = [8, 8], strides = [1, 1]} : vector<16x32xf32> to vector<8x8xf32>
    %cst_53 = arith.constant dense<0.000000e+00> : vector<8x8xf32>
    %111 = tpu.matmul %109, %110, %cst_53 {dimension_numbers = #tpu.dot_dimension_numbers<[1], [0], [0], [1], [0, 0, 1, 1], [], []>} : vector<8x8xf32>, vector<8x8xf32>, vector<8x8xf32> -> vector<8x8xf32>
    %112 = vector.extract_strided_slice %40 {offsets = [8, 8], sizes = [8, 8], strides = [1, 1]} : vector<16x32xf32> to vector<8x8xf32>
    %113 = vector.extract_strided_slice %55 {offsets = [8, 8], sizes = [8, 8], strides = [1, 1]} : vector<32x16xf32> to vector<8x8xf32>
    %cst_54 = arith.constant dense<0.000000e+00> : vector<8x8xf32>
    %114 = tpu.matmul %112, %113, %cst_54 {dimension_numbers = #tpu.dot_dimension_numbers<[1], [0], [0], [1], [0, 0, 1, 1], [], []>} : vector<8x8xf32>, vector<8x8xf32>, vector<8x8xf32> -> vector<8x8xf32>
    %cst_55 = arith.constant 0.353553385 : f32
    %115 = vector.broadcast %cst_55 : f32 to vector<8x8xf32>
    %116 = arith.mulf %114, %115 : vector<8x8xf32>
    %cst_56 = arith.constant dense<0xFF800000> : vector<8xf32>
    %117 = vector.multi_reduction <maximumf>, %116, %cst_56 [1] : vector<8x8xf32> to vector<8xf32>
    %118 = vector.shape_cast %117 : vector<8xf32> to vector<8x1xf32>
    %119 = vector.broadcast %118 : vector<8x1xf32> to vector<8x8xf32>
    %120 = arith.subf %116, %119 : vector<8x8xf32>
    %121 = math.exp %120 : vector<8x8xf32>
    %cst_57 = arith.constant dense<0.000000e+00> : vector<8xf32>
    %122 = vector.multi_reduction <add>, %121, %cst_57 [1] : vector<8x8xf32> to vector<8xf32>
    %123 = vector.shape_cast %122 : vector<8xf32> to vector<8x1xf32>
    %124 = tpu.reciprocal %123 {approx = true} : vector<8x1xf32> -> vector<8x1xf32>
    %125 = vector.broadcast %124 : vector<8x1xf32> to vector<8x8xf32>
    %126 = arith.mulf %121, %125 : vector<8x8xf32>
    %127 = vector.extract_strided_slice %54 {offsets = [8, 8], sizes = [8, 8], strides = [1, 1]} : vector<16x32xf32> to vector<8x8xf32>
    %cst_58 = arith.constant dense<0.000000e+00> : vector<8x8xf32>
    %128 = tpu.matmul %126, %127, %cst_58 {dimension_numbers = #tpu.dot_dimension_numbers<[1], [0], [0], [1], [0, 0, 1, 1], [], []>} : vector<8x8xf32>, vector<8x8xf32>, vector<8x8xf32> -> vector<8x8xf32>
    %129 = tpu.concatenate %111, %128 in 0 : vector<8x8xf32>, vector<8x8xf32> -> vector<16x8xf32>
    %130 = vector.extract_strided_slice %57 {offsets = [8, 0], sizes = [8, 32], strides = [1, 1]} : vector<32x32xf32> to vector<8x32xf32>
    %cst_59 = arith.constant dense<0.000000e+00> : vector<16x32xf32>
    %131 = tpu.matmul %129, %130, %cst_59 {dimension_numbers = #tpu.dot_dimension_numbers<[1], [0], [0], [1], [0, 0, 1, 1], [], []>} : vector<16x8xf32>, vector<8x32xf32>, vector<16x32xf32> -> vector<16x32xf32>
    %132 = arith.addf %94, %131 : vector<16x32xf32>
    %133 = vector.extract_strided_slice %40 {offsets = [0, 16], sizes = [8, 8], strides = [1, 1]} : vector<16x32xf32> to vector<8x8xf32>
    %134 = vector.extract_strided_slice %55 {offsets = [16, 0], sizes = [8, 8], strides = [1, 1]} : vector<32x16xf32> to vector<8x8xf32>
    %cst_60 = arith.constant dense<0.000000e+00> : vector<8x8xf32>
    %135 = tpu.matmul %133, %134, %cst_60 {dimension_numbers = #tpu.dot_dimension_numbers<[1], [0], [0], [1], [0, 0, 1, 1], [], []>} : vector<8x8xf32>, vector<8x8xf32>, vector<8x8xf32> -> vector<8x8xf32>
    %cst_61 = arith.constant 0.353553385 : f32
    %136 = vector.broadcast %cst_61 : f32 to vector<8x8xf32>
    %137 = arith.mulf %135, %136 : vector<8x8xf32>
    %cst_62 = arith.constant dense<0xFF800000> : vector<8xf32>
    %138 = vector.multi_reduction <maximumf>, %137, %cst_62 [1] : vector<8x8xf32> to vector<8xf32>
    %139 = vector.shape_cast %138 : vector<8xf32> to vector<8x1xf32>
    %140 = vector.broadcast %139 : vector<8x1xf32> to vector<8x8xf32>
    %141 = arith.subf %137, %140 : vector<8x8xf32>
    %142 = math.exp %141 : vector<8x8xf32>
    %cst_63 = arith.constant dense<0.000000e+00> : vector<8xf32>
    %143 = vector.multi_reduction <add>, %142, %cst_63 [1] : vector<8x8xf32> to vector<8xf32>
    %144 = vector.shape_cast %143 : vector<8xf32> to vector<8x1xf32>
    %145 = tpu.reciprocal %144 {approx = true} : vector<8x1xf32> -> vector<8x1xf32>
    %146 = vector.broadcast %145 : vector<8x1xf32> to vector<8x8xf32>
    %147 = arith.mulf %142, %146 : vector<8x8xf32>
    %148 = vector.extract_strided_slice %54 {offsets = [0, 16], sizes = [8, 8], strides = [1, 1]} : vector<16x32xf32> to vector<8x8xf32>
    %cst_64 = arith.constant dense<0.000000e+00> : vector<8x8xf32>
    %149 = tpu.matmul %147, %148, %cst_64 {dimension_numbers = #tpu.dot_dimension_numbers<[1], [0], [0], [1], [0, 0, 1, 1], [], []>} : vector<8x8xf32>, vector<8x8xf32>, vector<8x8xf32> -> vector<8x8xf32>
    %150 = vector.extract_strided_slice %40 {offsets = [8, 16], sizes = [8, 8], strides = [1, 1]} : vector<16x32xf32> to vector<8x8xf32>
    %151 = vector.extract_strided_slice %55 {offsets = [16, 8], sizes = [8, 8], strides = [1, 1]} : vector<32x16xf32> to vector<8x8xf32>
    %cst_65 = arith.constant dense<0.000000e+00> : vector<8x8xf32>
    %152 = tpu.matmul %150, %151, %cst_65 {dimension_numbers = #tpu.dot_dimension_numbers<[1], [0], [0], [1], [0, 0, 1, 1], [], []>} : vector<8x8xf32>, vector<8x8xf32>, vector<8x8xf32> -> vector<8x8xf32>
    %cst_66 = arith.constant 0.353553385 : f32
    %153 = vector.broadcast %cst_66 : f32 to vector<8x8xf32>
    %154 = arith.mulf %152, %153 : vector<8x8xf32>
    %cst_67 = arith.constant dense<0xFF800000> : vector<8xf32>
    %155 = vector.multi_reduction <maximumf>, %154, %cst_67 [1] : vector<8x8xf32> to vector<8xf32>
    %156 = vector.shape_cast %155 : vector<8xf32> to vector<8x1xf32>
    %157 = vector.broadcast %156 : vector<8x1xf32> to vector<8x8xf32>
    %158 = arith.subf %154, %157 : vector<8x8xf32>
    %159 = math.exp %158 : vector<8x8xf32>
    %cst_68 = arith.constant dense<0.000000e+00> : vector<8xf32>
    %160 = vector.multi_reduction <add>, %159, %cst_68 [1] : vector<8x8xf32> to vector<8xf32>
    %161 = vector.shape_cast %160 : vector<8xf32> to vector<8x1xf32>
    %162 = tpu.reciprocal %161 {approx = true} : vector<8x1xf32> -> vector<8x1xf32>
    %163 = vector.broadcast %162 : vector<8x1xf32> to vector<8x8xf32>
    %164 = arith.mulf %159, %163 : vector<8x8xf32>
    %165 = vector.extract_strided_slice %54 {offsets = [8, 16], sizes = [8, 8], strides = [1, 1]} : vector<16x32xf32> to vector<8x8xf32>
    %cst_69 = arith.constant dense<0.000000e+00> : vector<8x8xf32>
    %166 = tpu.matmul %164, %165, %cst_69 {dimension_numbers = #tpu.dot_dimension_numbers<[1], [0], [0], [1], [0, 0, 1, 1], [], []>} : vector<8x8xf32>, vector<8x8xf32>, vector<8x8xf32> -> vector<8x8xf32>
    %167 = tpu.concatenate %149, %166 in 0 : vector<8x8xf32>, vector<8x8xf32> -> vector<16x8xf32>
    %168 = vector.extract_strided_slice %57 {offsets = [16, 0], sizes = [8, 32], strides = [1, 1]} : vector<32x32xf32> to vector<8x32xf32>
    %cst_70 = arith.constant dense<0.000000e+00> : vector<16x32xf32>
    %169 = tpu.matmul %167, %168, %cst_70 {dimension_numbers = #tpu.dot_dimension_numbers<[1], [0], [0], [1], [0, 0, 1, 1], [], []>} : vector<16x8xf32>, vector<8x32xf32>, vector<16x32xf32> -> vector<16x32xf32>
    %170 = arith.addf %132, %169 : vector<16x32xf32>
    %171 = vector.extract_strided_slice %40 {offsets = [0, 24], sizes = [8, 8], strides = [1, 1]} : vector<16x32xf32> to vector<8x8xf32>
    %172 = vector.extract_strided_slice %55 {offsets = [24, 0], sizes = [8, 8], strides = [1, 1]} : vector<32x16xf32> to vector<8x8xf32>
    %cst_71 = arith.constant dense<0.000000e+00> : vector<8x8xf32>
    %173 = tpu.matmul %171, %172, %cst_71 {dimension_numbers = #tpu.dot_dimension_numbers<[1], [0], [0], [1], [0, 0, 1, 1], [], []>} : vector<8x8xf32>, vector<8x8xf32>, vector<8x8xf32> -> vector<8x8xf32>
    %cst_72 = arith.constant 0.353553385 : f32
    %174 = vector.broadcast %cst_72 : f32 to vector<8x8xf32>
    %175 = arith.mulf %173, %174 : vector<8x8xf32>
    %cst_73 = arith.constant dense<0xFF800000> : vector<8xf32>
    %176 = vector.multi_reduction <maximumf>, %175, %cst_73 [1] : vector<8x8xf32> to vector<8xf32>
    %177 = vector.shape_cast %176 : vector<8xf32> to vector<8x1xf32>
    %178 = vector.broadcast %177 : vector<8x1xf32> to vector<8x8xf32>
    %179 = arith.subf %175, %178 : vector<8x8xf32>
    %180 = math.exp %179 : vector<8x8xf32>
    %cst_74 = arith.constant dense<0.000000e+00> : vector<8xf32>
    %181 = vector.multi_reduction <add>, %180, %cst_74 [1] : vector<8x8xf32> to vector<8xf32>
    %182 = vector.shape_cast %181 : vector<8xf32> to vector<8x1xf32>
    %183 = tpu.reciprocal %182 {approx = true} : vector<8x1xf32> -> vector<8x1xf32>
    %184 = vector.broadcast %183 : vector<8x1xf32> to vector<8x8xf32>
    %185 = arith.mulf %180, %184 : vector<8x8xf32>
    %186 = vector.extract_strided_slice %54 {offsets = [0, 24], sizes = [8, 8], strides = [1, 1]} : vector<16x32xf32> to vector<8x8xf32>
    %cst_75 = arith.constant dense<0.000000e+00> : vector<8x8xf32>
    %187 = tpu.matmul %185, %186, %cst_75 {dimension_numbers = #tpu.dot_dimension_numbers<[1], [0], [0], [1], [0, 0, 1, 1], [], []>} : vector<8x8xf32>, vector<8x8xf32>, vector<8x8xf32> -> vector<8x8xf32>
    %188 = vector.extract_strided_slice %40 {offsets = [8, 24], sizes = [8, 8], strides = [1, 1]} : vector<16x32xf32> to vector<8x8xf32>
    %189 = vector.extract_strided_slice %55 {offsets = [24, 8], sizes = [8, 8], strides = [1, 1]} : vector<32x16xf32> to vector<8x8xf32>
    %cst_76 = arith.constant dense<0.000000e+00> : vector<8x8xf32>
    %190 = tpu.matmul %188, %189, %cst_76 {dimension_numbers = #tpu.dot_dimension_numbers<[1], [0], [0], [1], [0, 0, 1, 1], [], []>} : vector<8x8xf32>, vector<8x8xf32>, vector<8x8xf32> -> vector<8x8xf32>
    %cst_77 = arith.constant 0.353553385 : f32
    %191 = vector.broadcast %cst_77 : f32 to vector<8x8xf32>
    %192 = arith.mulf %190, %191 : vector<8x8xf32>
    %cst_78 = arith.constant dense<0xFF800000> : vector<8xf32>
    %193 = vector.multi_reduction <maximumf>, %192, %cst_78 [1] : vector<8x8xf32> to vector<8xf32>
    %194 = vector.shape_cast %193 : vector<8xf32> to vector<8x1xf32>
    %195 = vector.broadcast %194 : vector<8x1xf32> to vector<8x8xf32>
    %196 = arith.subf %192, %195 : vector<8x8xf32>
    %197 = math.exp %196 : vector<8x8xf32>
    %cst_79 = arith.constant dense<0.000000e+00> : vector<8xf32>
    %198 = vector.multi_reduction <add>, %197, %cst_79 [1] : vector<8x8xf32> to vector<8xf32>
    %199 = vector.shape_cast %198 : vector<8xf32> to vector<8x1xf32>
    %200 = tpu.reciprocal %199 {approx = true} : vector<8x1xf32> -> vector<8x1xf32>
    %201 = vector.broadcast %200 : vector<8x1xf32> to vector<8x8xf32>
    %202 = arith.mulf %197, %201 : vector<8x8xf32>
    %203 = vector.extract_strided_slice %54 {offsets = [8, 24], sizes = [8, 8], strides = [1, 1]} : vector<16x32xf32> to vector<8x8xf32>
    %cst_80 = arith.constant dense<0.000000e+00> : vector<8x8xf32>
    %204 = tpu.matmul %202, %203, %cst_80 {dimension_numbers = #tpu.dot_dimension_numbers<[1], [0], [0], [1], [0, 0, 1, 1], [], []>} : vector<8x8xf32>, vector<8x8xf32>, vector<8x8xf32> -> vector<8x8xf32>
    %205 = tpu.concatenate %187, %204 in 0 : vector<8x8xf32>, vector<8x8xf32> -> vector<16x8xf32>
    %206 = vector.extract_strided_slice %57 {offsets = [24, 0], sizes = [8, 32], strides = [1, 1]} : vector<32x32xf32> to vector<8x32xf32>
    %cst_81 = arith.constant dense<0.000000e+00> : vector<16x32xf32>
    %207 = tpu.matmul %205, %206, %cst_81 {dimension_numbers = #tpu.dot_dimension_numbers<[1], [0], [0], [1], [0, 0, 1, 1], [], []>} : vector<16x8xf32>, vector<8x32xf32>, vector<16x32xf32> -> vector<16x32xf32>
    %208 = arith.addf %170, %207 : vector<16x32xf32>
    %c0_82 = arith.constant 0 : index
    %c0_83 = arith.constant 0 : index
    %c0_84 = arith.constant 0 : index
    %209 = vector.load %arg13[%c0_82, %c0_83, %c0_84] : memref<2x1x32xf32, #tpu.memory_space<vmem>>, vector<1x1x32xf32>
    %210 = vector.shape_cast %209 : vector<1x1x32xf32> to vector<1x32xf32>
    %211 = vector.broadcast %210 : vector<1x32xf32> to vector<16x32xf32>
    %212 = arith.addf %208, %211 : vector<16x32xf32>
    %213 = arith.addf %212, %33 : vector<16x32xf32>
    %c0_85 = arith.constant 0 : index
    %c0_86 = arith.constant 0 : index
    %c0_87 = arith.constant 0 : index
    %214 = vector.load %arg14[%c0_85, %c0_86, %c0_87] : memref<2x1x32xf32, #tpu.memory_space<vmem>>, vector<1x1x32xf32>
    %215 = vector.shape_cast %214 : vector<1x1x32xf32> to vector<1x32xf32>
    %c0_88 = arith.constant 0 : index
    %c0_89 = arith.constant 0 : index
    %c0_90 = arith.constant 0 : index
    %216 = vector.load %arg15[%c0_88, %c0_89, %c0_90] : memref<2x1x32xf32, #tpu.memory_space<vmem>>, vector<1x1x32xf32>
    %217 = vector.shape_cast %216 : vector<1x1x32xf32> to vector<1x32xf32>
    %cst_91 = arith.constant dense<0.000000e+00> : vector<16xf32>
    %218 = vector.multi_reduction <add>, %213, %cst_91 [1] : vector<16x32xf32> to vector<16xf32>
    %219 = vector.shape_cast %218 : vector<16xf32> to vector<16x1xf32>
    %cst_92 = arith.constant 3.200000e+01 : f32
    %220 = vector.broadcast %cst_92 : f32 to vector<16x1xf32>
    %221 = arith.divf %219, %220 : vector<16x1xf32>
    %222 = vector.broadcast %221 : vector<16x1xf32> to vector<16x32xf32>
    %223 = arith.subf %213, %222 : vector<16x32xf32>
    %224 = arith.mulf %223, %223 : vector<16x32xf32>
    %cst_93 = arith.constant dense<0.000000e+00> : vector<16xf32>
    %225 = vector.multi_reduction <add>, %224, %cst_93 [1] : vector<16x32xf32> to vector<16xf32>
    %226 = vector.shape_cast %225 : vector<16xf32> to vector<16x1xf32>
    %cst_94 = arith.constant 3.200000e+01 : f32
    %227 = vector.broadcast %cst_94 : f32 to vector<16x1xf32>
    %228 = arith.divf %226, %227 : vector<16x1xf32>
    %229 = vector.broadcast %221 : vector<16x1xf32> to vector<16x32xf32>
    %230 = arith.subf %213, %229 : vector<16x32xf32>
    %cst_95 = arith.constant 9.99999996E-13 : f32
    %231 = vector.broadcast %cst_95 : f32 to vector<16x1xf32>
    %232 = arith.addf %228, %231 : vector<16x1xf32>
    %233 = math.rsqrt %232 : vector<16x1xf32>
    %234 = vector.broadcast %233 : vector<16x1xf32> to vector<16x32xf32>
    %235 = arith.mulf %230, %234 : vector<16x32xf32>
    %236 = vector.broadcast %215 : vector<1x32xf32> to vector<16x32xf32>
    %237 = arith.mulf %235, %236 : vector<16x32xf32>
    %238 = vector.broadcast %217 : vector<1x32xf32> to vector<16x32xf32>
    %239 = arith.addf %237, %238 : vector<16x32xf32>
    %c0_96 = arith.constant 0 : index
    %c0_97 = arith.constant 0 : index
    %c0_98 = arith.constant 0 : index
    %240 = vector.load %arg16[%c0_96, %c0_97, %c0_98] : memref<2x32x64xf32, #tpu.memory_space<vmem>>, vector<1x32x64xf32>
    %241 = vector.shape_cast %240 : vector<1x32x64xf32> to vector<32x64xf32>
    %cst_99 = arith.constant dense<0.000000e+00> : vector<16x64xf32>
    %242 = tpu.matmul %239, %241, %cst_99 {dimension_numbers = #tpu.dot_dimension_numbers<[1], [0], [0], [1], [0, 0, 1, 1], [], []>} : vector<16x32xf32>, vector<32x64xf32>, vector<16x64xf32> -> vector<16x64xf32>
    %c0_100 = arith.constant 0 : index
    %c0_101 = arith.constant 0 : index
    %c0_102 = arith.constant 0 : index
    %243 = vector.load %arg17[%c0_100, %c0_101, %c0_102] : memref<2x1x64xf32, #tpu.memory_space<vmem>>, vector<1x1x64xf32>
    %244 = vector.shape_cast %243 : vector<1x1x64xf32> to vector<1x64xf32>
    %245 = vector.broadcast %244 : vector<1x64xf32> to vector<16x64xf32>
    %246 = arith.addf %242, %245 : vector<16x64xf32>
    %cst_103 = arith.constant 5.000000e-01 : f32
    %247 = vector.broadcast %cst_103 : f32 to vector<16x64xf32>
    %248 = arith.mulf %247, %246 : vector<16x64xf32>
    %cst_104 = arith.constant 0.707106769 : f32
    %249 = vector.broadcast %cst_104 : f32 to vector<16x64xf32>
    %250 = arith.mulf %246, %249 : vector<16x64xf32>
    %cst_105 = arith.constant 0.000000e+00 : f32
    %251 = vector.broadcast %cst_105 : f32 to vector<16x64xf32>
    %252 = arith.cmpf oge, %250, %251 : vector<16x64xf32>
    %cst_106 = arith.constant 1.000000e+00 : f32
    %cst_107 = arith.constant -1.000000e+00 : f32
    %253 = vector.broadcast %cst_106 : f32 to vector<16x64xf32>
    %254 = vector.broadcast %cst_107 : f32 to vector<16x64xf32>
    %255 = arith.select %252, %253, %254 : vector<16x64xi1>, vector<16x64xf32>
    %256 = math.absf %250 : vector<16x64xf32>
    %cst_108 = arith.constant 0.327591091 : f32
    %257 = vector.broadcast %cst_108 : f32 to vector<16x64xf32>
    %258 = arith.mulf %257, %256 : vector<16x64xf32>
    %cst_109 = arith.constant 1.000000e+00 : f32
    %259 = vector.broadcast %cst_109 : f32 to vector<16x64xf32>
    %260 = arith.addf %259, %258 : vector<16x64xf32>
    %cst_110 = arith.constant 1.000000e+00 : f32
    %261 = vector.broadcast %cst_110 : f32 to vector<16x64xf32>
    %262 = arith.divf %261, %260 : vector<16x64xf32>
    %cst_111 = arith.constant 1.06140542 : f32
    %263 = vector.broadcast %cst_111 : f32 to vector<16x64xf32>
    %264 = arith.mulf %263, %262 : vector<16x64xf32>
    %cst_112 = arith.constant -1.45315206 : f32
    %265 = vector.broadcast %cst_112 : f32 to vector<16x64xf32>
    %266 = arith.addf %264, %265 : vector<16x64xf32>
    %267 = arith.mulf %266, %262 : vector<16x64xf32>
    %cst_113 = arith.constant 1.42141378 : f32
    %268 = vector.broadcast %cst_113 : f32 to vector<16x64xf32>
    %269 = arith.addf %267, %268 : vector<16x64xf32>
    %270 = arith.mulf %269, %262 : vector<16x64xf32>
    %cst_114 = arith.constant -0.284496725 : f32
    %271 = vector.broadcast %cst_114 : f32 to vector<16x64xf32>
    %272 = arith.addf %270, %271 : vector<16x64xf32>
    %273 = arith.mulf %272, %262 : vector<16x64xf32>
    %cst_115 = arith.constant 0.254829586 : f32
    %274 = vector.broadcast %cst_115 : f32 to vector<16x64xf32>
    %275 = arith.addf %273, %274 : vector<16x64xf32>
    %276 = arith.mulf %275, %262 : vector<16x64xf32>
    %cst_116 = arith.constant 0.000000e+00 : f32
    %277 = vector.broadcast %cst_116 : f32 to vector<16x64xf32>
    %278 = arith.subf %277, %256 : vector<16x64xf32>
    %279 = arith.mulf %278, %256 : vector<16x64xf32>
    %280 = math.exp %279 : vector<16x64xf32>
    %281 = arith.mulf %276, %280 : vector<16x64xf32>
    %cst_117 = arith.constant 1.000000e+00 : f32
    %282 = vector.broadcast %cst_117 : f32 to vector<16x64xf32>
    %283 = arith.subf %282, %281 : vector<16x64xf32>
    %284 = arith.mulf %255, %283 : vector<16x64xf32>
    %cst_118 = arith.constant 1.000000e+00 : f32
    %285 = vector.broadcast %cst_118 : f32 to vector<16x64xf32>
    %286 = arith.addf %285, %284 : vector<16x64xf32>
    %287 = arith.mulf %248, %286 : vector<16x64xf32>
    %c0_119 = arith.constant 0 : index
    %c0_120 = arith.constant 0 : index
    %c0_121 = arith.constant 0 : index
    %288 = vector.load %arg18[%c0_119, %c0_120, %c0_121] : memref<2x64x32xf32, #tpu.memory_space<vmem>>, vector<1x64x32xf32>
    %289 = vector.shape_cast %288 : vector<1x64x32xf32> to vector<64x32xf32>
    %cst_122 = arith.constant dense<0.000000e+00> : vector<16x32xf32>
    %290 = tpu.matmul %287, %289, %cst_122 {dimension_numbers = #tpu.dot_dimension_numbers<[1], [0], [0], [1], [0, 0, 1, 1], [], []>} : vector<16x64xf32>, vector<64x32xf32>, vector<16x32xf32> -> vector<16x32xf32>
    %c0_123 = arith.constant 0 : index
    %c0_124 = arith.constant 0 : index
    %c0_125 = arith.constant 0 : index
    %291 = vector.load %arg19[%c0_123, %c0_124, %c0_125] : memref<2x1x32xf32, #tpu.memory_space<vmem>>, vector<1x1x32xf32>
    %292 = vector.shape_cast %291 : vector<1x1x32xf32> to vector<1x32xf32>
    %293 = vector.broadcast %292 : vector<1x32xf32> to vector<16x32xf32>
    %294 = arith.addf %290, %293 : vector<16x32xf32>
    %295 = arith.addf %294, %239 : vector<16x32xf32>
    %c0_126 = arith.constant 0 : index
    %c0_127 = arith.constant 0 : index
    %c0_128 = arith.constant 0 : index
    %296 = vector.load %arg20[%c0_126, %c0_127, %c0_128] : memref<2x1x32xf32, #tpu.memory_space<vmem>>, vector<1x1x32xf32>
    %297 = vector.shape_cast %296 : vector<1x1x32xf32> to vector<1x32xf32>
    %c0_129 = arith.constant 0 : index
    %c0_130 = arith.constant 0 : index
    %c0_131 = arith.constant 0 : index
    %298 = vector.load %arg21[%c0_129, %c0_130, %c0_131] : memref<2x1x32xf32, #tpu.memory_space<vmem>>, vector<1x1x32xf32>
    %299 = vector.shape_cast %298 : vector<1x1x32xf32> to vector<1x32xf32>
    %cst_132 = arith.constant dense<0.000000e+00> : vector<16xf32>
    %300 = vector.multi_reduction <add>, %295, %cst_132 [1] : vector<16x32xf32> to vector<16xf32>
    %301 = vector.shape_cast %300 : vector<16xf32> to vector<16x1xf32>
    %cst_133 = arith.constant 3.200000e+01 : f32
    %302 = vector.broadcast %cst_133 : f32 to vector<16x1xf32>
    %303 = arith.divf %301, %302 : vector<16x1xf32>
    %304 = vector.broadcast %303 : vector<16x1xf32> to vector<16x32xf32>
    %305 = arith.subf %295, %304 : vector<16x32xf32>
    %306 = arith.mulf %305, %305 : vector<16x32xf32>
    %cst_134 = arith.constant dense<0.000000e+00> : vector<16xf32>
    %307 = vector.multi_reduction <add>, %306, %cst_134 [1] : vector<16x32xf32> to vector<16xf32>
    %308 = vector.shape_cast %307 : vector<16xf32> to vector<16x1xf32>
    %cst_135 = arith.constant 3.200000e+01 : f32
    %309 = vector.broadcast %cst_135 : f32 to vector<16x1xf32>
    %310 = arith.divf %308, %309 : vector<16x1xf32>
    %311 = vector.broadcast %303 : vector<16x1xf32> to vector<16x32xf32>
    %312 = arith.subf %295, %311 : vector<16x32xf32>
    %cst_136 = arith.constant 9.99999996E-13 : f32
    %313 = vector.broadcast %cst_136 : f32 to vector<16x1xf32>
    %314 = arith.addf %310, %313 : vector<16x1xf32>
    %315 = math.rsqrt %314 : vector<16x1xf32>
    %316 = vector.broadcast %315 : vector<16x1xf32> to vector<16x32xf32>
    %317 = arith.mulf %312, %316 : vector<16x32xf32>
    %318 = vector.broadcast %297 : vector<1x32xf32> to vector<16x32xf32>
    %319 = arith.mulf %317, %318 : vector<16x32xf32>
    %320 = vector.broadcast %299 : vector<1x32xf32> to vector<16x32xf32>
    %321 = arith.addf %319, %320 : vector<16x32xf32>
    %c1 = arith.constant 1 : index
    %c0_137 = arith.constant 0 : index
    %c0_138 = arith.constant 0 : index
    %322 = vector.load %arg6[%c1, %c0_137, %c0_138] : memref<2x32x32xf32, #tpu.memory_space<vmem>>, vector<1x32x32xf32>
    %323 = vector.shape_cast %322 : vector<1x32x32xf32> to vector<32x32xf32>
    %cst_139 = arith.constant dense<0.000000e+00> : vector<16x32xf32>
    %324 = tpu.matmul %321, %323, %cst_139 {dimension_numbers = #tpu.dot_dimension_numbers<[1], [0], [0], [1], [0, 0, 1, 1], [], []>} : vector<16x32xf32>, vector<32x32xf32>, vector<16x32xf32> -> vector<16x32xf32>
    %c1_140 = arith.constant 1 : index
    %c0_141 = arith.constant 0 : index
    %c0_142 = arith.constant 0 : index
    %325 = vector.load %arg7[%c1_140, %c0_141, %c0_142] : memref<2x1x32xf32, #tpu.memory_space<vmem>>, vector<1x1x32xf32>
    %326 = vector.shape_cast %325 : vector<1x1x32xf32> to vector<1x32xf32>
    %327 = vector.broadcast %326 : vector<1x32xf32> to vector<16x32xf32>
    %328 = arith.addf %324, %327 : vector<16x32xf32>
    %c1_143 = arith.constant 1 : index
    %c0_144 = arith.constant 0 : index
    %c0_145 = arith.constant 0 : index
    %329 = vector.load %arg8[%c1_143, %c0_144, %c0_145] : memref<2x32x32xf32, #tpu.memory_space<vmem>>, vector<1x32x32xf32>
    %330 = vector.shape_cast %329 : vector<1x32x32xf32> to vector<32x32xf32>
    %cst_146 = arith.constant dense<0.000000e+00> : vector<16x32xf32>
    %331 = tpu.matmul %321, %330, %cst_146 {dimension_numbers = #tpu.dot_dimension_numbers<[1], [0], [0], [1], [0, 0, 1, 1], [], []>} : vector<16x32xf32>, vector<32x32xf32>, vector<16x32xf32> -> vector<16x32xf32>
    %c1_147 = arith.constant 1 : index
    %c0_148 = arith.constant 0 : index
    %c0_149 = arith.constant 0 : index
    %332 = vector.load %arg9[%c1_147, %c0_148, %c0_149] : memref<2x1x32xf32, #tpu.memory_space<vmem>>, vector<1x1x32xf32>
    %333 = vector.shape_cast %332 : vector<1x1x32xf32> to vector<1x32xf32>
    %334 = vector.broadcast %333 : vector<1x32xf32> to vector<16x32xf32>
    %335 = arith.addf %331, %334 : vector<16x32xf32>
    %c1_150 = arith.constant 1 : index
    %c0_151 = arith.constant 0 : index
    %c0_152 = arith.constant 0 : index
    %336 = vector.load %arg10[%c1_150, %c0_151, %c0_152] : memref<2x32x32xf32, #tpu.memory_space<vmem>>, vector<1x32x32xf32>
    %337 = vector.shape_cast %336 : vector<1x32x32xf32> to vector<32x32xf32>
    %cst_153 = arith.constant dense<0.000000e+00> : vector<16x32xf32>
    %338 = tpu.matmul %321, %337, %cst_153 {dimension_numbers = #tpu.dot_dimension_numbers<[1], [0], [0], [1], [0, 0, 1, 1], [], []>} : vector<16x32xf32>, vector<32x32xf32>, vector<16x32xf32> -> vector<16x32xf32>
    %c1_154 = arith.constant 1 : index
    %c0_155 = arith.constant 0 : index
    %c0_156 = arith.constant 0 : index
    %339 = vector.load %arg11[%c1_154, %c0_155, %c0_156] : memref<2x1x32xf32, #tpu.memory_space<vmem>>, vector<1x1x32xf32>
    %340 = vector.shape_cast %339 : vector<1x1x32xf32> to vector<1x32xf32>
    %341 = vector.broadcast %340 : vector<1x32xf32> to vector<16x32xf32>
    %342 = arith.addf %338, %341 : vector<16x32xf32>
    %343 = tpu.transpose %335, [1, 0] : vector<16x32xf32> -> vector<32x16xf32>
    %c1_157 = arith.constant 1 : index
    %c0_158 = arith.constant 0 : index
    %c0_159 = arith.constant 0 : index
    %344 = vector.load %arg12[%c1_157, %c0_158, %c0_159] : memref<2x32x32xf32, #tpu.memory_space<vmem>>, vector<1x32x32xf32>
    %345 = vector.shape_cast %344 : vector<1x32x32xf32> to vector<32x32xf32>
    %346 = vector.extract_strided_slice %328 {offsets = [0, 0], sizes = [8, 8], strides = [1, 1]} : vector<16x32xf32> to vector<8x8xf32>
    %347 = vector.extract_strided_slice %343 {offsets = [0, 0], sizes = [8, 8], strides = [1, 1]} : vector<32x16xf32> to vector<8x8xf32>
    %cst_160 = arith.constant dense<0.000000e+00> : vector<8x8xf32>
    %348 = tpu.matmul %346, %347, %cst_160 {dimension_numbers = #tpu.dot_dimension_numbers<[1], [0], [0], [1], [0, 0, 1, 1], [], []>} : vector<8x8xf32>, vector<8x8xf32>, vector<8x8xf32> -> vector<8x8xf32>
    %cst_161 = arith.constant 0.353553385 : f32
    %349 = vector.broadcast %cst_161 : f32 to vector<8x8xf32>
    %350 = arith.mulf %348, %349 : vector<8x8xf32>
    %cst_162 = arith.constant dense<0xFF800000> : vector<8xf32>
    %351 = vector.multi_reduction <maximumf>, %350, %cst_162 [1] : vector<8x8xf32> to vector<8xf32>
    %352 = vector.shape_cast %351 : vector<8xf32> to vector<8x1xf32>
    %353 = vector.broadcast %352 : vector<8x1xf32> to vector<8x8xf32>
    %354 = arith.subf %350, %353 : vector<8x8xf32>
    %355 = math.exp %354 : vector<8x8xf32>
    %cst_163 = arith.constant dense<0.000000e+00> : vector<8xf32>
    %356 = vector.multi_reduction <add>, %355, %cst_163 [1] : vector<8x8xf32> to vector<8xf32>
    %357 = vector.shape_cast %356 : vector<8xf32> to vector<8x1xf32>
    %358 = tpu.reciprocal %357 {approx = true} : vector<8x1xf32> -> vector<8x1xf32>
    %359 = vector.broadcast %358 : vector<8x1xf32> to vector<8x8xf32>
    %360 = arith.mulf %355, %359 : vector<8x8xf32>
    %361 = vector.extract_strided_slice %342 {offsets = [0, 0], sizes = [8, 8], strides = [1, 1]} : vector<16x32xf32> to vector<8x8xf32>
    %cst_164 = arith.constant dense<0.000000e+00> : vector<8x8xf32>
    %362 = tpu.matmul %360, %361, %cst_164 {dimension_numbers = #tpu.dot_dimension_numbers<[1], [0], [0], [1], [0, 0, 1, 1], [], []>} : vector<8x8xf32>, vector<8x8xf32>, vector<8x8xf32> -> vector<8x8xf32>
    %363 = vector.extract_strided_slice %328 {offsets = [8, 0], sizes = [8, 8], strides = [1, 1]} : vector<16x32xf32> to vector<8x8xf32>
    %364 = vector.extract_strided_slice %343 {offsets = [0, 8], sizes = [8, 8], strides = [1, 1]} : vector<32x16xf32> to vector<8x8xf32>
    %cst_165 = arith.constant dense<0.000000e+00> : vector<8x8xf32>
    %365 = tpu.matmul %363, %364, %cst_165 {dimension_numbers = #tpu.dot_dimension_numbers<[1], [0], [0], [1], [0, 0, 1, 1], [], []>} : vector<8x8xf32>, vector<8x8xf32>, vector<8x8xf32> -> vector<8x8xf32>
    %cst_166 = arith.constant 0.353553385 : f32
    %366 = vector.broadcast %cst_166 : f32 to vector<8x8xf32>
    %367 = arith.mulf %365, %366 : vector<8x8xf32>
    %cst_167 = arith.constant dense<0xFF800000> : vector<8xf32>
    %368 = vector.multi_reduction <maximumf>, %367, %cst_167 [1] : vector<8x8xf32> to vector<8xf32>
    %369 = vector.shape_cast %368 : vector<8xf32> to vector<8x1xf32>
    %370 = vector.broadcast %369 : vector<8x1xf32> to vector<8x8xf32>
    %371 = arith.subf %367, %370 : vector<8x8xf32>
    %372 = math.exp %371 : vector<8x8xf32>
    %cst_168 = arith.constant dense<0.000000e+00> : vector<8xf32>
    %373 = vector.multi_reduction <add>, %372, %cst_168 [1] : vector<8x8xf32> to vector<8xf32>
    %374 = vector.shape_cast %373 : vector<8xf32> to vector<8x1xf32>
    %375 = tpu.reciprocal %374 {approx = true} : vector<8x1xf32> -> vector<8x1xf32>
    %376 = vector.broadcast %375 : vector<8x1xf32> to vector<8x8xf32>
    %377 = arith.mulf %372, %376 : vector<8x8xf32>
    %378 = vector.extract_strided_slice %342 {offsets = [8, 0], sizes = [8, 8], strides = [1, 1]} : vector<16x32xf32> to vector<8x8xf32>
    %cst_169 = arith.constant dense<0.000000e+00> : vector<8x8xf32>
    %379 = tpu.matmul %377, %378, %cst_169 {dimension_numbers = #tpu.dot_dimension_numbers<[1], [0], [0], [1], [0, 0, 1, 1], [], []>} : vector<8x8xf32>, vector<8x8xf32>, vector<8x8xf32> -> vector<8x8xf32>
    %380 = tpu.concatenate %362, %379 in 0 : vector<8x8xf32>, vector<8x8xf32> -> vector<16x8xf32>
    %381 = vector.extract_strided_slice %345 {offsets = [0, 0], sizes = [8, 32], strides = [1, 1]} : vector<32x32xf32> to vector<8x32xf32>
    %cst_170 = arith.constant dense<0.000000e+00> : vector<16x32xf32>
    %382 = tpu.matmul %380, %381, %cst_170 {dimension_numbers = #tpu.dot_dimension_numbers<[1], [0], [0], [1], [0, 0, 1, 1], [], []>} : vector<16x8xf32>, vector<8x32xf32>, vector<16x32xf32> -> vector<16x32xf32>
    %383 = vector.extract_strided_slice %328 {offsets = [0, 8], sizes = [8, 8], strides = [1, 1]} : vector<16x32xf32> to vector<8x8xf32>
    %384 = vector.extract_strided_slice %343 {offsets = [8, 0], sizes = [8, 8], strides = [1, 1]} : vector<32x16xf32> to vector<8x8xf32>
    %cst_171 = arith.constant dense<0.000000e+00> : vector<8x8xf32>
    %385 = tpu.matmul %383, %384, %cst_171 {dimension_numbers = #tpu.dot_dimension_numbers<[1], [0], [0], [1], [0, 0, 1, 1], [], []>} : vector<8x8xf32>, vector<8x8xf32>, vector<8x8xf32> -> vector<8x8xf32>
    %cst_172 = arith.constant 0.353553385 : f32
    %386 = vector.broadcast %cst_172 : f32 to vector<8x8xf32>
    %387 = arith.mulf %385, %386 : vector<8x8xf32>
    %cst_173 = arith.constant dense<0xFF800000> : vector<8xf32>
    %388 = vector.multi_reduction <maximumf>, %387, %cst_173 [1] : vector<8x8xf32> to vector<8xf32>
    %389 = vector.shape_cast %388 : vector<8xf32> to vector<8x1xf32>
    %390 = vector.broadcast %389 : vector<8x1xf32> to vector<8x8xf32>
    %391 = arith.subf %387, %390 : vector<8x8xf32>
    %392 = math.exp %391 : vector<8x8xf32>
    %cst_174 = arith.constant dense<0.000000e+00> : vector<8xf32>
    %393 = vector.multi_reduction <add>, %392, %cst_174 [1] : vector<8x8xf32> to vector<8xf32>
    %394 = vector.shape_cast %393 : vector<8xf32> to vector<8x1xf32>
    %395 = tpu.reciprocal %394 {approx = true} : vector<8x1xf32> -> vector<8x1xf32>
    %396 = vector.broadcast %395 : vector<8x1xf32> to vector<8x8xf32>
    %397 = arith.mulf %392, %396 : vector<8x8xf32>
    %398 = vector.extract_strided_slice %342 {offsets = [0, 8], sizes = [8, 8], strides = [1, 1]} : vector<16x32xf32> to vector<8x8xf32>
    %cst_175 = arith.constant dense<0.000000e+00> : vector<8x8xf32>
    %399 = tpu.matmul %397, %398, %cst_175 {dimension_numbers = #tpu.dot_dimension_numbers<[1], [0], [0], [1], [0, 0, 1, 1], [], []>} : vector<8x8xf32>, vector<8x8xf32>, vector<8x8xf32> -> vector<8x8xf32>
    %400 = vector.extract_strided_slice %328 {offsets = [8, 8], sizes = [8, 8], strides = [1, 1]} : vector<16x32xf32> to vector<8x8xf32>
    %401 = vector.extract_strided_slice %343 {offsets = [8, 8], sizes = [8, 8], strides = [1, 1]} : vector<32x16xf32> to vector<8x8xf32>
    %cst_176 = arith.constant dense<0.000000e+00> : vector<8x8xf32>
    %402 = tpu.matmul %400, %401, %cst_176 {dimension_numbers = #tpu.dot_dimension_numbers<[1], [0], [0], [1], [0, 0, 1, 1], [], []>} : vector<8x8xf32>, vector<8x8xf32>, vector<8x8xf32> -> vector<8x8xf32>
    %cst_177 = arith.constant 0.353553385 : f32
    %403 = vector.broadcast %cst_177 : f32 to vector<8x8xf32>
    %404 = arith.mulf %402, %403 : vector<8x8xf32>
    %cst_178 = arith.constant dense<0xFF800000> : vector<8xf32>
    %405 = vector.multi_reduction <maximumf>, %404, %cst_178 [1] : vector<8x8xf32> to vector<8xf32>
    %406 = vector.shape_cast %405 : vector<8xf32> to vector<8x1xf32>
    %407 = vector.broadcast %406 : vector<8x1xf32> to vector<8x8xf32>
    %408 = arith.subf %404, %407 : vector<8x8xf32>
    %409 = math.exp %408 : vector<8x8xf32>
    %cst_179 = arith.constant dense<0.000000e+00> : vector<8xf32>
    %410 = vector.multi_reduction <add>, %409, %cst_179 [1] : vector<8x8xf32> to vector<8xf32>
    %411 = vector.shape_cast %410 : vector<8xf32> to vector<8x1xf32>
    %412 = tpu.reciprocal %411 {approx = true} : vector<8x1xf32> -> vector<8x1xf32>
    %413 = vector.broadcast %412 : vector<8x1xf32> to vector<8x8xf32>
    %414 = arith.mulf %409, %413 : vector<8x8xf32>
    %415 = vector.extract_strided_slice %342 {offsets = [8, 8], sizes = [8, 8], strides = [1, 1]} : vector<16x32xf32> to vector<8x8xf32>
    %cst_180 = arith.constant dense<0.000000e+00> : vector<8x8xf32>
    %416 = tpu.matmul %414, %415, %cst_180 {dimension_numbers = #tpu.dot_dimension_numbers<[1], [0], [0], [1], [0, 0, 1, 1], [], []>} : vector<8x8xf32>, vector<8x8xf32>, vector<8x8xf32> -> vector<8x8xf32>
    %417 = tpu.concatenate %399, %416 in 0 : vector<8x8xf32>, vector<8x8xf32> -> vector<16x8xf32>
    %418 = vector.extract_strided_slice %345 {offsets = [8, 0], sizes = [8, 32], strides = [1, 1]} : vector<32x32xf32> to vector<8x32xf32>
    %cst_181 = arith.constant dense<0.000000e+00> : vector<16x32xf32>
    %419 = tpu.matmul %417, %418, %cst_181 {dimension_numbers = #tpu.dot_dimension_numbers<[1], [0], [0], [1], [0, 0, 1, 1], [], []>} : vector<16x8xf32>, vector<8x32xf32>, vector<16x32xf32> -> vector<16x32xf32>
    %420 = arith.addf %382, %419 : vector<16x32xf32>
    %421 = vector.extract_strided_slice %328 {offsets = [0, 16], sizes = [8, 8], strides = [1, 1]} : vector<16x32xf32> to vector<8x8xf32>
    %422 = vector.extract_strided_slice %343 {offsets = [16, 0], sizes = [8, 8], strides = [1, 1]} : vector<32x16xf32> to vector<8x8xf32>
    %cst_182 = arith.constant dense<0.000000e+00> : vector<8x8xf32>
    %423 = tpu.matmul %421, %422, %cst_182 {dimension_numbers = #tpu.dot_dimension_numbers<[1], [0], [0], [1], [0, 0, 1, 1], [], []>} : vector<8x8xf32>, vector<8x8xf32>, vector<8x8xf32> -> vector<8x8xf32>
    %cst_183 = arith.constant 0.353553385 : f32
    %424 = vector.broadcast %cst_183 : f32 to vector<8x8xf32>
    %425 = arith.mulf %423, %424 : vector<8x8xf32>
    %cst_184 = arith.constant dense<0xFF800000> : vector<8xf32>
    %426 = vector.multi_reduction <maximumf>, %425, %cst_184 [1] : vector<8x8xf32> to vector<8xf32>
    %427 = vector.shape_cast %426 : vector<8xf32> to vector<8x1xf32>
    %428 = vector.broadcast %427 : vector<8x1xf32> to vector<8x8xf32>
    %429 = arith.subf %425, %428 : vector<8x8xf32>
    %430 = math.exp %429 : vector<8x8xf32>
    %cst_185 = arith.constant dense<0.000000e+00> : vector<8xf32>
    %431 = vector.multi_reduction <add>, %430, %cst_185 [1] : vector<8x8xf32> to vector<8xf32>
    %432 = vector.shape_cast %431 : vector<8xf32> to vector<8x1xf32>
    %433 = tpu.reciprocal %432 {approx = true} : vector<8x1xf32> -> vector<8x1xf32>
    %434 = vector.broadcast %433 : vector<8x1xf32> to vector<8x8xf32>
    %435 = arith.mulf %430, %434 : vector<8x8xf32>
    %436 = vector.extract_strided_slice %342 {offsets = [0, 16], sizes = [8, 8], strides = [1, 1]} : vector<16x32xf32> to vector<8x8xf32>
    %cst_186 = arith.constant dense<0.000000e+00> : vector<8x8xf32>
    %437 = tpu.matmul %435, %436, %cst_186 {dimension_numbers = #tpu.dot_dimension_numbers<[1], [0], [0], [1], [0, 0, 1, 1], [], []>} : vector<8x8xf32>, vector<8x8xf32>, vector<8x8xf32> -> vector<8x8xf32>
    %438 = vector.extract_strided_slice %328 {offsets = [8, 16], sizes = [8, 8], strides = [1, 1]} : vector<16x32xf32> to vector<8x8xf32>
    %439 = vector.extract_strided_slice %343 {offsets = [16, 8], sizes = [8, 8], strides = [1, 1]} : vector<32x16xf32> to vector<8x8xf32>
    %cst_187 = arith.constant dense<0.000000e+00> : vector<8x8xf32>
    %440 = tpu.matmul %438, %439, %cst_187 {dimension_numbers = #tpu.dot_dimension_numbers<[1], [0], [0], [1], [0, 0, 1, 1], [], []>} : vector<8x8xf32>, vector<8x8xf32>, vector<8x8xf32> -> vector<8x8xf32>
    %cst_188 = arith.constant 0.353553385 : f32
    %441 = vector.broadcast %cst_188 : f32 to vector<8x8xf32>
    %442 = arith.mulf %440, %441 : vector<8x8xf32>
    %cst_189 = arith.constant dense<0xFF800000> : vector<8xf32>
    %443 = vector.multi_reduction <maximumf>, %442, %cst_189 [1] : vector<8x8xf32> to vector<8xf32>
    %444 = vector.shape_cast %443 : vector<8xf32> to vector<8x1xf32>
    %445 = vector.broadcast %444 : vector<8x1xf32> to vector<8x8xf32>
    %446 = arith.subf %442, %445 : vector<8x8xf32>
    %447 = math.exp %446 : vector<8x8xf32>
    %cst_190 = arith.constant dense<0.000000e+00> : vector<8xf32>
    %448 = vector.multi_reduction <add>, %447, %cst_190 [1] : vector<8x8xf32> to vector<8xf32>
    %449 = vector.shape_cast %448 : vector<8xf32> to vector<8x1xf32>
    %450 = tpu.reciprocal %449 {approx = true} : vector<8x1xf32> -> vector<8x1xf32>
    %451 = vector.broadcast %450 : vector<8x1xf32> to vector<8x8xf32>
    %452 = arith.mulf %447, %451 : vector<8x8xf32>
    %453 = vector.extract_strided_slice %342 {offsets = [8, 16], sizes = [8, 8], strides = [1, 1]} : vector<16x32xf32> to vector<8x8xf32>
    %cst_191 = arith.constant dense<0.000000e+00> : vector<8x8xf32>
    %454 = tpu.matmul %452, %453, %cst_191 {dimension_numbers = #tpu.dot_dimension_numbers<[1], [0], [0], [1], [0, 0, 1, 1], [], []>} : vector<8x8xf32>, vector<8x8xf32>, vector<8x8xf32> -> vector<8x8xf32>
    %455 = tpu.concatenate %437, %454 in 0 : vector<8x8xf32>, vector<8x8xf32> -> vector<16x8xf32>
    %456 = vector.extract_strided_slice %345 {offsets = [16, 0], sizes = [8, 32], strides = [1, 1]} : vector<32x32xf32> to vector<8x32xf32>
    %cst_192 = arith.constant dense<0.000000e+00> : vector<16x32xf32>
    %457 = tpu.matmul %455, %456, %cst_192 {dimension_numbers = #tpu.dot_dimension_numbers<[1], [0], [0], [1], [0, 0, 1, 1], [], []>} : vector<16x8xf32>, vector<8x32xf32>, vector<16x32xf32> -> vector<16x32xf32>
    %458 = arith.addf %420, %457 : vector<16x32xf32>
    %459 = vector.extract_strided_slice %328 {offsets = [0, 24], sizes = [8, 8], strides = [1, 1]} : vector<16x32xf32> to vector<8x8xf32>
    %460 = vector.extract_strided_slice %343 {offsets = [24, 0], sizes = [8, 8], strides = [1, 1]} : vector<32x16xf32> to vector<8x8xf32>
    %cst_193 = arith.constant dense<0.000000e+00> : vector<8x8xf32>
    %461 = tpu.matmul %459, %460, %cst_193 {dimension_numbers = #tpu.dot_dimension_numbers<[1], [0], [0], [1], [0, 0, 1, 1], [], []>} : vector<8x8xf32>, vector<8x8xf32>, vector<8x8xf32> -> vector<8x8xf32>
    %cst_194 = arith.constant 0.353553385 : f32
    %462 = vector.broadcast %cst_194 : f32 to vector<8x8xf32>
    %463 = arith.mulf %461, %462 : vector<8x8xf32>
    %cst_195 = arith.constant dense<0xFF800000> : vector<8xf32>
    %464 = vector.multi_reduction <maximumf>, %463, %cst_195 [1] : vector<8x8xf32> to vector<8xf32>
    %465 = vector.shape_cast %464 : vector<8xf32> to vector<8x1xf32>
    %466 = vector.broadcast %465 : vector<8x1xf32> to vector<8x8xf32>
    %467 = arith.subf %463, %466 : vector<8x8xf32>
    %468 = math.exp %467 : vector<8x8xf32>
    %cst_196 = arith.constant dense<0.000000e+00> : vector<8xf32>
    %469 = vector.multi_reduction <add>, %468, %cst_196 [1] : vector<8x8xf32> to vector<8xf32>
    %470 = vector.shape_cast %469 : vector<8xf32> to vector<8x1xf32>
    %471 = tpu.reciprocal %470 {approx = true} : vector<8x1xf32> -> vector<8x1xf32>
    %472 = vector.broadcast %471 : vector<8x1xf32> to vector<8x8xf32>
    %473 = arith.mulf %468, %472 : vector<8x8xf32>
    %474 = vector.extract_strided_slice %342 {offsets = [0, 24], sizes = [8, 8], strides = [1, 1]} : vector<16x32xf32> to vector<8x8xf32>
    %cst_197 = arith.constant dense<0.000000e+00> : vector<8x8xf32>
    %475 = tpu.matmul %473, %474, %cst_197 {dimension_numbers = #tpu.dot_dimension_numbers<[1], [0], [0], [1], [0, 0, 1, 1], [], []>} : vector<8x8xf32>, vector<8x8xf32>, vector<8x8xf32> -> vector<8x8xf32>
    %476 = vector.extract_strided_slice %328 {offsets = [8, 24], sizes = [8, 8], strides = [1, 1]} : vector<16x32xf32> to vector<8x8xf32>
    %477 = vector.extract_strided_slice %343 {offsets = [24, 8], sizes = [8, 8], strides = [1, 1]} : vector<32x16xf32> to vector<8x8xf32>
    %cst_198 = arith.constant dense<0.000000e+00> : vector<8x8xf32>
    %478 = tpu.matmul %476, %477, %cst_198 {dimension_numbers = #tpu.dot_dimension_numbers<[1], [0], [0], [1], [0, 0, 1, 1], [], []>} : vector<8x8xf32>, vector<8x8xf32>, vector<8x8xf32> -> vector<8x8xf32>
    %cst_199 = arith.constant 0.353553385 : f32
    %479 = vector.broadcast %cst_199 : f32 to vector<8x8xf32>
    %480 = arith.mulf %478, %479 : vector<8x8xf32>
    %cst_200 = arith.constant dense<0xFF800000> : vector<8xf32>
    %481 = vector.multi_reduction <maximumf>, %480, %cst_200 [1] : vector<8x8xf32> to vector<8xf32>
    %482 = vector.shape_cast %481 : vector<8xf32> to vector<8x1xf32>
    %483 = vector.broadcast %482 : vector<8x1xf32> to vector<8x8xf32>
    %484 = arith.subf %480, %483 : vector<8x8xf32>
    %485 = math.exp %484 : vector<8x8xf32>
    %cst_201 = arith.constant dense<0.000000e+00> : vector<8xf32>
    %486 = vector.multi_reduction <add>, %485, %cst_201 [1] : vector<8x8xf32> to vector<8xf32>
    %487 = vector.shape_cast %486 : vector<8xf32> to vector<8x1xf32>
    %488 = tpu.reciprocal %487 {approx = true} : vector<8x1xf32> -> vector<8x1xf32>
    %489 = vector.broadcast %488 : vector<8x1xf32> to vector<8x8xf32>
    %490 = arith.mulf %485, %489 : vector<8x8xf32>
    %491 = vector.extract_strided_slice %342 {offsets = [8, 24], sizes = [8, 8], strides = [1, 1]} : vector<16x32xf32> to vector<8x8xf32>
    %cst_202 = arith.constant dense<0.000000e+00> : vector<8x8xf32>
    %492 = tpu.matmul %490, %491, %cst_202 {dimension_numbers = #tpu.dot_dimension_numbers<[1], [0], [0], [1], [0, 0, 1, 1], [], []>} : vector<8x8xf32>, vector<8x8xf32>, vector<8x8xf32> -> vector<8x8xf32>
    %493 = tpu.concatenate %475, %492 in 0 : vector<8x8xf32>, vector<8x8xf32> -> vector<16x8xf32>
    %494 = vector.extract_strided_slice %345 {offsets = [24, 0], sizes = [8, 32], strides = [1, 1]} : vector<32x32xf32> to vector<8x32xf32>
    %cst_203 = arith.constant dense<0.000000e+00> : vector<16x32xf32>
    %495 = tpu.matmul %493, %494, %cst_203 {dimension_numbers = #tpu.dot_dimension_numbers<[1], [0], [0], [1], [0, 0, 1, 1], [], []>} : vector<16x8xf32>, vector<8x32xf32>, vector<16x32xf32> -> vector<16x32xf32>
    %496 = arith.addf %458, %495 : vector<16x32xf32>
    %c1_204 = arith.constant 1 : index
    %c0_205 = arith.constant 0 : index
    %c0_206 = arith.constant 0 : index
    %497 = vector.load %arg13[%c1_204, %c0_205, %c0_206] : memref<2x1x32xf32, #tpu.memory_space<vmem>>, vector<1x1x32xf32>
    %498 = vector.shape_cast %497 : vector<1x1x32xf32> to vector<1x32xf32>
    %499 = vector.broadcast %498 : vector<1x32xf32> to vector<16x32xf32>
    %500 = arith.addf %496, %499 : vector<16x32xf32>
    %501 = arith.addf %500, %321 : vector<16x32xf32>
    %c1_207 = arith.constant 1 : index
    %c0_208 = arith.constant 0 : index
    %c0_209 = arith.constant 0 : index
    %502 = vector.load %arg14[%c1_207, %c0_208, %c0_209] : memref<2x1x32xf32, #tpu.memory_space<vmem>>, vector<1x1x32xf32>
    %503 = vector.shape_cast %502 : vector<1x1x32xf32> to vector<1x32xf32>
    %c1_210 = arith.constant 1 : index
    %c0_211 = arith.constant 0 : index
    %c0_212 = arith.constant 0 : index
    %504 = vector.load %arg15[%c1_210, %c0_211, %c0_212] : memref<2x1x32xf32, #tpu.memory_space<vmem>>, vector<1x1x32xf32>
    %505 = vector.shape_cast %504 : vector<1x1x32xf32> to vector<1x32xf32>
    %cst_213 = arith.constant dense<0.000000e+00> : vector<16xf32>
    %506 = vector.multi_reduction <add>, %501, %cst_213 [1] : vector<16x32xf32> to vector<16xf32>
    %507 = vector.shape_cast %506 : vector<16xf32> to vector<16x1xf32>
    %cst_214 = arith.constant 3.200000e+01 : f32
    %508 = vector.broadcast %cst_214 : f32 to vector<16x1xf32>
    %509 = arith.divf %507, %508 : vector<16x1xf32>
    %510 = vector.broadcast %509 : vector<16x1xf32> to vector<16x32xf32>
    %511 = arith.subf %501, %510 : vector<16x32xf32>
    %512 = arith.mulf %511, %511 : vector<16x32xf32>
    %cst_215 = arith.constant dense<0.000000e+00> : vector<16xf32>
    %513 = vector.multi_reduction <add>, %512, %cst_215 [1] : vector<16x32xf32> to vector<16xf32>
    %514 = vector.shape_cast %513 : vector<16xf32> to vector<16x1xf32>
    %cst_216 = arith.constant 3.200000e+01 : f32
    %515 = vector.broadcast %cst_216 : f32 to vector<16x1xf32>
    %516 = arith.divf %514, %515 : vector<16x1xf32>
    %517 = vector.broadcast %509 : vector<16x1xf32> to vector<16x32xf32>
    %518 = arith.subf %501, %517 : vector<16x32xf32>
    %cst_217 = arith.constant 9.99999996E-13 : f32
    %519 = vector.broadcast %cst_217 : f32 to vector<16x1xf32>
    %520 = arith.addf %516, %519 : vector<16x1xf32>
    %521 = math.rsqrt %520 : vector<16x1xf32>
    %522 = vector.broadcast %521 : vector<16x1xf32> to vector<16x32xf32>
    %523 = arith.mulf %518, %522 : vector<16x32xf32>
    %524 = vector.broadcast %503 : vector<1x32xf32> to vector<16x32xf32>
    %525 = arith.mulf %523, %524 : vector<16x32xf32>
    %526 = vector.broadcast %505 : vector<1x32xf32> to vector<16x32xf32>
    %527 = arith.addf %525, %526 : vector<16x32xf32>
    %c1_218 = arith.constant 1 : index
    %c0_219 = arith.constant 0 : index
    %c0_220 = arith.constant 0 : index
    %528 = vector.load %arg16[%c1_218, %c0_219, %c0_220] : memref<2x32x64xf32, #tpu.memory_space<vmem>>, vector<1x32x64xf32>
    %529 = vector.shape_cast %528 : vector<1x32x64xf32> to vector<32x64xf32>
    %cst_221 = arith.constant dense<0.000000e+00> : vector<16x64xf32>
    %530 = tpu.matmul %527, %529, %cst_221 {dimension_numbers = #tpu.dot_dimension_numbers<[1], [0], [0], [1], [0, 0, 1, 1], [], []>} : vector<16x32xf32>, vector<32x64xf32>, vector<16x64xf32> -> vector<16x64xf32>
    %c1_222 = arith.constant 1 : index
    %c0_223 = arith.constant 0 : index
    %c0_224 = arith.constant 0 : index
    %531 = vector.load %arg17[%c1_222, %c0_223, %c0_224] : memref<2x1x64xf32, #tpu.memory_space<vmem>>, vector<1x1x64xf32>
    %532 = vector.shape_cast %531 : vector<1x1x64xf32> to vector<1x64xf32>
    %533 = vector.broadcast %532 : vector<1x64xf32> to vector<16x64xf32>
    %534 = arith.addf %530, %533 : vector<16x64xf32>
    %cst_225 = arith.constant 5.000000e-01 : f32
    %535 = vector.broadcast %cst_225 : f32 to vector<16x64xf32>
    %536 = arith.mulf %535, %534 : vector<16x64xf32>
    %cst_226 = arith.constant 0.707106769 : f32
    %537 = vector.broadcast %cst_226 : f32 to vector<16x64xf32>
    %538 = arith.mulf %534, %537 : vector<16x64xf32>
    %cst_227 = arith.constant 0.000000e+00 : f32
    %539 = vector.broadcast %cst_227 : f32 to vector<16x64xf32>
    %540 = arith.cmpf oge, %538, %539 : vector<16x64xf32>
    %cst_228 = arith.constant 1.000000e+00 : f32
    %cst_229 = arith.constant -1.000000e+00 : f32
    %541 = vector.broadcast %cst_228 : f32 to vector<16x64xf32>
    %542 = vector.broadcast %cst_229 : f32 to vector<16x64xf32>
    %543 = arith.select %540, %541, %542 : vector<16x64xi1>, vector<16x64xf32>
    %544 = math.absf %538 : vector<16x64xf32>
    %cst_230 = arith.constant 0.327591091 : f32
    %545 = vector.broadcast %cst_230 : f32 to vector<16x64xf32>
    %546 = arith.mulf %545, %544 : vector<16x64xf32>
    %cst_231 = arith.constant 1.000000e+00 : f32
    %547 = vector.broadcast %cst_231 : f32 to vector<16x64xf32>
    %548 = arith.addf %547, %546 : vector<16x64xf32>
    %cst_232 = arith.constant 1.000000e+00 : f32
    %549 = vector.broadcast %cst_232 : f32 to vector<16x64xf32>
    %550 = arith.divf %549, %548 : vector<16x64xf32>
    %cst_233 = arith.constant 1.06140542 : f32
    %551 = vector.broadcast %cst_233 : f32 to vector<16x64xf32>
    %552 = arith.mulf %551, %550 : vector<16x64xf32>
    %cst_234 = arith.constant -1.45315206 : f32
    %553 = vector.broadcast %cst_234 : f32 to vector<16x64xf32>
    %554 = arith.addf %552, %553 : vector<16x64xf32>
    %555 = arith.mulf %554, %550 : vector<16x64xf32>
    %cst_235 = arith.constant 1.42141378 : f32
    %556 = vector.broadcast %cst_235 : f32 to vector<16x64xf32>
    %557 = arith.addf %555, %556 : vector<16x64xf32>
    %558 = arith.mulf %557, %550 : vector<16x64xf32>
    %cst_236 = arith.constant -0.284496725 : f32
    %559 = vector.broadcast %cst_236 : f32 to vector<16x64xf32>
    %560 = arith.addf %558, %559 : vector<16x64xf32>
    %561 = arith.mulf %560, %550 : vector<16x64xf32>
    %cst_237 = arith.constant 0.254829586 : f32
    %562 = vector.broadcast %cst_237 : f32 to vector<16x64xf32>
    %563 = arith.addf %561, %562 : vector<16x64xf32>
    %564 = arith.mulf %563, %550 : vector<16x64xf32>
    %cst_238 = arith.constant 0.000000e+00 : f32
    %565 = vector.broadcast %cst_238 : f32 to vector<16x64xf32>
    %566 = arith.subf %565, %544 : vector<16x64xf32>
    %567 = arith.mulf %566, %544 : vector<16x64xf32>
    %568 = math.exp %567 : vector<16x64xf32>
    %569 = arith.mulf %564, %568 : vector<16x64xf32>
    %cst_239 = arith.constant 1.000000e+00 : f32
    %570 = vector.broadcast %cst_239 : f32 to vector<16x64xf32>
    %571 = arith.subf %570, %569 : vector<16x64xf32>
    %572 = arith.mulf %543, %571 : vector<16x64xf32>
    %cst_240 = arith.constant 1.000000e+00 : f32
    %573 = vector.broadcast %cst_240 : f32 to vector<16x64xf32>
    %574 = arith.addf %573, %572 : vector<16x64xf32>
    %575 = arith.mulf %536, %574 : vector<16x64xf32>
    %c1_241 = arith.constant 1 : index
    %c0_242 = arith.constant 0 : index
    %c0_243 = arith.constant 0 : index
    %576 = vector.load %arg18[%c1_241, %c0_242, %c0_243] : memref<2x64x32xf32, #tpu.memory_space<vmem>>, vector<1x64x32xf32>
    %577 = vector.shape_cast %576 : vector<1x64x32xf32> to vector<64x32xf32>
    %cst_244 = arith.constant dense<0.000000e+00> : vector<16x32xf32>
    %578 = tpu.matmul %575, %577, %cst_244 {dimension_numbers = #tpu.dot_dimension_numbers<[1], [0], [0], [1], [0, 0, 1, 1], [], []>} : vector<16x64xf32>, vector<64x32xf32>, vector<16x32xf32> -> vector<16x32xf32>
    %c1_245 = arith.constant 1 : index
    %c0_246 = arith.constant 0 : index
    %c0_247 = arith.constant 0 : index
    %579 = vector.load %arg19[%c1_245, %c0_246, %c0_247] : memref<2x1x32xf32, #tpu.memory_space<vmem>>, vector<1x1x32xf32>
    %580 = vector.shape_cast %579 : vector<1x1x32xf32> to vector<1x32xf32>
    %581 = vector.broadcast %580 : vector<1x32xf32> to vector<16x32xf32>
    %582 = arith.addf %578, %581 : vector<16x32xf32>
    %583 = arith.addf %582, %527 : vector<16x32xf32>
    %c1_248 = arith.constant 1 : index
    %c0_249 = arith.constant 0 : index
    %c0_250 = arith.constant 0 : index
    %584 = vector.load %arg20[%c1_248, %c0_249, %c0_250] : memref<2x1x32xf32, #tpu.memory_space<vmem>>, vector<1x1x32xf32>
    %585 = vector.shape_cast %584 : vector<1x1x32xf32> to vector<1x32xf32>
    %c1_251 = arith.constant 1 : index
    %c0_252 = arith.constant 0 : index
    %c0_253 = arith.constant 0 : index
    %586 = vector.load %arg21[%c1_251, %c0_252, %c0_253] : memref<2x1x32xf32, #tpu.memory_space<vmem>>, vector<1x1x32xf32>
    %587 = vector.shape_cast %586 : vector<1x1x32xf32> to vector<1x32xf32>
    %cst_254 = arith.constant dense<0.000000e+00> : vector<16xf32>
    %588 = vector.multi_reduction <add>, %583, %cst_254 [1] : vector<16x32xf32> to vector<16xf32>
    %589 = vector.shape_cast %588 : vector<16xf32> to vector<16x1xf32>
    %cst_255 = arith.constant 3.200000e+01 : f32
    %590 = vector.broadcast %cst_255 : f32 to vector<16x1xf32>
    %591 = arith.divf %589, %590 : vector<16x1xf32>
    %592 = vector.broadcast %591 : vector<16x1xf32> to vector<16x32xf32>
    %593 = arith.subf %583, %592 : vector<16x32xf32>
    %594 = arith.mulf %593, %593 : vector<16x32xf32>
    %cst_256 = arith.constant dense<0.000000e+00> : vector<16xf32>
    %595 = vector.multi_reduction <add>, %594, %cst_256 [1] : vector<16x32xf32> to vector<16xf32>
    %596 = vector.shape_cast %595 : vector<16xf32> to vector<16x1xf32>
    %cst_257 = arith.constant 3.200000e+01 : f32
    %597 = vector.broadcast %cst_257 : f32 to vector<16x1xf32>
    %598 = arith.divf %596, %597 : vector<16x1xf32>
    %599 = vector.broadcast %591 : vector<16x1xf32> to vector<16x32xf32>
    %600 = arith.subf %583, %599 : vector<16x32xf32>
    %cst_258 = arith.constant 9.99999996E-13 : f32
    %601 = vector.broadcast %cst_258 : f32 to vector<16x1xf32>
    %602 = arith.addf %598, %601 : vector<16x1xf32>
    %603 = math.rsqrt %602 : vector<16x1xf32>
    %604 = vector.broadcast %603 : vector<16x1xf32> to vector<16x32xf32>
    %605 = arith.mulf %600, %604 : vector<16x32xf32>
    %606 = vector.broadcast %585 : vector<1x32xf32> to vector<16x32xf32>
    %607 = arith.mulf %605, %606 : vector<16x32xf32>
    %608 = vector.broadcast %587 : vector<1x32xf32> to vector<16x32xf32>
    %609 = arith.addf %607, %608 : vector<16x32xf32>
    %c0_259 = arith.constant 0 : index
    %c0_260 = arith.constant 0 : index
    %610 = vector.load %arg1[%c0_259, %c0_260] : memref<16x1xf32, #tpu.memory_space<vmem>>, vector<16x1xf32>
    %611 = vector.broadcast %610 : vector<16x1xf32> to vector<16x32xf32>
    %612 = arith.mulf %609, %611 : vector<16x32xf32>
    %c0_261 = arith.constant 0 : index
    %c0_262 = arith.constant 0 : index
    %613 = vector.load %arg22[%c0_261, %c0_262] : memref<32x32xf32, #tpu.memory_space<vmem>>, vector<32x32xf32>
    %cst_263 = arith.constant dense<0.000000e+00> : vector<16x32xf32>
    %614 = tpu.matmul %612, %613, %cst_263 {dimension_numbers = #tpu.dot_dimension_numbers<[1], [0], [0], [1], [0, 0, 1, 1], [], []>} : vector<16x32xf32>, vector<32x32xf32>, vector<16x32xf32> -> vector<16x32xf32>
    %c0_264 = arith.constant 0 : index
    %c0_265 = arith.constant 0 : index
    %615 = vector.load %arg23[%c0_264, %c0_265] : memref<1x32xf32, #tpu.memory_space<vmem>>, vector<1x32xf32>
    %616 = vector.broadcast %615 : vector<1x32xf32> to vector<16x32xf32>
    %617 = arith.addf %614, %616 : vector<16x32xf32>
    %c0_266 = arith.constant 0 : index
    %c0_267 = arith.constant 0 : index
    %618 = vector.load %arg26[%c0_266, %c0_267] : memref<32x32xf32, #tpu.memory_space<vmem>>, vector<32x32xf32>
    %cst_268 = arith.constant dense<0.000000e+00> : vector<16x32xf32>
    %619 = tpu.matmul %617, %618, %cst_268 {dimension_numbers = #tpu.dot_dimension_numbers<[1], [0], [0], [1], [0, 0, 1, 1], [], []>} : vector<16x32xf32>, vector<32x32xf32>, vector<16x32xf32> -> vector<16x32xf32>
    %c0_269 = arith.constant 0 : index
    %c0_270 = arith.constant 0 : index
    %620 = vector.load %arg27[%c0_269, %c0_270] : memref<1x32xf32, #tpu.memory_space<vmem>>, vector<1x32xf32>
    %621 = vector.broadcast %620 : vector<1x32xf32> to vector<16x32xf32>
    %622 = arith.addf %619, %621 : vector<16x32xf32>
    %c0_271 = arith.constant 0 : index
    %c0_272 = arith.constant 0 : index
    %623 = vector.load %arg28[%c0_271, %c0_272] : memref<32x32xf32, #tpu.memory_space<vmem>>, vector<32x32xf32>
    %cst_273 = arith.constant dense<0.000000e+00> : vector<16x32xf32>
    %624 = tpu.matmul %617, %623, %cst_273 {dimension_numbers = #tpu.dot_dimension_numbers<[1], [0], [0], [1], [0, 0, 1, 1], [], []>} : vector<16x32xf32>, vector<32x32xf32>, vector<16x32xf32> -> vector<16x32xf32>
    %c0_274 = arith.constant 0 : index
    %c0_275 = arith.constant 0 : index
    %625 = vector.load %arg29[%c0_274, %c0_275] : memref<1x32xf32, #tpu.memory_space<vmem>>, vector<1x32xf32>
    %626 = vector.broadcast %625 : vector<1x32xf32> to vector<16x32xf32>
    %627 = arith.addf %624, %626 : vector<16x32xf32>
    %628 = tpu.transpose %622, [1, 0] : vector<16x32xf32> -> vector<32x16xf32>
    %629 = vector.extract_strided_slice %617 {offsets = [0, 0], sizes = [1, 32], strides = [1, 1]} : vector<16x32xf32> to vector<1x32xf32>
    %630 = vector.extract_strided_slice %617 {offsets = [8, 0], sizes = [1, 32], strides = [1, 1]} : vector<16x32xf32> to vector<1x32xf32>
    %631 = tpu.concatenate %629, %630 in 0 : vector<1x32xf32>, vector<1x32xf32> -> vector<2x32xf32>
    %c0_276 = arith.constant 0 : index
    %c0_277 = arith.constant 0 : index
    %632 = vector.load %arg24[%c0_276, %c0_277] : memref<32x32xf32, #tpu.memory_space<vmem>>, vector<32x32xf32>
    %cst_278 = arith.constant dense<0.000000e+00> : vector<2x32xf32>
    %633 = tpu.matmul %631, %632, %cst_278 {dimension_numbers = #tpu.dot_dimension_numbers<[1], [0], [0], [1], [0, 0, 1, 1], [], []>} : vector<2x32xf32>, vector<32x32xf32>, vector<2x32xf32> -> vector<2x32xf32>
    %c0_279 = arith.constant 0 : index
    %c0_280 = arith.constant 0 : index
    %634 = vector.load %arg25[%c0_279, %c0_280] : memref<1x32xf32, #tpu.memory_space<vmem>>, vector<1x32xf32>
    %635 = vector.broadcast %634 : vector<1x32xf32> to vector<2x32xf32>
    %636 = arith.addf %633, %635 : vector<2x32xf32>
    %637 = vector.extract_strided_slice %636 {offsets = [0, 0], sizes = [1, 8], strides = [1, 1]} : vector<2x32xf32> to vector<1x8xf32>
    %638 = vector.extract_strided_slice %628 {offsets = [0, 0], sizes = [8, 8], strides = [1, 1]} : vector<32x16xf32> to vector<8x8xf32>
    %cst_281 = arith.constant dense<0.000000e+00> : vector<1x8xf32>
    %639 = tpu.matmul %637, %638, %cst_281 {dimension_numbers = #tpu.dot_dimension_numbers<[1], [0], [0], [1], [0, 0, 1, 1], [], []>} : vector<1x8xf32>, vector<8x8xf32>, vector<1x8xf32> -> vector<1x8xf32>
    %cst_282 = arith.constant 0.353553385 : f32
    %640 = vector.broadcast %cst_282 : f32 to vector<1x8xf32>
    %641 = arith.mulf %639, %640 : vector<1x8xf32>
    %cst_283 = arith.constant dense<0xFF800000> : vector<1xf32>
    %642 = vector.multi_reduction <maximumf>, %641, %cst_283 [1] : vector<1x8xf32> to vector<1xf32>
    %643 = vector.shape_cast %642 : vector<1xf32> to vector<1x1xf32>
    %644 = vector.broadcast %643 : vector<1x1xf32> to vector<1x8xf32>
    %645 = arith.subf %641, %644 : vector<1x8xf32>
    %646 = math.exp %645 : vector<1x8xf32>
    %cst_284 = arith.constant dense<0.000000e+00> : vector<1xf32>
    %647 = vector.multi_reduction <add>, %646, %cst_284 [1] : vector<1x8xf32> to vector<1xf32>
    %648 = vector.shape_cast %647 : vector<1xf32> to vector<1x1xf32>
    %649 = tpu.reciprocal %648 {approx = true} : vector<1x1xf32> -> vector<1x1xf32>
    %650 = vector.broadcast %649 : vector<1x1xf32> to vector<1x8xf32>
    %651 = arith.mulf %646, %650 : vector<1x8xf32>
    %652 = vector.extract_strided_slice %627 {offsets = [0, 0], sizes = [8, 8], strides = [1, 1]} : vector<16x32xf32> to vector<8x8xf32>
    %cst_285 = arith.constant dense<0.000000e+00> : vector<1x8xf32>
    %653 = tpu.matmul %651, %652, %cst_285 {dimension_numbers = #tpu.dot_dimension_numbers<[1], [0], [0], [1], [0, 0, 1, 1], [], []>} : vector<1x8xf32>, vector<8x8xf32>, vector<1x8xf32> -> vector<1x8xf32>
    %654 = math.tanh %653 : vector<1x8xf32>
    %c0_286 = arith.constant 0 : index
    %c0_287 = arith.constant 0 : index
    %655 = vector.load %arg30[%c0_286, %c0_287] : memref<32x32xf32, #tpu.memory_space<vmem>>, vector<8x32xf32>
    %cst_288 = arith.constant dense<0.000000e+00> : vector<1x32xf32>
    %656 = tpu.matmul %654, %655, %cst_288 {dimension_numbers = #tpu.dot_dimension_numbers<[1], [0], [0], [1], [0, 0, 1, 1], [], []>} : vector<1x8xf32>, vector<8x32xf32>, vector<1x32xf32> -> vector<1x32xf32>
    %657 = vector.extract_strided_slice %636 {offsets = [0, 8], sizes = [1, 8], strides = [1, 1]} : vector<2x32xf32> to vector<1x8xf32>
    %658 = vector.extract_strided_slice %628 {offsets = [8, 0], sizes = [8, 8], strides = [1, 1]} : vector<32x16xf32> to vector<8x8xf32>
    %cst_289 = arith.constant dense<0.000000e+00> : vector<1x8xf32>
    %659 = tpu.matmul %657, %658, %cst_289 {dimension_numbers = #tpu.dot_dimension_numbers<[1], [0], [0], [1], [0, 0, 1, 1], [], []>} : vector<1x8xf32>, vector<8x8xf32>, vector<1x8xf32> -> vector<1x8xf32>
    %cst_290 = arith.constant 0.353553385 : f32
    %660 = vector.broadcast %cst_290 : f32 to vector<1x8xf32>
    %661 = arith.mulf %659, %660 : vector<1x8xf32>
    %cst_291 = arith.constant dense<0xFF800000> : vector<1xf32>
    %662 = vector.multi_reduction <maximumf>, %661, %cst_291 [1] : vector<1x8xf32> to vector<1xf32>
    %663 = vector.shape_cast %662 : vector<1xf32> to vector<1x1xf32>
    %664 = vector.broadcast %663 : vector<1x1xf32> to vector<1x8xf32>
    %665 = arith.subf %661, %664 : vector<1x8xf32>
    %666 = math.exp %665 : vector<1x8xf32>
    %cst_292 = arith.constant dense<0.000000e+00> : vector<1xf32>
    %667 = vector.multi_reduction <add>, %666, %cst_292 [1] : vector<1x8xf32> to vector<1xf32>
    %668 = vector.shape_cast %667 : vector<1xf32> to vector<1x1xf32>
    %669 = tpu.reciprocal %668 {approx = true} : vector<1x1xf32> -> vector<1x1xf32>
    %670 = vector.broadcast %669 : vector<1x1xf32> to vector<1x8xf32>
    %671 = arith.mulf %666, %670 : vector<1x8xf32>
    %672 = vector.extract_strided_slice %627 {offsets = [0, 8], sizes = [8, 8], strides = [1, 1]} : vector<16x32xf32> to vector<8x8xf32>
    %cst_293 = arith.constant dense<0.000000e+00> : vector<1x8xf32>
    %673 = tpu.matmul %671, %672, %cst_293 {dimension_numbers = #tpu.dot_dimension_numbers<[1], [0], [0], [1], [0, 0, 1, 1], [], []>} : vector<1x8xf32>, vector<8x8xf32>, vector<1x8xf32> -> vector<1x8xf32>
    %674 = math.tanh %673 : vector<1x8xf32>
    %c8 = arith.constant 8 : index
    %c0_294 = arith.constant 0 : index
    %675 = vector.load %arg30[%c8, %c0_294] : memref<32x32xf32, #tpu.memory_space<vmem>>, vector<8x32xf32>
    %cst_295 = arith.constant dense<0.000000e+00> : vector<1x32xf32>
    %676 = tpu.matmul %674, %675, %cst_295 {dimension_numbers = #tpu.dot_dimension_numbers<[1], [0], [0], [1], [0, 0, 1, 1], [], []>} : vector<1x8xf32>, vector<8x32xf32>, vector<1x32xf32> -> vector<1x32xf32>
    %677 = arith.addf %656, %676 : vector<1x32xf32>
    %678 = vector.extract_strided_slice %636 {offsets = [0, 16], sizes = [1, 8], strides = [1, 1]} : vector<2x32xf32> to vector<1x8xf32>
    %679 = vector.extract_strided_slice %628 {offsets = [16, 0], sizes = [8, 8], strides = [1, 1]} : vector<32x16xf32> to vector<8x8xf32>
    %cst_296 = arith.constant dense<0.000000e+00> : vector<1x8xf32>
    %680 = tpu.matmul %678, %679, %cst_296 {dimension_numbers = #tpu.dot_dimension_numbers<[1], [0], [0], [1], [0, 0, 1, 1], [], []>} : vector<1x8xf32>, vector<8x8xf32>, vector<1x8xf32> -> vector<1x8xf32>
    %cst_297 = arith.constant 0.353553385 : f32
    %681 = vector.broadcast %cst_297 : f32 to vector<1x8xf32>
    %682 = arith.mulf %680, %681 : vector<1x8xf32>
    %cst_298 = arith.constant dense<0xFF800000> : vector<1xf32>
    %683 = vector.multi_reduction <maximumf>, %682, %cst_298 [1] : vector<1x8xf32> to vector<1xf32>
    %684 = vector.shape_cast %683 : vector<1xf32> to vector<1x1xf32>
    %685 = vector.broadcast %684 : vector<1x1xf32> to vector<1x8xf32>
    %686 = arith.subf %682, %685 : vector<1x8xf32>
    %687 = math.exp %686 : vector<1x8xf32>
    %cst_299 = arith.constant dense<0.000000e+00> : vector<1xf32>
    %688 = vector.multi_reduction <add>, %687, %cst_299 [1] : vector<1x8xf32> to vector<1xf32>
    %689 = vector.shape_cast %688 : vector<1xf32> to vector<1x1xf32>
    %690 = tpu.reciprocal %689 {approx = true} : vector<1x1xf32> -> vector<1x1xf32>
    %691 = vector.broadcast %690 : vector<1x1xf32> to vector<1x8xf32>
    %692 = arith.mulf %687, %691 : vector<1x8xf32>
    %693 = vector.extract_strided_slice %627 {offsets = [0, 16], sizes = [8, 8], strides = [1, 1]} : vector<16x32xf32> to vector<8x8xf32>
    %cst_300 = arith.constant dense<0.000000e+00> : vector<1x8xf32>
    %694 = tpu.matmul %692, %693, %cst_300 {dimension_numbers = #tpu.dot_dimension_numbers<[1], [0], [0], [1], [0, 0, 1, 1], [], []>} : vector<1x8xf32>, vector<8x8xf32>, vector<1x8xf32> -> vector<1x8xf32>
    %695 = math.tanh %694 : vector<1x8xf32>
    %c16 = arith.constant 16 : index
    %c0_301 = arith.constant 0 : index
    %696 = vector.load %arg30[%c16, %c0_301] : memref<32x32xf32, #tpu.memory_space<vmem>>, vector<8x32xf32>
    %cst_302 = arith.constant dense<0.000000e+00> : vector<1x32xf32>
    %697 = tpu.matmul %695, %696, %cst_302 {dimension_numbers = #tpu.dot_dimension_numbers<[1], [0], [0], [1], [0, 0, 1, 1], [], []>} : vector<1x8xf32>, vector<8x32xf32>, vector<1x32xf32> -> vector<1x32xf32>
    %698 = arith.addf %677, %697 : vector<1x32xf32>
    %699 = vector.extract_strided_slice %636 {offsets = [0, 24], sizes = [1, 8], strides = [1, 1]} : vector<2x32xf32> to vector<1x8xf32>
    %700 = vector.extract_strided_slice %628 {offsets = [24, 0], sizes = [8, 8], strides = [1, 1]} : vector<32x16xf32> to vector<8x8xf32>
    %cst_303 = arith.constant dense<0.000000e+00> : vector<1x8xf32>
    %701 = tpu.matmul %699, %700, %cst_303 {dimension_numbers = #tpu.dot_dimension_numbers<[1], [0], [0], [1], [0, 0, 1, 1], [], []>} : vector<1x8xf32>, vector<8x8xf32>, vector<1x8xf32> -> vector<1x8xf32>
    %cst_304 = arith.constant 0.353553385 : f32
    %702 = vector.broadcast %cst_304 : f32 to vector<1x8xf32>
    %703 = arith.mulf %701, %702 : vector<1x8xf32>
    %cst_305 = arith.constant dense<0xFF800000> : vector<1xf32>
    %704 = vector.multi_reduction <maximumf>, %703, %cst_305 [1] : vector<1x8xf32> to vector<1xf32>
    %705 = vector.shape_cast %704 : vector<1xf32> to vector<1x1xf32>
    %706 = vector.broadcast %705 : vector<1x1xf32> to vector<1x8xf32>
    %707 = arith.subf %703, %706 : vector<1x8xf32>
    %708 = math.exp %707 : vector<1x8xf32>
    %cst_306 = arith.constant dense<0.000000e+00> : vector<1xf32>
    %709 = vector.multi_reduction <add>, %708, %cst_306 [1] : vector<1x8xf32> to vector<1xf32>
    %710 = vector.shape_cast %709 : vector<1xf32> to vector<1x1xf32>
    %711 = tpu.reciprocal %710 {approx = true} : vector<1x1xf32> -> vector<1x1xf32>
    %712 = vector.broadcast %711 : vector<1x1xf32> to vector<1x8xf32>
    %713 = arith.mulf %708, %712 : vector<1x8xf32>
    %714 = vector.extract_strided_slice %627 {offsets = [0, 24], sizes = [8, 8], strides = [1, 1]} : vector<16x32xf32> to vector<8x8xf32>
    %cst_307 = arith.constant dense<0.000000e+00> : vector<1x8xf32>
    %715 = tpu.matmul %713, %714, %cst_307 {dimension_numbers = #tpu.dot_dimension_numbers<[1], [0], [0], [1], [0, 0, 1, 1], [], []>} : vector<1x8xf32>, vector<8x8xf32>, vector<1x8xf32> -> vector<1x8xf32>
    %716 = math.tanh %715 : vector<1x8xf32>
    %c24 = arith.constant 24 : index
    %c0_308 = arith.constant 0 : index
    %717 = vector.load %arg30[%c24, %c0_308] : memref<32x32xf32, #tpu.memory_space<vmem>>, vector<8x32xf32>
    %cst_309 = arith.constant dense<0.000000e+00> : vector<1x32xf32>
    %718 = tpu.matmul %716, %717, %cst_309 {dimension_numbers = #tpu.dot_dimension_numbers<[1], [0], [0], [1], [0, 0, 1, 1], [], []>} : vector<1x8xf32>, vector<8x32xf32>, vector<1x32xf32> -> vector<1x32xf32>
    %719 = arith.addf %698, %718 : vector<1x32xf32>
    %c0_310 = arith.constant 0 : index
    %c0_311 = arith.constant 0 : index
    %720 = vector.load %arg31[%c0_310, %c0_311] : memref<1x32xf32, #tpu.memory_space<vmem>>, vector<1x32xf32>
    %721 = arith.addf %719, %720 : vector<1x32xf32>
    %722 = math.tanh %721 : vector<1x32xf32>
    %723 = vector.extract_strided_slice %636 {offsets = [1, 0], sizes = [1, 8], strides = [1, 1]} : vector<2x32xf32> to vector<1x8xf32>
    %724 = vector.extract_strided_slice %628 {offsets = [0, 8], sizes = [8, 8], strides = [1, 1]} : vector<32x16xf32> to vector<8x8xf32>
    %cst_312 = arith.constant dense<0.000000e+00> : vector<1x8xf32>
    %725 = tpu.matmul %723, %724, %cst_312 {dimension_numbers = #tpu.dot_dimension_numbers<[1], [0], [0], [1], [0, 0, 1, 1], [], []>} : vector<1x8xf32>, vector<8x8xf32>, vector<1x8xf32> -> vector<1x8xf32>
    %cst_313 = arith.constant 0.353553385 : f32
    %726 = vector.broadcast %cst_313 : f32 to vector<1x8xf32>
    %727 = arith.mulf %725, %726 : vector<1x8xf32>
    %cst_314 = arith.constant dense<0xFF800000> : vector<1xf32>
    %728 = vector.multi_reduction <maximumf>, %727, %cst_314 [1] : vector<1x8xf32> to vector<1xf32>
    %729 = vector.shape_cast %728 : vector<1xf32> to vector<1x1xf32>
    %730 = vector.broadcast %729 : vector<1x1xf32> to vector<1x8xf32>
    %731 = arith.subf %727, %730 : vector<1x8xf32>
    %732 = math.exp %731 : vector<1x8xf32>
    %cst_315 = arith.constant dense<0.000000e+00> : vector<1xf32>
    %733 = vector.multi_reduction <add>, %732, %cst_315 [1] : vector<1x8xf32> to vector<1xf32>
    %734 = vector.shape_cast %733 : vector<1xf32> to vector<1x1xf32>
    %735 = tpu.reciprocal %734 {approx = true} : vector<1x1xf32> -> vector<1x1xf32>
    %736 = vector.broadcast %735 : vector<1x1xf32> to vector<1x8xf32>
    %737 = arith.mulf %732, %736 : vector<1x8xf32>
    %738 = vector.extract_strided_slice %627 {offsets = [8, 0], sizes = [8, 8], strides = [1, 1]} : vector<16x32xf32> to vector<8x8xf32>
    %cst_316 = arith.constant dense<0.000000e+00> : vector<1x8xf32>
    %739 = tpu.matmul %737, %738, %cst_316 {dimension_numbers = #tpu.dot_dimension_numbers<[1], [0], [0], [1], [0, 0, 1, 1], [], []>} : vector<1x8xf32>, vector<8x8xf32>, vector<1x8xf32> -> vector<1x8xf32>
    %740 = math.tanh %739 : vector<1x8xf32>
    %c0_317 = arith.constant 0 : index
    %c0_318 = arith.constant 0 : index
    %741 = vector.load %arg30[%c0_317, %c0_318] : memref<32x32xf32, #tpu.memory_space<vmem>>, vector<8x32xf32>
    %cst_319 = arith.constant dense<0.000000e+00> : vector<1x32xf32>
    %742 = tpu.matmul %740, %741, %cst_319 {dimension_numbers = #tpu.dot_dimension_numbers<[1], [0], [0], [1], [0, 0, 1, 1], [], []>} : vector<1x8xf32>, vector<8x32xf32>, vector<1x32xf32> -> vector<1x32xf32>
    %743 = vector.extract_strided_slice %636 {offsets = [1, 8], sizes = [1, 8], strides = [1, 1]} : vector<2x32xf32> to vector<1x8xf32>
    %744 = vector.extract_strided_slice %628 {offsets = [8, 8], sizes = [8, 8], strides = [1, 1]} : vector<32x16xf32> to vector<8x8xf32>
    %cst_320 = arith.constant dense<0.000000e+00> : vector<1x8xf32>
    %745 = tpu.matmul %743, %744, %cst_320 {dimension_numbers = #tpu.dot_dimension_numbers<[1], [0], [0], [1], [0, 0, 1, 1], [], []>} : vector<1x8xf32>, vector<8x8xf32>, vector<1x8xf32> -> vector<1x8xf32>
    %cst_321 = arith.constant 0.353553385 : f32
    %746 = vector.broadcast %cst_321 : f32 to vector<1x8xf32>
    %747 = arith.mulf %745, %746 : vector<1x8xf32>
    %cst_322 = arith.constant dense<0xFF800000> : vector<1xf32>
    %748 = vector.multi_reduction <maximumf>, %747, %cst_322 [1] : vector<1x8xf32> to vector<1xf32>
    %749 = vector.shape_cast %748 : vector<1xf32> to vector<1x1xf32>
    %750 = vector.broadcast %749 : vector<1x1xf32> to vector<1x8xf32>
    %751 = arith.subf %747, %750 : vector<1x8xf32>
    %752 = math.exp %751 : vector<1x8xf32>
    %cst_323 = arith.constant dense<0.000000e+00> : vector<1xf32>
    %753 = vector.multi_reduction <add>, %752, %cst_323 [1] : vector<1x8xf32> to vector<1xf32>
    %754 = vector.shape_cast %753 : vector<1xf32> to vector<1x1xf32>
    %755 = tpu.reciprocal %754 {approx = true} : vector<1x1xf32> -> vector<1x1xf32>
    %756 = vector.broadcast %755 : vector<1x1xf32> to vector<1x8xf32>
    %757 = arith.mulf %752, %756 : vector<1x8xf32>
    %758 = vector.extract_strided_slice %627 {offsets = [8, 8], sizes = [8, 8], strides = [1, 1]} : vector<16x32xf32> to vector<8x8xf32>
    %cst_324 = arith.constant dense<0.000000e+00> : vector<1x8xf32>
    %759 = tpu.matmul %757, %758, %cst_324 {dimension_numbers = #tpu.dot_dimension_numbers<[1], [0], [0], [1], [0, 0, 1, 1], [], []>} : vector<1x8xf32>, vector<8x8xf32>, vector<1x8xf32> -> vector<1x8xf32>
    %760 = math.tanh %759 : vector<1x8xf32>
    %c8_325 = arith.constant 8 : index
    %c0_326 = arith.constant 0 : index
    %761 = vector.load %arg30[%c8_325, %c0_326] : memref<32x32xf32, #tpu.memory_space<vmem>>, vector<8x32xf32>
    %cst_327 = arith.constant dense<0.000000e+00> : vector<1x32xf32>
    %762 = tpu.matmul %760, %761, %cst_327 {dimension_numbers = #tpu.dot_dimension_numbers<[1], [0], [0], [1], [0, 0, 1, 1], [], []>} : vector<1x8xf32>, vector<8x32xf32>, vector<1x32xf32> -> vector<1x32xf32>
    %763 = arith.addf %742, %762 : vector<1x32xf32>
    %764 = vector.extract_strided_slice %636 {offsets = [1, 16], sizes = [1, 8], strides = [1, 1]} : vector<2x32xf32> to vector<1x8xf32>
    %765 = vector.extract_strided_slice %628 {offsets = [16, 8], sizes = [8, 8], strides = [1, 1]} : vector<32x16xf32> to vector<8x8xf32>
    %cst_328 = arith.constant dense<0.000000e+00> : vector<1x8xf32>
    %766 = tpu.matmul %764, %765, %cst_328 {dimension_numbers = #tpu.dot_dimension_numbers<[1], [0], [0], [1], [0, 0, 1, 1], [], []>} : vector<1x8xf32>, vector<8x8xf32>, vector<1x8xf32> -> vector<1x8xf32>
    %cst_329 = arith.constant 0.353553385 : f32
    %767 = vector.broadcast %cst_329 : f32 to vector<1x8xf32>
    %768 = arith.mulf %766, %767 : vector<1x8xf32>
    %cst_330 = arith.constant dense<0xFF800000> : vector<1xf32>
    %769 = vector.multi_reduction <maximumf>, %768, %cst_330 [1] : vector<1x8xf32> to vector<1xf32>
    %770 = vector.shape_cast %769 : vector<1xf32> to vector<1x1xf32>
    %771 = vector.broadcast %770 : vector<1x1xf32> to vector<1x8xf32>
    %772 = arith.subf %768, %771 : vector<1x8xf32>
    %773 = math.exp %772 : vector<1x8xf32>
    %cst_331 = arith.constant dense<0.000000e+00> : vector<1xf32>
    %774 = vector.multi_reduction <add>, %773, %cst_331 [1] : vector<1x8xf32> to vector<1xf32>
    %775 = vector.shape_cast %774 : vector<1xf32> to vector<1x1xf32>
    %776 = tpu.reciprocal %775 {approx = true} : vector<1x1xf32> -> vector<1x1xf32>
    %777 = vector.broadcast %776 : vector<1x1xf32> to vector<1x8xf32>
    %778 = arith.mulf %773, %777 : vector<1x8xf32>
    %779 = vector.extract_strided_slice %627 {offsets = [8, 16], sizes = [8, 8], strides = [1, 1]} : vector<16x32xf32> to vector<8x8xf32>
    %cst_332 = arith.constant dense<0.000000e+00> : vector<1x8xf32>
    %780 = tpu.matmul %778, %779, %cst_332 {dimension_numbers = #tpu.dot_dimension_numbers<[1], [0], [0], [1], [0, 0, 1, 1], [], []>} : vector<1x8xf32>, vector<8x8xf32>, vector<1x8xf32> -> vector<1x8xf32>
    %781 = math.tanh %780 : vector<1x8xf32>
    %c16_333 = arith.constant 16 : index
    %c0_334 = arith.constant 0 : index
    %782 = vector.load %arg30[%c16_333, %c0_334] : memref<32x32xf32, #tpu.memory_space<vmem>>, vector<8x32xf32>
    %cst_335 = arith.constant dense<0.000000e+00> : vector<1x32xf32>
    %783 = tpu.matmul %781, %782, %cst_335 {dimension_numbers = #tpu.dot_dimension_numbers<[1], [0], [0], [1], [0, 0, 1, 1], [], []>} : vector<1x8xf32>, vector<8x32xf32>, vector<1x32xf32> -> vector<1x32xf32>
    %784 = arith.addf %763, %783 : vector<1x32xf32>
    %785 = vector.extract_strided_slice %636 {offsets = [1, 24], sizes = [1, 8], strides = [1, 1]} : vector<2x32xf32> to vector<1x8xf32>
    %786 = vector.extract_strided_slice %628 {offsets = [24, 8], sizes = [8, 8], strides = [1, 1]} : vector<32x16xf32> to vector<8x8xf32>
    %cst_336 = arith.constant dense<0.000000e+00> : vector<1x8xf32>
    %787 = tpu.matmul %785, %786, %cst_336 {dimension_numbers = #tpu.dot_dimension_numbers<[1], [0], [0], [1], [0, 0, 1, 1], [], []>} : vector<1x8xf32>, vector<8x8xf32>, vector<1x8xf32> -> vector<1x8xf32>
    %cst_337 = arith.constant 0.353553385 : f32
    %788 = vector.broadcast %cst_337 : f32 to vector<1x8xf32>
    %789 = arith.mulf %787, %788 : vector<1x8xf32>
    %cst_338 = arith.constant dense<0xFF800000> : vector<1xf32>
    %790 = vector.multi_reduction <maximumf>, %789, %cst_338 [1] : vector<1x8xf32> to vector<1xf32>
    %791 = vector.shape_cast %790 : vector<1xf32> to vector<1x1xf32>
    %792 = vector.broadcast %791 : vector<1x1xf32> to vector<1x8xf32>
    %793 = arith.subf %789, %792 : vector<1x8xf32>
    %794 = math.exp %793 : vector<1x8xf32>
    %cst_339 = arith.constant dense<0.000000e+00> : vector<1xf32>
    %795 = vector.multi_reduction <add>, %794, %cst_339 [1] : vector<1x8xf32> to vector<1xf32>
    %796 = vector.shape_cast %795 : vector<1xf32> to vector<1x1xf32>
    %797 = tpu.reciprocal %796 {approx = true} : vector<1x1xf32> -> vector<1x1xf32>
    %798 = vector.broadcast %797 : vector<1x1xf32> to vector<1x8xf32>
    %799 = arith.mulf %794, %798 : vector<1x8xf32>
    %800 = vector.extract_strided_slice %627 {offsets = [8, 24], sizes = [8, 8], strides = [1, 1]} : vector<16x32xf32> to vector<8x8xf32>
    %cst_340 = arith.constant dense<0.000000e+00> : vector<1x8xf32>
    %801 = tpu.matmul %799, %800, %cst_340 {dimension_numbers = #tpu.dot_dimension_numbers<[1], [0], [0], [1], [0, 0, 1, 1], [], []>} : vector<1x8xf32>, vector<8x8xf32>, vector<1x8xf32> -> vector<1x8xf32>
    %802 = math.tanh %801 : vector<1x8xf32>
    %c24_341 = arith.constant 24 : index
    %c0_342 = arith.constant 0 : index
    %803 = vector.load %arg30[%c24_341, %c0_342] : memref<32x32xf32, #tpu.memory_space<vmem>>, vector<8x32xf32>
    %cst_343 = arith.constant dense<0.000000e+00> : vector<1x32xf32>
    %804 = tpu.matmul %802, %803, %cst_343 {dimension_numbers = #tpu.dot_dimension_numbers<[1], [0], [0], [1], [0, 0, 1, 1], [], []>} : vector<1x8xf32>, vector<8x32xf32>, vector<1x32xf32> -> vector<1x32xf32>
    %805 = arith.addf %784, %804 : vector<1x32xf32>
    %c0_344 = arith.constant 0 : index
    %c0_345 = arith.constant 0 : index
    %806 = vector.load %arg31[%c0_344, %c0_345] : memref<1x32xf32, #tpu.memory_space<vmem>>, vector<1x32xf32>
    %807 = arith.addf %805, %806 : vector<1x32xf32>
    %808 = math.tanh %807 : vector<1x32xf32>
    %809 = tpu.concatenate %722, %808 in 0 : vector<1x32xf32>, vector<1x32xf32> -> vector<2x32xf32>
    %c0_346 = arith.constant 0 : index
    %c0_347 = arith.constant 0 : index
    %810 = vector.load %arg32[%c0_346, %c0_347] : memref<32x3xf32, #tpu.memory_space<vmem>>, vector<32x3xf32>
    %cst_348 = arith.constant dense<0.000000e+00> : vector<2x3xf32>
    %811 = tpu.matmul %809, %810, %cst_348 {dimension_numbers = #tpu.dot_dimension_numbers<[1], [0], [0], [1], [0, 0, 1, 1], [], []>} : vector<2x32xf32>, vector<32x3xf32>, vector<2x3xf32> -> vector<2x3xf32>
    %c0_349 = arith.constant 0 : index
    %c0_350 = arith.constant 0 : index
    %812 = vector.load %arg33[%c0_349, %c0_350] : memref<1x3xf32, #tpu.memory_space<vmem>>, vector<1x3xf32>
    %813 = vector.broadcast %812 : vector<1x3xf32> to vector<2x3xf32>
    %814 = arith.addf %811, %813 : vector<2x3xf32>
    %cst_351 = arith.constant 0.000000e+00 : f32
    %815 = vector.broadcast %cst_351 : f32 to vector<2x93xf32>
    %816 = tpu.concatenate %809, %814, %815 in 1 : vector<2x32xf32>, vector<2x3xf32>, vector<2x93xf32> -> vector<2x128xf32>
    %c0_352 = arith.constant 0 : index
    %c0_353 = arith.constant 0 : index
    %817 = vector.load %arg34[%c0_352, %c0_353] : memref<2x128xf32, #tpu.memory_space<vmem>>, vector<2x128xf32>
    tpu.vector_store %arg34[%c0_352, %c0_353], %816 {strides = array<i32>} : memref<2x128xf32, #tpu.memory_space<vmem>>, vector<2x128xf32>,
    return
  }
}

</mosaic_0001>

<llo_original>
// kernel: lcf_bert_only_local_forward.1
$region0: #{lcf_bert_only_local_forward.1}
  #allocation0 [shape = 'u32[]', space=smem, size = 0x4, offset = 0x4, fixed_abs, tag = 'smem constant byte address 0x4 - core index']
  #allocation1 [shape = 'u32[144,128]{1,0:T(1,128)}', space=vmem, size = 0x12000, scoped, tag = 'internal scratch']
  %s0 = inlined_call_operand.smem [shape: u32[35], index: -1, kind: input, shape index: {}]
  %s1 = sld [smem:[%s0]]
  %s2 = scalar_lea.smem %s0, 1
  %s3 = sld [smem:[%s2]]
  %s4 = scalar_lea.smem %s0, 2
  %s5 = sld [smem:[%s4]]
  %s6 = scalar_lea.smem %s0, 3
  %s7 = sld [smem:[%s6]]
  %s8 = scalar_lea.smem %s0, 4
  %s9 = sld [smem:[%s8]]
  %s10 = scalar_lea.smem %s0, 5
  %s11 = sld [smem:[%s10]]
  %s12 = scalar_lea.smem %s0, 6
  %s13 = sld [smem:[%s12]]
  %s14 = scalar_lea.smem %s0, 7
  %s15 = sld [smem:[%s14]]
  %s16 = scalar_lea.smem %s0, 8
  %s17 = sld [smem:[%s16]]
  %s18 = scalar_lea.smem %s0, 9
  %s19 = sld [smem:[%s18]]
  %s20 = scalar_lea.smem %s0, 10
  %s21 = sld [smem:[%s20]]
  %s22 = scalar_lea.smem %s0, 11
  %s23 = sld [smem:[%s22]]
  %s24 = scalar_lea.smem %s0, 12
  %s25 = sld [smem:[%s24]]
  %s26 = scalar_lea.smem %s0, 13
  %s27 = sld [smem:[%s26]]
  %s28 = scalar_lea.smem %s0, 14
  %s29 = sld [smem:[%s28]]
  %s30 = scalar_lea.smem %s0, 15
  %s31 = sld [smem:[%s30]]
  %s32 = scalar_lea.smem %s0, 16
  %s33 = sld [smem:[%s32]]
  %s34 = scalar_lea.smem %s0, 17
  %s35 = sld [smem:[%s34]]
  %s36 = scalar_lea.smem %s0, 18
  %s37 = sld [smem:[%s36]]
  %s38 = scalar_lea.smem %s0, 19
  %s39 = sld [smem:[%s38]]
  %s40 = scalar_lea.smem %s0, 20
  %s41 = sld [smem:[%s40]]
  %s42 = scalar_lea.smem %s0, 21
  %s43 = sld [smem:[%s42]]
  %s44 = scalar_lea.smem %s0, 22
  %s45 = sld [smem:[%s44]]
  %s46 = scalar_lea.smem %s0, 23
  %s47 = sld [smem:[%s46]]
  %s48 = scalar_lea.smem %s0, 24
  %s49 = sld [smem:[%s48]]
  %s50 = scalar_lea.smem %s0, 25
  %s51 = sld [smem:[%s50]]
  %s52 = scalar_lea.smem %s0, 26
  %s53 = sld [smem:[%s52]]
  %s54 = scalar_lea.smem %s0, 27
  %s55 = sld [smem:[%s54]]
  %s56 = scalar_lea.smem %s0, 28
  %s57 = sld [smem:[%s56]]
  %s58 = scalar_lea.smem %s0, 29
  %s59 = sld [smem:[%s58]]
  %s60 = scalar_lea.smem %s0, 30
  %s61 = sld [smem:[%s60]]
  %s62 = scalar_lea.smem %s0, 31
  %s63 = sld [smem:[%s62]]
  %s64 = scalar_lea.smem %s0, 32
  %s65 = sld [smem:[%s64]]
  %s66 = scalar_lea.smem %s0, 33
  %s67 = sld [smem:[%s66]]
  %s68 = scalar_lea.smem %s0, 34
  %s69 = sld [smem:[%s68]]
  %s70 = sld [smem:[#allocation0]]
  $region202: #{lcf_bert_only_local_forward.1} parent=0
    _
  %s72 = ssub.s32 1, %s70
  %s73 = scalar_select 0, %s72, %s70
  $region1: #{lcf_bert_only_local_forward.1} parent=0
    #allocation2 [shape = 'u8[512]{0}', space=vmem, size = 0x400, scoped, tag = 'input window, operand 4, single buffered']
    #allocation3 [shape = 's32[1]{0}', space=sflag, size = 0x4, scoped, tag = 'scoped memory for lcf_bert_only_local_forward.1']
    #allocation4 [shape = 'u8[512]{0}', space=vmem, size = 0x400, scoped, tag = 'input window, operand 5, single buffered']
    #allocation5 [shape = 's32[1]{0}', space=sflag, size = 0x4, scoped, tag = 'scoped memory for lcf_bert_only_local_forward.1']
    #allocation6 [shape = 'u8[1024]{0}', space=vmem, size = 0x400, scoped, tag = 'input window, operand 7, single buffered']
    #allocation7 [shape = 'u8[1024]{0}', space=vmem, size = 0x400, scoped, tag = 'input window, operand 9, single buffered']
    #allocation8 [shape = 's32[1]{0}', space=sflag, size = 0x4, scoped, tag = 'scoped memory for lcf_bert_only_local_forward.1']
    #allocation9 [shape = 'u8[1024]{0}', space=vmem, size = 0x400, scoped, tag = 'input window, operand 13, single buffered']
    #allocation10 [shape = 'u8[1024]{0}', space=vmem, size = 0x400, scoped, tag = 'input window, operand 14, single buffered']
    #allocation11 [shape = 's32[1]{0}', space=sflag, size = 0x4, scoped, tag = 'scoped memory for lcf_bert_only_local_forward.1']
    #allocation12 [shape = 'u8[1024]{0}', space=vmem, size = 0x400, scoped, tag = 'input window, operand 15, single buffered']
    #allocation13 [shape = 'u8[1024]{0}', space=vmem, size = 0x400, scoped, tag = 'input window, operand 17, single buffered']
    #allocation14 [shape = 's32[1]{0}', space=sflag, size = 0x4, scoped, tag = 'scoped memory for lcf_bert_only_local_forward.1']
    #allocation15 [shape = 'u8[1024]{0}', space=vmem, size = 0x400, scoped, tag = 'input window, operand 19, single buffered']
    #allocation16 [shape = 'u8[1024]{0}', space=vmem, size = 0x400, scoped, tag = 'input window, operand 21, single buffered']
    #allocation17 [shape = 's32[1]{0}', space=sflag, size = 0x4, scoped, tag = 'scoped memory for lcf_bert_only_local_forward.1']
    #allocation18 [shape = 'u8[512]{0}', space=vmem, size = 0x400, scoped, tag = 'input window, operand 23, single buffered']
    #allocation19 [shape = 'u8[16384]{0}', space=vmem, size = 0x4000, scoped, tag = 'input window, operand 30, single buffered']
    #allocation20 [shape = 's32[1]{0}', space=sflag, size = 0x4, scoped, tag = 'scoped memory for lcf_bert_only_local_forward.1']
    #allocation21 [shape = 'u8[512]{0}', space=vmem, size = 0x400, scoped, tag = 'input window, operand 31, single buffered']
    #allocation22 [shape = 'u8[512]{0}', space=vmem, size = 0x400, scoped, tag = 'input window, operand 33, single buffered']
    #allocation23 [shape = 's32[1]{0}', space=sflag, size = 0x4, scoped, tag = 'scoped memory for lcf_bert_only_local_forward.1']
    %74 = vsyncpa [#allocation3], 0
    %75 = vsyncpa [#allocation5], 0
    %76 = vsyncpa [#allocation8], 0
    %77 = vsyncpa [#allocation11], 0
    %78 = vsyncpa [#allocation14], 0
    %79 = vsyncpa [#allocation17], 0
    %80 = vsyncpa [#allocation20], 0
    %81 = vsyncpa [#allocation23], 0
    // Predicated region
    $region2: #{lcf_bert_only_local_forward.1} parent=1 // pred_check
      _
    $region3: #{lcf_bert_only_local_forward.1} parent=1 // pred_check_branch
      %83 = sbr.rel (0) target = $region5
    $region4: #{lcf_bert_only_local_forward.1} parent=1 // pred_region
      _
    $region5: #{lcf_bert_only_local_forward.1} parent=1 // pred_fallthru
      _
    // Predicated region
    $region6: #{lcf_bert_only_local_forward.1} parent=1 // pred_check
      _
    $region7: #{lcf_bert_only_local_forward.1} parent=1 // pred_check_branch
      %85 = sbr.rel (0) target = $region9
    $region8: #{lcf_bert_only_local_forward.1} parent=1 // pred_region
      _
    $region9: #{lcf_bert_only_local_forward.1} parent=1 // pred_fallthru
      _
    // Predicated region
    $region10: #{lcf_bert_only_local_forward.1} parent=1 // pred_check
      _
    $region11: #{lcf_bert_only_local_forward.1} parent=1 // pred_check_branch
      %87 = sbr.rel (0) target = $region13
    $region12: #{lcf_bert_only_local_forward.1} parent=1 // pred_region
      _
    $region13: #{lcf_bert_only_local_forward.1} parent=1 // pred_fallthru
      _
    // Predicated region
    $region14: #{lcf_bert_only_local_forward.1} parent=1 // pred_check
      _
    $region15: #{lcf_bert_only_local_forward.1} parent=1 // pred_check_branch
      %89 = sbr.rel (0) target = $region17
    $region16: #{lcf_bert_only_local_forward.1} parent=1 // pred_region
      _
    $region17: #{lcf_bert_only_local_forward.1} parent=1 // pred_fallthru
      _
    // Predicated region
    $region18: #{lcf_bert_only_local_forward.1} parent=1 // pred_check
      _
    $region19: #{lcf_bert_only_local_forward.1} parent=1 // pred_check_branch
      %91 = sbr.rel (0) target = $region21
    $region20: #{lcf_bert_only_local_forward.1} parent=1 // pred_region
      %s93 = ssub.s32 16, 16
      %94 = vsyncadd [#allocation3], %s93
      %s96 = sshll.u32 [#allocation2], 4
      %s97 = int_to_ptr.vmem [resolvable:$true] %s96
      %99 = dma.hbm_to_vmem [thread:$0]  %s9, 16, %s97, [#allocation3]
    $region21: #{lcf_bert_only_local_forward.1} parent=1 // pred_fallthru
      _
    // Predicated region
    $region22: #{lcf_bert_only_local_forward.1} parent=1 // pred_check
      _
    $region23: #{lcf_bert_only_local_forward.1} parent=1 // pred_check_branch
      %101 = sbr.rel (0) target = $region25
    $region24: #{lcf_bert_only_local_forward.1} parent=1 // pred_region
      %s103 = ssub.s32 16, 16
      %104 = vsyncadd [#allocation5], %s103
      %s106 = sshll.u32 [#allocation4], 4
      %s107 = int_to_ptr.vmem [resolvable:$true] %s106
      %109 = dma.hbm_to_vmem [thread:$0]  %s11, 16, %s107, [#allocation5]
    $region25: #{lcf_bert_only_local_forward.1} parent=1 // pred_fallthru
      _
    // Predicated region
    $region26: #{lcf_bert_only_local_forward.1} parent=1 // pred_check
      _
    $region27: #{lcf_bert_only_local_forward.1} parent=1 // pred_check_branch
      %111 = sbr.rel (0) target = $region29
    $region28: #{lcf_bert_only_local_forward.1} parent=1 // pred_region
      _
    $region29: #{lcf_bert_only_local_forward.1} parent=1 // pred_fallthru
      _
    // Predicated region
    $region30: #{lcf_bert_only_local_forward.1} parent=1 // pred_check
      _
    $region31: #{lcf_bert_only_local_forward.1} parent=1 // pred_check_branch
      %113 = sbr.rel (0) target = $region33
    $region32: #{lcf_bert_only_local_forward.1} parent=1 // pred_region
      %s115 = ssub.s32 32, 32
      %116 = vsyncadd [#allocation5], %s115
      %s117 = sshll.u32 [#allocation6], 4
      %s118 = int_to_ptr.vmem [resolvable:$true] %s117
      %123 = dma.hbm_to_vmem [thread:$0]  %s15, 32, %s118, [#allocation5], 16, 16, 1
    $region33: #{lcf_bert_only_local_forward.1} parent=1 // pred_fallthru
      _
    // Predicated region
    $region34: #{lcf_bert_only_local_forward.1} parent=1 // pred_check
      _
    $region35: #{lcf_bert_only_local_forward.1} parent=1 // pred_check_branch
      %125 = sbr.rel (0) target = $region37
    $region36: #{lcf_bert_only_local_forward.1} parent=1 // pred_region
      _
    $region37: #{lcf_bert_only_local_forward.1} parent=1 // pred_fallthru
      _
    // Predicated region
    $region38: #{lcf_bert_only_local_forward.1} parent=1 // pred_check
      _
    $region39: #{lcf_bert_only_local_forward.1} parent=1 // pred_check_branch
      %127 = sbr.rel (0) target = $region41
    $region40: #{lcf_bert_only_local_forward.1} parent=1 // pred_region
      %s129 = ssub.s32 32, 32
      %130 = vsyncadd [#allocation8], %s129
      %s131 = sshll.u32 [#allocation7], 4
      %s132 = int_to_ptr.vmem [resolvable:$true] %s131
      %137 = dma.hbm_to_vmem [thread:$0]  %s19, 32, %s132, [#allocation8], 16, 16, 1
    $region41: #{lcf_bert_only_local_forward.1} parent=1 // pred_fallthru
      _
    // Predicated region
    $region42: #{lcf_bert_only_local_forward.1} parent=1 // pred_check
      _
    $region43: #{lcf_bert_only_local_forward.1} parent=1 // pred_check_branch
      %139 = sbr.rel (0) target = $region45
    $region44: #{lcf_bert_only_local_forward.1} parent=1 // pred_region
      _
    $region45: #{lcf_bert_only_local_forward.1} parent=1 // pred_fallthru
      _
    // Predicated region
    $region46: #{lcf_bert_only_local_forward.1} parent=1 // pred_check
      _
    $region47: #{lcf_bert_only_local_forward.1} parent=1 // pred_check_branch
      %141 = sbr.rel (0) target = $region49
    $region48: #{lcf_bert_only_local_forward.1} parent=1 // pred_region
      _
    $region49: #{lcf_bert_only_local_forward.1} parent=1 // pred_fallthru
      _
    // Predicated region
    $region50: #{lcf_bert_only_local_forward.1} parent=1 // pred_check
      _
    $region51: #{lcf_bert_only_local_forward.1} parent=1 // pred_check_branch
      %143 = sbr.rel (0) target = $region53
    $region52: #{lcf_bert_only_local_forward.1} parent=1 // pred_region
      _
    $region53: #{lcf_bert_only_local_forward.1} parent=1 // pred_fallthru
      _
    // Predicated region
    $region54: #{lcf_bert_only_local_forward.1} parent=1 // pred_check
      _
    $region55: #{lcf_bert_only_local_forward.1} parent=1 // pred_check_branch
      %145 = sbr.rel (0) target = $region57
    $region56: #{lcf_bert_only_local_forward.1} parent=1 // pred_region
      %s147 = ssub.s32 32, 32
      %148 = vsyncadd [#allocation8], %s147
      %s149 = sshll.u32 [#allocation9], 4
      %s150 = int_to_ptr.vmem [resolvable:$true] %s149
      %155 = dma.hbm_to_vmem [thread:$0]  %s27, 32, %s150, [#allocation8], 16, 16, 1
    $region57: #{lcf_bert_only_local_forward.1} parent=1 // pred_fallthru
      _
    // Predicated region
    $region58: #{lcf_bert_only_local_forward.1} parent=1 // pred_check
      _
    $region59: #{lcf_bert_only_local_forward.1} parent=1 // pred_check_branch
      %157 = sbr.rel (0) target = $region61
    $region60: #{lcf_bert_only_local_forward.1} parent=1 // pred_region
      %s159 = ssub.s32 32, 32
      %160 = vsyncadd [#allocation11], %s159
      %s161 = sshll.u32 [#allocation10], 4
      %s162 = int_to_ptr.vmem [resolvable:$true] %s161
      %167 = dma.hbm_to_vmem [thread:$0]  %s29, 32, %s162, [#allocation11], 16, 16, 1
    $region61: #{lcf_bert_only_local_forward.1} parent=1 // pred_fallthru
      _
    // Predicated region
    $region62: #{lcf_bert_only_local_forward.1} parent=1 // pred_check
      _
    $region63: #{lcf_bert_only_local_forward.1} parent=1 // pred_check_branch
      %169 = sbr.rel (0) target = $region65
    $region64: #{lcf_bert_only_local_forward.1} parent=1 // pred_region
      %s171 = ssub.s32 32, 32
      %172 = vsyncadd [#allocation11], %s171
      %s173 = sshll.u32 [#allocation12], 4
      %s174 = int_to_ptr.vmem [resolvable:$true] %s173
      %179 = dma.hbm_to_vmem [thread:$0]  %s31, 32, %s174, [#allocation11], 16, 16, 1
    $region65: #{lcf_bert_only_local_forward.1} parent=1 // pred_fallthru
      _
    // Predicated region
    $region66: #{lcf_bert_only_local_forward.1} parent=1 // pred_check
      _
    $region67: #{lcf_bert_only_local_forward.1} parent=1 // pred_check_branch
      %181 = sbr.rel (0) target = $region69
    $region68: #{lcf_bert_only_local_forward.1} parent=1 // pred_region
      _
    $region69: #{lcf_bert_only_local_forward.1} parent=1 // pred_fallthru
      _
    // Predicated region
    $region70: #{lcf_bert_only_local_forward.1} parent=1 // pred_check
      _
    $region71: #{lcf_bert_only_local_forward.1} parent=1 // pred_check_branch
      %183 = sbr.rel (0) target = $region73
    $region72: #{lcf_bert_only_local_forward.1} parent=1 // pred_region
      %s185 = ssub.s32 32, 32
      %186 = vsyncadd [#allocation14], %s185
      %s187 = sshll.u32 [#allocation13], 4
      %s188 = int_to_ptr.vmem [resolvable:$true] %s187
      %193 = dma.hbm_to_vmem [thread:$0]  %s35, 32, %s188, [#allocation14], 16, 16, 1
    $region73: #{lcf_bert_only_local_forward.1} parent=1 // pred_fallthru
      _
    // Predicated region
    $region74: #{lcf_bert_only_local_forward.1} parent=1 // pred_check
      _
    $region75: #{lcf_bert_only_local_forward.1} parent=1 // pred_check_branch
      %195 = sbr.rel (0) target = $region77
    $region76: #{lcf_bert_only_local_forward.1} parent=1 // pred_region
      _
    $region77: #{lcf_bert_only_local_forward.1} parent=1 // pred_fallthru
      _
    // Predicated region
    $region78: #{lcf_bert_only_local_forward.1} parent=1 // pred_check
      _
    $region79: #{lcf_bert_only_local_forward.1} parent=1 // pred_check_branch
      %197 = sbr.rel (0) target = $region81
    $region80: #{lcf_bert_only_local_forward.1} parent=1 // pred_region
      %s199 = ssub.s32 32, 32
      %200 = vsyncadd [#allocation14], %s199
      %s201 = sshll.u32 [#allocation15], 4
      %s202 = int_to_ptr.vmem [resolvable:$true] %s201
      %207 = dma.hbm_to_vmem [thread:$0]  %s39, 32, %s202, [#allocation14], 16, 16, 1
    $region81: #{lcf_bert_only_local_forward.1} parent=1 // pred_fallthru
      _
    // Predicated region
    $region82: #{lcf_bert_only_local_forward.1} parent=1 // pred_check
      _
    $region83: #{lcf_bert_only_local_forward.1} parent=1 // pred_check_branch
      %209 = sbr.rel (0) target = $region85
    $region84: #{lcf_bert_only_local_forward.1} parent=1 // pred_region
      _
    $region85: #{lcf_bert_only_local_forward.1} parent=1 // pred_fallthru
      _
    // Predicated region
    $region86: #{lcf_bert_only_local_forward.1} parent=1 // pred_check
      _
    $region87: #{lcf_bert_only_local_forward.1} parent=1 // pred_check_branch
      %211 = sbr.rel (0) target = $region89
    $region88: #{lcf_bert_only_local_forward.1} parent=1 // pred_region
      %s213 = ssub.s32 32, 32
      %214 = vsyncadd [#allocation17], %s213
      %s215 = sshll.u32 [#allocation16], 4
      %s216 = int_to_ptr.vmem [resolvable:$true] %s215
      %221 = dma.hbm_to_vmem [thread:$0]  %s43, 32, %s216, [#allocation17], 16, 16, 1
    $region89: #{lcf_bert_only_local_forward.1} parent=1 // pred_fallthru
      _
    // Predicated region
    $region90: #{lcf_bert_only_local_forward.1} parent=1 // pred_check
      _
    $region91: #{lcf_bert_only_local_forward.1} parent=1 // pred_check_branch
      %223 = sbr.rel (0) target = $region93
    $region92: #{lcf_bert_only_local_forward.1} parent=1 // pred_region
      _
    $region93: #{lcf_bert_only_local_forward.1} parent=1 // pred_fallthru
      _
    // Predicated region
    $region94: #{lcf_bert_only_local_forward.1} parent=1 // pred_check
      _
    $region95: #{lcf_bert_only_local_forward.1} parent=1 // pred_check_branch
      %225 = sbr.rel (0) target = $region97
    $region96: #{lcf_bert_only_local_forward.1} parent=1 // pred_region
      %s227 = ssub.s32 16, 16
      %228 = vsyncadd [#allocation17], %s227
      %s230 = sshll.u32 [#allocation18], 4
      %s231 = int_to_ptr.vmem [resolvable:$true] %s230
      %233 = dma.hbm_to_vmem [thread:$0]  %s47, 16, %s231, [#allocation17]
    $region97: #{lcf_bert_only_local_forward.1} parent=1 // pred_fallthru
      _
    // Predicated region
    $region98: #{lcf_bert_only_local_forward.1} parent=1 // pred_check
      _
    $region99: #{lcf_bert_only_local_forward.1} parent=1 // pred_check_branch
      %235 = sbr.rel (0) target = $region101
    $region100: #{lcf_bert_only_local_forward.1} parent=1 // pred_region
      _
    $region101: #{lcf_bert_only_local_forward.1} parent=1 // pred_fallthru
      _
    // Predicated region
    $region102: #{lcf_bert_only_local_forward.1} parent=1 // pred_check
      _
    $region103: #{lcf_bert_only_local_forward.1} parent=1 // pred_check_branch
      %237 = sbr.rel (0) target = $region105
    $region104: #{lcf_bert_only_local_forward.1} parent=1 // pred_region
      _
    $region105: #{lcf_bert_only_local_forward.1} parent=1 // pred_fallthru
      _
    // Predicated region
    $region106: #{lcf_bert_only_local_forward.1} parent=1 // pred_check
      _
    $region107: #{lcf_bert_only_local_forward.1} parent=1 // pred_check_branch
      %239 = sbr.rel (0) target = $region109
    $region108: #{lcf_bert_only_local_forward.1} parent=1 // pred_region
      _
    $region109: #{lcf_bert_only_local_forward.1} parent=1 // pred_fallthru
      _
    // Predicated region
    $region110: #{lcf_bert_only_local_forward.1} parent=1 // pred_check
      _
    $region111: #{lcf_bert_only_local_forward.1} parent=1 // pred_check_branch
      %241 = sbr.rel (0) target = $region113
    $region112: #{lcf_bert_only_local_forward.1} parent=1 // pred_region
      _
    $region113: #{lcf_bert_only_local_forward.1} parent=1 // pred_fallthru
      _
    // Predicated region
    $region114: #{lcf_bert_only_local_forward.1} parent=1 // pred_check
      _
    $region115: #{lcf_bert_only_local_forward.1} parent=1 // pred_check_branch
      %243 = sbr.rel (0) target = $region117
    $region116: #{lcf_bert_only_local_forward.1} parent=1 // pred_region
      _
    $region117: #{lcf_bert_only_local_forward.1} parent=1 // pred_fallthru
      _
    // Predicated region
    $region118: #{lcf_bert_only_local_forward.1} parent=1 // pred_check
      _
    $region119: #{lcf_bert_only_local_forward.1} parent=1 // pred_check_branch
      %245 = sbr.rel (0) target = $region121
    $region120: #{lcf_bert_only_local_forward.1} parent=1 // pred_region
      _
    $region121: #{lcf_bert_only_local_forward.1} parent=1 // pred_fallthru
      _
    // Predicated region
    $region122: #{lcf_bert_only_local_forward.1} parent=1 // pred_check
      _
    $region123: #{lcf_bert_only_local_forward.1} parent=1 // pred_check_branch
      %247 = sbr.rel (0) target = $region125
    $region124: #{lcf_bert_only_local_forward.1} parent=1 // pred_region
      %s249 = ssub.s32 512, 512
      %250 = vsyncadd [#allocation20], %s249
      %s251 = sshll.u32 [#allocation19], 4
      %s252 = int_to_ptr.vmem [resolvable:$true] %s251
      %257 = dma.hbm_to_vmem [thread:$0]  %s61, 512, %s252, [#allocation20], 128, 128, 8
    $region125: #{lcf_bert_only_local_forward.1} parent=1 // pred_fallthru
      _
    // Predicated region
    $region126: #{lcf_bert_only_local_forward.1} parent=1 // pred_check
      _
    $region127: #{lcf_bert_only_local_forward.1} parent=1 // pred_check_branch
      %259 = sbr.rel (0) target = $region129
    $region128: #{lcf_bert_only_local_forward.1} parent=1 // pred_region
      %s261 = ssub.s32 16, 16
      %262 = vsyncadd [#allocation20], %s261
      %s264 = sshll.u32 [#allocation21], 4
      %s265 = int_to_ptr.vmem [resolvable:$true] %s264
      %267 = dma.hbm_to_vmem [thread:$0]  %s63, 16, %s265, [#allocation20]
    $region129: #{lcf_bert_only_local_forward.1} parent=1 // pred_fallthru
      _
    // Predicated region
    $region130: #{lcf_bert_only_local_forward.1} parent=1 // pred_check
      _
    $region131: #{lcf_bert_only_local_forward.1} parent=1 // pred_check_branch
      %269 = sbr.rel (0) target = $region133
    $region132: #{lcf_bert_only_local_forward.1} parent=1 // pred_region
      _
    $region133: #{lcf_bert_only_local_forward.1} parent=1 // pred_fallthru
      _
    // Predicated region
    $region134: #{lcf_bert_only_local_forward.1} parent=1 // pred_check
      _
    $region135: #{lcf_bert_only_local_forward.1} parent=1 // pred_check_branch
      %271 = sbr.rel (0) target = $region137
    $region136: #{lcf_bert_only_local_forward.1} parent=1 // pred_region
      %s273 = ssub.s32 16, 16
      %274 = vsyncadd [#allocation23], %s273
      %s276 = sshll.u32 [#allocation22], 4
      %s277 = int_to_ptr.vmem [resolvable:$true] %s276
      %279 = dma.hbm_to_vmem [thread:$0]  %s67, 16, %s277, [#allocation23]
    $region137: #{lcf_bert_only_local_forward.1} parent=1 // pred_fallthru
      _
    // Predicated region
    $region138: #{lcf_bert_only_local_forward.1} parent=1 // pred_check
      _
    $region139: #{lcf_bert_only_local_forward.1} parent=1 // pred_check_branch
      %281 = sbr.rel (0) target = $region141
    $region140: #{lcf_bert_only_local_forward.1} parent=1 // pred_region
      %282 = dma.done [#allocation3], 16
    $region141: #{lcf_bert_only_local_forward.1} parent=1 // pred_fallthru
      _
    // Predicated region
    $region142: #{lcf_bert_only_local_forward.1} parent=1 // pred_check
      _
    $region143: #{lcf_bert_only_local_forward.1} parent=1 // pred_check_branch
      %284 = sbr.rel (0) target = $region145
    $region144: #{lcf_bert_only_local_forward.1} parent=1 // pred_region
      %285 = dma.done [#allocation5], 16
    $region145: #{lcf_bert_only_local_forward.1} parent=1 // pred_fallthru
      _
    // Predicated region
    $region146: #{lcf_bert_only_local_forward.1} parent=1 // pred_check
      _
    $region147: #{lcf_bert_only_local_forward.1} parent=1 // pred_check_branch
      %287 = sbr.rel (0) target = $region149
    $region148: #{lcf_bert_only_local_forward.1} parent=1 // pred_region
      %288 = dma.done [#allocation5], 32
    $region149: #{lcf_bert_only_local_forward.1} parent=1 // pred_fallthru
      _
    // Predicated region
    $region150: #{lcf_bert_only_local_forward.1} parent=1 // pred_check
      _
    $region151: #{lcf_bert_only_local_forward.1} parent=1 // pred_check_branch
      %290 = sbr.rel (0) target = $region153
    $region152: #{lcf_bert_only_local_forward.1} parent=1 // pred_region
      %291 = dma.done [#allocation8], 32
    $region153: #{lcf_bert_only_local_forward.1} parent=1 // pred_fallthru
      _
    // Predicated region
    $region154: #{lcf_bert_only_local_forward.1} parent=1 // pred_check
      _
    $region155: #{lcf_bert_only_local_forward.1} parent=1 // pred_check_branch
      %293 = sbr.rel (0) target = $region157
    $region156: #{lcf_bert_only_local_forward.1} parent=1 // pred_region
      %294 = dma.done [#allocation8], 32
    $region157: #{lcf_bert_only_local_forward.1} parent=1 // pred_fallthru
      _
    // Predicated region
    $region158: #{lcf_bert_only_local_forward.1} parent=1 // pred_check
      _
    $region159: #{lcf_bert_only_local_forward.1} parent=1 // pred_check_branch
      %296 = sbr.rel (0) target = $region161
    $region160: #{lcf_bert_only_local_forward.1} parent=1 // pred_region
      %297 = dma.done [#allocation11], 32
    $region161: #{lcf_bert_only_local_forward.1} parent=1 // pred_fallthru
      _
    // Predicated region
    $region162: #{lcf_bert_only_local_forward.1} parent=1 // pred_check
      _
    $region163: #{lcf_bert_only_local_forward.1} parent=1 // pred_check_branch
      %299 = sbr.rel (0) target = $region165
    $region164: #{lcf_bert_only_local_forward.1} parent=1 // pred_region
      %300 = dma.done [#allocation11], 32
    $region165: #{lcf_bert_only_local_forward.1} parent=1 // pred_fallthru
      _
    // Predicated region
    $region166: #{lcf_bert_only_local_forward.1} parent=1 // pred_check
      _
    $region167: #{lcf_bert_only_local_forward.1} parent=1 // pred_check_branch
      %302 = sbr.rel (0) target = $region169
    $region168: #{lcf_bert_only_local_forward.1} parent=1 // pred_region
      %303 = dma.done [#allocation14], 32
    $region169: #{lcf_bert_only_local_forward.1} parent=1 // pred_fallthru
      _
    // Predicated region
    $region170: #{lcf_bert_only_local_forward.1} parent=1 // pred_check
      _
    $region171: #{lcf_bert_only_local_forward.1} parent=1 // pred_check_branch
      %305 = sbr.rel (0) target = $region173
    $region172: #{lcf_bert_only_local_forward.1} parent=1 // pred_region
      %306 = dma.done [#allocation14], 32
    $region173: #{lcf_bert_only_local_forward.1} parent=1 // pred_fallthru
      _
    // Predicated region
    $region174: #{lcf_bert_only_local_forward.1} parent=1 // pred_check
      _
    $region175: #{lcf_bert_only_local_forward.1} parent=1 // pred_check_branch
      %308 = sbr.rel (0) target = $region177
    $region176: #{lcf_bert_only_local_forward.1} parent=1 // pred_region
      %309 = dma.done [#allocation17], 32
    $region177: #{lcf_bert_only_local_forward.1} parent=1 // pred_fallthru
      _
    // Predicated region
    $region178: #{lcf_bert_only_local_forward.1} parent=1 // pred_check
      _
    $region179: #{lcf_bert_only_local_forward.1} parent=1 // pred_check_branch
      %311 = sbr.rel (0) target = $region181
    $region180: #{lcf_bert_only_local_forward.1} parent=1 // pred_region
      %312 = dma.done [#allocation17], 16
    $region181: #{lcf_bert_only_local_forward.1} parent=1 // pred_fallthru
      _
    // Predicated region
    $region182: #{lcf_bert_only_local_forward.1} parent=1 // pred_check
      _
    $region183: #{lcf_bert_only_local_forward.1} parent=1 // pred_check_branch
      %314 = sbr.rel (0) target = $region185
    $region184: #{lcf_bert_only_local_forward.1} parent=1 // pred_region
      %315 = dma.done [#allocation20], 512
    $region185: #{lcf_bert_only_local_forward.1} parent=1 // pred_fallthru
      _
    // Predicated region
    $region186: #{lcf_bert_only_local_forward.1} parent=1 // pred_check
      _
    $region187: #{lcf_bert_only_local_forward.1} parent=1 // pred_check_branch
      %317 = sbr.rel (0) target = $region189
    $region188: #{lcf_bert_only_local_forward.1} parent=1 // pred_region
      %318 = dma.done [#allocation20], 16
    $region189: #{lcf_bert_only_local_forward.1} parent=1 // pred_fallthru
      _
    // Predicated region
    $region190: #{lcf_bert_only_local_forward.1} parent=1 // pred_check
      _
    $region191: #{lcf_bert_only_local_forward.1} parent=1 // pred_check_branch
      %320 = sbr.rel (0) target = $region193
    $region192: #{lcf_bert_only_local_forward.1} parent=1 // pred_region
      %321 = dma.done [#allocation23], 16
    $region193: #{lcf_bert_only_local_forward.1} parent=1 // pred_fallthru
      _
    %v322 = vld [vmem:[%s1] sm:$0xff]
    %v323 = vld [vmem:[%s1 + $0x8] sm:$0xff]
    %v324 = vlaneseq
    %v325 = vand.u32 %v324, 127
    %326 = vset.pattern.permute.xlu0 0
    %327 = vperm.xlu0 %326, %v322
    %v328 = vpop.permute.xlu0 %327
    %329 = vset.pattern.permute.xlu0 0
    %330 = vperm.xlu0 %329, %v323
    %v331 = vpop.permute.xlu0 %330
    %vm332 = vcmp.eq.s32.totalorder %v325, %v328
    %vm333 = vcmp.eq.s32.totalorder %v325, %v331
    %v334 = vsel %vm332, 1, 0
    %v335 = vsel %vm333, 1, 0
    %v336 = vcvt.s32.f32 %v334
    %v337 = vcvt.s32.f32 %v335
    %v338 = vld [vmem:[%s5] sm:$0xff]
    %v339 = vld [vmem:[%s5 + $0x8] sm:$0xff]
    %v340 = vld [vmem:[%s5 + $0x10] sm:$0xff]
    %v341 = vld [vmem:[%s5 + $0x18] sm:$0xff]
    %v342 = vld [vmem:[%s5 + $0x20] sm:$0xff]
    %v343 = vld [vmem:[%s5 + $0x28] sm:$0xff]
    %v344 = vld [vmem:[%s5 + $0x30] sm:$0xff]
    %v345 = vld [vmem:[%s7] sm:$0xff]
    %v346 = vld [vmem:[%s7 + $0x8] sm:$0xff]
    %vm347 = vcmask 457728
    %v349 = vsel %vm347, %v336, 0
    %v352 = vsel %vm347, %v337, 0
    %354 = vmatprep.subr.mxu0 0.0
    %355 = vmatpush1.msra.mxu0 %v338
    %356 = vmatprep.subr.mxu0 0.0
    %357 = vmatpush1.msra.mxu0 %v339
    %358 = vmatprep.subr.mxu0 0.0
    %359 = vmatpush1.msra.mxu0 %v340
    %360 = vmatprep.subr.mxu0 0.0
    %361 = vmatpush1.msra.mxu0 %v341
    %362 = vmatprep.subr.mxu0 0.0
    %363 = vmatpush1.msra.mxu0 %v342
    %364 = vmatprep.subr.mxu0 0.0
    %365 = vmatpush1.msra.mxu0 %v343
    %366 = vmatprep.subr.mxu0 0.0
    %367 = vmatpush1.msra.mxu0 %v344
    %368 = vmatprep.subr.mxu0 0.0
    %369 = vmatpush1.msra.mxu0 0.0
    %370 = vmatprep.subr.mxu0 0.0
    %371 = vmatpush1.msra.mxu0 0.0
    %372 = vmatprep.subr.mxu0 0.0
    %373 = vmatpush1.msra.mxu0 0.0
    %374 = vmatprep.subr.mxu0 0.0
    %375 = vmatpush1.msra.mxu0 0.0
    %376 = vmatprep.subr.mxu0 0.0
    %377 = vmatpush1.msra.mxu0 0.0
    %378 = vmatprep.subr.mxu0 0.0
    %379 = vmatpush1.msra.mxu0 0.0
    %380 = vmatprep.subr.mxu0 0.0
    %381 = vmatpush1.msra.mxu0 0.0
    %382 = vmatprep.subr.mxu0 0.0
    %383 = vmatpush1.msra.mxu0 0.0
    %384 = vmatprep.subr.mxu0 0.0
    %385 = vmatpush1.msra.mxu0 0.0
    %386 = vmatprep.subr.mxu0 0.0
    %387 = vmatpush1.msra.mxu0 0.0
    %388 = vmatprep.subr.mxu0 0.0
    %389 = vmatpush1.msra.mxu0 0.0
    %390 = vmatprep.subr.mxu0 0.0
    %391 = vmatpush1.msra.mxu0 0.0
    %392 = vmatprep.subr.mxu0 0.0
    %393 = vmatpush1.msra.mxu0 0.0
    %394 = vmatprep.subr.mxu0 0.0
    %395 = vmatpush1.msra.mxu0 0.0
    %396 = vmatprep.subr.mxu0 0.0
    %397 = vmatpush1.msra.mxu0 0.0
    %398 = vmatprep.subr.mxu0 0.0
    %399 = vmatpush1.msra.mxu0 0.0
    %400 = vmatprep.subr.mxu0 0.0
    %401 = vmatpush1.msra.mxu0 0.0
    %402 = vmatprep.subr.mxu0 0.0
    %403 = vmatpush1.msra.mxu0 0.0
    %404 = vmatprep.subr.mxu0 0.0
    %405 = vmatpush1.msra.mxu0 0.0
    %406 = vmatprep.subr.mxu0 0.0
    %407 = vmatpush1.msra.mxu0 0.0
    %408 = vmatprep.subr.mxu0 0.0
    %409 = vmatpush1.msra.mxu0 0.0
    %410 = vmatprep.subr.mxu0 0.0
    %411 = vmatpush1.msra.mxu0 0.0
    %412 = vmatprep.subr.mxu0 0.0
    %413 = vmatpush1.msra.mxu0 0.0
    %414 = vmatprep.subr.mxu0 0.0
    %415 = vmatpush1.msra.mxu0 0.0
    %416 = vmatprep.subr.mxu0 0.0
    %417 = vmatpush1.msra.mxu0 0.0
    %418 = vmatprep.mubr.f32.mxu0 0.0
    %419 = vmatmul.mubr.f32.gmra.mrb[0].mxu0 %v349
    %v420 = vpop.f32.mrb[0].mxu0
    %v421 = vadd.f32 %v345, %v420
    %v422 = vpop.f32.mrb[0].mxu0
    %423 = vmatprep.mubr.f32.mxu0 0.0
    %424 = vmatmul.mubr.f32.gmra.mrb[0].mxu0 %v352
    %v425 = vpop.f32.mrb[0].mxu0
    %v426 = vadd.f32 %v346, %v425
    %v427 = vpop.f32.mrb[0].mxu0
    %428 = vdwg.mxu0
    %v429 = vld [vmem:[#allocation2] sm:$0x1]
    %v430 = vld [vmem:[#allocation4] sm:$0x1]
    %vm431 = vcmask 261120
    %v432 = vsel %vm431, %v421, 0.0
    %433 = vadd.xlane.f32.xlu0 %v432
    %v434 = vpop.xlane.xlu0 %433
    %v435 = vsel %vm431, %v426, 0.0
    %436 = vadd.xlane.f32.xlu0 %v435
    %v437 = vpop.xlane.xlu0 %436
    %v438 = vrcp.pop 32.0
    %v439 = vmul.f32 %v434, %v438
    %v440 = vmul.f32 %v437, %v438
    %v441 = vsub.f32 %v421, %v439
    %v442 = vsub.f32 %v426, %v440
    %v443 = vmul.f32 %v441, %v441
    %v444 = vmul.f32 %v442, %v442
    %v445 = vsel %vm431, %v443, 0.0
    %446 = vadd.xlane.f32.xlu0 %v445
    %v447 = vpop.xlane.xlu0 %446
    %v448 = vsel %vm431, %v444, 0.0
    %449 = vadd.xlane.f32.xlu0 %v448
    %v450 = vpop.xlane.xlu0 %449
    %v451 = vmul.f32 %v447, %v438
    %v452 = vmul.f32 %v450, %v438
    %v453 = vadd.f32 %v451, 1e-12
    %v454 = vadd.f32 %v452, 1e-12
    %v455 = vrsqrt.pop %v453
    %v456 = vrsqrt.pop %v454
    %v457 = vmul.f32 %v441, %v455
    %v458 = vmul.f32 %v442, %v456
    %v460 = vlaneseq
    %v461 = vshrl.u32 %v460, 7
    %v462 = vsub.s32 0, %v461
    %v463 = vrot.slane %v429, %v462
    %v465 = vmul.f32 %v457, %v463
    %v466 = vmul.f32 %v458, %v463
    %v468 = vlaneseq
    %v469 = vshrl.u32 %v468, 7
    %v470 = vsub.s32 0, %v469
    %v471 = vrot.slane %v430, %v470
    %v473 = vadd.f32 %v465, %v471
    %v474 = vadd.f32 %v466, %v471
    %v475 = vld [vmem:[%s13] sm:$0xff]
    %v476 = vld [vmem:[%s13 + $0x8] sm:$0xff]
    %v477 = vld [vmem:[%s13 + $0x10] sm:$0xff]
    %v478 = vld [vmem:[%s13 + $0x18] sm:$0xff]
    %v479 = vld [vmem:[#allocation6] sm:$0x1]
    %v481 = vlaneseq
    %v482 = vshrl.u32 %v481, 7
    %v483 = vsub.s32 0, %v482
    %v484 = vrot.slane %v479, %v483
    %v487 = vsel %vm431, %v473, 0
    %v490 = vsel %vm431, %v474, 0
    %492 = vmatprep.subr.mxu0 0.0
    %493 = vmatpush1.msra.mxu0 %v475
    %494 = vmatprep.subr.mxu0 0.0
    %495 = vmatpush1.msra.mxu0 %v476
    %496 = vmatprep.subr.mxu0 0.0
    %497 = vmatpush1.msra.mxu0 %v477
    %498 = vmatprep.subr.mxu0 0.0
    %499 = vmatpush1.msra.mxu0 %v478
    %500 = vmatprep.subr.mxu0 0.0
    %501 = vmatpush1.msra.mxu0 0.0
    %502 = vmatprep.subr.mxu0 0.0
    %503 = vmatpush1.msra.mxu0 0.0
    %504 = vmatprep.subr.mxu0 0.0
    %505 = vmatpush1.msra.mxu0 0.0
    %506 = vmatprep.subr.mxu0 0.0
    %507 = vmatpush1.msra.mxu0 0.0
    %508 = vmatprep.subr.mxu0 0.0
    %509 = vmatpush1.msra.mxu0 0.0
    %510 = vmatprep.subr.mxu0 0.0
    %511 = vmatpush1.msra.mxu0 0.0
    %512 = vmatprep.subr.mxu0 0.0
    %513 = vmatpush1.msra.mxu0 0.0
    %514 = vmatprep.subr.mxu0 0.0
    %515 = vmatpush1.msra.mxu0 0.0
    %516 = vmatprep.subr.mxu0 0.0
    %517 = vmatpush1.msra.mxu0 0.0
    %518 = vmatprep.subr.mxu0 0.0
    %519 = vmatpush1.msra.mxu0 0.0
    %520 = vmatprep.subr.mxu0 0.0
    %521 = vmatpush1.msra.mxu0 0.0
    %522 = vmatprep.subr.mxu0 0.0
    %523 = vmatpush1.msra.mxu0 0.0
    %524 = vmatprep.subr.mxu0 0.0
    %525 = vmatpush1.msra.mxu0 0.0
    %526 = vmatprep.subr.mxu0 0.0
    %527 = vmatpush1.msra.mxu0 0.0
    %528 = vmatprep.subr.mxu0 0.0
    %529 = vmatpush1.msra.mxu0 0.0
    %530 = vmatprep.subr.mxu0 0.0
    %531 = vmatpush1.msra.mxu0 0.0
    %532 = vmatprep.subr.mxu0 0.0
    %533 = vmatpush1.msra.mxu0 0.0
    %534 = vmatprep.subr.mxu0 0.0
    %535 = vmatpush1.msra.mxu0 0.0
    %536 = vmatprep.subr.mxu0 0.0
    %537 = vmatpush1.msra.mxu0 0.0
    %538 = vmatprep.subr.mxu0 0.0
    %539 = vmatpush1.msra.mxu0 0.0
    %540 = vmatprep.subr.mxu0 0.0
    %541 = vmatpush1.msra.mxu0 0.0
    %542 = vmatprep.subr.mxu0 0.0
    %543 = vmatpush1.msra.mxu0 0.0
    %544 = vmatprep.subr.mxu0 0.0
    %545 = vmatpush1.msra.mxu0 0.0
    %546 = vmatprep.subr.mxu0 0.0
    %547 = vmatpush1.msra.mxu0 0.0
    %548 = vmatprep.subr.mxu0 0.0
    %549 = vmatpush1.msra.mxu0 0.0
    %550 = vmatprep.subr.mxu0 0.0
    %551 = vmatpush1.msra.mxu0 0.0
    %552 = vmatprep.subr.mxu0 0.0
    %553 = vmatpush1.msra.mxu0 0.0
    %554 = vmatprep.subr.mxu0 0.0
    %555 = vmatpush1.msra.mxu0 0.0
    %556 = vmatprep.mubr.f32.mxu0 0.0
    %557 = vmatmul.mubr.f32.gmra.mrb[0].mxu0 %v487
    %v558 = vpop.f32.mrb[0].mxu0
    %v559 = vadd.f32 %v484, %v558
    %v560 = vpop.f32.mrb[0].mxu0
    %561 = vmatprep.mubr.f32.mxu0 0.0
    %562 = vmatmul.mubr.f32.gmra.mrb[0].mxu0 %v490
    %v563 = vpop.f32.mrb[0].mxu0
    %v564 = vadd.f32 %v484, %v563
    %v565 = vpop.f32.mrb[0].mxu0
    %566 = vdwg.mxu0
    %v567 = vld [vmem:[%s17] sm:$0xff]
    %v568 = vld [vmem:[%s17 + $0x8] sm:$0xff]
    %v569 = vld [vmem:[%s17 + $0x10] sm:$0xff]
    %v570 = vld [vmem:[%s17 + $0x18] sm:$0xff]
    %v571 = vld [vmem:[#allocation7] sm:$0x1]
    %v573 = vlaneseq
    %v574 = vshrl.u32 %v573, 7
    %v575 = vsub.s32 0, %v574
    %v576 = vrot.slane %v571, %v575
    %578 = vmatprep.subr.mxu0 0.0
    %579 = vmatpush1.msra.mxu0 %v567
    %580 = vmatprep.subr.mxu0 0.0
    %581 = vmatpush1.msra.mxu0 %v568
    %582 = vmatprep.subr.mxu0 0.0
    %583 = vmatpush1.msra.mxu0 %v569
    %584 = vmatprep.subr.mxu0 0.0
    %585 = vmatpush1.msra.mxu0 %v570
    %586 = vmatprep.subr.mxu0 0.0
    %587 = vmatpush1.msra.mxu0 0.0
    %588 = vmatprep.subr.mxu0 0.0
    %589 = vmatpush1.msra.mxu0 0.0
    %590 = vmatprep.subr.mxu0 0.0
    %591 = vmatpush1.msra.mxu0 0.0
    %592 = vmatprep.subr.mxu0 0.0
    %593 = vmatpush1.msra.mxu0 0.0
    %594 = vmatprep.subr.mxu0 0.0
    %595 = vmatpush1.msra.mxu0 0.0
    %596 = vmatprep.subr.mxu0 0.0
    %597 = vmatpush1.msra.mxu0 0.0
    %598 = vmatprep.subr.mxu0 0.0
    %599 = vmatpush1.msra.mxu0 0.0
    %600 = vmatprep.subr.mxu0 0.0
    %601 = vmatpush1.msra.mxu0 0.0
    %602 = vmatprep.subr.mxu0 0.0
    %603 = vmatpush1.msra.mxu0 0.0
    %604 = vmatprep.subr.mxu0 0.0
    %605 = vmatpush1.msra.mxu0 0.0
    %606 = vmatprep.subr.mxu0 0.0
    %607 = vmatpush1.msra.mxu0 0.0
    %608 = vmatprep.subr.mxu0 0.0
    %609 = vmatpush1.msra.mxu0 0.0
    %610 = vmatprep.subr.mxu0 0.0
    %611 = vmatpush1.msra.mxu0 0.0
    %612 = vmatprep.subr.mxu0 0.0
    %613 = vmatpush1.msra.mxu0 0.0
    %614 = vmatprep.subr.mxu0 0.0
    %615 = vmatpush1.msra.mxu0 0.0
    %616 = vmatprep.subr.mxu0 0.0
    %617 = vmatpush1.msra.mxu0 0.0
    %618 = vmatprep.subr.mxu0 0.0
    %619 = vmatpush1.msra.mxu0 0.0
    %620 = vmatprep.subr.mxu0 0.0
    %621 = vmatpush1.msra.mxu0 0.0
    %622 = vmatprep.subr.mxu0 0.0
    %623 = vmatpush1.msra.mxu0 0.0
    %624 = vmatprep.subr.mxu0 0.0
    %625 = vmatpush1.msra.mxu0 0.0
    %626 = vmatprep.subr.mxu0 0.0
    %627 = vmatpush1.msra.mxu0 0.0
    %628 = vmatprep.subr.mxu0 0.0
    %629 = vmatpush1.msra.mxu0 0.0
    %630 = vmatprep.subr.mxu0 0.0
    %631 = vmatpush1.msra.mxu0 0.0
    %632 = vmatprep.subr.mxu0 0.0
    %633 = vmatpush1.msra.mxu0 0.0
    %634 = vmatprep.subr.mxu0 0.0
    %635 = vmatpush1.msra.mxu0 0.0
    %636 = vmatprep.subr.mxu0 0.0
    %637 = vmatpush1.msra.mxu0 0.0
    %638 = vmatprep.subr.mxu0 0.0
    %639 = vmatpush1.msra.mxu0 0.0
    %640 = vmatprep.subr.mxu0 0.0
    %641 = vmatpush1.msra.mxu0 0.0
    %642 = vmatprep.mubr.f32.mxu0 0.0
    %643 = vmatmul.mubr.f32.gmra.mrb[0].mxu0 %v487
    %v644 = vpop.f32.mrb[0].mxu0
    %v645 = vadd.f32 %v576, %v644
    %v646 = vpop.f32.mrb[0].mxu0
    %647 = vmatprep.mubr.f32.mxu0 0.0
    %648 = vmatmul.mubr.f32.gmra.mrb[0].mxu0 %v490
    %v649 = vpop.f32.mrb[0].mxu0
    %v650 = vadd.f32 %v576, %v649
    %v651 = vpop.f32.mrb[0].mxu0
    %652 = vdwg.mxu0
    %v653 = vld [vmem:[%s21] sm:$0xff]
    %v654 = vld [vmem:[%s21 + $0x8] sm:$0xff]
    %v655 = vld [vmem:[%s21 + $0x10] sm:$0xff]
    %v656 = vld [vmem:[%s21 + $0x18] sm:$0xff]
    %v657 = vld [vmem:[%s23] sm:$0x1]
    %v659 = vlaneseq
    %v660 = vshrl.u32 %v659, 7
    %v661 = vsub.s32 0, %v660
    %v662 = vrot.slane %v657, %v661
    %664 = vmatprep.subr.mxu0 0.0
    %665 = vmatpush1.msra.mxu0 %v653
    %666 = vmatprep.subr.mxu0 0.0
    %667 = vmatpush1.msra.mxu0 %v654
    %668 = vmatprep.subr.mxu0 0.0
    %669 = vmatpush1.msra.mxu0 %v655
    %670 = vmatprep.subr.mxu0 0.0
    %671 = vmatpush1.msra.mxu0 %v656
    %672 = vmatprep.subr.mxu0 0.0
    %673 = vmatpush1.msra.mxu0 0.0
    %674 = vmatprep.subr.mxu0 0.0
    %675 = vmatpush1.msra.mxu0 0.0
    %676 = vmatprep.subr.mxu0 0.0
    %677 = vmatpush1.msra.mxu0 0.0
    %678 = vmatprep.subr.mxu0 0.0
    %679 = vmatpush1.msra.mxu0 0.0
    %680 = vmatprep.subr.mxu0 0.0
    %681 = vmatpush1.msra.mxu0 0.0
    %682 = vmatprep.subr.mxu0 0.0
    %683 = vmatpush1.msra.mxu0 0.0
    %684 = vmatprep.subr.mxu0 0.0
    %685 = vmatpush1.msra.mxu0 0.0
    %686 = vmatprep.subr.mxu0 0.0
    %687 = vmatpush1.msra.mxu0 0.0
    %688 = vmatprep.subr.mxu0 0.0
    %689 = vmatpush1.msra.mxu0 0.0
    %690 = vmatprep.subr.mxu0 0.0
    %691 = vmatpush1.msra.mxu0 0.0
    %692 = vmatprep.subr.mxu0 0.0
    %693 = vmatpush1.msra.mxu0 0.0
    %694 = vmatprep.subr.mxu0 0.0
    %695 = vmatpush1.msra.mxu0 0.0
    %696 = vmatprep.subr.mxu0 0.0
    %697 = vmatpush1.msra.mxu0 0.0
    %698 = vmatprep.subr.mxu0 0.0
    %699 = vmatpush1.msra.mxu0 0.0
    %700 = vmatprep.subr.mxu0 0.0
    %701 = vmatpush1.msra.mxu0 0.0
    %702 = vmatprep.subr.mxu0 0.0
    %703 = vmatpush1.msra.mxu0 0.0
    %704 = vmatprep.subr.mxu0 0.0
    %705 = vmatpush1.msra.mxu0 0.0
    %706 = vmatprep.subr.mxu0 0.0
    %707 = vmatpush1.msra.mxu0 0.0
    %708 = vmatprep.subr.mxu0 0.0
    %709 = vmatpush1.msra.mxu0 0.0
    %710 = vmatprep.subr.mxu0 0.0
    %711 = vmatpush1.msra.mxu0 0.0
    %712 = vmatprep.subr.mxu0 0.0
    %713 = vmatpush1.msra.mxu0 0.0
    %714 = vmatprep.subr.mxu0 0.0
    %715 = vmatpush1.msra.mxu0 0.0
    %716 = vmatprep.subr.mxu0 0.0
    %717 = vmatpush1.msra.mxu0 0.0
    %718 = vmatprep.subr.mxu0 0.0
    %719 = vmatpush1.msra.mxu0 0.0
    %720 = vmatprep.subr.mxu0 0.0
    %721 = vmatpush1.msra.mxu0 0.0
    %722 = vmatprep.subr.mxu0 0.0
    %723 = vmatpush1.msra.mxu0 0.0
    %724 = vmatprep.subr.mxu0 0.0
    %725 = vmatpush1.msra.mxu0 0.0
    %726 = vmatprep.subr.mxu0 0.0
    %727 = vmatpush1.msra.mxu0 0.0
    %728 = vmatprep.mubr.f32.mxu0 0.0
    %729 = vmatmul.mubr.f32.gmra.mrb[0].mxu0 %v487
    %v730 = vpop.f32.mrb[0].mxu0
    %v731 = vadd.f32 %v662, %v730
    %v732 = vpop.f32.mrb[0].mxu0
    %733 = vmatprep.mubr.f32.mxu0 0.0
    %734 = vmatmul.mubr.f32.gmra.mrb[0].mxu0 %v490
    %v735 = vpop.f32.mrb[0].mxu0
    %v736 = vadd.f32 %v662, %v735
    %v737 = vpop.f32.mrb[0].mxu0
    %738 = vdwg.mxu0
    %v739 = vld [vmem:[%s25] sm:$0xff]
    %v740 = vld [vmem:[%s25 + $0x8] sm:$0xff]
    %v741 = vld [vmem:[%s25 + $0x10] sm:$0xff]
    %v742 = vld [vmem:[%s25 + $0x18] sm:$0xff]
    %vm743 = vcmask 64512
    %v745 = vsel %vm743, %v559, 0
    %v748 = vsel %vm743, %v645, 0
    %750 = vmatprep.subr.mxu0 0.0
    %751 = vmatpush1.xpose.msra.mxu0 %v748
    %752 = vmatprep.subr.mxu0 0.0
    %753 = vmatpush1.xpose.msra.mxu0 0.0
    %754 = vmatprep.subr.mxu0 0.0
    %755 = vmatpush1.xpose.msra.mxu0 0.0
    %756 = vmatprep.subr.mxu0 0.0
    %757 = vmatpush1.xpose.msra.mxu0 0.0
    %758 = vmatprep.subr.mxu0 0.0
    %759 = vmatpush1.xpose.msra.mxu0 0.0
    %760 = vmatprep.subr.mxu0 0.0
    %761 = vmatpush1.xpose.msra.mxu0 0.0
    %762 = vmatprep.subr.mxu0 0.0
    %763 = vmatpush1.xpose.msra.mxu0 0.0
    %764 = vmatprep.subr.mxu0 0.0
    %765 = vmatpush1.xpose.msra.mxu0 0.0
    %766 = vmatprep.subr.mxu0 0.0
    %767 = vmatpush1.xpose.msra.mxu0 0.0
    %768 = vmatprep.subr.mxu0 0.0
    %769 = vmatpush1.xpose.msra.mxu0 0.0
    %770 = vmatprep.subr.mxu0 0.0
    %771 = vmatpush1.xpose.msra.mxu0 0.0
    %772 = vmatprep.subr.mxu0 0.0
    %773 = vmatpush1.xpose.msra.mxu0 0.0
    %774 = vmatprep.subr.mxu0 0.0
    %775 = vmatpush1.xpose.msra.mxu0 0.0
    %776 = vmatprep.subr.mxu0 0.0
    %777 = vmatpush1.xpose.msra.mxu0 0.0
    %778 = vmatprep.subr.mxu0 0.0
    %779 = vmatpush1.xpose.msra.mxu0 0.0
    %780 = vmatprep.subr.mxu0 0.0
    %781 = vmatpush1.xpose.msra.mxu0 0.0
    %782 = vmatprep.subr.mxu0 0.0
    %783 = vmatpush1.xpose.msra.mxu0 0.0
    %784 = vmatprep.subr.mxu0 0.0
    %785 = vmatpush1.xpose.msra.mxu0 0.0
    %786 = vmatprep.subr.mxu0 0.0
    %787 = vmatpush1.xpose.msra.mxu0 0.0
    %788 = vmatprep.subr.mxu0 0.0
    %789 = vmatpush1.xpose.msra.mxu0 0.0
    %790 = vmatprep.subr.mxu0 0.0
    %791 = vmatpush1.xpose.msra.mxu0 0.0
    %792 = vmatprep.subr.mxu0 0.0
    %793 = vmatpush1.xpose.msra.mxu0 0.0
    %794 = vmatprep.subr.mxu0 0.0
    %795 = vmatpush1.xpose.msra.mxu0 0.0
    %796 = vmatprep.subr.mxu0 0.0
    %797 = vmatpush1.xpose.msra.mxu0 0.0
    %798 = vmatprep.subr.mxu0 0.0
    %799 = vmatpush1.xpose.msra.mxu0 0.0
    %800 = vmatprep.subr.mxu0 0.0
    %801 = vmatpush1.xpose.msra.mxu0 0.0
    %802 = vmatprep.subr.mxu0 0.0
    %803 = vmatpush1.xpose.msra.mxu0 0.0
    %804 = vmatprep.subr.mxu0 0.0
    %805 = vmatpush1.xpose.msra.mxu0 0.0
    %806 = vmatprep.subr.mxu0 0.0
    %807 = vmatpush1.xpose.msra.mxu0 0.0
    %808 = vmatprep.subr.mxu0 0.0
    %809 = vmatpush1.xpose.msra.mxu0 0.0
    %810 = vmatprep.subr.mxu0 0.0
    %811 = vmatpush1.xpose.msra.mxu0 0.0
    %812 = vmatprep.subr.mxu0 0.0
    %813 = vmatpush1.xpose.msra.mxu0 0.0
    %814 = vmatprep.mubr.f32.mxu0 0.0
    %815 = vmatmul.mubr.f32.gmra.mrb[0].mxu0 %v745
    %v816 = vpop.f32.mrb[0].mxu0
    %v817 = vadd.f32 0.0, %v816
    %v818 = vpop.f32.mrb[0].mxu0
    %819 = vdwg.mxu0
    %v820 = vmul.f32 %v817, 0.35355338
    %v821 = vsel %vm743, %v820, -inf
    %822 = vmax.xlane.f32.xlu0 %v821
    %v823 = vpop.xlane.xlu0 %822
    %v824 = vsub.f32 %v820, %v823
    %v825 = vmul.f32 %v824, 1.442695
    %v826 = vpow.pop %v825
    %v827 = vsel %vm743, %v826, 0.0
    %828 = vadd.xlane.f32.xlu0 %v827
    %v829 = vpop.xlane.xlu0 %828
    %v830 = vrcp.pop %v829
    %v831 = vmul.f32 %v826, %v830
    %v833 = vsel %vm743, %v831, 0
    %835 = vmatprep.subr.mxu0 0.0
    %836 = vmatpush1.msra.mxu0 %v731
    %837 = vmatprep.subr.mxu0 0.0
    %838 = vmatpush1.msra.mxu0 0.0
    %839 = vmatprep.subr.mxu0 0.0
    %840 = vmatpush1.msra.mxu0 0.0
    %841 = vmatprep.subr.mxu0 0.0
    %842 = vmatpush1.msra.mxu0 0.0
    %843 = vmatprep.subr.mxu0 0.0
    %844 = vmatpush1.msra.mxu0 0.0
    %845 = vmatprep.subr.mxu0 0.0
    %846 = vmatpush1.msra.mxu0 0.0
    %847 = vmatprep.subr.mxu0 0.0
    %848 = vmatpush1.msra.mxu0 0.0
    %849 = vmatprep.subr.mxu0 0.0
    %850 = vmatpush1.msra.mxu0 0.0
    %851 = vmatprep.subr.mxu0 0.0
    %852 = vmatpush1.msra.mxu0 0.0
    %853 = vmatprep.subr.mxu0 0.0
    %854 = vmatpush1.msra.mxu0 0.0
    %855 = vmatprep.subr.mxu0 0.0
    %856 = vmatpush1.msra.mxu0 0.0
    %857 = vmatprep.subr.mxu0 0.0
    %858 = vmatpush1.msra.mxu0 0.0
    %859 = vmatprep.subr.mxu0 0.0
    %860 = vmatpush1.msra.mxu0 0.0
    %861 = vmatprep.subr.mxu0 0.0
    %862 = vmatpush1.msra.mxu0 0.0
    %863 = vmatprep.subr.mxu0 0.0
    %864 = vmatpush1.msra.mxu0 0.0
    %865 = vmatprep.subr.mxu0 0.0
    %866 = vmatpush1.msra.mxu0 0.0
    %867 = vmatprep.subr.mxu0 0.0
    %868 = vmatpush1.msra.mxu0 0.0
    %869 = vmatprep.subr.mxu0 0.0
    %870 = vmatpush1.msra.mxu0 0.0
    %871 = vmatprep.subr.mxu0 0.0
    %872 = vmatpush1.msra.mxu0 0.0
    %873 = vmatprep.subr.mxu0 0.0
    %874 = vmatpush1.msra.mxu0 0.0
    %875 = vmatprep.subr.mxu0 0.0
    %876 = vmatpush1.msra.mxu0 0.0
    %877 = vmatprep.subr.mxu0 0.0
    %878 = vmatpush1.msra.mxu0 0.0
    %879 = vmatprep.subr.mxu0 0.0
    %880 = vmatpush1.msra.mxu0 0.0
    %881 = vmatprep.subr.mxu0 0.0
    %882 = vmatpush1.msra.mxu0 0.0
    %883 = vmatprep.subr.mxu0 0.0
    %884 = vmatpush1.msra.mxu0 0.0
    %885 = vmatprep.subr.mxu0 0.0
    %886 = vmatpush1.msra.mxu0 0.0
    %887 = vmatprep.subr.mxu0 0.0
    %888 = vmatpush1.msra.mxu0 0.0
    %889 = vmatprep.subr.mxu0 0.0
    %890 = vmatpush1.msra.mxu0 0.0
    %891 = vmatprep.subr.mxu0 0.0
    %892 = vmatpush1.msra.mxu0 0.0
    %893 = vmatprep.subr.mxu0 0.0
    %894 = vmatpush1.msra.mxu0 0.0
    %895 = vmatprep.subr.mxu0 0.0
    %896 = vmatpush1.msra.mxu0 0.0
    %897 = vmatprep.subr.mxu0 0.0
    %898 = vmatpush1.msra.mxu0 0.0
    %899 = vmatprep.mubr.f32.mxu0 0.0
    %900 = vmatmul.mubr.f32.gmra.mrb[0].mxu0 %v833
    %v901 = vpop.f32.mrb[0].mxu0
    %v902 = vadd.f32 0.0, %v901
    %v903 = vpop.f32.mrb[0].mxu0
    %904 = vdwg.mxu0
    %v906 = vsel %vm743, %v564, 0
    %v909 = vsel %vm743, %v650, 0
    %911 = vmatprep.subr.mxu0 0.0
    %912 = vmatpush1.xpose.msra.mxu0 %v909
    %913 = vmatprep.subr.mxu0 0.0
    %914 = vmatpush1.xpose.msra.mxu0 0.0
    %915 = vmatprep.subr.mxu0 0.0
    %916 = vmatpush1.xpose.msra.mxu0 0.0
    %917 = vmatprep.subr.mxu0 0.0
    %918 = vmatpush1.xpose.msra.mxu0 0.0
    %919 = vmatprep.subr.mxu0 0.0
    %920 = vmatpush1.xpose.msra.mxu0 0.0
    %921 = vmatprep.subr.mxu0 0.0
    %922 = vmatpush1.xpose.msra.mxu0 0.0
    %923 = vmatprep.subr.mxu0 0.0
    %924 = vmatpush1.xpose.msra.mxu0 0.0
    %925 = vmatprep.subr.mxu0 0.0
    %926 = vmatpush1.xpose.msra.mxu0 0.0
    %927 = vmatprep.subr.mxu0 0.0
    %928 = vmatpush1.xpose.msra.mxu0 0.0
    %929 = vmatprep.subr.mxu0 0.0
    %930 = vmatpush1.xpose.msra.mxu0 0.0
    %931 = vmatprep.subr.mxu0 0.0
    %932 = vmatpush1.xpose.msra.mxu0 0.0
    %933 = vmatprep.subr.mxu0 0.0
    %934 = vmatpush1.xpose.msra.mxu0 0.0
    %935 = vmatprep.subr.mxu0 0.0
    %936 = vmatpush1.xpose.msra.mxu0 0.0
    %937 = vmatprep.subr.mxu0 0.0
    %938 = vmatpush1.xpose.msra.mxu0 0.0
    %939 = vmatprep.subr.mxu0 0.0
    %940 = vmatpush1.xpose.msra.mxu0 0.0
    %941 = vmatprep.subr.mxu0 0.0
    %942 = vmatpush1.xpose.msra.mxu0 0.0
    %943 = vmatprep.subr.mxu0 0.0
    %944 = vmatpush1.xpose.msra.mxu0 0.0
    %945 = vmatprep.subr.mxu0 0.0
    %946 = vmatpush1.xpose.msra.mxu0 0.0
    %947 = vmatprep.subr.mxu0 0.0
    %948 = vmatpush1.xpose.msra.mxu0 0.0
    %949 = vmatprep.subr.mxu0 0.0
    %950 = vmatpush1.xpose.msra.mxu0 0.0
    %951 = vmatprep.subr.mxu0 0.0
    %952 = vmatpush1.xpose.msra.mxu0 0.0
    %953 = vmatprep.subr.mxu0 0.0
    %954 = vmatpush1.xpose.msra.mxu0 0.0
    %955 = vmatprep.subr.mxu0 0.0
    %956 = vmatpush1.xpose.msra.mxu0 0.0
    %957 = vmatprep.subr.mxu0 0.0
    %958 = vmatpush1.xpose.msra.mxu0 0.0
    %959 = vmatprep.subr.mxu0 0.0
    %960 = vmatpush1.xpose.msra.mxu0 0.0
    %961 = vmatprep.subr.mxu0 0.0
    %962 = vmatpush1.xpose.msra.mxu0 0.0
    %963 = vmatprep.subr.mxu0 0.0
    %964 = vmatpush1.xpose.msra.mxu0 0.0
    %965 = vmatprep.subr.mxu0 0.0
    %966 = vmatpush1.xpose.msra.mxu0 0.0
    %967 = vmatprep.subr.mxu0 0.0
    %968 = vmatpush1.xpose.msra.mxu0 0.0
    %969 = vmatprep.subr.mxu0 0.0
    %970 = vmatpush1.xpose.msra.mxu0 0.0
    %971 = vmatprep.subr.mxu0 0.0
    %972 = vmatpush1.xpose.msra.mxu0 0.0
    %973 = vmatprep.subr.mxu0 0.0
    %974 = vmatpush1.xpose.msra.mxu0 0.0
    %975 = vmatprep.mubr.f32.mxu0 0.0
    %976 = vmatmul.mubr.f32.gmra.mrb[0].mxu0 %v906
    %v977 = vpop.f32.mrb[0].mxu0
    %v978 = vadd.f32 0.0, %v977
    %v979 = vpop.f32.mrb[0].mxu0
    %980 = vdwg.mxu0
    %v981 = vmul.f32 %v978, 0.35355338
    %v982 = vsel %vm743, %v981, -inf
    %983 = vmax.xlane.f32.xlu0 %v982
    %v984 = vpop.xlane.xlu0 %983
    %v985 = vsub.f32 %v981, %v984
    %v986 = vmul.f32 %v985, 1.442695
    %v987 = vpow.pop %v986
    %v988 = vsel %vm743, %v987, 0.0
    %989 = vadd.xlane.f32.xlu0 %v988
    %v990 = vpop.xlane.xlu0 %989
    %v991 = vrcp.pop %v990
    %v992 = vmul.f32 %v987, %v991
    %v994 = vsel %vm743, %v992, 0
    %996 = vmatprep.subr.mxu0 0.0
    %997 = vmatpush1.msra.mxu0 %v736
    %998 = vmatprep.subr.mxu0 0.0
    %999 = vmatpush1.msra.mxu0 0.0
    %1000 = vmatprep.subr.mxu0 0.0
    %1001 = vmatpush1.msra.mxu0 0.0
    %1002 = vmatprep.subr.mxu0 0.0
    %1003 = vmatpush1.msra.mxu0 0.0
    %1004 = vmatprep.subr.mxu0 0.0
    %1005 = vmatpush1.msra.mxu0 0.0
    %1006 = vmatprep.subr.mxu0 0.0
    %1007 = vmatpush1.msra.mxu0 0.0
    %1008 = vmatprep.subr.mxu0 0.0
    %1009 = vmatpush1.msra.mxu0 0.0
    %1010 = vmatprep.subr.mxu0 0.0
    %1011 = vmatpush1.msra.mxu0 0.0
    %1012 = vmatprep.subr.mxu0 0.0
    %1013 = vmatpush1.msra.mxu0 0.0
    %1014 = vmatprep.subr.mxu0 0.0
    %1015 = vmatpush1.msra.mxu0 0.0
    %1016 = vmatprep.subr.mxu0 0.0
    %1017 = vmatpush1.msra.mxu0 0.0
    %1018 = vmatprep.subr.mxu0 0.0
    %1019 = vmatpush1.msra.mxu0 0.0
    %1020 = vmatprep.subr.mxu0 0.0
    %1021 = vmatpush1.msra.mxu0 0.0
    %1022 = vmatprep.subr.mxu0 0.0
    %1023 = vmatpush1.msra.mxu0 0.0
    %1024 = vmatprep.subr.mxu0 0.0
    %1025 = vmatpush1.msra.mxu0 0.0
    %1026 = vmatprep.subr.mxu0 0.0
    %1027 = vmatpush1.msra.mxu0 0.0
    %1028 = vmatprep.subr.mxu0 0.0
    %1029 = vmatpush1.msra.mxu0 0.0
    %1030 = vmatprep.subr.mxu0 0.0
    %1031 = vmatpush1.msra.mxu0 0.0
    %1032 = vmatprep.subr.mxu0 0.0
    %1033 = vmatpush1.msra.mxu0 0.0
    %1034 = vmatprep.subr.mxu0 0.0
    %1035 = vmatpush1.msra.mxu0 0.0
    %1036 = vmatprep.subr.mxu0 0.0
    %1037 = vmatpush1.msra.mxu0 0.0
    %1038 = vmatprep.subr.mxu0 0.0
    %1039 = vmatpush1.msra.mxu0 0.0
    %1040 = vmatprep.subr.mxu0 0.0
    %1041 = vmatpush1.msra.mxu0 0.0
    %1042 = vmatprep.subr.mxu0 0.0
    %1043 = vmatpush1.msra.mxu0 0.0
    %1044 = vmatprep.subr.mxu0 0.0
    %1045 = vmatpush1.msra.mxu0 0.0
    %1046 = vmatprep.subr.mxu0 0.0
    %1047 = vmatpush1.msra.mxu0 0.0
    %1048 = vmatprep.subr.mxu0 0.0
    %1049 = vmatpush1.msra.mxu0 0.0
    %1050 = vmatprep.subr.mxu0 0.0
    %1051 = vmatpush1.msra.mxu0 0.0
    %1052 = vmatprep.subr.mxu0 0.0
    %1053 = vmatpush1.msra.mxu0 0.0
    %1054 = vmatprep.subr.mxu0 0.0
    %1055 = vmatpush1.msra.mxu0 0.0
    %1056 = vmatprep.subr.mxu0 0.0
    %1057 = vmatpush1.msra.mxu0 0.0
    %1058 = vmatprep.subr.mxu0 0.0
    %1059 = vmatpush1.msra.mxu0 0.0
    %1060 = vmatprep.mubr.f32.mxu0 0.0
    %1061 = vmatmul.mubr.f32.gmra.mrb[0].mxu0 %v994
    %v1062 = vpop.f32.mrb[0].mxu0
    %v1063 = vadd.f32 0.0, %v1062
    %v1064 = vpop.f32.mrb[0].mxu0
    %1065 = vdwg.mxu0
    %1066 = vrot.lane.b32.xlu0 %v559, 120
    %v1067 = vpop.permute.xlu0 %1066
    %1068 = vrot.lane.b32.xlu0 %v645, 120
    %v1069 = vpop.permute.xlu0 %1068
    %v1070 = vsel %vm743, %v1067, 0
    %v1072 = vsel %vm743, %v1069, 0
    %1074 = vmatprep.subr.mxu0 0.0
    %1075 = vmatpush1.xpose.msra.mxu0 %v1072
    %1076 = vmatprep.subr.mxu0 0.0
    %1077 = vmatpush1.xpose.msra.mxu0 0.0
    %1078 = vmatprep.subr.mxu0 0.0
    %1079 = vmatpush1.xpose.msra.mxu0 0.0
    %1080 = vmatprep.subr.mxu0 0.0
    %1081 = vmatpush1.xpose.msra.mxu0 0.0
    %1082 = vmatprep.subr.mxu0 0.0
    %1083 = vmatpush1.xpose.msra.mxu0 0.0
    %1084 = vmatprep.subr.mxu0 0.0
    %1085 = vmatpush1.xpose.msra.mxu0 0.0
    %1086 = vmatprep.subr.mxu0 0.0
    %1087 = vmatpush1.xpose.msra.mxu0 0.0
    %1088 = vmatprep.subr.mxu0 0.0
    %1089 = vmatpush1.xpose.msra.mxu0 0.0
    %1090 = vmatprep.subr.mxu0 0.0
    %1091 = vmatpush1.xpose.msra.mxu0 0.0
    %1092 = vmatprep.subr.mxu0 0.0
    %1093 = vmatpush1.xpose.msra.mxu0 0.0
    %1094 = vmatprep.subr.mxu0 0.0
    %1095 = vmatpush1.xpose.msra.mxu0 0.0
    %1096 = vmatprep.subr.mxu0 0.0
    %1097 = vmatpush1.xpose.msra.mxu0 0.0
    %1098 = vmatprep.subr.mxu0 0.0
    %1099 = vmatpush1.xpose.msra.mxu0 0.0
    %1100 = vmatprep.subr.mxu0 0.0
    %1101 = vmatpush1.xpose.msra.mxu0 0.0
    %1102 = vmatprep.subr.mxu0 0.0
    %1103 = vmatpush1.xpose.msra.mxu0 0.0
    %1104 = vmatprep.subr.mxu0 0.0
    %1105 = vmatpush1.xpose.msra.mxu0 0.0
    %1106 = vmatprep.subr.mxu0 0.0
    %1107 = vmatpush1.xpose.msra.mxu0 0.0
    %1108 = vmatprep.subr.mxu0 0.0
    %1109 = vmatpush1.xpose.msra.mxu0 0.0
    %1110 = vmatprep.subr.mxu0 0.0
    %1111 = vmatpush1.xpose.msra.mxu0 0.0
    %1112 = vmatprep.subr.mxu0 0.0
    %1113 = vmatpush1.xpose.msra.mxu0 0.0
    %1114 = vmatprep.subr.mxu0 0.0
    %1115 = vmatpush1.xpose.msra.mxu0 0.0
    %1116 = vmatprep.subr.mxu0 0.0
    %1117 = vmatpush1.xpose.msra.mxu0 0.0
    %1118 = vmatprep.subr.mxu0 0.0
    %1119 = vmatpush1.xpose.msra.mxu0 0.0
    %1120 = vmatprep.subr.mxu0 0.0
    %1121 = vmatpush1.xpose.msra.mxu0 0.0
    %1122 = vmatprep.subr.mxu0 0.0
    %1123 = vmatpush1.xpose.msra.mxu0 0.0
    %1124 = vmatprep.subr.mxu0 0.0
    %1125 = vmatpush1.xpose.msra.mxu0 0.0
    %1126 = vmatprep.subr.mxu0 0.0
    %1127 = vmatpush1.xpose.msra.mxu0 0.0
    %1128 = vmatprep.subr.mxu0 0.0
    %1129 = vmatpush1.xpose.msra.mxu0 0.0
    %1130 = vmatprep.subr.mxu0 0.0
    %1131 = vmatpush1.xpose.msra.mxu0 0.0
    %1132 = vmatprep.subr.mxu0 0.0
    %1133 = vmatpush1.xpose.msra.mxu0 0.0
    %1134 = vmatprep.subr.mxu0 0.0
    %1135 = vmatpush1.xpose.msra.mxu0 0.0
    %1136 = vmatprep.subr.mxu0 0.0
    %1137 = vmatpush1.xpose.msra.mxu0 0.0
    %1138 = vmatprep.mubr.f32.mxu0 0.0
    %1139 = vmatmul.mubr.f32.gmra.mrb[0].mxu0 %v1070
    %v1140 = vpop.f32.mrb[0].mxu0
    %v1141 = vadd.f32 0.0, %v1140
    %v1142 = vpop.f32.mrb[0].mxu0
    %1143 = vdwg.mxu0
    %v1144 = vmul.f32 %v1141, 0.35355338
    %v1145 = vsel %vm743, %v1144, -inf
    %1146 = vmax.xlane.f32.xlu0 %v1145
    %v1147 = vpop.xlane.xlu0 %1146
    %v1148 = vsub.f32 %v1144, %v1147
    %v1149 = vmul.f32 %v1148, 1.442695
    %v1150 = vpow.pop %v1149
    %v1151 = vsel %vm743, %v1150, 0.0
    %1152 = vadd.xlane.f32.xlu0 %v1151
    %v1153 = vpop.xlane.xlu0 %1152
    %v1154 = vrcp.pop %v1153
    %v1155 = vmul.f32 %v1150, %v1154
    %1157 = vrot.lane.b32.xlu0 %v731, 120
    %v1158 = vpop.permute.xlu0 %1157
    %v1161 = vsel %vm743, %v1155, 0
    %1163 = vmatprep.subr.mxu0 0.0
    %1164 = vmatpush1.msra.mxu0 %v1158
    %1165 = vmatprep.subr.mxu0 0.0
    %1166 = vmatpush1.msra.mxu0 0.0
    %1167 = vmatprep.subr.mxu0 0.0
    %1168 = vmatpush1.msra.mxu0 0.0
    %1169 = vmatprep.subr.mxu0 0.0
    %1170 = vmatpush1.msra.mxu0 0.0
    %1171 = vmatprep.subr.mxu0 0.0
    %1172 = vmatpush1.msra.mxu0 0.0
    %1173 = vmatprep.subr.mxu0 0.0
    %1174 = vmatpush1.msra.mxu0 0.0
    %1175 = vmatprep.subr.mxu0 0.0
    %1176 = vmatpush1.msra.mxu0 0.0
    %1177 = vmatprep.subr.mxu0 0.0
    %1178 = vmatpush1.msra.mxu0 0.0
    %1179 = vmatprep.subr.mxu0 0.0
    %1180 = vmatpush1.msra.mxu0 0.0
    %1181 = vmatprep.subr.mxu0 0.0
    %1182 = vmatpush1.msra.mxu0 0.0
    %1183 = vmatprep.subr.mxu0 0.0
    %1184 = vmatpush1.msra.mxu0 0.0
    %1185 = vmatprep.subr.mxu0 0.0
    %1186 = vmatpush1.msra.mxu0 0.0
    %1187 = vmatprep.subr.mxu0 0.0
    %1188 = vmatpush1.msra.mxu0 0.0
    %1189 = vmatprep.subr.mxu0 0.0
    %1190 = vmatpush1.msra.mxu0 0.0
    %1191 = vmatprep.subr.mxu0 0.0
    %1192 = vmatpush1.msra.mxu0 0.0
    %1193 = vmatprep.subr.mxu0 0.0
    %1194 = vmatpush1.msra.mxu0 0.0
    %1195 = vmatprep.subr.mxu0 0.0
    %1196 = vmatpush1.msra.mxu0 0.0
    %1197 = vmatprep.subr.mxu0 0.0
    %1198 = vmatpush1.msra.mxu0 0.0
    %1199 = vmatprep.subr.mxu0 0.0
    %1200 = vmatpush1.msra.mxu0 0.0
    %1201 = vmatprep.subr.mxu0 0.0
    %1202 = vmatpush1.msra.mxu0 0.0
    %1203 = vmatprep.subr.mxu0 0.0
    %1204 = vmatpush1.msra.mxu0 0.0
    %1205 = vmatprep.subr.mxu0 0.0
    %1206 = vmatpush1.msra.mxu0 0.0
    %1207 = vmatprep.subr.mxu0 0.0
    %1208 = vmatpush1.msra.mxu0 0.0
    %1209 = vmatprep.subr.mxu0 0.0
    %1210 = vmatpush1.msra.mxu0 0.0
    %1211 = vmatprep.subr.mxu0 0.0
    %1212 = vmatpush1.msra.mxu0 0.0
    %1213 = vmatprep.subr.mxu0 0.0
    %1214 = vmatpush1.msra.mxu0 0.0
    %1215 = vmatprep.subr.mxu0 0.0
    %1216 = vmatpush1.msra.mxu0 0.0
    %1217 = vmatprep.subr.mxu0 0.0
    %1218 = vmatpush1.msra.mxu0 0.0
    %1219 = vmatprep.subr.mxu0 0.0
    %1220 = vmatpush1.msra.mxu0 0.0
    %1221 = vmatprep.subr.mxu0 0.0
    %1222 = vmatpush1.msra.mxu0 0.0
    %1223 = vmatprep.subr.mxu0 0.0
    %1224 = vmatpush1.msra.mxu0 0.0
    %1225 = vmatprep.subr.mxu0 0.0
    %1226 = vmatpush1.msra.mxu0 0.0
    %1227 = vmatprep.mubr.f32.mxu0 0.0
    %1228 = vmatmul.mubr.f32.gmra.mrb[0].mxu0 %v1161
    %v1229 = vpop.f32.mrb[0].mxu0
    %v1230 = vadd.f32 0.0, %v1229
    %v1231 = vpop.f32.mrb[0].mxu0
    %1232 = vdwg.mxu0
    %1233 = vrot.lane.b32.xlu0 %v564, 120
    %v1234 = vpop.permute.xlu0 %1233
    %1235 = vrot.lane.b32.xlu0 %v650, 120
    %v1236 = vpop.permute.xlu0 %1235
    %v1237 = vsel %vm743, %v1234, 0
    %v1239 = vsel %vm743, %v1236, 0
    %1241 = vmatprep.subr.mxu0 0.0
    %1242 = vmatpush1.xpose.msra.mxu0 %v1239
    %1243 = vmatprep.subr.mxu0 0.0
    %1244 = vmatpush1.xpose.msra.mxu0 0.0
    %1245 = vmatprep.subr.mxu0 0.0
    %1246 = vmatpush1.xpose.msra.mxu0 0.0
    %1247 = vmatprep.subr.mxu0 0.0
    %1248 = vmatpush1.xpose.msra.mxu0 0.0
    %1249 = vmatprep.subr.mxu0 0.0
    %1250 = vmatpush1.xpose.msra.mxu0 0.0
    %1251 = vmatprep.subr.mxu0 0.0
    %1252 = vmatpush1.xpose.msra.mxu0 0.0
    %1253 = vmatprep.subr.mxu0 0.0
    %1254 = vmatpush1.xpose.msra.mxu0 0.0
    %1255 = vmatprep.subr.mxu0 0.0
    %1256 = vmatpush1.xpose.msra.mxu0 0.0
    %1257 = vmatprep.subr.mxu0 0.0
    %1258 = vmatpush1.xpose.msra.mxu0 0.0
    %1259 = vmatprep.subr.mxu0 0.0
    %1260 = vmatpush1.xpose.msra.mxu0 0.0
    %1261 = vmatprep.subr.mxu0 0.0
    %1262 = vmatpush1.xpose.msra.mxu0 0.0
    %1263 = vmatprep.subr.mxu0 0.0
    %1264 = vmatpush1.xpose.msra.mxu0 0.0
    %1265 = vmatprep.subr.mxu0 0.0
    %1266 = vmatpush1.xpose.msra.mxu0 0.0
    %1267 = vmatprep.subr.mxu0 0.0
    %1268 = vmatpush1.xpose.msra.mxu0 0.0
    %1269 = vmatprep.subr.mxu0 0.0
    %1270 = vmatpush1.xpose.msra.mxu0 0.0
    %1271 = vmatprep.subr.mxu0 0.0
    %1272 = vmatpush1.xpose.msra.mxu0 0.0
    %1273 = vmatprep.subr.mxu0 0.0
    %1274 = vmatpush1.xpose.msra.mxu0 0.0
    %1275 = vmatprep.subr.mxu0 0.0
    %1276 = vmatpush1.xpose.msra.mxu0 0.0
    %1277 = vmatprep.subr.mxu0 0.0
    %1278 = vmatpush1.xpose.msra.mxu0 0.0
    %1279 = vmatprep.subr.mxu0 0.0
    %1280 = vmatpush1.xpose.msra.mxu0 0.0
    %1281 = vmatprep.subr.mxu0 0.0
    %1282 = vmatpush1.xpose.msra.mxu0 0.0
    %1283 = vmatprep.subr.mxu0 0.0
    %1284 = vmatpush1.xpose.msra.mxu0 0.0
    %1285 = vmatprep.subr.mxu0 0.0
    %1286 = vmatpush1.xpose.msra.mxu0 0.0
    %1287 = vmatprep.subr.mxu0 0.0
    %1288 = vmatpush1.xpose.msra.mxu0 0.0
    %1289 = vmatprep.subr.mxu0 0.0
    %1290 = vmatpush1.xpose.msra.mxu0 0.0
    %1291 = vmatprep.subr.mxu0 0.0
    %1292 = vmatpush1.xpose.msra.mxu0 0.0
    %1293 = vmatprep.subr.mxu0 0.0
    %1294 = vmatpush1.xpose.msra.mxu0 0.0
    %1295 = vmatprep.subr.mxu0 0.0
    %1296 = vmatpush1.xpose.msra.mxu0 0.0
    %1297 = vmatprep.subr.mxu0 0.0
    %1298 = vmatpush1.xpose.msra.mxu0 0.0
    %1299 = vmatprep.subr.mxu0 0.0
    %1300 = vmatpush1.xpose.msra.mxu0 0.0
    %1301 = vmatprep.subr.mxu0 0.0
    %1302 = vmatpush1.xpose.msra.mxu0 0.0
    %1303 = vmatprep.subr.mxu0 0.0
    %1304 = vmatpush1.xpose.msra.mxu0 0.0
    %1305 = vmatprep.mubr.f32.mxu0 0.0
    %1306 = vmatmul.mubr.f32.gmra.mrb[0].mxu0 %v1237
    %v1307 = vpop.f32.mrb[0].mxu0
    %v1308 = vadd.f32 0.0, %v1307
    %v1309 = vpop.f32.mrb[0].mxu0
    %1310 = vdwg.mxu0
    %v1311 = vmul.f32 %v1308, 0.35355338
    %v1312 = vsel %vm743, %v1311, -inf
    %1313 = vmax.xlane.f32.xlu0 %v1312
    %v1314 = vpop.xlane.xlu0 %1313
    %v1315 = vsub.f32 %v1311, %v1314
    %v1316 = vmul.f32 %v1315, 1.442695
    %v1317 = vpow.pop %v1316
    %v1318 = vsel %vm743, %v1317, 0.0
    %1319 = vadd.xlane.f32.xlu0 %v1318
    %v1320 = vpop.xlane.xlu0 %1319
    %v1321 = vrcp.pop %v1320
    %v1322 = vmul.f32 %v1317, %v1321
    %1324 = vrot.lane.b32.xlu0 %v736, 120
    %v1325 = vpop.permute.xlu0 %1324
    %v1328 = vsel %vm743, %v1322, 0
    %1330 = vmatprep.subr.mxu0 0.0
    %1331 = vmatpush1.msra.mxu0 %v1325
    %1332 = vmatprep.subr.mxu0 0.0
    %1333 = vmatpush1.msra.mxu0 0.0
    %1334 = vmatprep.subr.mxu0 0.0
    %1335 = vmatpush1.msra.mxu0 0.0
    %1336 = vmatprep.subr.mxu0 0.0
    %1337 = vmatpush1.msra.mxu0 0.0
    %1338 = vmatprep.subr.mxu0 0.0
    %1339 = vmatpush1.msra.mxu0 0.0
    %1340 = vmatprep.subr.mxu0 0.0
    %1341 = vmatpush1.msra.mxu0 0.0
    %1342 = vmatprep.subr.mxu0 0.0
    %1343 = vmatpush1.msra.mxu0 0.0
    %1344 = vmatprep.subr.mxu0 0.0
    %1345 = vmatpush1.msra.mxu0 0.0
    %1346 = vmatprep.subr.mxu0 0.0
    %1347 = vmatpush1.msra.mxu0 0.0
    %1348 = vmatprep.subr.mxu0 0.0
    %1349 = vmatpush1.msra.mxu0 0.0
    %1350 = vmatprep.subr.mxu0 0.0
    %1351 = vmatpush1.msra.mxu0 0.0
    %1352 = vmatprep.subr.mxu0 0.0
    %1353 = vmatpush1.msra.mxu0 0.0
    %1354 = vmatprep.subr.mxu0 0.0
    %1355 = vmatpush1.msra.mxu0 0.0
    %1356 = vmatprep.subr.mxu0 0.0
    %1357 = vmatpush1.msra.mxu0 0.0
    %1358 = vmatprep.subr.mxu0 0.0
    %1359 = vmatpush1.msra.mxu0 0.0
    %1360 = vmatprep.subr.mxu0 0.0
    %1361 = vmatpush1.msra.mxu0 0.0
    %1362 = vmatprep.subr.mxu0 0.0
    %1363 = vmatpush1.msra.mxu0 0.0
    %1364 = vmatprep.subr.mxu0 0.0
    %1365 = vmatpush1.msra.mxu0 0.0
    %1366 = vmatprep.subr.mxu0 0.0
    %1367 = vmatpush1.msra.mxu0 0.0
    %1368 = vmatprep.subr.mxu0 0.0
    %1369 = vmatpush1.msra.mxu0 0.0
    %1370 = vmatprep.subr.mxu0 0.0
    %1371 = vmatpush1.msra.mxu0 0.0
    %1372 = vmatprep.subr.mxu0 0.0
    %1373 = vmatpush1.msra.mxu0 0.0
    %1374 = vmatprep.subr.mxu0 0.0
    %1375 = vmatpush1.msra.mxu0 0.0
    %1376 = vmatprep.subr.mxu0 0.0
    %1377 = vmatpush1.msra.mxu0 0.0
    %1378 = vmatprep.subr.mxu0 0.0
    %1379 = vmatpush1.msra.mxu0 0.0
    %1380 = vmatprep.subr.mxu0 0.0
    %1381 = vmatpush1.msra.mxu0 0.0
    %1382 = vmatprep.subr.mxu0 0.0
    %1383 = vmatpush1.msra.mxu0 0.0
    %1384 = vmatprep.subr.mxu0 0.0
    %1385 = vmatpush1.msra.mxu0 0.0
    %1386 = vmatprep.subr.mxu0 0.0
    %1387 = vmatpush1.msra.mxu0 0.0
    %1388 = vmatprep.subr.mxu0 0.0
    %1389 = vmatpush1.msra.mxu0 0.0
    %1390 = vmatprep.subr.mxu0 0.0
    %1391 = vmatpush1.msra.mxu0 0.0
    %1392 = vmatprep.subr.mxu0 0.0
    %1393 = vmatpush1.msra.mxu0 0.0
    %1394 = vmatprep.mubr.f32.mxu0 0.0
    %1395 = vmatmul.mubr.f32.gmra.mrb[0].mxu0 %v1328
    %v1396 = vpop.f32.mrb[0].mxu0
    %v1397 = vadd.f32 0.0, %v1396
    %v1398 = vpop.f32.mrb[0].mxu0
    %1399 = vdwg.mxu0
    %v1401 = vsel %vm743, %v1230, 0
    %v1404 = vsel %vm743, %v1397, 0
    %1406 = vmatprep.subr.mxu0 0.0
    %1407 = vmatpush1.msra.mxu0 %v740
    %1408 = vmatprep.subr.mxu0 0.0
    %1409 = vmatpush1.msra.mxu0 0.0
    %1410 = vmatprep.subr.mxu0 0.0
    %1411 = vmatpush1.msra.mxu0 0.0
    %1412 = vmatprep.subr.mxu0 0.0
    %1413 = vmatpush1.msra.mxu0 0.0
    %1414 = vmatprep.subr.mxu0 0.0
    %1415 = vmatpush1.msra.mxu0 0.0
    %1416 = vmatprep.subr.mxu0 0.0
    %1417 = vmatpush1.msra.mxu0 0.0
    %1418 = vmatprep.subr.mxu0 0.0
    %1419 = vmatpush1.msra.mxu0 0.0
    %1420 = vmatprep.subr.mxu0 0.0
    %1421 = vmatpush1.msra.mxu0 0.0
    %1422 = vmatprep.subr.mxu0 0.0
    %1423 = vmatpush1.msra.mxu0 0.0
    %1424 = vmatprep.subr.mxu0 0.0
    %1425 = vmatpush1.msra.mxu0 0.0
    %1426 = vmatprep.subr.mxu0 0.0
    %1427 = vmatpush1.msra.mxu0 0.0
    %1428 = vmatprep.subr.mxu0 0.0
    %1429 = vmatpush1.msra.mxu0 0.0
    %1430 = vmatprep.subr.mxu0 0.0
    %1431 = vmatpush1.msra.mxu0 0.0
    %1432 = vmatprep.subr.mxu0 0.0
    %1433 = vmatpush1.msra.mxu0 0.0
    %1434 = vmatprep.subr.mxu0 0.0
    %1435 = vmatpush1.msra.mxu0 0.0
    %1436 = vmatprep.subr.mxu0 0.0
    %1437 = vmatpush1.msra.mxu0 0.0
    %1438 = vmatprep.subr.mxu0 0.0
    %1439 = vmatpush1.msra.mxu0 0.0
    %1440 = vmatprep.subr.mxu0 0.0
    %1441 = vmatpush1.msra.mxu0 0.0
    %1442 = vmatprep.subr.mxu0 0.0
    %1443 = vmatpush1.msra.mxu0 0.0
    %1444 = vmatprep.subr.mxu0 0.0
    %1445 = vmatpush1.msra.mxu0 0.0
    %1446 = vmatprep.subr.mxu0 0.0
    %1447 = vmatpush1.msra.mxu0 0.0
    %1448 = vmatprep.subr.mxu0 0.0
    %1449 = vmatpush1.msra.mxu0 0.0
    %1450 = vmatprep.subr.mxu0 0.0
    %1451 = vmatpush1.msra.mxu0 0.0
    %1452 = vmatprep.subr.mxu0 0.0
    %1453 = vmatpush1.msra.mxu0 0.0
    %1454 = vmatprep.subr.mxu0 0.0
    %1455 = vmatpush1.msra.mxu0 0.0
    %1456 = vmatprep.subr.mxu0 0.0
    %1457 = vmatpush1.msra.mxu0 0.0
    %1458 = vmatprep.subr.mxu0 0.0
    %1459 = vmatpush1.msra.mxu0 0.0
    %1460 = vmatprep.subr.mxu0 0.0
    %1461 = vmatpush1.msra.mxu0 0.0
    %1462 = vmatprep.subr.mxu0 0.0
    %1463 = vmatpush1.msra.mxu0 0.0
    %1464 = vmatprep.subr.mxu0 0.0
    %1465 = vmatpush1.msra.mxu0 0.0
    %1466 = vmatprep.subr.mxu0 0.0
    %1467 = vmatpush1.msra.mxu0 0.0
    %1468 = vmatprep.subr.mxu0 0.0
    %1469 = vmatpush1.msra.mxu0 0.0
    %1470 = vmatprep.mubr.f32.mxu0 0.0
    %1471 = vmatmul.mubr.f32.gmra.mrb[0].mxu0 %v1401
    %v1472 = vpop.f32.mrb[0].mxu0
    %v1473 = vadd.f32 0.0, %v1472
    %v1474 = vpop.f32.mrb[0].mxu0
    %1475 = vmatprep.mubr.f32.mxu0 0.0
    %1476 = vmatmul.mubr.f32.gmra.mrb[0].mxu0 %v1404
    %v1477 = vpop.f32.mrb[0].mxu0
    %v1478 = vadd.f32 0.0, %v1477
    %v1479 = vpop.f32.mrb[0].mxu0
    %1480 = vdwg.mxu0
    %v1482 = vsel %vm743, %v902, 0
    %v1485 = vsel %vm743, %v1063, 0
    %1487 = vmatprep.subr.mxu0 0.0
    %1488 = vmatpush1.msra.mxu0 %v739
    %1489 = vmatprep.subr.mxu0 0.0
    %1490 = vmatpush1.msra.mxu0 0.0
    %1491 = vmatprep.subr.mxu0 0.0
    %1492 = vmatpush1.msra.mxu0 0.0
    %1493 = vmatprep.subr.mxu0 0.0
    %1494 = vmatpush1.msra.mxu0 0.0
    %1495 = vmatprep.subr.mxu0 0.0
    %1496 = vmatpush1.msra.mxu0 0.0
    %1497 = vmatprep.subr.mxu0 0.0
    %1498 = vmatpush1.msra.mxu0 0.0
    %1499 = vmatprep.subr.mxu0 0.0
    %1500 = vmatpush1.msra.mxu0 0.0
    %1501 = vmatprep.subr.mxu0 0.0
    %1502 = vmatpush1.msra.mxu0 0.0
    %1503 = vmatprep.subr.mxu0 0.0
    %1504 = vmatpush1.msra.mxu0 0.0
    %1505 = vmatprep.subr.mxu0 0.0
    %1506 = vmatpush1.msra.mxu0 0.0
    %1507 = vmatprep.subr.mxu0 0.0
    %1508 = vmatpush1.msra.mxu0 0.0
    %1509 = vmatprep.subr.mxu0 0.0
    %1510 = vmatpush1.msra.mxu0 0.0
    %1511 = vmatprep.subr.mxu0 0.0
    %1512 = vmatpush1.msra.mxu0 0.0
    %1513 = vmatprep.subr.mxu0 0.0
    %1514 = vmatpush1.msra.mxu0 0.0
    %1515 = vmatprep.subr.mxu0 0.0
    %1516 = vmatpush1.msra.mxu0 0.0
    %1517 = vmatprep.subr.mxu0 0.0
    %1518 = vmatpush1.msra.mxu0 0.0
    %1519 = vmatprep.subr.mxu0 0.0
    %1520 = vmatpush1.msra.mxu0 0.0
    %1521 = vmatprep.subr.mxu0 0.0
    %1522 = vmatpush1.msra.mxu0 0.0
    %1523 = vmatprep.subr.mxu0 0.0
    %1524 = vmatpush1.msra.mxu0 0.0
    %1525 = vmatprep.subr.mxu0 0.0
    %1526 = vmatpush1.msra.mxu0 0.0
    %1527 = vmatprep.subr.mxu0 0.0
    %1528 = vmatpush1.msra.mxu0 0.0
    %1529 = vmatprep.subr.mxu0 0.0
    %1530 = vmatpush1.msra.mxu0 0.0
    %1531 = vmatprep.subr.mxu0 0.0
    %1532 = vmatpush1.msra.mxu0 0.0
    %1533 = vmatprep.subr.mxu0 0.0
    %1534 = vmatpush1.msra.mxu0 0.0
    %1535 = vmatprep.subr.mxu0 0.0
    %1536 = vmatpush1.msra.mxu0 0.0
    %1537 = vmatprep.subr.mxu0 0.0
    %1538 = vmatpush1.msra.mxu0 0.0
    %1539 = vmatprep.subr.mxu0 0.0
    %1540 = vmatpush1.msra.mxu0 0.0
    %1541 = vmatprep.subr.mxu0 0.0
    %1542 = vmatpush1.msra.mxu0 0.0
    %1543 = vmatprep.subr.mxu0 0.0
    %1544 = vmatpush1.msra.mxu0 0.0
    %1545 = vmatprep.subr.mxu0 0.0
    %1546 = vmatpush1.msra.mxu0 0.0
    %1547 = vmatprep.subr.mxu0 0.0
    %1548 = vmatpush1.msra.mxu0 0.0
    %1549 = vmatprep.subr.mxu0 0.0
    %1550 = vmatpush1.msra.mxu0 0.0
    %1551 = vmatprep.mubr.f32.mxu0 0.0
    %1552 = vmatmul.mubr.f32.gmra.mrb[0].mxu0 %v1482
    %v1553 = vpop.f32.mrb[0].mxu0
    %v1554 = vadd.f32 %v1473, %v1553
    %v1555 = vpop.f32.mrb[0].mxu0
    %1556 = vmatprep.mubr.f32.mxu0 0.0
    %1557 = vmatmul.mubr.f32.gmra.mrb[0].mxu0 %v1485
    %v1558 = vpop.f32.mrb[0].mxu0
    %v1559 = vadd.f32 %v1478, %v1558
    %v1560 = vpop.f32.mrb[0].mxu0
    %1561 = vdwg.mxu0
    %1562 = vrot.lane.b32.xlu0 %v559, 112
    %v1563 = vpop.permute.xlu0 %1562
    %1564 = vrot.lane.b32.xlu0 %v645, 112
    %v1565 = vpop.permute.xlu0 %1564
    %v1566 = vsel %vm743, %v1563, 0
    %v1568 = vsel %vm743, %v1565, 0
    %1570 = vmatprep.subr.mxu0 0.0
    %1571 = vmatpush1.xpose.msra.mxu0 %v1568
    %1572 = vmatprep.subr.mxu0 0.0
    %1573 = vmatpush1.xpose.msra.mxu0 0.0
    %1574 = vmatprep.subr.mxu0 0.0
    %1575 = vmatpush1.xpose.msra.mxu0 0.0
    %1576 = vmatprep.subr.mxu0 0.0
    %1577 = vmatpush1.xpose.msra.mxu0 0.0
    %1578 = vmatprep.subr.mxu0 0.0
    %1579 = vmatpush1.xpose.msra.mxu0 0.0
    %1580 = vmatprep.subr.mxu0 0.0
    %1581 = vmatpush1.xpose.msra.mxu0 0.0
    %1582 = vmatprep.subr.mxu0 0.0
    %1583 = vmatpush1.xpose.msra.mxu0 0.0
    %1584 = vmatprep.subr.mxu0 0.0
    %1585 = vmatpush1.xpose.msra.mxu0 0.0
    %1586 = vmatprep.subr.mxu0 0.0
    %1587 = vmatpush1.xpose.msra.mxu0 0.0
    %1588 = vmatprep.subr.mxu0 0.0
    %1589 = vmatpush1.xpose.msra.mxu0 0.0
    %1590 = vmatprep.subr.mxu0 0.0
    %1591 = vmatpush1.xpose.msra.mxu0 0.0
    %1592 = vmatprep.subr.mxu0 0.0
    %1593 = vmatpush1.xpose.msra.mxu0 0.0
    %1594 = vmatprep.subr.mxu0 0.0
    %1595 = vmatpush1.xpose.msra.mxu0 0.0
    %1596 = vmatprep.subr.mxu0 0.0
    %1597 = vmatpush1.xpose.msra.mxu0 0.0
    %1598 = vmatprep.subr.mxu0 0.0
    %1599 = vmatpush1.xpose.msra.mxu0 0.0
    %1600 = vmatprep.subr.mxu0 0.0
    %1601 = vmatpush1.xpose.msra.mxu0 0.0
    %1602 = vmatprep.subr.mxu0 0.0
    %1603 = vmatpush1.xpose.msra.mxu0 0.0
    %1604 = vmatprep.subr.mxu0 0.0
    %1605 = vmatpush1.xpose.msra.mxu0 0.0
    %1606 = vmatprep.subr.mxu0 0.0
    %1607 = vmatpush1.xpose.msra.mxu0 0.0
    %1608 = vmatprep.subr.mxu0 0.0
    %1609 = vmatpush1.xpose.msra.mxu0 0.0
    %1610 = vmatprep.subr.mxu0 0.0
    %1611 = vmatpush1.xpose.msra.mxu0 0.0
    %1612 = vmatprep.subr.mxu0 0.0
    %1613 = vmatpush1.xpose.msra.mxu0 0.0
    %1614 = vmatprep.subr.mxu0 0.0
    %1615 = vmatpush1.xpose.msra.mxu0 0.0
    %1616 = vmatprep.subr.mxu0 0.0
    %1617 = vmatpush1.xpose.msra.mxu0 0.0
    %1618 = vmatprep.subr.mxu0 0.0
    %1619 = vmatpush1.xpose.msra.mxu0 0.0
    %1620 = vmatprep.subr.mxu0 0.0
    %1621 = vmatpush1.xpose.msra.mxu0 0.0
    %1622 = vmatprep.subr.mxu0 0.0
    %1623 = vmatpush1.xpose.msra.mxu0 0.0
    %1624 = vmatprep.subr.mxu0 0.0
    %1625 = vmatpush1.xpose.msra.mxu0 0.0
    %1626 = vmatprep.subr.mxu0 0.0
    %1627 = vmatpush1.xpose.msra.mxu0 0.0
    %1628 = vmatprep.subr.mxu0 0.0
    %1629 = vmatpush1.xpose.msra.mxu0 0.0
    %1630 = vmatprep.subr.mxu0 0.0
    %1631 = vmatpush1.xpose.msra.mxu0 0.0
    %1632 = vmatprep.subr.mxu0 0.0
    %1633 = vmatpush1.xpose.msra.mxu0 0.0
    %1634 = vmatprep.mubr.f32.mxu0 0.0
    %1635 = vmatmul.mubr.f32.gmra.mrb[0].mxu0 %v1566
    %v1636 = vpop.f32.mrb[0].mxu0
    %v1637 = vadd.f32 0.0, %v1636
    %v1638 = vpop.f32.mrb[0].mxu0
    %1639 = vdwg.mxu0
    %v1640 = vmul.f32 %v1637, 0.35355338
    %v1641 = vsel %vm743, %v1640, -inf
    %1642 = vmax.xlane.f32.xlu0 %v1641
    %v1643 = vpop.xlane.xlu0 %1642
    %v1644 = vsub.f32 %v1640, %v1643
    %v1645 = vmul.f32 %v1644, 1.442695
    %v1646 = vpow.pop %v1645
    %v1647 = vsel %vm743, %v1646, 0.0
    %1648 = vadd.xlane.f32.xlu0 %v1647
    %v1649 = vpop.xlane.xlu0 %1648
    %v1650 = vrcp.pop %v1649
    %v1651 = vmul.f32 %v1646, %v1650
    %1652 = vrot.lane.b32.xlu0 %v731, 112
    %v1653 = vpop.permute.xlu0 %1652
    %v1656 = vsel %vm743, %v1651, 0
    %1658 = vmatprep.subr.mxu0 0.0
    %1659 = vmatpush1.msra.mxu0 %v1653
    %1660 = vmatprep.subr.mxu0 0.0
    %1661 = vmatpush1.msra.mxu0 0.0
    %1662 = vmatprep.subr.mxu0 0.0
    %1663 = vmatpush1.msra.mxu0 0.0
    %1664 = vmatprep.subr.mxu0 0.0
    %1665 = vmatpush1.msra.mxu0 0.0
    %1666 = vmatprep.subr.mxu0 0.0
    %1667 = vmatpush1.msra.mxu0 0.0
    %1668 = vmatprep.subr.mxu0 0.0
    %1669 = vmatpush1.msra.mxu0 0.0
    %1670 = vmatprep.subr.mxu0 0.0
    %1671 = vmatpush1.msra.mxu0 0.0
    %1672 = vmatprep.subr.mxu0 0.0
    %1673 = vmatpush1.msra.mxu0 0.0
    %1674 = vmatprep.subr.mxu0 0.0
    %1675 = vmatpush1.msra.mxu0 0.0
    %1676 = vmatprep.subr.mxu0 0.0
    %1677 = vmatpush1.msra.mxu0 0.0
    %1678 = vmatprep.subr.mxu0 0.0
    %1679 = vmatpush1.msra.mxu0 0.0
    %1680 = vmatprep.subr.mxu0 0.0
    %1681 = vmatpush1.msra.mxu0 0.0
    %1682 = vmatprep.subr.mxu0 0.0
    %1683 = vmatpush1.msra.mxu0 0.0
    %1684 = vmatprep.subr.mxu0 0.0
    %1685 = vmatpush1.msra.mxu0 0.0
    %1686 = vmatprep.subr.mxu0 0.0
    %1687 = vmatpush1.msra.mxu0 0.0
    %1688 = vmatprep.subr.mxu0 0.0
    %1689 = vmatpush1.msra.mxu0 0.0
    %1690 = vmatprep.subr.mxu0 0.0
    %1691 = vmatpush1.msra.mxu0 0.0
    %1692 = vmatprep.subr.mxu0 0.0
    %1693 = vmatpush1.msra.mxu0 0.0
    %1694 = vmatprep.subr.mxu0 0.0
    %1695 = vmatpush1.msra.mxu0 0.0
    %1696 = vmatprep.subr.mxu0 0.0
    %1697 = vmatpush1.msra.mxu0 0.0
    %1698 = vmatprep.subr.mxu0 0.0
    %1699 = vmatpush1.msra.mxu0 0.0
    %1700 = vmatprep.subr.mxu0 0.0
    %1701 = vmatpush1.msra.mxu0 0.0
    %1702 = vmatprep.subr.mxu0 0.0
    %1703 = vmatpush1.msra.mxu0 0.0
    %1704 = vmatprep.subr.mxu0 0.0
    %1705 = vmatpush1.msra.mxu0 0.0
    %1706 = vmatprep.subr.mxu0 0.0
    %1707 = vmatpush1.msra.mxu0 0.0
    %1708 = vmatprep.subr.mxu0 0.0
    %1709 = vmatpush1.msra.mxu0 0.0
    %1710 = vmatprep.subr.mxu0 0.0
    %1711 = vmatpush1.msra.mxu0 0.0
    %1712 = vmatprep.subr.mxu0 0.0
    %1713 = vmatpush1.msra.mxu0 0.0
    %1714 = vmatprep.subr.mxu0 0.0
    %1715 = vmatpush1.msra.mxu0 0.0
    %1716 = vmatprep.subr.mxu0 0.0
    %1717 = vmatpush1.msra.mxu0 0.0
    %1718 = vmatprep.subr.mxu0 0.0
    %1719 = vmatpush1.msra.mxu0 0.0
    %1720 = vmatprep.subr.mxu0 0.0
    %1721 = vmatpush1.msra.mxu0 0.0
    %1722 = vmatprep.mubr.f32.mxu0 0.0
    %1723 = vmatmul.mubr.f32.gmra.mrb[0].mxu0 %v1656
    %v1724 = vpop.f32.mrb[0].mxu0
    %v1725 = vadd.f32 0.0, %v1724
    %v1726 = vpop.f32.mrb[0].mxu0
    %1727 = vdwg.mxu0
    %1728 = vrot.lane.b32.xlu0 %v564, 112
    %v1729 = vpop.permute.xlu0 %1728
    %1730 = vrot.lane.b32.xlu0 %v650, 112
    %v1731 = vpop.permute.xlu0 %1730
    %v1732 = vsel %vm743, %v1729, 0
    %v1734 = vsel %vm743, %v1731, 0
    %1736 = vmatprep.subr.mxu0 0.0
    %1737 = vmatpush1.xpose.msra.mxu0 %v1734
    %1738 = vmatprep.subr.mxu0 0.0
    %1739 = vmatpush1.xpose.msra.mxu0 0.0
    %1740 = vmatprep.subr.mxu0 0.0
    %1741 = vmatpush1.xpose.msra.mxu0 0.0
    %1742 = vmatprep.subr.mxu0 0.0
    %1743 = vmatpush1.xpose.msra.mxu0 0.0
    %1744 = vmatprep.subr.mxu0 0.0
    %1745 = vmatpush1.xpose.msra.mxu0 0.0
    %1746 = vmatprep.subr.mxu0 0.0
    %1747 = vmatpush1.xpose.msra.mxu0 0.0
    %1748 = vmatprep.subr.mxu0 0.0
    %1749 = vmatpush1.xpose.msra.mxu0 0.0
    %1750 = vmatprep.subr.mxu0 0.0
    %1751 = vmatpush1.xpose.msra.mxu0 0.0
    %1752 = vmatprep.subr.mxu0 0.0
    %1753 = vmatpush1.xpose.msra.mxu0 0.0
    %1754 = vmatprep.subr.mxu0 0.0
    %1755 = vmatpush1.xpose.msra.mxu0 0.0
    %1756 = vmatprep.subr.mxu0 0.0
    %1757 = vmatpush1.xpose.msra.mxu0 0.0
    %1758 = vmatprep.subr.mxu0 0.0
    %1759 = vmatpush1.xpose.msra.mxu0 0.0
    %1760 = vmatprep.subr.mxu0 0.0
    %1761 = vmatpush1.xpose.msra.mxu0 0.0
    %1762 = vmatprep.subr.mxu0 0.0
    %1763 = vmatpush1.xpose.msra.mxu0 0.0
    %1764 = vmatprep.subr.mxu0 0.0
    %1765 = vmatpush1.xpose.msra.mxu0 0.0
    %1766 = vmatprep.subr.mxu0 0.0
    %1767 = vmatpush1.xpose.msra.mxu0 0.0
    %1768 = vmatprep.subr.mxu0 0.0
    %1769 = vmatpush1.xpose.msra.mxu0 0.0
    %1770 = vmatprep.subr.mxu0 0.0
    %1771 = vmatpush1.xpose.msra.mxu0 0.0
    %1772 = vmatprep.subr.mxu0 0.0
    %1773 = vmatpush1.xpose.msra.mxu0 0.0
    %1774 = vmatprep.subr.mxu0 0.0
    %1775 = vmatpush1.xpose.msra.mxu0 0.0
    %1776 = vmatprep.subr.mxu0 0.0
    %1777 = vmatpush1.xpose.msra.mxu0 0.0
    %1778 = vmatprep.subr.mxu0 0.0
    %1779 = vmatpush1.xpose.msra.mxu0 0.0
    %1780 = vmatprep.subr.mxu0 0.0
    %1781 = vmatpush1.xpose.msra.mxu0 0.0
    %1782 = vmatprep.subr.mxu0 0.0
    %1783 = vmatpush1.xpose.msra.mxu0 0.0
    %1784 = vmatprep.subr.mxu0 0.0
    %1785 = vmatpush1.xpose.msra.mxu0 0.0
    %1786 = vmatprep.subr.mxu0 0.0
    %1787 = vmatpush1.xpose.msra.mxu0 0.0
    %1788 = vmatprep.subr.mxu0 0.0
    %1789 = vmatpush1.xpose.msra.mxu0 0.0
    %1790 = vmatprep.subr.mxu0 0.0
    %1791 = vmatpush1.xpose.msra.mxu0 0.0
    %1792 = vmatprep.subr.mxu0 0.0
    %1793 = vmatpush1.xpose.msra.mxu0 0.0
    %1794 = vmatprep.subr.mxu0 0.0
    %1795 = vmatpush1.xpose.msra.mxu0 0.0
    %1796 = vmatprep.subr.mxu0 0.0
    %1797 = vmatpush1.xpose.msra.mxu0 0.0
    %1798 = vmatprep.subr.mxu0 0.0
    %1799 = vmatpush1.xpose.msra.mxu0 0.0
    %1800 = vmatprep.mubr.f32.mxu0 0.0
    %1801 = vmatmul.mubr.f32.gmra.mrb[0].mxu0 %v1732
    %v1802 = vpop.f32.mrb[0].mxu0
    %v1803 = vadd.f32 0.0, %v1802
    %v1804 = vpop.f32.mrb[0].mxu0
    %1805 = vdwg.mxu0
    %v1806 = vmul.f32 %v1803, 0.35355338
    %v1807 = vsel %vm743, %v1806, -inf
    %1808 = vmax.xlane.f32.xlu0 %v1807
    %v1809 = vpop.xlane.xlu0 %1808
    %v1810 = vsub.f32 %v1806, %v1809
    %v1811 = vmul.f32 %v1810, 1.442695
    %v1812 = vpow.pop %v1811
    %v1813 = vsel %vm743, %v1812, 0.0
    %1814 = vadd.xlane.f32.xlu0 %v1813
    %v1815 = vpop.xlane.xlu0 %1814
    %v1816 = vrcp.pop %v1815
    %v1817 = vmul.f32 %v1812, %v1816
    %1818 = vrot.lane.b32.xlu0 %v736, 112
    %v1819 = vpop.permute.xlu0 %1818
    %v1822 = vsel %vm743, %v1817, 0
    %1824 = vmatprep.subr.mxu0 0.0
    %1825 = vmatpush1.msra.mxu0 %v1819
    %1826 = vmatprep.subr.mxu0 0.0
    %1827 = vmatpush1.msra.mxu0 0.0
    %1828 = vmatprep.subr.mxu0 0.0
    %1829 = vmatpush1.msra.mxu0 0.0
    %1830 = vmatprep.subr.mxu0 0.0
    %1831 = vmatpush1.msra.mxu0 0.0
    %1832 = vmatprep.subr.mxu0 0.0
    %1833 = vmatpush1.msra.mxu0 0.0
    %1834 = vmatprep.subr.mxu0 0.0
    %1835 = vmatpush1.msra.mxu0 0.0
    %1836 = vmatprep.subr.mxu0 0.0
    %1837 = vmatpush1.msra.mxu0 0.0
    %1838 = vmatprep.subr.mxu0 0.0
    %1839 = vmatpush1.msra.mxu0 0.0
    %1840 = vmatprep.subr.mxu0 0.0
    %1841 = vmatpush1.msra.mxu0 0.0
    %1842 = vmatprep.subr.mxu0 0.0
    %1843 = vmatpush1.msra.mxu0 0.0
    %1844 = vmatprep.subr.mxu0 0.0
    %1845 = vmatpush1.msra.mxu0 0.0
    %1846 = vmatprep.subr.mxu0 0.0
    %1847 = vmatpush1.msra.mxu0 0.0
    %1848 = vmatprep.subr.mxu0 0.0
    %1849 = vmatpush1.msra.mxu0 0.0
    %1850 = vmatprep.subr.mxu0 0.0
    %1851 = vmatpush1.msra.mxu0 0.0
    %1852 = vmatprep.subr.mxu0 0.0
    %1853 = vmatpush1.msra.mxu0 0.0
    %1854 = vmatprep.subr.mxu0 0.0
    %1855 = vmatpush1.msra.mxu0 0.0
    %1856 = vmatprep.subr.mxu0 0.0
    %1857 = vmatpush1.msra.mxu0 0.0
    %1858 = vmatprep.subr.mxu0 0.0
    %1859 = vmatpush1.msra.mxu0 0.0
    %1860 = vmatprep.subr.mxu0 0.0
    %1861 = vmatpush1.msra.mxu0 0.0
    %1862 = vmatprep.subr.mxu0 0.0
    %1863 = vmatpush1.msra.mxu0 0.0
    %1864 = vmatprep.subr.mxu0 0.0
    %1865 = vmatpush1.msra.mxu0 0.0
    %1866 = vmatprep.subr.mxu0 0.0
    %1867 = vmatpush1.msra.mxu0 0.0
    %1868 = vmatprep.subr.mxu0 0.0
    %1869 = vmatpush1.msra.mxu0 0.0
    %1870 = vmatprep.subr.mxu0 0.0
    %1871 = vmatpush1.msra.mxu0 0.0
    %1872 = vmatprep.subr.mxu0 0.0
    %1873 = vmatpush1.msra.mxu0 0.0
    %1874 = vmatprep.subr.mxu0 0.0
    %1875 = vmatpush1.msra.mxu0 0.0
    %1876 = vmatprep.subr.mxu0 0.0
    %1877 = vmatpush1.msra.mxu0 0.0
    %1878 = vmatprep.subr.mxu0 0.0
    %1879 = vmatpush1.msra.mxu0 0.0
    %1880 = vmatprep.subr.mxu0 0.0
    %1881 = vmatpush1.msra.mxu0 0.0
    %1882 = vmatprep.subr.mxu0 0.0
    %1883 = vmatpush1.msra.mxu0 0.0
    %1884 = vmatprep.subr.mxu0 0.0
    %1885 = vmatpush1.msra.mxu0 0.0
    %1886 = vmatprep.subr.mxu0 0.0
    %1887 = vmatpush1.msra.mxu0 0.0
    %1888 = vmatprep.mubr.f32.mxu0 0.0
    %1889 = vmatmul.mubr.f32.gmra.mrb[0].mxu0 %v1822
    %v1890 = vpop.f32.mrb[0].mxu0
    %v1891 = vadd.f32 0.0, %v1890
    %v1892 = vpop.f32.mrb[0].mxu0
    %1893 = vdwg.mxu0
    %v1895 = vsel %vm743, %v1725, 0
    %v1898 = vsel %vm743, %v1891, 0
    %1900 = vmatprep.subr.mxu0 0.0
    %1901 = vmatpush1.msra.mxu0 %v741
    %1902 = vmatprep.subr.mxu0 0.0
    %1903 = vmatpush1.msra.mxu0 0.0
    %1904 = vmatprep.subr.mxu0 0.0
    %1905 = vmatpush1.msra.mxu0 0.0
    %1906 = vmatprep.subr.mxu0 0.0
    %1907 = vmatpush1.msra.mxu0 0.0
    %1908 = vmatprep.subr.mxu0 0.0
    %1909 = vmatpush1.msra.mxu0 0.0
    %1910 = vmatprep.subr.mxu0 0.0
    %1911 = vmatpush1.msra.mxu0 0.0
    %1912 = vmatprep.subr.mxu0 0.0
    %1913 = vmatpush1.msra.mxu0 0.0
    %1914 = vmatprep.subr.mxu0 0.0
    %1915 = vmatpush1.msra.mxu0 0.0
    %1916 = vmatprep.subr.mxu0 0.0
    %1917 = vmatpush1.msra.mxu0 0.0
    %1918 = vmatprep.subr.mxu0 0.0
    %1919 = vmatpush1.msra.mxu0 0.0
    %1920 = vmatprep.subr.mxu0 0.0
    %1921 = vmatpush1.msra.mxu0 0.0
    %1922 = vmatprep.subr.mxu0 0.0
    %1923 = vmatpush1.msra.mxu0 0.0
    %1924 = vmatprep.subr.mxu0 0.0
    %1925 = vmatpush1.msra.mxu0 0.0
    %1926 = vmatprep.subr.mxu0 0.0
    %1927 = vmatpush1.msra.mxu0 0.0
    %1928 = vmatprep.subr.mxu0 0.0
    %1929 = vmatpush1.msra.mxu0 0.0
    %1930 = vmatprep.subr.mxu0 0.0
    %1931 = vmatpush1.msra.mxu0 0.0
    %1932 = vmatprep.subr.mxu0 0.0
    %1933 = vmatpush1.msra.mxu0 0.0
    %1934 = vmatprep.subr.mxu0 0.0
    %1935 = vmatpush1.msra.mxu0 0.0
    %1936 = vmatprep.subr.mxu0 0.0
    %1937 = vmatpush1.msra.mxu0 0.0
    %1938 = vmatprep.subr.mxu0 0.0
    %1939 = vmatpush1.msra.mxu0 0.0
    %1940 = vmatprep.subr.mxu0 0.0
    %1941 = vmatpush1.msra.mxu0 0.0
    %1942 = vmatprep.subr.mxu0 0.0
    %1943 = vmatpush1.msra.mxu0 0.0
    %1944 = vmatprep.subr.mxu0 0.0
    %1945 = vmatpush1.msra.mxu0 0.0
    %1946 = vmatprep.subr.mxu0 0.0
    %1947 = vmatpush1.msra.mxu0 0.0
    %1948 = vmatprep.subr.mxu0 0.0
    %1949 = vmatpush1.msra.mxu0 0.0
    %1950 = vmatprep.subr.mxu0 0.0
    %1951 = vmatpush1.msra.mxu0 0.0
    %1952 = vmatprep.subr.mxu0 0.0
    %1953 = vmatpush1.msra.mxu0 0.0
    %1954 = vmatprep.subr.mxu0 0.0
    %1955 = vmatpush1.msra.mxu0 0.0
    %1956 = vmatprep.subr.mxu0 0.0
    %1957 = vmatpush1.msra.mxu0 0.0
    %1958 = vmatprep.subr.mxu0 0.0
    %1959 = vmatpush1.msra.mxu0 0.0
    %1960 = vmatprep.subr.mxu0 0.0
    %1961 = vmatpush1.msra.mxu0 0.0
    %1962 = vmatprep.subr.mxu0 0.0
    %1963 = vmatpush1.msra.mxu0 0.0
    %1964 = vmatprep.mubr.f32.mxu0 0.0
    %1965 = vmatmul.mubr.f32.gmra.mrb[0].mxu0 %v1895
    %v1966 = vpop.f32.mrb[0].mxu0
    %v1967 = vadd.f32 0.0, %v1966
    %v1968 = vpop.f32.mrb[0].mxu0
    %1969 = vmatprep.mubr.f32.mxu0 0.0
    %1970 = vmatmul.mubr.f32.gmra.mrb[0].mxu0 %v1898
    %v1971 = vpop.f32.mrb[0].mxu0
    %v1972 = vadd.f32 0.0, %v1971
    %v1973 = vpop.f32.mrb[0].mxu0
    %1974 = vdwg.mxu0
    %v1975 = vadd.f32 %v1554, %v1967
    %v1976 = vadd.f32 %v1559, %v1972
    %1977 = vrot.lane.b32.xlu0 %v559, 104
    %v1978 = vpop.permute.xlu0 %1977
    %1979 = vrot.lane.b32.xlu0 %v645, 104
    %v1980 = vpop.permute.xlu0 %1979
    %v1981 = vsel %vm743, %v1978, 0
    %v1983 = vsel %vm743, %v1980, 0
    %1985 = vmatprep.subr.mxu0 0.0
    %1986 = vmatpush1.xpose.msra.mxu0 %v1983
    %1987 = vmatprep.subr.mxu0 0.0
    %1988 = vmatpush1.xpose.msra.mxu0 0.0
    %1989 = vmatprep.subr.mxu0 0.0
    %1990 = vmatpush1.xpose.msra.mxu0 0.0
    %1991 = vmatprep.subr.mxu0 0.0
    %1992 = vmatpush1.xpose.msra.mxu0 0.0
    %1993 = vmatprep.subr.mxu0 0.0
    %1994 = vmatpush1.xpose.msra.mxu0 0.0
    %1995 = vmatprep.subr.mxu0 0.0
    %1996 = vmatpush1.xpose.msra.mxu0 0.0
    %1997 = vmatprep.subr.mxu0 0.0
    %1998 = vmatpush1.xpose.msra.mxu0 0.0
    %1999 = vmatprep.subr.mxu0 0.0
    %2000 = vmatpush1.xpose.msra.mxu0 0.0
    %2001 = vmatprep.subr.mxu0 0.0
    %2002 = vmatpush1.xpose.msra.mxu0 0.0
    %2003 = vmatprep.subr.mxu0 0.0
    %2004 = vmatpush1.xpose.msra.mxu0 0.0
    %2005 = vmatprep.subr.mxu0 0.0
    %2006 = vmatpush1.xpose.msra.mxu0 0.0
    %2007 = vmatprep.subr.mxu0 0.0
    %2008 = vmatpush1.xpose.msra.mxu0 0.0
    %2009 = vmatprep.subr.mxu0 0.0
    %2010 = vmatpush1.xpose.msra.mxu0 0.0
    %2011 = vmatprep.subr.mxu0 0.0
    %2012 = vmatpush1.xpose.msra.mxu0 0.0
    %2013 = vmatprep.subr.mxu0 0.0
    %2014 = vmatpush1.xpose.msra.mxu0 0.0
    %2015 = vmatprep.subr.mxu0 0.0
    %2016 = vmatpush1.xpose.msra.mxu0 0.0
    %2017 = vmatprep.subr.mxu0 0.0
    %2018 = vmatpush1.xpose.msra.mxu0 0.0
    %2019 = vmatprep.subr.mxu0 0.0
    %2020 = vmatpush1.xpose.msra.mxu0 0.0
    %2021 = vmatprep.subr.mxu0 0.0
    %2022 = vmatpush1.xpose.msra.mxu0 0.0
    %2023 = vmatprep.subr.mxu0 0.0
    %2024 = vmatpush1.xpose.msra.mxu0 0.0
    %2025 = vmatprep.subr.mxu0 0.0
    %2026 = vmatpush1.xpose.msra.mxu0 0.0
    %2027 = vmatprep.subr.mxu0 0.0
    %2028 = vmatpush1.xpose.msra.mxu0 0.0
    %2029 = vmatprep.subr.mxu0 0.0
    %2030 = vmatpush1.xpose.msra.mxu0 0.0
    %2031 = vmatprep.subr.mxu0 0.0
    %2032 = vmatpush1.xpose.msra.mxu0 0.0
    %2033 = vmatprep.subr.mxu0 0.0
    %2034 = vmatpush1.xpose.msra.mxu0 0.0
    %2035 = vmatprep.subr.mxu0 0.0
    %2036 = vmatpush1.xpose.msra.mxu0 0.0
    %2037 = vmatprep.subr.mxu0 0.0
    %2038 = vmatpush1.xpose.msra.mxu0 0.0
    %2039 = vmatprep.subr.mxu0 0.0
    %2040 = vmatpush1.xpose.msra.mxu0 0.0
    %2041 = vmatprep.subr.mxu0 0.0
    %2042 = vmatpush1.xpose.msra.mxu0 0.0
    %2043 = vmatprep.subr.mxu0 0.0
    %2044 = vmatpush1.xpose.msra.mxu0 0.0
    %2045 = vmatprep.subr.mxu0 0.0
    %2046 = vmatpush1.xpose.msra.mxu0 0.0
    %2047 = vmatprep.subr.mxu0 0.0
    %2048 = vmatpush1.xpose.msra.mxu0 0.0
    %2049 = vmatprep.mubr.f32.mxu0 0.0
    %2050 = vmatmul.mubr.f32.gmra.mrb[0].mxu0 %v1981
    %v2051 = vpop.f32.mrb[0].mxu0
    %v2052 = vadd.f32 0.0, %v2051
    %v2053 = vpop.f32.mrb[0].mxu0
    %2054 = vdwg.mxu0
    %v2055 = vmul.f32 %v2052, 0.35355338
    %v2056 = vsel %vm743, %v2055, -inf
    %2057 = vmax.xlane.f32.xlu0 %v2056
    %v2058 = vpop.xlane.xlu0 %2057
    %v2059 = vsub.f32 %v2055, %v2058
    %v2060 = vmul.f32 %v2059, 1.442695
    %v2061 = vpow.pop %v2060
    %v2062 = vsel %vm743, %v2061, 0.0
    %2063 = vadd.xlane.f32.xlu0 %v2062
    %v2064 = vpop.xlane.xlu0 %2063
    %v2065 = vrcp.pop %v2064
    %v2066 = vmul.f32 %v2061, %v2065
    %2067 = vrot.lane.b32.xlu0 %v731, 104
    %v2068 = vpop.permute.xlu0 %2067
    %v2071 = vsel %vm743, %v2066, 0
    %2073 = vmatprep.subr.mxu0 0.0
    %2074 = vmatpush1.msra.mxu0 %v2068
    %2075 = vmatprep.subr.mxu0 0.0
    %2076 = vmatpush1.msra.mxu0 0.0
    %2077 = vmatprep.subr.mxu0 0.0
    %2078 = vmatpush1.msra.mxu0 0.0
    %2079 = vmatprep.subr.mxu0 0.0
    %2080 = vmatpush1.msra.mxu0 0.0
    %2081 = vmatprep.subr.mxu0 0.0
    %2082 = vmatpush1.msra.mxu0 0.0
    %2083 = vmatprep.subr.mxu0 0.0
    %2084 = vmatpush1.msra.mxu0 0.0
    %2085 = vmatprep.subr.mxu0 0.0
    %2086 = vmatpush1.msra.mxu0 0.0
    %2087 = vmatprep.subr.mxu0 0.0
    %2088 = vmatpush1.msra.mxu0 0.0
    %2089 = vmatprep.subr.mxu0 0.0
    %2090 = vmatpush1.msra.mxu0 0.0
    %2091 = vmatprep.subr.mxu0 0.0
    %2092 = vmatpush1.msra.mxu0 0.0
    %2093 = vmatprep.subr.mxu0 0.0
    %2094 = vmatpush1.msra.mxu0 0.0
    %2095 = vmatprep.subr.mxu0 0.0
    %2096 = vmatpush1.msra.mxu0 0.0
    %2097 = vmatprep.subr.mxu0 0.0
    %2098 = vmatpush1.msra.mxu0 0.0
    %2099 = vmatprep.subr.mxu0 0.0
    %2100 = vmatpush1.msra.mxu0 0.0
    %2101 = vmatprep.subr.mxu0 0.0
    %2102 = vmatpush1.msra.mxu0 0.0
    %2103 = vmatprep.subr.mxu0 0.0
    %2104 = vmatpush1.msra.mxu0 0.0
    %2105 = vmatprep.subr.mxu0 0.0
    %2106 = vmatpush1.msra.mxu0 0.0
    %2107 = vmatprep.subr.mxu0 0.0
    %2108 = vmatpush1.msra.mxu0 0.0
    %2109 = vmatprep.subr.mxu0 0.0
    %2110 = vmatpush1.msra.mxu0 0.0
    %2111 = vmatprep.subr.mxu0 0.0
    %2112 = vmatpush1.msra.mxu0 0.0
    %2113 = vmatprep.subr.mxu0 0.0
    %2114 = vmatpush1.msra.mxu0 0.0
    %2115 = vmatprep.subr.mxu0 0.0
    %2116 = vmatpush1.msra.mxu0 0.0
    %2117 = vmatprep.subr.mxu0 0.0
    %2118 = vmatpush1.msra.mxu0 0.0
    %2119 = vmatprep.subr.mxu0 0.0
    %2120 = vmatpush1.msra.mxu0 0.0
    %2121 = vmatprep.subr.mxu0 0.0
    %2122 = vmatpush1.msra.mxu0 0.0
    %2123 = vmatprep.subr.mxu0 0.0
    %2124 = vmatpush1.msra.mxu0 0.0
    %2125 = vmatprep.subr.mxu0 0.0
    %2126 = vmatpush1.msra.mxu0 0.0
    %2127 = vmatprep.subr.mxu0 0.0
    %2128 = vmatpush1.msra.mxu0 0.0
    %2129 = vmatprep.subr.mxu0 0.0
    %2130 = vmatpush1.msra.mxu0 0.0
    %2131 = vmatprep.subr.mxu0 0.0
    %2132 = vmatpush1.msra.mxu0 0.0
    %2133 = vmatprep.subr.mxu0 0.0
    %2134 = vmatpush1.msra.mxu0 0.0
    %2135 = vmatprep.subr.mxu0 0.0
    %2136 = vmatpush1.msra.mxu0 0.0
    %2137 = vmatprep.mubr.f32.mxu0 0.0
    %2138 = vmatmul.mubr.f32.gmra.mrb[0].mxu0 %v2071
    %v2139 = vpop.f32.mrb[0].mxu0
    %v2140 = vadd.f32 0.0, %v2139
    %v2141 = vpop.f32.mrb[0].mxu0
    %2142 = vdwg.mxu0
    %2143 = vrot.lane.b32.xlu0 %v564, 104
    %v2144 = vpop.permute.xlu0 %2143
    %2145 = vrot.lane.b32.xlu0 %v650, 104
    %v2146 = vpop.permute.xlu0 %2145
    %v2147 = vsel %vm743, %v2144, 0
    %v2149 = vsel %vm743, %v2146, 0
    %2151 = vmatprep.subr.mxu0 0.0
    %2152 = vmatpush1.xpose.msra.mxu0 %v2149
    %2153 = vmatprep.subr.mxu0 0.0
    %2154 = vmatpush1.xpose.msra.mxu0 0.0
    %2155 = vmatprep.subr.mxu0 0.0
    %2156 = vmatpush1.xpose.msra.mxu0 0.0
    %2157 = vmatprep.subr.mxu0 0.0
    %2158 = vmatpush1.xpose.msra.mxu0 0.0
    %2159 = vmatprep.subr.mxu0 0.0
    %2160 = vmatpush1.xpose.msra.mxu0 0.0
    %2161 = vmatprep.subr.mxu0 0.0
    %2162 = vmatpush1.xpose.msra.mxu0 0.0
    %2163 = vmatprep.subr.mxu0 0.0
    %2164 = vmatpush1.xpose.msra.mxu0 0.0
    %2165 = vmatprep.subr.mxu0 0.0
    %2166 = vmatpush1.xpose.msra.mxu0 0.0
    %2167 = vmatprep.subr.mxu0 0.0
    %2168 = vmatpush1.xpose.msra.mxu0 0.0
    %2169 = vmatprep.subr.mxu0 0.0
    %2170 = vmatpush1.xpose.msra.mxu0 0.0
    %2171 = vmatprep.subr.mxu0 0.0
    %2172 = vmatpush1.xpose.msra.mxu0 0.0
    %2173 = vmatprep.subr.mxu0 0.0
    %2174 = vmatpush1.xpose.msra.mxu0 0.0
    %2175 = vmatprep.subr.mxu0 0.0
    %2176 = vmatpush1.xpose.msra.mxu0 0.0
    %2177 = vmatprep.subr.mxu0 0.0
    %2178 = vmatpush1.xpose.msra.mxu0 0.0
    %2179 = vmatprep.subr.mxu0 0.0
    %2180 = vmatpush1.xpose.msra.mxu0 0.0
    %2181 = vmatprep.subr.mxu0 0.0
    %2182 = vmatpush1.xpose.msra.mxu0 0.0
    %2183 = vmatprep.subr.mxu0 0.0
    %2184 = vmatpush1.xpose.msra.mxu0 0.0
    %2185 = vmatprep.subr.mxu0 0.0
    %2186 = vmatpush1.xpose.msra.mxu0 0.0
    %2187 = vmatprep.subr.mxu0 0.0
    %2188 = vmatpush1.xpose.msra.mxu0 0.0
    %2189 = vmatprep.subr.mxu0 0.0
    %2190 = vmatpush1.xpose.msra.mxu0 0.0
    %2191 = vmatprep.subr.mxu0 0.0
    %2192 = vmatpush1.xpose.msra.mxu0 0.0
    %2193 = vmatprep.subr.mxu0 0.0
    %2194 = vmatpush1.xpose.msra.mxu0 0.0
    %2195 = vmatprep.subr.mxu0 0.0
    %2196 = vmatpush1.xpose.msra.mxu0 0.0
    %2197 = vmatprep.subr.mxu0 0.0
    %2198 = vmatpush1.xpose.msra.mxu0 0.0
    %2199 = vmatprep.subr.mxu0 0.0
    %2200 = vmatpush1.xpose.msra.mxu0 0.0
    %2201 = vmatprep.subr.mxu0 0.0
    %2202 = vmatpush1.xpose.msra.mxu0 0.0
    %2203 = vmatprep.subr.mxu0 0.0
    %2204 = vmatpush1.xpose.msra.mxu0 0.0
    %2205 = vmatprep.subr.mxu0 0.0
    %2206 = vmatpush1.xpose.msra.mxu0 0.0
    %2207 = vmatprep.subr.mxu0 0.0
    %2208 = vmatpush1.xpose.msra.mxu0 0.0
    %2209 = vmatprep.subr.mxu0 0.0
    %2210 = vmatpush1.xpose.msra.mxu0 0.0
    %2211 = vmatprep.subr.mxu0 0.0
    %2212 = vmatpush1.xpose.msra.mxu0 0.0
    %2213 = vmatprep.subr.mxu0 0.0
    %2214 = vmatpush1.xpose.msra.mxu0 0.0
    %2215 = vmatprep.mubr.f32.mxu0 0.0
    %2216 = vmatmul.mubr.f32.gmra.mrb[0].mxu0 %v2147
    %v2217 = vpop.f32.mrb[0].mxu0
    %v2218 = vadd.f32 0.0, %v2217
    %v2219 = vpop.f32.mrb[0].mxu0
    %2220 = vdwg.mxu0
    %v2221 = vmul.f32 %v2218, 0.35355338
    %v2222 = vsel %vm743, %v2221, -inf
    %2223 = vmax.xlane.f32.xlu0 %v2222
    %v2224 = vpop.xlane.xlu0 %2223
    %v2225 = vsub.f32 %v2221, %v2224
    %v2226 = vmul.f32 %v2225, 1.442695
    %v2227 = vpow.pop %v2226
    %v2228 = vsel %vm743, %v2227, 0.0
    %2229 = vadd.xlane.f32.xlu0 %v2228
    %v2230 = vpop.xlane.xlu0 %2229
    %v2231 = vrcp.pop %v2230
    %v2232 = vmul.f32 %v2227, %v2231
    %2233 = vrot.lane.b32.xlu0 %v736, 104
    %v2234 = vpop.permute.xlu0 %2233
    %v2237 = vsel %vm743, %v2232, 0
    %2239 = vmatprep.subr.mxu0 0.0
    %2240 = vmatpush1.msra.mxu0 %v2234
    %2241 = vmatprep.subr.mxu0 0.0
    %2242 = vmatpush1.msra.mxu0 0.0
    %2243 = vmatprep.subr.mxu0 0.0
    %2244 = vmatpush1.msra.mxu0 0.0
    %2245 = vmatprep.subr.mxu0 0.0
    %2246 = vmatpush1.msra.mxu0 0.0
    %2247 = vmatprep.subr.mxu0 0.0
    %2248 = vmatpush1.msra.mxu0 0.0
    %2249 = vmatprep.subr.mxu0 0.0
    %2250 = vmatpush1.msra.mxu0 0.0
    %2251 = vmatprep.subr.mxu0 0.0
    %2252 = vmatpush1.msra.mxu0 0.0
    %2253 = vmatprep.subr.mxu0 0.0
    %2254 = vmatpush1.msra.mxu0 0.0
    %2255 = vmatprep.subr.mxu0 0.0
    %2256 = vmatpush1.msra.mxu0 0.0
    %2257 = vmatprep.subr.mxu0 0.0
    %2258 = vmatpush1.msra.mxu0 0.0
    %2259 = vmatprep.subr.mxu0 0.0
    %2260 = vmatpush1.msra.mxu0 0.0
    %2261 = vmatprep.subr.mxu0 0.0
    %2262 = vmatpush1.msra.mxu0 0.0
    %2263 = vmatprep.subr.mxu0 0.0
    %2264 = vmatpush1.msra.mxu0 0.0
    %2265 = vmatprep.subr.mxu0 0.0
    %2266 = vmatpush1.msra.mxu0 0.0
    %2267 = vmatprep.subr.mxu0 0.0
    %2268 = vmatpush1.msra.mxu0 0.0
    %2269 = vmatprep.subr.mxu0 0.0
    %2270 = vmatpush1.msra.mxu0 0.0
    %2271 = vmatprep.subr.mxu0 0.0
    %2272 = vmatpush1.msra.mxu0 0.0
    %2273 = vmatprep.subr.mxu0 0.0
    %2274 = vmatpush1.msra.mxu0 0.0
    %2275 = vmatprep.subr.mxu0 0.0
    %2276 = vmatpush1.msra.mxu0 0.0
    %2277 = vmatprep.subr.mxu0 0.0
    %2278 = vmatpush1.msra.mxu0 0.0
    %2279 = vmatprep.subr.mxu0 0.0
    %2280 = vmatpush1.msra.mxu0 0.0
    %2281 = vmatprep.subr.mxu0 0.0
    %2282 = vmatpush1.msra.mxu0 0.0
    %2283 = vmatprep.subr.mxu0 0.0
    %2284 = vmatpush1.msra.mxu0 0.0
    %2285 = vmatprep.subr.mxu0 0.0
    %2286 = vmatpush1.msra.mxu0 0.0
    %2287 = vmatprep.subr.mxu0 0.0
    %2288 = vmatpush1.msra.mxu0 0.0
    %2289 = vmatprep.subr.mxu0 0.0
    %2290 = vmatpush1.msra.mxu0 0.0
    %2291 = vmatprep.subr.mxu0 0.0
    %2292 = vmatpush1.msra.mxu0 0.0
    %2293 = vmatprep.subr.mxu0 0.0
    %2294 = vmatpush1.msra.mxu0 0.0
    %2295 = vmatprep.subr.mxu0 0.0
    %2296 = vmatpush1.msra.mxu0 0.0
    %2297 = vmatprep.subr.mxu0 0.0
    %2298 = vmatpush1.msra.mxu0 0.0
    %2299 = vmatprep.subr.mxu0 0.0
    %2300 = vmatpush1.msra.mxu0 0.0
    %2301 = vmatprep.subr.mxu0 0.0
    %2302 = vmatpush1.msra.mxu0 0.0
    %2303 = vmatprep.mubr.f32.mxu0 0.0
    %2304 = vmatmul.mubr.f32.gmra.mrb[0].mxu0 %v2237
    %v2305 = vpop.f32.mrb[0].mxu0
    %v2306 = vadd.f32 0.0, %v2305
    %v2307 = vpop.f32.mrb[0].mxu0
    %2308 = vdwg.mxu0
    %v2310 = vsel %vm743, %v2140, 0
    %v2313 = vsel %vm743, %v2306, 0
    %2315 = vmatprep.subr.mxu0 0.0
    %2316 = vmatpush1.msra.mxu0 %v742
    %2317 = vmatprep.subr.mxu0 0.0
    %2318 = vmatpush1.msra.mxu0 0.0
    %2319 = vmatprep.subr.mxu0 0.0
    %2320 = vmatpush1.msra.mxu0 0.0
    %2321 = vmatprep.subr.mxu0 0.0
    %2322 = vmatpush1.msra.mxu0 0.0
    %2323 = vmatprep.subr.mxu0 0.0
    %2324 = vmatpush1.msra.mxu0 0.0
    %2325 = vmatprep.subr.mxu0 0.0
    %2326 = vmatpush1.msra.mxu0 0.0
    %2327 = vmatprep.subr.mxu0 0.0
    %2328 = vmatpush1.msra.mxu0 0.0
    %2329 = vmatprep.subr.mxu0 0.0
    %2330 = vmatpush1.msra.mxu0 0.0
    %2331 = vmatprep.subr.mxu0 0.0
    %2332 = vmatpush1.msra.mxu0 0.0
    %2333 = vmatprep.subr.mxu0 0.0
    %2334 = vmatpush1.msra.mxu0 0.0
    %2335 = vmatprep.subr.mxu0 0.0
    %2336 = vmatpush1.msra.mxu0 0.0
    %2337 = vmatprep.subr.mxu0 0.0
    %2338 = vmatpush1.msra.mxu0 0.0
    %2339 = vmatprep.subr.mxu0 0.0
    %2340 = vmatpush1.msra.mxu0 0.0
    %2341 = vmatprep.subr.mxu0 0.0
    %2342 = vmatpush1.msra.mxu0 0.0
    %2343 = vmatprep.subr.mxu0 0.0
    %2344 = vmatpush1.msra.mxu0 0.0
    %2345 = vmatprep.subr.mxu0 0.0
    %2346 = vmatpush1.msra.mxu0 0.0
    %2347 = vmatprep.subr.mxu0 0.0
    %2348 = vmatpush1.msra.mxu0 0.0
    %2349 = vmatprep.subr.mxu0 0.0
    %2350 = vmatpush1.msra.mxu0 0.0
    %2351 = vmatprep.subr.mxu0 0.0
    %2352 = vmatpush1.msra.mxu0 0.0
    %2353 = vmatprep.subr.mxu0 0.0
    %2354 = vmatpush1.msra.mxu0 0.0
    %2355 = vmatprep.subr.mxu0 0.0
    %2356 = vmatpush1.msra.mxu0 0.0
    %2357 = vmatprep.subr.mxu0 0.0
    %2358 = vmatpush1.msra.mxu0 0.0
    %2359 = vmatprep.subr.mxu0 0.0
    %2360 = vmatpush1.msra.mxu0 0.0
    %2361 = vmatprep.subr.mxu0 0.0
    %2362 = vmatpush1.msra.mxu0 0.0
    %2363 = vmatprep.subr.mxu0 0.0
    %2364 = vmatpush1.msra.mxu0 0.0
    %2365 = vmatprep.subr.mxu0 0.0
    %2366 = vmatpush1.msra.mxu0 0.0
    %2367 = vmatprep.subr.mxu0 0.0
    %2368 = vmatpush1.msra.mxu0 0.0
    %2369 = vmatprep.subr.mxu0 0.0
    %2370 = vmatpush1.msra.mxu0 0.0
    %2371 = vmatprep.subr.mxu0 0.0
    %2372 = vmatpush1.msra.mxu0 0.0
    %2373 = vmatprep.subr.mxu0 0.0
    %2374 = vmatpush1.msra.mxu0 0.0
    %2375 = vmatprep.subr.mxu0 0.0
    %2376 = vmatpush1.msra.mxu0 0.0
    %2377 = vmatprep.subr.mxu0 0.0
    %2378 = vmatpush1.msra.mxu0 0.0
    %2379 = vmatprep.mubr.f32.mxu0 0.0
    %2380 = vmatmul.mubr.f32.gmra.mrb[0].mxu0 %v2310
    %v2381 = vpop.f32.mrb[0].mxu0
    %v2382 = vadd.f32 0.0, %v2381
    %v2383 = vpop.f32.mrb[0].mxu0
    %2384 = vmatprep.mubr.f32.mxu0 0.0
    %2385 = vmatmul.mubr.f32.gmra.mrb[0].mxu0 %v2313
    %v2386 = vpop.f32.mrb[0].mxu0
    %v2387 = vadd.f32 0.0, %v2386
    %v2388 = vpop.f32.mrb[0].mxu0
    %2389 = vdwg.mxu0
    %v2390 = vadd.f32 %v1975, %v2382
    %v2391 = vadd.f32 %v1976, %v2387
    %v2392 = vld [vmem:[#allocation9] sm:$0x1]
    %v2394 = vlaneseq
    %v2395 = vshrl.u32 %v2394, 7
    %v2396 = vsub.s32 0, %v2395
    %v2397 = vrot.slane %v2392, %v2396
    %v2399 = vadd.f32 %v2390, %v2397
    %v2400 = vadd.f32 %v2391, %v2397
    %v2401 = vadd.f32 %v2399, %v473
    %v2402 = vadd.f32 %v2400, %v474
    %v2403 = vld [vmem:[#allocation10] sm:$0x1]
    %v2404 = vld [vmem:[#allocation12] sm:$0x1]
    %v2405 = vsel %vm431, %v2401, 0.0
    %2406 = vadd.xlane.f32.xlu0 %v2405
    %v2407 = vpop.xlane.xlu0 %2406
    %v2408 = vsel %vm431, %v2402, 0.0
    %2409 = vadd.xlane.f32.xlu0 %v2408
    %v2410 = vpop.xlane.xlu0 %2409
    %v2411 = vmul.f32 %v2407, %v438
    %v2412 = vmul.f32 %v2410, %v438
    %v2413 = vsub.f32 %v2401, %v2411
    %v2414 = vsub.f32 %v2402, %v2412
    %v2415 = vmul.f32 %v2413, %v2413
    %v2416 = vmul.f32 %v2414, %v2414
    %v2417 = vsel %vm431, %v2415, 0.0
    %2418 = vadd.xlane.f32.xlu0 %v2417
    %v2419 = vpop.xlane.xlu0 %2418
    %v2420 = vsel %vm431, %v2416, 0.0
    %2421 = vadd.xlane.f32.xlu0 %v2420
    %v2422 = vpop.xlane.xlu0 %2421
    %v2423 = vmul.f32 %v2419, %v438
    %v2424 = vmul.f32 %v2422, %v438
    %v2425 = vadd.f32 %v2423, 1e-12
    %v2426 = vadd.f32 %v2424, 1e-12
    %v2427 = vrsqrt.pop %v2425
    %v2428 = vrsqrt.pop %v2426
    %v2429 = vmul.f32 %v2413, %v2427
    %v2430 = vmul.f32 %v2414, %v2428
    %v2432 = vlaneseq
    %v2433 = vshrl.u32 %v2432, 7
    %v2434 = vsub.s32 0, %v2433
    %v2435 = vrot.slane %v2403, %v2434
    %v2437 = vmul.f32 %v2429, %v2435
    %v2438 = vmul.f32 %v2430, %v2435
    %v2440 = vlaneseq
    %v2441 = vshrl.u32 %v2440, 7
    %v2442 = vsub.s32 0, %v2441
    %v2443 = vrot.slane %v2404, %v2442
    %v2445 = vadd.f32 %v2437, %v2443
    %v2446 = vadd.f32 %v2438, %v2443
    %v2447 = vld [vmem:[%s33] sm:$0xff]
    %v2448 = vld [vmem:[%s33 + $0x8] sm:$0xff]
    %v2449 = vld [vmem:[%s33 + $0x10] sm:$0xff]
    %v2450 = vld [vmem:[%s33 + $0x18] sm:$0xff]
    %v2451 = vld [vmem:[#allocation13] sm:$0x1]
    %v2453 = vlaneseq
    %v2454 = vshrl.u32 %v2453, 7
    %v2455 = vsub.s32 0, %v2454
    %v2456 = vrot.slane %v2451, %v2455
    %v2459 = vsel %vm431, %v2445, 0
    %v2462 = vsel %vm431, %v2446, 0
    %2464 = vmatprep.subr.mxu0 0.0
    %2465 = vmatpush1.msra.mxu0 %v2447
    %2466 = vmatprep.subr.mxu0 0.0
    %2467 = vmatpush1.msra.mxu0 %v2448
    %2468 = vmatprep.subr.mxu0 0.0
    %2469 = vmatpush1.msra.mxu0 %v2449
    %2470 = vmatprep.subr.mxu0 0.0
    %2471 = vmatpush1.msra.mxu0 %v2450
    %2472 = vmatprep.subr.mxu0 0.0
    %2473 = vmatpush1.msra.mxu0 0.0
    %2474 = vmatprep.subr.mxu0 0.0
    %2475 = vmatpush1.msra.mxu0 0.0
    %2476 = vmatprep.subr.mxu0 0.0
    %2477 = vmatpush1.msra.mxu0 0.0
    %2478 = vmatprep.subr.mxu0 0.0
    %2479 = vmatpush1.msra.mxu0 0.0
    %2480 = vmatprep.subr.mxu0 0.0
    %2481 = vmatpush1.msra.mxu0 0.0
    %2482 = vmatprep.subr.mxu0 0.0
    %2483 = vmatpush1.msra.mxu0 0.0
    %2484 = vmatprep.subr.mxu0 0.0
    %2485 = vmatpush1.msra.mxu0 0.0
    %2486 = vmatprep.subr.mxu0 0.0
    %2487 = vmatpush1.msra.mxu0 0.0
    %2488 = vmatprep.subr.mxu0 0.0
    %2489 = vmatpush1.msra.mxu0 0.0
    %2490 = vmatprep.subr.mxu0 0.0
    %2491 = vmatpush1.msra.mxu0 0.0
    %2492 = vmatprep.subr.mxu0 0.0
    %2493 = vmatpush1.msra.mxu0 0.0
    %2494 = vmatprep.subr.mxu0 0.0
    %2495 = vmatpush1.msra.mxu0 0.0
    %2496 = vmatprep.subr.mxu0 0.0
    %2497 = vmatpush1.msra.mxu0 0.0
    %2498 = vmatprep.subr.mxu0 0.0
    %2499 = vmatpush1.msra.mxu0 0.0
    %2500 = vmatprep.subr.mxu0 0.0
    %2501 = vmatpush1.msra.mxu0 0.0
    %2502 = vmatprep.subr.mxu0 0.0
    %2503 = vmatpush1.msra.mxu0 0.0
    %2504 = vmatprep.subr.mxu0 0.0
    %2505 = vmatpush1.msra.mxu0 0.0
    %2506 = vmatprep.subr.mxu0 0.0
    %2507 = vmatpush1.msra.mxu0 0.0
    %2508 = vmatprep.subr.mxu0 0.0
    %2509 = vmatpush1.msra.mxu0 0.0
    %2510 = vmatprep.subr.mxu0 0.0
    %2511 = vmatpush1.msra.mxu0 0.0
    %2512 = vmatprep.subr.mxu0 0.0
    %2513 = vmatpush1.msra.mxu0 0.0
    %2514 = vmatprep.subr.mxu0 0.0
    %2515 = vmatpush1.msra.mxu0 0.0
    %2516 = vmatprep.subr.mxu0 0.0
    %2517 = vmatpush1.msra.mxu0 0.0
    %2518 = vmatprep.subr.mxu0 0.0
    %2519 = vmatpush1.msra.mxu0 0.0
    %2520 = vmatprep.subr.mxu0 0.0
    %2521 = vmatpush1.msra.mxu0 0.0
    %2522 = vmatprep.subr.mxu0 0.0
    %2523 = vmatpush1.msra.mxu0 0.0
    %2524 = vmatprep.subr.mxu0 0.0
    %2525 = vmatpush1.msra.mxu0 0.0
    %2526 = vmatprep.subr.mxu0 0.0
    %2527 = vmatpush1.msra.mxu0 0.0
    %2528 = vmatprep.mubr.f32.mxu0 0.0
    %2529 = vmatmul.mubr.f32.gmra.mrb[0].mxu0 %v2459
    %v2530 = vpop.f32.mrb[0].mxu0
    %v2531 = vadd.f32 %v2456, %v2530
    %v2532 = vpop.f32.mrb[0].mxu0
    %2533 = vmatprep.mubr.f32.mxu0 0.0
    %2534 = vmatmul.mubr.f32.gmra.mrb[0].mxu0 %v2462
    %v2535 = vpop.f32.mrb[0].mxu0
    %v2536 = vadd.f32 %v2456, %v2535
    %v2537 = vpop.f32.mrb[0].mxu0
    %2538 = vdwg.mxu0
    %v2539 = vmul.f32 %v2531, 0.5
    %v2540 = vmul.f32 %v2536, 0.5
    %v2541 = vmul.f32 %v2531, 0.70710677
    %v2542 = vmul.f32 %v2536, 0.70710677
    %vm2543 = vcmp.ge.f32.partialorder %v2541, 0.0
    %vm2544 = vcmp.ge.f32.partialorder %v2542, 0.0
    %v2545 = vsel %vm2543, 1.0, -1.0
    %v2546 = vsel %vm2544, 1.0, -1.0
    %v2547 = vand.u32 2147483647, %v2541
    %v2548 = vand.u32 2147483647, %v2542
    %v2549 = vmul.f32 %v2547, 0.3275911
    %v2550 = vmul.f32 %v2548, 0.3275911
    %v2551 = vadd.f32 %v2549, 1.0
    %v2552 = vadd.f32 %v2550, 1.0
    %v2553 = vrcp.pop %v2551
    %v2554 = vmul.f32 1.0, %v2553
    %v2555 = vrcp.pop %v2552
    %v2556 = vmul.f32 1.0, %v2555
    %v2557 = vmul.f32 %v2554, 1.0614054
    %v2558 = vmul.f32 %v2556, 1.0614054
    %v2559 = vadd.f32 %v2557, -1.4531521
    %v2560 = vadd.f32 %v2558, -1.4531521
    %v2561 = vmul.f32 %v2559, %v2554
    %v2562 = vmul.f32 %v2560, %v2556
    %v2563 = vadd.f32 %v2561, 1.4214138
    %v2564 = vadd.f32 %v2562, 1.4214138
    %v2565 = vmul.f32 %v2563, %v2554
    %v2566 = vmul.f32 %v2564, %v2556
    %v2567 = vadd.f32 %v2565, -0.28449672
    %v2568 = vadd.f32 %v2566, -0.28449672
    %v2569 = vmul.f32 %v2567, %v2554
    %v2570 = vmul.f32 %v2568, %v2556
    %v2571 = vadd.f32 %v2569, 0.2548296
    %v2572 = vadd.f32 %v2570, 0.2548296
    %v2573 = vmul.f32 %v2571, %v2554
    %v2574 = vmul.f32 %v2572, %v2556
    %v2575 = vsub.f32 0.0, %v2547
    %v2576 = vsub.f32 0.0, %v2548
    %v2577 = vmul.f32 %v2575, %v2547
    %v2578 = vmul.f32 %v2576, %v2548
    %v2579 = vmul.f32 %v2577, 1.442695
    %v2580 = vpow.pop %v2579
    %v2581 = vmul.f32 %v2578, 1.442695
    %v2582 = vpow.pop %v2581
    %v2583 = vmul.f32 %v2573, %v2580
    %v2584 = vmul.f32 %v2574, %v2582
    %v2585 = vsub.f32 1.0, %v2583
    %v2586 = vsub.f32 1.0, %v2584
    %v2587 = vmul.f32 %v2545, %v2585
    %v2588 = vmul.f32 %v2546, %v2586
    %v2589 = vadd.f32 %v2587, 1.0
    %v2590 = vadd.f32 %v2588, 1.0
    %v2591 = vmul.f32 %v2539, %v2589
    %v2592 = vmul.f32 %v2540, %v2590
    %v2593 = vld [vmem:[%s37] sm:$0xff]
    %v2594 = vld [vmem:[%s37 + $0x8] sm:$0xff]
    %v2595 = vld [vmem:[%s37 + $0x10] sm:$0xff]
    %v2596 = vld [vmem:[%s37 + $0x18] sm:$0xff]
    %v2597 = vld [vmem:[%s37 + $0x20] sm:$0xff]
    %v2598 = vld [vmem:[%s37 + $0x28] sm:$0xff]
    %v2599 = vld [vmem:[%s37 + $0x30] sm:$0xff]
    %v2600 = vld [vmem:[%s37 + $0x38] sm:$0xff]
    %v2601 = vld [vmem:[#allocation15] sm:$0x1]
    %v2603 = vlaneseq
    %v2604 = vshrl.u32 %v2603, 7
    %v2605 = vsub.s32 0, %v2604
    %v2606 = vrot.slane %v2601, %v2605
    %vm2608 = vcmask 523264
    %v2610 = vsel %vm2608, %v2591, 0
    %v2613 = vsel %vm2608, %v2592, 0
    %2615 = vmatprep.subr.mxu0 0.0
    %2616 = vmatpush1.msra.mxu0 %v2593
    %2617 = vmatprep.subr.mxu0 0.0
    %2618 = vmatpush1.msra.mxu0 %v2594
    %2619 = vmatprep.subr.mxu0 0.0
    %2620 = vmatpush1.msra.mxu0 %v2595
    %2621 = vmatprep.subr.mxu0 0.0
    %2622 = vmatpush1.msra.mxu0 %v2596
    %2623 = vmatprep.subr.mxu0 0.0
    %2624 = vmatpush1.msra.mxu0 %v2597
    %2625 = vmatprep.subr.mxu0 0.0
    %2626 = vmatpush1.msra.mxu0 %v2598
    %2627 = vmatprep.subr.mxu0 0.0
    %2628 = vmatpush1.msra.mxu0 %v2599
    %2629 = vmatprep.subr.mxu0 0.0
    %2630 = vmatpush1.msra.mxu0 %v2600
    %2631 = vmatprep.subr.mxu0 0.0
    %2632 = vmatpush1.msra.mxu0 0.0
    %2633 = vmatprep.subr.mxu0 0.0
    %2634 = vmatpush1.msra.mxu0 0.0
    %2635 = vmatprep.subr.mxu0 0.0
    %2636 = vmatpush1.msra.mxu0 0.0
    %2637 = vmatprep.subr.mxu0 0.0
    %2638 = vmatpush1.msra.mxu0 0.0
    %2639 = vmatprep.subr.mxu0 0.0
    %2640 = vmatpush1.msra.mxu0 0.0
    %2641 = vmatprep.subr.mxu0 0.0
    %2642 = vmatpush1.msra.mxu0 0.0
    %2643 = vmatprep.subr.mxu0 0.0
    %2644 = vmatpush1.msra.mxu0 0.0
    %2645 = vmatprep.subr.mxu0 0.0
    %2646 = vmatpush1.msra.mxu0 0.0
    %2647 = vmatprep.subr.mxu0 0.0
    %2648 = vmatpush1.msra.mxu0 0.0
    %2649 = vmatprep.subr.mxu0 0.0
    %2650 = vmatpush1.msra.mxu0 0.0
    %2651 = vmatprep.subr.mxu0 0.0
    %2652 = vmatpush1.msra.mxu0 0.0
    %2653 = vmatprep.subr.mxu0 0.0
    %2654 = vmatpush1.msra.mxu0 0.0
    %2655 = vmatprep.subr.mxu0 0.0
    %2656 = vmatpush1.msra.mxu0 0.0
    %2657 = vmatprep.subr.mxu0 0.0
    %2658 = vmatpush1.msra.mxu0 0.0
    %2659 = vmatprep.subr.mxu0 0.0
    %2660 = vmatpush1.msra.mxu0 0.0
    %2661 = vmatprep.subr.mxu0 0.0
    %2662 = vmatpush1.msra.mxu0 0.0
    %2663 = vmatprep.subr.mxu0 0.0
    %2664 = vmatpush1.msra.mxu0 0.0
    %2665 = vmatprep.subr.mxu0 0.0
    %2666 = vmatpush1.msra.mxu0 0.0
    %2667 = vmatprep.subr.mxu0 0.0
    %2668 = vmatpush1.msra.mxu0 0.0
    %2669 = vmatprep.subr.mxu0 0.0
    %2670 = vmatpush1.msra.mxu0 0.0
    %2671 = vmatprep.subr.mxu0 0.0
    %2672 = vmatpush1.msra.mxu0 0.0
    %2673 = vmatprep.subr.mxu0 0.0
    %2674 = vmatpush1.msra.mxu0 0.0
    %2675 = vmatprep.subr.mxu0 0.0
    %2676 = vmatpush1.msra.mxu0 0.0
    %2677 = vmatprep.subr.mxu0 0.0
    %2678 = vmatpush1.msra.mxu0 0.0
    %2679 = vmatprep.mubr.f32.mxu0 0.0
    %2680 = vmatmul.mubr.f32.gmra.mrb[0].mxu0 %v2610
    %v2681 = vpop.f32.mrb[0].mxu0
    %v2682 = vadd.f32 %v2606, %v2681
    %v2683 = vpop.f32.mrb[0].mxu0
    %2684 = vmatprep.mubr.f32.mxu0 0.0
    %2685 = vmatmul.mubr.f32.gmra.mrb[0].mxu0 %v2613
    %v2686 = vpop.f32.mrb[0].mxu0
    %v2687 = vadd.f32 %v2606, %v2686
    %v2688 = vpop.f32.mrb[0].mxu0
    %2689 = vdwg.mxu0
    %v2690 = vadd.f32 %v2682, %v2445
    %v2691 = vadd.f32 %v2687, %v2446
    %v2692 = vld [vmem:[%s41] sm:$0x1]
    %v2693 = vld [vmem:[#allocation16] sm:$0x1]
    %v2694 = vsel %vm431, %v2690, 0.0
    %2695 = vadd.xlane.f32.xlu0 %v2694
    %v2696 = vpop.xlane.xlu0 %2695
    %v2697 = vsel %vm431, %v2691, 0.0
    %2698 = vadd.xlane.f32.xlu0 %v2697
    %v2699 = vpop.xlane.xlu0 %2698
    %v2700 = vmul.f32 %v2696, %v438
    %v2701 = vmul.f32 %v2699, %v438
    %v2702 = vsub.f32 %v2690, %v2700
    %v2703 = vsub.f32 %v2691, %v2701
    %v2704 = vmul.f32 %v2702, %v2702
    %v2705 = vmul.f32 %v2703, %v2703
    %v2706 = vsel %vm431, %v2704, 0.0
    %2707 = vadd.xlane.f32.xlu0 %v2706
    %v2708 = vpop.xlane.xlu0 %2707
    %v2709 = vsel %vm431, %v2705, 0.0
    %2710 = vadd.xlane.f32.xlu0 %v2709
    %v2711 = vpop.xlane.xlu0 %2710
    %v2712 = vmul.f32 %v2708, %v438
    %v2713 = vmul.f32 %v2711, %v438
    %v2714 = vadd.f32 %v2712, 1e-12
    %v2715 = vadd.f32 %v2713, 1e-12
    %v2716 = vrsqrt.pop %v2714
    %v2717 = vrsqrt.pop %v2715
    %v2718 = vmul.f32 %v2702, %v2716
    %v2719 = vmul.f32 %v2703, %v2717
    %v2721 = vlaneseq
    %v2722 = vshrl.u32 %v2721, 7
    %v2723 = vsub.s32 0, %v2722
    %v2724 = vrot.slane %v2692, %v2723
    %v2726 = vmul.f32 %v2718, %v2724
    %v2727 = vmul.f32 %v2719, %v2724
    %v2729 = vlaneseq
    %v2730 = vshrl.u32 %v2729, 7
    %v2731 = vsub.s32 0, %v2730
    %v2732 = vrot.slane %v2693, %v2731
    %v2734 = vadd.f32 %v2726, %v2732
    %v2735 = vadd.f32 %v2727, %v2732
    %s2736 = scalar_lea.vmem %s13, 32
    %v2737 = vld [vmem:[%s2736] sm:$0xff]
    %v2738 = vld [vmem:[%s2736 + $0x8] sm:$0xff]
    %v2739 = vld [vmem:[%s2736 + $0x10] sm:$0xff]
    %v2740 = vld [vmem:[%s2736 + $0x18] sm:$0xff]
    %s2741 = scalar_lea.vmem [#allocation6], 1
    %v2742 = vld [vmem:[%s2741] sm:$0x1]
    %v2744 = vlaneseq
    %v2745 = vshrl.u32 %v2744, 7
    %v2746 = vsub.s32 0, %v2745
    %v2747 = vrot.slane %v2742, %v2746
    %v2750 = vsel %vm431, %v2734, 0
    %v2753 = vsel %vm431, %v2735, 0
    %2755 = vmatprep.subr.mxu0 0.0
    %2756 = vmatpush1.msra.mxu0 %v2737
    %2757 = vmatprep.subr.mxu0 0.0
    %2758 = vmatpush1.msra.mxu0 %v2738
    %2759 = vmatprep.subr.mxu0 0.0
    %2760 = vmatpush1.msra.mxu0 %v2739
    %2761 = vmatprep.subr.mxu0 0.0
    %2762 = vmatpush1.msra.mxu0 %v2740
    %2763 = vmatprep.subr.mxu0 0.0
    %2764 = vmatpush1.msra.mxu0 0.0
    %2765 = vmatprep.subr.mxu0 0.0
    %2766 = vmatpush1.msra.mxu0 0.0
    %2767 = vmatprep.subr.mxu0 0.0
    %2768 = vmatpush1.msra.mxu0 0.0
    %2769 = vmatprep.subr.mxu0 0.0
    %2770 = vmatpush1.msra.mxu0 0.0
    %2771 = vmatprep.subr.mxu0 0.0
    %2772 = vmatpush1.msra.mxu0 0.0
    %2773 = vmatprep.subr.mxu0 0.0
    %2774 = vmatpush1.msra.mxu0 0.0
    %2775 = vmatprep.subr.mxu0 0.0
    %2776 = vmatpush1.msra.mxu0 0.0
    %2777 = vmatprep.subr.mxu0 0.0
    %2778 = vmatpush1.msra.mxu0 0.0
    %2779 = vmatprep.subr.mxu0 0.0
    %2780 = vmatpush1.msra.mxu0 0.0
    %2781 = vmatprep.subr.mxu0 0.0
    %2782 = vmatpush1.msra.mxu0 0.0
    %2783 = vmatprep.subr.mxu0 0.0
    %2784 = vmatpush1.msra.mxu0 0.0
    %2785 = vmatprep.subr.mxu0 0.0
    %2786 = vmatpush1.msra.mxu0 0.0
    %2787 = vmatprep.subr.mxu0 0.0
    %2788 = vmatpush1.msra.mxu0 0.0
    %2789 = vmatprep.subr.mxu0 0.0
    %2790 = vmatpush1.msra.mxu0 0.0
    %2791 = vmatprep.subr.mxu0 0.0
    %2792 = vmatpush1.msra.mxu0 0.0
    %2793 = vmatprep.subr.mxu0 0.0
    %2794 = vmatpush1.msra.mxu0 0.0
    %2795 = vmatprep.subr.mxu0 0.0
    %2796 = vmatpush1.msra.mxu0 0.0
    %2797 = vmatprep.subr.mxu0 0.0
    %2798 = vmatpush1.msra.mxu0 0.0
    %2799 = vmatprep.subr.mxu0 0.0
    %2800 = vmatpush1.msra.mxu0 0.0
    %2801 = vmatprep.subr.mxu0 0.0
    %2802 = vmatpush1.msra.mxu0 0.0
    %2803 = vmatprep.subr.mxu0 0.0
    %2804 = vmatpush1.msra.mxu0 0.0
    %2805 = vmatprep.subr.mxu0 0.0
    %2806 = vmatpush1.msra.mxu0 0.0
    %2807 = vmatprep.subr.mxu0 0.0
    %2808 = vmatpush1.msra.mxu0 0.0
    %2809 = vmatprep.subr.mxu0 0.0
    %2810 = vmatpush1.msra.mxu0 0.0
    %2811 = vmatprep.subr.mxu0 0.0
    %2812 = vmatpush1.msra.mxu0 0.0
    %2813 = vmatprep.subr.mxu0 0.0
    %2814 = vmatpush1.msra.mxu0 0.0
    %2815 = vmatprep.subr.mxu0 0.0
    %2816 = vmatpush1.msra.mxu0 0.0
    %2817 = vmatprep.subr.mxu0 0.0
    %2818 = vmatpush1.msra.mxu0 0.0
    %2819 = vmatprep.mubr.f32.mxu0 0.0
    %2820 = vmatmul.mubr.f32.gmra.mrb[0].mxu0 %v2750
    %v2821 = vpop.f32.mrb[0].mxu0
    %v2822 = vadd.f32 %v2747, %v2821
    %v2823 = vpop.f32.mrb[0].mxu0
    %2824 = vmatprep.mubr.f32.mxu0 0.0
    %2825 = vmatmul.mubr.f32.gmra.mrb[0].mxu0 %v2753
    %v2826 = vpop.f32.mrb[0].mxu0
    %v2827 = vadd.f32 %v2747, %v2826
    %v2828 = vpop.f32.mrb[0].mxu0
    %2829 = vdwg.mxu0
    %s2830 = scalar_lea.vmem %s17, 32
    %v2831 = vld [vmem:[%s2830] sm:$0xff]
    %v2832 = vld [vmem:[%s2830 + $0x8] sm:$0xff]
    %v2833 = vld [vmem:[%s2830 + $0x10] sm:$0xff]
    %v2834 = vld [vmem:[%s2830 + $0x18] sm:$0xff]
    %s2835 = scalar_lea.vmem [#allocation7], 1
    %v2836 = vld [vmem:[%s2835] sm:$0x1]
    %v2838 = vlaneseq
    %v2839 = vshrl.u32 %v2838, 7
    %v2840 = vsub.s32 0, %v2839
    %v2841 = vrot.slane %v2836, %v2840
    %2843 = vmatprep.subr.mxu0 0.0
    %2844 = vmatpush1.msra.mxu0 %v2831
    %2845 = vmatprep.subr.mxu0 0.0
    %2846 = vmatpush1.msra.mxu0 %v2832
    %2847 = vmatprep.subr.mxu0 0.0
    %2848 = vmatpush1.msra.mxu0 %v2833
    %2849 = vmatprep.subr.mxu0 0.0
    %2850 = vmatpush1.msra.mxu0 %v2834
    %2851 = vmatprep.subr.mxu0 0.0
    %2852 = vmatpush1.msra.mxu0 0.0
    %2853 = vmatprep.subr.mxu0 0.0
    %2854 = vmatpush1.msra.mxu0 0.0
    %2855 = vmatprep.subr.mxu0 0.0
    %2856 = vmatpush1.msra.mxu0 0.0
    %2857 = vmatprep.subr.mxu0 0.0
    %2858 = vmatpush1.msra.mxu0 0.0
    %2859 = vmatprep.subr.mxu0 0.0
    %2860 = vmatpush1.msra.mxu0 0.0
    %2861 = vmatprep.subr.mxu0 0.0
    %2862 = vmatpush1.msra.mxu0 0.0
    %2863 = vmatprep.subr.mxu0 0.0
    %2864 = vmatpush1.msra.mxu0 0.0
    %2865 = vmatprep.subr.mxu0 0.0
    %2866 = vmatpush1.msra.mxu0 0.0
    %2867 = vmatprep.subr.mxu0 0.0
    %2868 = vmatpush1.msra.mxu0 0.0
    %2869 = vmatprep.subr.mxu0 0.0
    %2870 = vmatpush1.msra.mxu0 0.0
    %2871 = vmatprep.subr.mxu0 0.0
    %2872 = vmatpush1.msra.mxu0 0.0
    %2873 = vmatprep.subr.mxu0 0.0
    %2874 = vmatpush1.msra.mxu0 0.0
    %2875 = vmatprep.subr.mxu0 0.0
    %2876 = vmatpush1.msra.mxu0 0.0
    %2877 = vmatprep.subr.mxu0 0.0
    %2878 = vmatpush1.msra.mxu0 0.0
    %2879 = vmatprep.subr.mxu0 0.0
    %2880 = vmatpush1.msra.mxu0 0.0
    %2881 = vmatprep.subr.mxu0 0.0
    %2882 = vmatpush1.msra.mxu0 0.0
    %2883 = vmatprep.subr.mxu0 0.0
    %2884 = vmatpush1.msra.mxu0 0.0
    %2885 = vmatprep.subr.mxu0 0.0
    %2886 = vmatpush1.msra.mxu0 0.0
    %2887 = vmatprep.subr.mxu0 0.0
    %2888 = vmatpush1.msra.mxu0 0.0
    %2889 = vmatprep.subr.mxu0 0.0
    %2890 = vmatpush1.msra.mxu0 0.0
    %2891 = vmatprep.subr.mxu0 0.0
    %2892 = vmatpush1.msra.mxu0 0.0
    %2893 = vmatprep.subr.mxu0 0.0
    %2894 = vmatpush1.msra.mxu0 0.0
    %2895 = vmatprep.subr.mxu0 0.0
    %2896 = vmatpush1.msra.mxu0 0.0
    %2897 = vmatprep.subr.mxu0 0.0
    %2898 = vmatpush1.msra.mxu0 0.0
    %2899 = vmatprep.subr.mxu0 0.0
    %2900 = vmatpush1.msra.mxu0 0.0
    %2901 = vmatprep.subr.mxu0 0.0
    %2902 = vmatpush1.msra.mxu0 0.0
    %2903 = vmatprep.subr.mxu0 0.0
    %2904 = vmatpush1.msra.mxu0 0.0
    %2905 = vmatprep.subr.mxu0 0.0
    %2906 = vmatpush1.msra.mxu0 0.0
    %2907 = vmatprep.mubr.f32.mxu0 0.0
    %2908 = vmatmul.mubr.f32.gmra.mrb[0].mxu0 %v2750
    %v2909 = vpop.f32.mrb[0].mxu0
    %v2910 = vadd.f32 %v2841, %v2909
    %v2911 = vpop.f32.mrb[0].mxu0
    %2912 = vmatprep.mubr.f32.mxu0 0.0
    %2913 = vmatmul.mubr.f32.gmra.mrb[0].mxu0 %v2753
    %v2914 = vpop.f32.mrb[0].mxu0
    %v2915 = vadd.f32 %v2841, %v2914
    %v2916 = vpop.f32.mrb[0].mxu0
    %2917 = vdwg.mxu0
    %s2918 = scalar_lea.vmem %s21, 32
    %v2919 = vld [vmem:[%s2918] sm:$0xff]
    %v2920 = vld [vmem:[%s2918 + $0x8] sm:$0xff]
    %v2921 = vld [vmem:[%s2918 + $0x10] sm:$0xff]
    %v2922 = vld [vmem:[%s2918 + $0x18] sm:$0xff]
    %s2923 = scalar_lea.vmem %s23, 1
    %v2924 = vld [vmem:[%s2923] sm:$0x1]
    %v2926 = vlaneseq
    %v2927 = vshrl.u32 %v2926, 7
    %v2928 = vsub.s32 0, %v2927
    %v2929 = vrot.slane %v2924, %v2928
    %2931 = vmatprep.subr.mxu0 0.0
    %2932 = vmatpush1.msra.mxu0 %v2919
    %2933 = vmatprep.subr.mxu0 0.0
    %2934 = vmatpush1.msra.mxu0 %v2920
    %2935 = vmatprep.subr.mxu0 0.0
    %2936 = vmatpush1.msra.mxu0 %v2921
    %2937 = vmatprep.subr.mxu0 0.0
    %2938 = vmatpush1.msra.mxu0 %v2922
    %2939 = vmatprep.subr.mxu0 0.0
    %2940 = vmatpush1.msra.mxu0 0.0
    %2941 = vmatprep.subr.mxu0 0.0
    %2942 = vmatpush1.msra.mxu0 0.0
    %2943 = vmatprep.subr.mxu0 0.0
    %2944 = vmatpush1.msra.mxu0 0.0
    %2945 = vmatprep.subr.mxu0 0.0
    %2946 = vmatpush1.msra.mxu0 0.0
    %2947 = vmatprep.subr.mxu0 0.0
    %2948 = vmatpush1.msra.mxu0 0.0
    %2949 = vmatprep.subr.mxu0 0.0
    %2950 = vmatpush1.msra.mxu0 0.0
    %2951 = vmatprep.subr.mxu0 0.0
    %2952 = vmatpush1.msra.mxu0 0.0
    %2953 = vmatprep.subr.mxu0 0.0
    %2954 = vmatpush1.msra.mxu0 0.0
    %2955 = vmatprep.subr.mxu0 0.0
    %2956 = vmatpush1.msra.mxu0 0.0
    %2957 = vmatprep.subr.mxu0 0.0
    %2958 = vmatpush1.msra.mxu0 0.0
    %2959 = vmatprep.subr.mxu0 0.0
    %2960 = vmatpush1.msra.mxu0 0.0
    %2961 = vmatprep.subr.mxu0 0.0
    %2962 = vmatpush1.msra.mxu0 0.0
    %2963 = vmatprep.subr.mxu0 0.0
    %2964 = vmatpush1.msra.mxu0 0.0
    %2965 = vmatprep.subr.mxu0 0.0
    %2966 = vmatpush1.msra.mxu0 0.0
    %2967 = vmatprep.subr.mxu0 0.0
    %2968 = vmatpush1.msra.mxu0 0.0
    %2969 = vmatprep.subr.mxu0 0.0
    %2970 = vmatpush1.msra.mxu0 0.0
    %2971 = vmatprep.subr.mxu0 0.0
    %2972 = vmatpush1.msra.mxu0 0.0
    %2973 = vmatprep.subr.mxu0 0.0
    %2974 = vmatpush1.msra.mxu0 0.0
    %2975 = vmatprep.subr.mxu0 0.0
    %2976 = vmatpush1.msra.mxu0 0.0
    %2977 = vmatprep.subr.mxu0 0.0
    %2978 = vmatpush1.msra.mxu0 0.0
    %2979 = vmatprep.subr.mxu0 0.0
    %2980 = vmatpush1.msra.mxu0 0.0
    %2981 = vmatprep.subr.mxu0 0.0
    %2982 = vmatpush1.msra.mxu0 0.0
    %2983 = vmatprep.subr.mxu0 0.0
    %2984 = vmatpush1.msra.mxu0 0.0
    %2985 = vmatprep.subr.mxu0 0.0
    %2986 = vmatpush1.msra.mxu0 0.0
    %2987 = vmatprep.subr.mxu0 0.0
    %2988 = vmatpush1.msra.mxu0 0.0
    %2989 = vmatprep.subr.mxu0 0.0
    %2990 = vmatpush1.msra.mxu0 0.0
    %2991 = vmatprep.subr.mxu0 0.0
    %2992 = vmatpush1.msra.mxu0 0.0
    %2993 = vmatprep.subr.mxu0 0.0
    %2994 = vmatpush1.msra.mxu0 0.0
    %2995 = vmatprep.mubr.f32.mxu0 0.0
    %2996 = vmatmul.mubr.f32.gmra.mrb[0].mxu0 %v2750
    %v2997 = vpop.f32.mrb[0].mxu0
    %v2998 = vadd.f32 %v2929, %v2997
    %v2999 = vpop.f32.mrb[0].mxu0
    %3000 = vmatprep.mubr.f32.mxu0 0.0
    %3001 = vmatmul.mubr.f32.gmra.mrb[0].mxu0 %v2753
    %v3002 = vpop.f32.mrb[0].mxu0
    %v3003 = vadd.f32 %v2929, %v3002
    %v3004 = vpop.f32.mrb[0].mxu0
    %3005 = vdwg.mxu0
    %s3006 = scalar_lea.vmem %s25, 32
    %v3007 = vld [vmem:[%s3006] sm:$0xff]
    %v3008 = vld [vmem:[%s3006 + $0x8] sm:$0xff]
    %v3009 = vld [vmem:[%s3006 + $0x10] sm:$0xff]
    %v3010 = vld [vmem:[%s3006 + $0x18] sm:$0xff]
    %v3012 = vsel %vm743, %v2822, 0
    %v3015 = vsel %vm743, %v2910, 0
    %3017 = vmatprep.subr.mxu0 0.0
    %3018 = vmatpush1.xpose.msra.mxu0 %v3015
    %3019 = vmatprep.subr.mxu0 0.0
    %3020 = vmatpush1.xpose.msra.mxu0 0.0
    %3021 = vmatprep.subr.mxu0 0.0
    %3022 = vmatpush1.xpose.msra.mxu0 0.0
    %3023 = vmatprep.subr.mxu0 0.0
    %3024 = vmatpush1.xpose.msra.mxu0 0.0
    %3025 = vmatprep.subr.mxu0 0.0
    %3026 = vmatpush1.xpose.msra.mxu0 0.0
    %3027 = vmatprep.subr.mxu0 0.0
    %3028 = vmatpush1.xpose.msra.mxu0 0.0
    %3029 = vmatprep.subr.mxu0 0.0
    %3030 = vmatpush1.xpose.msra.mxu0 0.0
    %3031 = vmatprep.subr.mxu0 0.0
    %3032 = vmatpush1.xpose.msra.mxu0 0.0
    %3033 = vmatprep.subr.mxu0 0.0
    %3034 = vmatpush1.xpose.msra.mxu0 0.0
    %3035 = vmatprep.subr.mxu0 0.0
    %3036 = vmatpush1.xpose.msra.mxu0 0.0
    %3037 = vmatprep.subr.mxu0 0.0
    %3038 = vmatpush1.xpose.msra.mxu0 0.0
    %3039 = vmatprep.subr.mxu0 0.0
    %3040 = vmatpush1.xpose.msra.mxu0 0.0
    %3041 = vmatprep.subr.mxu0 0.0
    %3042 = vmatpush1.xpose.msra.mxu0 0.0
    %3043 = vmatprep.subr.mxu0 0.0
    %3044 = vmatpush1.xpose.msra.mxu0 0.0
    %3045 = vmatprep.subr.mxu0 0.0
    %3046 = vmatpush1.xpose.msra.mxu0 0.0
    %3047 = vmatprep.subr.mxu0 0.0
    %3048 = vmatpush1.xpose.msra.mxu0 0.0
    %3049 = vmatprep.subr.mxu0 0.0
    %3050 = vmatpush1.xpose.msra.mxu0 0.0
    %3051 = vmatprep.subr.mxu0 0.0
    %3052 = vmatpush1.xpose.msra.mxu0 0.0
    %3053 = vmatprep.subr.mxu0 0.0
    %3054 = vmatpush1.xpose.msra.mxu0 0.0
    %3055 = vmatprep.subr.mxu0 0.0
    %3056 = vmatpush1.xpose.msra.mxu0 0.0
    %3057 = vmatprep.subr.mxu0 0.0
    %3058 = vmatpush1.xpose.msra.mxu0 0.0
    %3059 = vmatprep.subr.mxu0 0.0
    %3060 = vmatpush1.xpose.msra.mxu0 0.0
    %3061 = vmatprep.subr.mxu0 0.0
    %3062 = vmatpush1.xpose.msra.mxu0 0.0
    %3063 = vmatprep.subr.mxu0 0.0
    %3064 = vmatpush1.xpose.msra.mxu0 0.0
    %3065 = vmatprep.subr.mxu0 0.0
    %3066 = vmatpush1.xpose.msra.mxu0 0.0
    %3067 = vmatprep.subr.mxu0 0.0
    %3068 = vmatpush1.xpose.msra.mxu0 0.0
    %3069 = vmatprep.subr.mxu0 0.0
    %3070 = vmatpush1.xpose.msra.mxu0 0.0
    %3071 = vmatprep.subr.mxu0 0.0
    %3072 = vmatpush1.xpose.msra.mxu0 0.0
    %3073 = vmatprep.subr.mxu0 0.0
    %3074 = vmatpush1.xpose.msra.mxu0 0.0
    %3075 = vmatprep.subr.mxu0 0.0
    %3076 = vmatpush1.xpose.msra.mxu0 0.0
    %3077 = vmatprep.subr.mxu0 0.0
    %3078 = vmatpush1.xpose.msra.mxu0 0.0
    %3079 = vmatprep.subr.mxu0 0.0
    %3080 = vmatpush1.xpose.msra.mxu0 0.0
    %3081 = vmatprep.mubr.f32.mxu0 0.0
    %3082 = vmatmul.mubr.f32.gmra.mrb[0].mxu0 %v3012
    %v3083 = vpop.f32.mrb[0].mxu0
    %v3084 = vadd.f32 0.0, %v3083
    %v3085 = vpop.f32.mrb[0].mxu0
    %3086 = vdwg.mxu0
    %v3087 = vmul.f32 %v3084, 0.35355338
    %v3088 = vsel %vm743, %v3087, -inf
    %3089 = vmax.xlane.f32.xlu0 %v3088
    %v3090 = vpop.xlane.xlu0 %3089
    %v3091 = vsub.f32 %v3087, %v3090
    %v3092 = vmul.f32 %v3091, 1.442695
    %v3093 = vpow.pop %v3092
    %v3094 = vsel %vm743, %v3093, 0.0
    %3095 = vadd.xlane.f32.xlu0 %v3094
    %v3096 = vpop.xlane.xlu0 %3095
    %v3097 = vrcp.pop %v3096
    %v3098 = vmul.f32 %v3093, %v3097
    %v3100 = vsel %vm743, %v3098, 0
    %3102 = vmatprep.subr.mxu0 0.0
    %3103 = vmatpush1.msra.mxu0 %v2998
    %3104 = vmatprep.subr.mxu0 0.0
    %3105 = vmatpush1.msra.mxu0 0.0
    %3106 = vmatprep.subr.mxu0 0.0
    %3107 = vmatpush1.msra.mxu0 0.0
    %3108 = vmatprep.subr.mxu0 0.0
    %3109 = vmatpush1.msra.mxu0 0.0
    %3110 = vmatprep.subr.mxu0 0.0
    %3111 = vmatpush1.msra.mxu0 0.0
    %3112 = vmatprep.subr.mxu0 0.0
    %3113 = vmatpush1.msra.mxu0 0.0
    %3114 = vmatprep.subr.mxu0 0.0
    %3115 = vmatpush1.msra.mxu0 0.0
    %3116 = vmatprep.subr.mxu0 0.0
    %3117 = vmatpush1.msra.mxu0 0.0
    %3118 = vmatprep.subr.mxu0 0.0
    %3119 = vmatpush1.msra.mxu0 0.0
    %3120 = vmatprep.subr.mxu0 0.0
    %3121 = vmatpush1.msra.mxu0 0.0
    %3122 = vmatprep.subr.mxu0 0.0
    %3123 = vmatpush1.msra.mxu0 0.0
    %3124 = vmatprep.subr.mxu0 0.0
    %3125 = vmatpush1.msra.mxu0 0.0
    %3126 = vmatprep.subr.mxu0 0.0
    %3127 = vmatpush1.msra.mxu0 0.0
    %3128 = vmatprep.subr.mxu0 0.0
    %3129 = vmatpush1.msra.mxu0 0.0
    %3130 = vmatprep.subr.mxu0 0.0
    %3131 = vmatpush1.msra.mxu0 0.0
    %3132 = vmatprep.subr.mxu0 0.0
    %3133 = vmatpush1.msra.mxu0 0.0
    %3134 = vmatprep.subr.mxu0 0.0
    %3135 = vmatpush1.msra.mxu0 0.0
    %3136 = vmatprep.subr.mxu0 0.0
    %3137 = vmatpush1.msra.mxu0 0.0
    %3138 = vmatprep.subr.mxu0 0.0
    %3139 = vmatpush1.msra.mxu0 0.0
    %3140 = vmatprep.subr.mxu0 0.0
    %3141 = vmatpush1.msra.mxu0 0.0
    %3142 = vmatprep.subr.mxu0 0.0
    %3143 = vmatpush1.msra.mxu0 0.0
    %3144 = vmatprep.subr.mxu0 0.0
    %3145 = vmatpush1.msra.mxu0 0.0
    %3146 = vmatprep.subr.mxu0 0.0
    %3147 = vmatpush1.msra.mxu0 0.0
    %3148 = vmatprep.subr.mxu0 0.0
    %3149 = vmatpush1.msra.mxu0 0.0
    %3150 = vmatprep.subr.mxu0 0.0
    %3151 = vmatpush1.msra.mxu0 0.0
    %3152 = vmatprep.subr.mxu0 0.0
    %3153 = vmatpush1.msra.mxu0 0.0
    %3154 = vmatprep.subr.mxu0 0.0
    %3155 = vmatpush1.msra.mxu0 0.0
    %3156 = vmatprep.subr.mxu0 0.0
    %3157 = vmatpush1.msra.mxu0 0.0
    %3158 = vmatprep.subr.mxu0 0.0
    %3159 = vmatpush1.msra.mxu0 0.0
    %3160 = vmatprep.subr.mxu0 0.0
    %3161 = vmatpush1.msra.mxu0 0.0
    %3162 = vmatprep.subr.mxu0 0.0
    %3163 = vmatpush1.msra.mxu0 0.0
    %3164 = vmatprep.subr.mxu0 0.0
    %3165 = vmatpush1.msra.mxu0 0.0
    %3166 = vmatprep.mubr.f32.mxu0 0.0
    %3167 = vmatmul.mubr.f32.gmra.mrb[0].mxu0 %v3100
    %v3168 = vpop.f32.mrb[0].mxu0
    %v3169 = vadd.f32 0.0, %v3168
    %v3170 = vpop.f32.mrb[0].mxu0
    %3171 = vdwg.mxu0
    %v3173 = vsel %vm743, %v2827, 0
    %v3176 = vsel %vm743, %v2915, 0
    %3178 = vmatprep.subr.mxu0 0.0
    %3179 = vmatpush1.xpose.msra.mxu0 %v3176
    %3180 = vmatprep.subr.mxu0 0.0
    %3181 = vmatpush1.xpose.msra.mxu0 0.0
    %3182 = vmatprep.subr.mxu0 0.0
    %3183 = vmatpush1.xpose.msra.mxu0 0.0
    %3184 = vmatprep.subr.mxu0 0.0
    %3185 = vmatpush1.xpose.msra.mxu0 0.0
    %3186 = vmatprep.subr.mxu0 0.0
    %3187 = vmatpush1.xpose.msra.mxu0 0.0
    %3188 = vmatprep.subr.mxu0 0.0
    %3189 = vmatpush1.xpose.msra.mxu0 0.0
    %3190 = vmatprep.subr.mxu0 0.0
    %3191 = vmatpush1.xpose.msra.mxu0 0.0
    %3192 = vmatprep.subr.mxu0 0.0
    %3193 = vmatpush1.xpose.msra.mxu0 0.0
    %3194 = vmatprep.subr.mxu0 0.0
    %3195 = vmatpush1.xpose.msra.mxu0 0.0
    %3196 = vmatprep.subr.mxu0 0.0
    %3197 = vmatpush1.xpose.msra.mxu0 0.0
    %3198 = vmatprep.subr.mxu0 0.0
    %3199 = vmatpush1.xpose.msra.mxu0 0.0
    %3200 = vmatprep.subr.mxu0 0.0
    %3201 = vmatpush1.xpose.msra.mxu0 0.0
    %3202 = vmatprep.subr.mxu0 0.0
    %3203 = vmatpush1.xpose.msra.mxu0 0.0
    %3204 = vmatprep.subr.mxu0 0.0
    %3205 = vmatpush1.xpose.msra.mxu0 0.0
    %3206 = vmatprep.subr.mxu0 0.0
    %3207 = vmatpush1.xpose.msra.mxu0 0.0
    %3208 = vmatprep.subr.mxu0 0.0
    %3209 = vmatpush1.xpose.msra.mxu0 0.0
    %3210 = vmatprep.subr.mxu0 0.0
    %3211 = vmatpush1.xpose.msra.mxu0 0.0
    %3212 = vmatprep.subr.mxu0 0.0
    %3213 = vmatpush1.xpose.msra.mxu0 0.0
    %3214 = vmatprep.subr.mxu0 0.0
    %3215 = vmatpush1.xpose.msra.mxu0 0.0
    %3216 = vmatprep.subr.mxu0 0.0
    %3217 = vmatpush1.xpose.msra.mxu0 0.0
    %3218 = vmatprep.subr.mxu0 0.0
    %3219 = vmatpush1.xpose.msra.mxu0 0.0
    %3220 = vmatprep.subr.mxu0 0.0
    %3221 = vmatpush1.xpose.msra.mxu0 0.0
    %3222 = vmatprep.subr.mxu0 0.0
    %3223 = vmatpush1.xpose.msra.mxu0 0.0
    %3224 = vmatprep.subr.mxu0 0.0
    %3225 = vmatpush1.xpose.msra.mxu0 0.0
    %3226 = vmatprep.subr.mxu0 0.0
    %3227 = vmatpush1.xpose.msra.mxu0 0.0
    %3228 = vmatprep.subr.mxu0 0.0
    %3229 = vmatpush1.xpose.msra.mxu0 0.0
    %3230 = vmatprep.subr.mxu0 0.0
    %3231 = vmatpush1.xpose.msra.mxu0 0.0
    %3232 = vmatprep.subr.mxu0 0.0
    %3233 = vmatpush1.xpose.msra.mxu0 0.0
    %3234 = vmatprep.subr.mxu0 0.0
    %3235 = vmatpush1.xpose.msra.mxu0 0.0
    %3236 = vmatprep.subr.mxu0 0.0
    %3237 = vmatpush1.xpose.msra.mxu0 0.0
    %3238 = vmatprep.subr.mxu0 0.0
    %3239 = vmatpush1.xpose.msra.mxu0 0.0
    %3240 = vmatprep.subr.mxu0 0.0
    %3241 = vmatpush1.xpose.msra.mxu0 0.0
    %3242 = vmatprep.mubr.f32.mxu0 0.0
    %3243 = vmatmul.mubr.f32.gmra.mrb[0].mxu0 %v3173
    %v3244 = vpop.f32.mrb[0].mxu0
    %v3245 = vadd.f32 0.0, %v3244
    %v3246 = vpop.f32.mrb[0].mxu0
    %3247 = vdwg.mxu0
    %v3248 = vmul.f32 %v3245, 0.35355338
    %v3249 = vsel %vm743, %v3248, -inf
    %3250 = vmax.xlane.f32.xlu0 %v3249
    %v3251 = vpop.xlane.xlu0 %3250
    %v3252 = vsub.f32 %v3248, %v3251
    %v3253 = vmul.f32 %v3252, 1.442695
    %v3254 = vpow.pop %v3253
    %v3255 = vsel %vm743, %v3254, 0.0
    %3256 = vadd.xlane.f32.xlu0 %v3255
    %v3257 = vpop.xlane.xlu0 %3256
    %v3258 = vrcp.pop %v3257
    %v3259 = vmul.f32 %v3254, %v3258
    %v3261 = vsel %vm743, %v3259, 0
    %3263 = vmatprep.subr.mxu0 0.0
    %3264 = vmatpush1.msra.mxu0 %v3003
    %3265 = vmatprep.subr.mxu0 0.0
    %3266 = vmatpush1.msra.mxu0 0.0
    %3267 = vmatprep.subr.mxu0 0.0
    %3268 = vmatpush1.msra.mxu0 0.0
    %3269 = vmatprep.subr.mxu0 0.0
    %3270 = vmatpush1.msra.mxu0 0.0
    %3271 = vmatprep.subr.mxu0 0.0
    %3272 = vmatpush1.msra.mxu0 0.0
    %3273 = vmatprep.subr.mxu0 0.0
    %3274 = vmatpush1.msra.mxu0 0.0
    %3275 = vmatprep.subr.mxu0 0.0
    %3276 = vmatpush1.msra.mxu0 0.0
    %3277 = vmatprep.subr.mxu0 0.0
    %3278 = vmatpush1.msra.mxu0 0.0
    %3279 = vmatprep.subr.mxu0 0.0
    %3280 = vmatpush1.msra.mxu0 0.0
    %3281 = vmatprep.subr.mxu0 0.0
    %3282 = vmatpush1.msra.mxu0 0.0
    %3283 = vmatprep.subr.mxu0 0.0
    %3284 = vmatpush1.msra.mxu0 0.0
    %3285 = vmatprep.subr.mxu0 0.0
    %3286 = vmatpush1.msra.mxu0 0.0
    %3287 = vmatprep.subr.mxu0 0.0
    %3288 = vmatpush1.msra.mxu0 0.0
    %3289 = vmatprep.subr.mxu0 0.0
    %3290 = vmatpush1.msra.mxu0 0.0
    %3291 = vmatprep.subr.mxu0 0.0
    %3292 = vmatpush1.msra.mxu0 0.0
    %3293 = vmatprep.subr.mxu0 0.0
    %3294 = vmatpush1.msra.mxu0 0.0
    %3295 = vmatprep.subr.mxu0 0.0
    %3296 = vmatpush1.msra.mxu0 0.0
    %3297 = vmatprep.subr.mxu0 0.0
    %3298 = vmatpush1.msra.mxu0 0.0
    %3299 = vmatprep.subr.mxu0 0.0
    %3300 = vmatpush1.msra.mxu0 0.0
    %3301 = vmatprep.subr.mxu0 0.0
    %3302 = vmatpush1.msra.mxu0 0.0
    %3303 = vmatprep.subr.mxu0 0.0
    %3304 = vmatpush1.msra.mxu0 0.0
    %3305 = vmatprep.subr.mxu0 0.0
    %3306 = vmatpush1.msra.mxu0 0.0
    %3307 = vmatprep.subr.mxu0 0.0
    %3308 = vmatpush1.msra.mxu0 0.0
    %3309 = vmatprep.subr.mxu0 0.0
    %3310 = vmatpush1.msra.mxu0 0.0
    %3311 = vmatprep.subr.mxu0 0.0
    %3312 = vmatpush1.msra.mxu0 0.0
    %3313 = vmatprep.subr.mxu0 0.0
    %3314 = vmatpush1.msra.mxu0 0.0
    %3315 = vmatprep.subr.mxu0 0.0
    %3316 = vmatpush1.msra.mxu0 0.0
    %3317 = vmatprep.subr.mxu0 0.0
    %3318 = vmatpush1.msra.mxu0 0.0
    %3319 = vmatprep.subr.mxu0 0.0
    %3320 = vmatpush1.msra.mxu0 0.0
    %3321 = vmatprep.subr.mxu0 0.0
    %3322 = vmatpush1.msra.mxu0 0.0
    %3323 = vmatprep.subr.mxu0 0.0
    %3324 = vmatpush1.msra.mxu0 0.0
    %3325 = vmatprep.subr.mxu0 0.0
    %3326 = vmatpush1.msra.mxu0 0.0
    %3327 = vmatprep.mubr.f32.mxu0 0.0
    %3328 = vmatmul.mubr.f32.gmra.mrb[0].mxu0 %v3261
    %v3329 = vpop.f32.mrb[0].mxu0
    %v3330 = vadd.f32 0.0, %v3329
    %v3331 = vpop.f32.mrb[0].mxu0
    %3332 = vdwg.mxu0
    %3333 = vrot.lane.b32.xlu0 %v2822, 120
    %v3334 = vpop.permute.xlu0 %3333
    %3335 = vrot.lane.b32.xlu0 %v2910, 120
    %v3336 = vpop.permute.xlu0 %3335
    %v3337 = vsel %vm743, %v3334, 0
    %v3339 = vsel %vm743, %v3336, 0
    %3341 = vmatprep.subr.mxu0 0.0
    %3342 = vmatpush1.xpose.msra.mxu0 %v3339
    %3343 = vmatprep.subr.mxu0 0.0
    %3344 = vmatpush1.xpose.msra.mxu0 0.0
    %3345 = vmatprep.subr.mxu0 0.0
    %3346 = vmatpush1.xpose.msra.mxu0 0.0
    %3347 = vmatprep.subr.mxu0 0.0
    %3348 = vmatpush1.xpose.msra.mxu0 0.0
    %3349 = vmatprep.subr.mxu0 0.0
    %3350 = vmatpush1.xpose.msra.mxu0 0.0
    %3351 = vmatprep.subr.mxu0 0.0
    %3352 = vmatpush1.xpose.msra.mxu0 0.0
    %3353 = vmatprep.subr.mxu0 0.0
    %3354 = vmatpush1.xpose.msra.mxu0 0.0
    %3355 = vmatprep.subr.mxu0 0.0
    %3356 = vmatpush1.xpose.msra.mxu0 0.0
    %3357 = vmatprep.subr.mxu0 0.0
    %3358 = vmatpush1.xpose.msra.mxu0 0.0
    %3359 = vmatprep.subr.mxu0 0.0
    %3360 = vmatpush1.xpose.msra.mxu0 0.0
    %3361 = vmatprep.subr.mxu0 0.0
    %3362 = vmatpush1.xpose.msra.mxu0 0.0
    %3363 = vmatprep.subr.mxu0 0.0
    %3364 = vmatpush1.xpose.msra.mxu0 0.0
    %3365 = vmatprep.subr.mxu0 0.0
    %3366 = vmatpush1.xpose.msra.mxu0 0.0
    %3367 = vmatprep.subr.mxu0 0.0
    %3368 = vmatpush1.xpose.msra.mxu0 0.0
    %3369 = vmatprep.subr.mxu0 0.0
    %3370 = vmatpush1.xpose.msra.mxu0 0.0
    %3371 = vmatprep.subr.mxu0 0.0
    %3372 = vmatpush1.xpose.msra.mxu0 0.0
    %3373 = vmatprep.subr.mxu0 0.0
    %3374 = vmatpush1.xpose.msra.mxu0 0.0
    %3375 = vmatprep.subr.mxu0 0.0
    %3376 = vmatpush1.xpose.msra.mxu0 0.0
    %3377 = vmatprep.subr.mxu0 0.0
    %3378 = vmatpush1.xpose.msra.mxu0 0.0
    %3379 = vmatprep.subr.mxu0 0.0
    %3380 = vmatpush1.xpose.msra.mxu0 0.0
    %3381 = vmatprep.subr.mxu0 0.0
    %3382 = vmatpush1.xpose.msra.mxu0 0.0
    %3383 = vmatprep.subr.mxu0 0.0
    %3384 = vmatpush1.xpose.msra.mxu0 0.0
    %3385 = vmatprep.subr.mxu0 0.0
    %3386 = vmatpush1.xpose.msra.mxu0 0.0
    %3387 = vmatprep.subr.mxu0 0.0
    %3388 = vmatpush1.xpose.msra.mxu0 0.0
    %3389 = vmatprep.subr.mxu0 0.0
    %3390 = vmatpush1.xpose.msra.mxu0 0.0
    %3391 = vmatprep.subr.mxu0 0.0
    %3392 = vmatpush1.xpose.msra.mxu0 0.0
    %3393 = vmatprep.subr.mxu0 0.0
    %3394 = vmatpush1.xpose.msra.mxu0 0.0
    %3395 = vmatprep.subr.mxu0 0.0
    %3396 = vmatpush1.xpose.msra.mxu0 0.0
    %3397 = vmatprep.subr.mxu0 0.0
    %3398 = vmatpush1.xpose.msra.mxu0 0.0
    %3399 = vmatprep.subr.mxu0 0.0
    %3400 = vmatpush1.xpose.msra.mxu0 0.0
    %3401 = vmatprep.subr.mxu0 0.0
    %3402 = vmatpush1.xpose.msra.mxu0 0.0
    %3403 = vmatprep.subr.mxu0 0.0
    %3404 = vmatpush1.xpose.msra.mxu0 0.0
    %3405 = vmatprep.mubr.f32.mxu0 0.0
    %3406 = vmatmul.mubr.f32.gmra.mrb[0].mxu0 %v3337
    %v3407 = vpop.f32.mrb[0].mxu0
    %v3408 = vadd.f32 0.0, %v3407
    %v3409 = vpop.f32.mrb[0].mxu0
    %3410 = vdwg.mxu0
    %v3411 = vmul.f32 %v3408, 0.35355338
    %v3412 = vsel %vm743, %v3411, -inf
    %3413 = vmax.xlane.f32.xlu0 %v3412
    %v3414 = vpop.xlane.xlu0 %3413
    %v3415 = vsub.f32 %v3411, %v3414
    %v3416 = vmul.f32 %v3415, 1.442695
    %v3417 = vpow.pop %v3416
    %v3418 = vsel %vm743, %v3417, 0.0
    %3419 = vadd.xlane.f32.xlu0 %v3418
    %v3420 = vpop.xlane.xlu0 %3419
    %v3421 = vrcp.pop %v3420
    %v3422 = vmul.f32 %v3417, %v3421
    %3424 = vrot.lane.b32.xlu0 %v2998, 120
    %v3425 = vpop.permute.xlu0 %3424
    %v3428 = vsel %vm743, %v3422, 0
    %3430 = vmatprep.subr.mxu0 0.0
    %3431 = vmatpush1.msra.mxu0 %v3425
    %3432 = vmatprep.subr.mxu0 0.0
    %3433 = vmatpush1.msra.mxu0 0.0
    %3434 = vmatprep.subr.mxu0 0.0
    %3435 = vmatpush1.msra.mxu0 0.0
    %3436 = vmatprep.subr.mxu0 0.0
    %3437 = vmatpush1.msra.mxu0 0.0
    %3438 = vmatprep.subr.mxu0 0.0
    %3439 = vmatpush1.msra.mxu0 0.0
    %3440 = vmatprep.subr.mxu0 0.0
    %3441 = vmatpush1.msra.mxu0 0.0
    %3442 = vmatprep.subr.mxu0 0.0
    %3443 = vmatpush1.msra.mxu0 0.0
    %3444 = vmatprep.subr.mxu0 0.0
    %3445 = vmatpush1.msra.mxu0 0.0
    %3446 = vmatprep.subr.mxu0 0.0
    %3447 = vmatpush1.msra.mxu0 0.0
    %3448 = vmatprep.subr.mxu0 0.0
    %3449 = vmatpush1.msra.mxu0 0.0
    %3450 = vmatprep.subr.mxu0 0.0
    %3451 = vmatpush1.msra.mxu0 0.0
    %3452 = vmatprep.subr.mxu0 0.0
    %3453 = vmatpush1.msra.mxu0 0.0
    %3454 = vmatprep.subr.mxu0 0.0
    %3455 = vmatpush1.msra.mxu0 0.0
    %3456 = vmatprep.subr.mxu0 0.0
    %3457 = vmatpush1.msra.mxu0 0.0
    %3458 = vmatprep.subr.mxu0 0.0
    %3459 = vmatpush1.msra.mxu0 0.0
    %3460 = vmatprep.subr.mxu0 0.0
    %3461 = vmatpush1.msra.mxu0 0.0
    %3462 = vmatprep.subr.mxu0 0.0
    %3463 = vmatpush1.msra.mxu0 0.0
    %3464 = vmatprep.subr.mxu0 0.0
    %3465 = vmatpush1.msra.mxu0 0.0
    %3466 = vmatprep.subr.mxu0 0.0
    %3467 = vmatpush1.msra.mxu0 0.0
    %3468 = vmatprep.subr.mxu0 0.0
    %3469 = vmatpush1.msra.mxu0 0.0
    %3470 = vmatprep.subr.mxu0 0.0
    %3471 = vmatpush1.msra.mxu0 0.0
    %3472 = vmatprep.subr.mxu0 0.0
    %3473 = vmatpush1.msra.mxu0 0.0
    %3474 = vmatprep.subr.mxu0 0.0
    %3475 = vmatpush1.msra.mxu0 0.0
    %3476 = vmatprep.subr.mxu0 0.0
    %3477 = vmatpush1.msra.mxu0 0.0
    %3478 = vmatprep.subr.mxu0 0.0
    %3479 = vmatpush1.msra.mxu0 0.0
    %3480 = vmatprep.subr.mxu0 0.0
    %3481 = vmatpush1.msra.mxu0 0.0
    %3482 = vmatprep.subr.mxu0 0.0
    %3483 = vmatpush1.msra.mxu0 0.0
    %3484 = vmatprep.subr.mxu0 0.0
    %3485 = vmatpush1.msra.mxu0 0.0
    %3486 = vmatprep.subr.mxu0 0.0
    %3487 = vmatpush1.msra.mxu0 0.0
    %3488 = vmatprep.subr.mxu0 0.0
    %3489 = vmatpush1.msra.mxu0 0.0
    %3490 = vmatprep.subr.mxu0 0.0
    %3491 = vmatpush1.msra.mxu0 0.0
    %3492 = vmatprep.subr.mxu0 0.0
    %3493 = vmatpush1.msra.mxu0 0.0
    %3494 = vmatprep.mubr.f32.mxu0 0.0
    %3495 = vmatmul.mubr.f32.gmra.mrb[0].mxu0 %v3428
    %v3496 = vpop.f32.mrb[0].mxu0
    %v3497 = vadd.f32 0.0, %v3496
    %v3498 = vpop.f32.mrb[0].mxu0
    %3499 = vdwg.mxu0
    %3500 = vrot.lane.b32.xlu0 %v2827, 120
    %v3501 = vpop.permute.xlu0 %3500
    %3502 = vrot.lane.b32.xlu0 %v2915, 120
    %v3503 = vpop.permute.xlu0 %3502
    %v3504 = vsel %vm743, %v3501, 0
    %v3506 = vsel %vm743, %v3503, 0
    %3508 = vmatprep.subr.mxu0 0.0
    %3509 = vmatpush1.xpose.msra.mxu0 %v3506
    %3510 = vmatprep.subr.mxu0 0.0
    %3511 = vmatpush1.xpose.msra.mxu0 0.0
    %3512 = vmatprep.subr.mxu0 0.0
    %3513 = vmatpush1.xpose.msra.mxu0 0.0
    %3514 = vmatprep.subr.mxu0 0.0
    %3515 = vmatpush1.xpose.msra.mxu0 0.0
    %3516 = vmatprep.subr.mxu0 0.0
    %3517 = vmatpush1.xpose.msra.mxu0 0.0
    %3518 = vmatprep.subr.mxu0 0.0
    %3519 = vmatpush1.xpose.msra.mxu0 0.0
    %3520 = vmatprep.subr.mxu0 0.0
    %3521 = vmatpush1.xpose.msra.mxu0 0.0
    %3522 = vmatprep.subr.mxu0 0.0
    %3523 = vmatpush1.xpose.msra.mxu0 0.0
    %3524 = vmatprep.subr.mxu0 0.0
    %3525 = vmatpush1.xpose.msra.mxu0 0.0
    %3526 = vmatprep.subr.mxu0 0.0
    %3527 = vmatpush1.xpose.msra.mxu0 0.0
    %3528 = vmatprep.subr.mxu0 0.0
    %3529 = vmatpush1.xpose.msra.mxu0 0.0
    %3530 = vmatprep.subr.mxu0 0.0
    %3531 = vmatpush1.xpose.msra.mxu0 0.0
    %3532 = vmatprep.subr.mxu0 0.0
    %3533 = vmatpush1.xpose.msra.mxu0 0.0
    %3534 = vmatprep.subr.mxu0 0.0
    %3535 = vmatpush1.xpose.msra.mxu0 0.0
    %3536 = vmatprep.subr.mxu0 0.0
    %3537 = vmatpush1.xpose.msra.mxu0 0.0
    %3538 = vmatprep.subr.mxu0 0.0
    %3539 = vmatpush1.xpose.msra.mxu0 0.0
    %3540 = vmatprep.subr.mxu0 0.0
    %3541 = vmatpush1.xpose.msra.mxu0 0.0
    %3542 = vmatprep.subr.mxu0 0.0
    %3543 = vmatpush1.xpose.msra.mxu0 0.0
    %3544 = vmatprep.subr.mxu0 0.0
    %3545 = vmatpush1.xpose.msra.mxu0 0.0
    %3546 = vmatprep.subr.mxu0 0.0
    %3547 = vmatpush1.xpose.msra.mxu0 0.0
    %3548 = vmatprep.subr.mxu0 0.0
    %3549 = vmatpush1.xpose.msra.mxu0 0.0
    %3550 = vmatprep.subr.mxu0 0.0
    %3551 = vmatpush1.xpose.msra.mxu0 0.0
    %3552 = vmatprep.subr.mxu0 0.0
    %3553 = vmatpush1.xpose.msra.mxu0 0.0
    %3554 = vmatprep.subr.mxu0 0.0
    %3555 = vmatpush1.xpose.msra.mxu0 0.0
    %3556 = vmatprep.subr.mxu0 0.0
    %3557 = vmatpush1.xpose.msra.mxu0 0.0
    %3558 = vmatprep.subr.mxu0 0.0
    %3559 = vmatpush1.xpose.msra.mxu0 0.0
    %3560 = vmatprep.subr.mxu0 0.0
    %3561 = vmatpush1.xpose.msra.mxu0 0.0
    %3562 = vmatprep.subr.mxu0 0.0
    %3563 = vmatpush1.xpose.msra.mxu0 0.0
    %3564 = vmatprep.subr.mxu0 0.0
    %3565 = vmatpush1.xpose.msra.mxu0 0.0
    %3566 = vmatprep.subr.mxu0 0.0
    %3567 = vmatpush1.xpose.msra.mxu0 0.0
    %3568 = vmatprep.subr.mxu0 0.0
    %3569 = vmatpush1.xpose.msra.mxu0 0.0
    %3570 = vmatprep.subr.mxu0 0.0
    %3571 = vmatpush1.xpose.msra.mxu0 0.0
    %3572 = vmatprep.mubr.f32.mxu0 0.0
    %3573 = vmatmul.mubr.f32.gmra.mrb[0].mxu0 %v3504
    %v3574 = vpop.f32.mrb[0].mxu0
    %v3575 = vadd.f32 0.0, %v3574
    %v3576 = vpop.f32.mrb[0].mxu0
    %3577 = vdwg.mxu0
    %v3578 = vmul.f32 %v3575, 0.35355338
    %v3579 = vsel %vm743, %v3578, -inf
    %3580 = vmax.xlane.f32.xlu0 %v3579
    %v3581 = vpop.xlane.xlu0 %3580
    %v3582 = vsub.f32 %v3578, %v3581
    %v3583 = vmul.f32 %v3582, 1.442695
    %v3584 = vpow.pop %v3583
    %v3585 = vsel %vm743, %v3584, 0.0
    %3586 = vadd.xlane.f32.xlu0 %v3585
    %v3587 = vpop.xlane.xlu0 %3586
    %v3588 = vrcp.pop %v3587
    %v3589 = vmul.f32 %v3584, %v3588
    %3591 = vrot.lane.b32.xlu0 %v3003, 120
    %v3592 = vpop.permute.xlu0 %3591
    %v3595 = vsel %vm743, %v3589, 0
    %3597 = vmatprep.subr.mxu0 0.0
    %3598 = vmatpush1.msra.mxu0 %v3592
    %3599 = vmatprep.subr.mxu0 0.0
    %3600 = vmatpush1.msra.mxu0 0.0
    %3601 = vmatprep.subr.mxu0 0.0
    %3602 = vmatpush1.msra.mxu0 0.0
    %3603 = vmatprep.subr.mxu0 0.0
    %3604 = vmatpush1.msra.mxu0 0.0
    %3605 = vmatprep.subr.mxu0 0.0
    %3606 = vmatpush1.msra.mxu0 0.0
    %3607 = vmatprep.subr.mxu0 0.0
    %3608 = vmatpush1.msra.mxu0 0.0
    %3609 = vmatprep.subr.mxu0 0.0
    %3610 = vmatpush1.msra.mxu0 0.0
    %3611 = vmatprep.subr.mxu0 0.0
    %3612 = vmatpush1.msra.mxu0 0.0
    %3613 = vmatprep.subr.mxu0 0.0
    %3614 = vmatpush1.msra.mxu0 0.0
    %3615 = vmatprep.subr.mxu0 0.0
    %3616 = vmatpush1.msra.mxu0 0.0
    %3617 = vmatprep.subr.mxu0 0.0
    %3618 = vmatpush1.msra.mxu0 0.0
    %3619 = vmatprep.subr.mxu0 0.0
    %3620 = vmatpush1.msra.mxu0 0.0
    %3621 = vmatprep.subr.mxu0 0.0
    %3622 = vmatpush1.msra.mxu0 0.0
    %3623 = vmatprep.subr.mxu0 0.0
    %3624 = vmatpush1.msra.mxu0 0.0
    %3625 = vmatprep.subr.mxu0 0.0
    %3626 = vmatpush1.msra.mxu0 0.0
    %3627 = vmatprep.subr.mxu0 0.0
    %3628 = vmatpush1.msra.mxu0 0.0
    %3629 = vmatprep.subr.mxu0 0.0
    %3630 = vmatpush1.msra.mxu0 0.0
    %3631 = vmatprep.subr.mxu0 0.0
    %3632 = vmatpush1.msra.mxu0 0.0
    %3633 = vmatprep.subr.mxu0 0.0
    %3634 = vmatpush1.msra.mxu0 0.0
    %3635 = vmatprep.subr.mxu0 0.0
    %3636 = vmatpush1.msra.mxu0 0.0
    %3637 = vmatprep.subr.mxu0 0.0
    %3638 = vmatpush1.msra.mxu0 0.0
    %3639 = vmatprep.subr.mxu0 0.0
    %3640 = vmatpush1.msra.mxu0 0.0
    %3641 = vmatprep.subr.mxu0 0.0
    %3642 = vmatpush1.msra.mxu0 0.0
    %3643 = vmatprep.subr.mxu0 0.0
    %3644 = vmatpush1.msra.mxu0 0.0
    %3645 = vmatprep.subr.mxu0 0.0
    %3646 = vmatpush1.msra.mxu0 0.0
    %3647 = vmatprep.subr.mxu0 0.0
    %3648 = vmatpush1.msra.mxu0 0.0
    %3649 = vmatprep.subr.mxu0 0.0
    %3650 = vmatpush1.msra.mxu0 0.0
    %3651 = vmatprep.subr.mxu0 0.0
    %3652 = vmatpush1.msra.mxu0 0.0
    %3653 = vmatprep.subr.mxu0 0.0
    %3654 = vmatpush1.msra.mxu0 0.0
    %3655 = vmatprep.subr.mxu0 0.0
    %3656 = vmatpush1.msra.mxu0 0.0
    %3657 = vmatprep.subr.mxu0 0.0
    %3658 = vmatpush1.msra.mxu0 0.0
    %3659 = vmatprep.subr.mxu0 0.0
    %3660 = vmatpush1.msra.mxu0 0.0
    %3661 = vmatprep.mubr.f32.mxu0 0.0
    %3662 = vmatmul.mubr.f32.gmra.mrb[0].mxu0 %v3595
    %v3663 = vpop.f32.mrb[0].mxu0
    %v3664 = vadd.f32 0.0, %v3663
    %v3665 = vpop.f32.mrb[0].mxu0
    %3666 = vdwg.mxu0
    %v3668 = vsel %vm743, %v3497, 0
    %v3671 = vsel %vm743, %v3664, 0
    %3673 = vmatprep.subr.mxu0 0.0
    %3674 = vmatpush1.msra.mxu0 %v3008
    %3675 = vmatprep.subr.mxu0 0.0
    %3676 = vmatpush1.msra.mxu0 0.0
    %3677 = vmatprep.subr.mxu0 0.0
    %3678 = vmatpush1.msra.mxu0 0.0
    %3679 = vmatprep.subr.mxu0 0.0
    %3680 = vmatpush1.msra.mxu0 0.0
    %3681 = vmatprep.subr.mxu0 0.0
    %3682 = vmatpush1.msra.mxu0 0.0
    %3683 = vmatprep.subr.mxu0 0.0
    %3684 = vmatpush1.msra.mxu0 0.0
    %3685 = vmatprep.subr.mxu0 0.0
    %3686 = vmatpush1.msra.mxu0 0.0
    %3687 = vmatprep.subr.mxu0 0.0
    %3688 = vmatpush1.msra.mxu0 0.0
    %3689 = vmatprep.subr.mxu0 0.0
    %3690 = vmatpush1.msra.mxu0 0.0
    %3691 = vmatprep.subr.mxu0 0.0
    %3692 = vmatpush1.msra.mxu0 0.0
    %3693 = vmatprep.subr.mxu0 0.0
    %3694 = vmatpush1.msra.mxu0 0.0
    %3695 = vmatprep.subr.mxu0 0.0
    %3696 = vmatpush1.msra.mxu0 0.0
    %3697 = vmatprep.subr.mxu0 0.0
    %3698 = vmatpush1.msra.mxu0 0.0
    %3699 = vmatprep.subr.mxu0 0.0
    %3700 = vmatpush1.msra.mxu0 0.0
    %3701 = vmatprep.subr.mxu0 0.0
    %3702 = vmatpush1.msra.mxu0 0.0
    %3703 = vmatprep.subr.mxu0 0.0
    %3704 = vmatpush1.msra.mxu0 0.0
    %3705 = vmatprep.subr.mxu0 0.0
    %3706 = vmatpush1.msra.mxu0 0.0
    %3707 = vmatprep.subr.mxu0 0.0
    %3708 = vmatpush1.msra.mxu0 0.0
    %3709 = vmatprep.subr.mxu0 0.0
    %3710 = vmatpush1.msra.mxu0 0.0
    %3711 = vmatprep.subr.mxu0 0.0
    %3712 = vmatpush1.msra.mxu0 0.0
    %3713 = vmatprep.subr.mxu0 0.0
    %3714 = vmatpush1.msra.mxu0 0.0
    %3715 = vmatprep.subr.mxu0 0.0
    %3716 = vmatpush1.msra.mxu0 0.0
    %3717 = vmatprep.subr.mxu0 0.0
    %3718 = vmatpush1.msra.mxu0 0.0
    %3719 = vmatprep.subr.mxu0 0.0
    %3720 = vmatpush1.msra.mxu0 0.0
    %3721 = vmatprep.subr.mxu0 0.0
    %3722 = vmatpush1.msra.mxu0 0.0
    %3723 = vmatprep.subr.mxu0 0.0
    %3724 = vmatpush1.msra.mxu0 0.0
    %3725 = vmatprep.subr.mxu0 0.0
    %3726 = vmatpush1.msra.mxu0 0.0
    %3727 = vmatprep.subr.mxu0 0.0
    %3728 = vmatpush1.msra.mxu0 0.0
    %3729 = vmatprep.subr.mxu0 0.0
    %3730 = vmatpush1.msra.mxu0 0.0
    %3731 = vmatprep.subr.mxu0 0.0
    %3732 = vmatpush1.msra.mxu0 0.0
    %3733 = vmatprep.subr.mxu0 0.0
    %3734 = vmatpush1.msra.mxu0 0.0
    %3735 = vmatprep.subr.mxu0 0.0
    %3736 = vmatpush1.msra.mxu0 0.0
    %3737 = vmatprep.mubr.f32.mxu0 0.0
    %3738 = vmatmul.mubr.f32.gmra.mrb[0].mxu0 %v3668
    %v3739 = vpop.f32.mrb[0].mxu0
    %v3740 = vadd.f32 0.0, %v3739
    %v3741 = vpop.f32.mrb[0].mxu0
    %3742 = vmatprep.mubr.f32.mxu0 0.0
    %3743 = vmatmul.mubr.f32.gmra.mrb[0].mxu0 %v3671
    %v3744 = vpop.f32.mrb[0].mxu0
    %v3745 = vadd.f32 0.0, %v3744
    %v3746 = vpop.f32.mrb[0].mxu0
    %3747 = vdwg.mxu0
    %v3749 = vsel %vm743, %v3169, 0
    %v3752 = vsel %vm743, %v3330, 0
    %3754 = vmatprep.subr.mxu0 0.0
    %3755 = vmatpush1.msra.mxu0 %v3007
    %3756 = vmatprep.subr.mxu0 0.0
    %3757 = vmatpush1.msra.mxu0 0.0
    %3758 = vmatprep.subr.mxu0 0.0
    %3759 = vmatpush1.msra.mxu0 0.0
    %3760 = vmatprep.subr.mxu0 0.0
    %3761 = vmatpush1.msra.mxu0 0.0
    %3762 = vmatprep.subr.mxu0 0.0
    %3763 = vmatpush1.msra.mxu0 0.0
    %3764 = vmatprep.subr.mxu0 0.0
    %3765 = vmatpush1.msra.mxu0 0.0
    %3766 = vmatprep.subr.mxu0 0.0
    %3767 = vmatpush1.msra.mxu0 0.0
    %3768 = vmatprep.subr.mxu0 0.0
    %3769 = vmatpush1.msra.mxu0 0.0
    %3770 = vmatprep.subr.mxu0 0.0
    %3771 = vmatpush1.msra.mxu0 0.0
    %3772 = vmatprep.subr.mxu0 0.0
    %3773 = vmatpush1.msra.mxu0 0.0
    %3774 = vmatprep.subr.mxu0 0.0
    %3775 = vmatpush1.msra.mxu0 0.0
    %3776 = vmatprep.subr.mxu0 0.0
    %3777 = vmatpush1.msra.mxu0 0.0
    %3778 = vmatprep.subr.mxu0 0.0
    %3779 = vmatpush1.msra.mxu0 0.0
    %3780 = vmatprep.subr.mxu0 0.0
    %3781 = vmatpush1.msra.mxu0 0.0
    %3782 = vmatprep.subr.mxu0 0.0
    %3783 = vmatpush1.msra.mxu0 0.0
    %3784 = vmatprep.subr.mxu0 0.0
    %3785 = vmatpush1.msra.mxu0 0.0
    %3786 = vmatprep.subr.mxu0 0.0
    %3787 = vmatpush1.msra.mxu0 0.0
    %3788 = vmatprep.subr.mxu0 0.0
    %3789 = vmatpush1.msra.mxu0 0.0
    %3790 = vmatprep.subr.mxu0 0.0
    %3791 = vmatpush1.msra.mxu0 0.0
    %3792 = vmatprep.subr.mxu0 0.0
    %3793 = vmatpush1.msra.mxu0 0.0
    %3794 = vmatprep.subr.mxu0 0.0
    %3795 = vmatpush1.msra.mxu0 0.0
    %3796 = vmatprep.subr.mxu0 0.0
    %3797 = vmatpush1.msra.mxu0 0.0
    %3798 = vmatprep.subr.mxu0 0.0
    %3799 = vmatpush1.msra.mxu0 0.0
    %3800 = vmatprep.subr.mxu0 0.0
    %3801 = vmatpush1.msra.mxu0 0.0
    %3802 = vmatprep.subr.mxu0 0.0
    %3803 = vmatpush1.msra.mxu0 0.0
    %3804 = vmatprep.subr.mxu0 0.0
    %3805 = vmatpush1.msra.mxu0 0.0
    %3806 = vmatprep.subr.mxu0 0.0
    %3807 = vmatpush1.msra.mxu0 0.0
    %3808 = vmatprep.subr.mxu0 0.0
    %3809 = vmatpush1.msra.mxu0 0.0
    %3810 = vmatprep.subr.mxu0 0.0
    %3811 = vmatpush1.msra.mxu0 0.0
    %3812 = vmatprep.subr.mxu0 0.0
    %3813 = vmatpush1.msra.mxu0 0.0
    %3814 = vmatprep.subr.mxu0 0.0
    %3815 = vmatpush1.msra.mxu0 0.0
    %3816 = vmatprep.subr.mxu0 0.0
    %3817 = vmatpush1.msra.mxu0 0.0
    %3818 = vmatprep.mubr.f32.mxu0 0.0
    %3819 = vmatmul.mubr.f32.gmra.mrb[0].mxu0 %v3749
    %v3820 = vpop.f32.mrb[0].mxu0
    %v3821 = vadd.f32 %v3740, %v3820
    %v3822 = vpop.f32.mrb[0].mxu0
    %3823 = vmatprep.mubr.f32.mxu0 0.0
    %3824 = vmatmul.mubr.f32.gmra.mrb[0].mxu0 %v3752
    %v3825 = vpop.f32.mrb[0].mxu0
    %v3826 = vadd.f32 %v3745, %v3825
    %v3827 = vpop.f32.mrb[0].mxu0
    %3828 = vdwg.mxu0
    %3829 = vrot.lane.b32.xlu0 %v2822, 112
    %v3830 = vpop.permute.xlu0 %3829
    %3831 = vrot.lane.b32.xlu0 %v2910, 112
    %v3832 = vpop.permute.xlu0 %3831
    %v3833 = vsel %vm743, %v3830, 0
    %v3835 = vsel %vm743, %v3832, 0
    %3837 = vmatprep.subr.mxu0 0.0
    %3838 = vmatpush1.xpose.msra.mxu0 %v3835
    %3839 = vmatprep.subr.mxu0 0.0
    %3840 = vmatpush1.xpose.msra.mxu0 0.0
    %3841 = vmatprep.subr.mxu0 0.0
    %3842 = vmatpush1.xpose.msra.mxu0 0.0
    %3843 = vmatprep.subr.mxu0 0.0
    %3844 = vmatpush1.xpose.msra.mxu0 0.0
    %3845 = vmatprep.subr.mxu0 0.0
    %3846 = vmatpush1.xpose.msra.mxu0 0.0
    %3847 = vmatprep.subr.mxu0 0.0
    %3848 = vmatpush1.xpose.msra.mxu0 0.0
    %3849 = vmatprep.subr.mxu0 0.0
    %3850 = vmatpush1.xpose.msra.mxu0 0.0
    %3851 = vmatprep.subr.mxu0 0.0
    %3852 = vmatpush1.xpose.msra.mxu0 0.0
    %3853 = vmatprep.subr.mxu0 0.0
    %3854 = vmatpush1.xpose.msra.mxu0 0.0
    %3855 = vmatprep.subr.mxu0 0.0
    %3856 = vmatpush1.xpose.msra.mxu0 0.0
    %3857 = vmatprep.subr.mxu0 0.0
    %3858 = vmatpush1.xpose.msra.mxu0 0.0
    %3859 = vmatprep.subr.mxu0 0.0
    %3860 = vmatpush1.xpose.msra.mxu0 0.0
    %3861 = vmatprep.subr.mxu0 0.0
    %3862 = vmatpush1.xpose.msra.mxu0 0.0
    %3863 = vmatprep.subr.mxu0 0.0
    %3864 = vmatpush1.xpose.msra.mxu0 0.0
    %3865 = vmatprep.subr.mxu0 0.0
    %3866 = vmatpush1.xpose.msra.mxu0 0.0
    %3867 = vmatprep.subr.mxu0 0.0
    %3868 = vmatpush1.xpose.msra.mxu0 0.0
    %3869 = vmatprep.subr.mxu0 0.0
    %3870 = vmatpush1.xpose.msra.mxu0 0.0
    %3871 = vmatprep.subr.mxu0 0.0
    %3872 = vmatpush1.xpose.msra.mxu0 0.0
    %3873 = vmatprep.subr.mxu0 0.0
    %3874 = vmatpush1.xpose.msra.mxu0 0.0
    %3875 = vmatprep.subr.mxu0 0.0
    %3876 = vmatpush1.xpose.msra.mxu0 0.0
    %3877 = vmatprep.subr.mxu0 0.0
    %3878 = vmatpush1.xpose.msra.mxu0 0.0
    %3879 = vmatprep.subr.mxu0 0.0
    %3880 = vmatpush1.xpose.msra.mxu0 0.0
    %3881 = vmatprep.subr.mxu0 0.0
    %3882 = vmatpush1.xpose.msra.mxu0 0.0
    %3883 = vmatprep.subr.mxu0 0.0
    %3884 = vmatpush1.xpose.msra.mxu0 0.0
    %3885 = vmatprep.subr.mxu0 0.0
    %3886 = vmatpush1.xpose.msra.mxu0 0.0
    %3887 = vmatprep.subr.mxu0 0.0
    %3888 = vmatpush1.xpose.msra.mxu0 0.0
    %3889 = vmatprep.subr.mxu0 0.0
    %3890 = vmatpush1.xpose.msra.mxu0 0.0
    %3891 = vmatprep.subr.mxu0 0.0
    %3892 = vmatpush1.xpose.msra.mxu0 0.0
    %3893 = vmatprep.subr.mxu0 0.0
    %3894 = vmatpush1.xpose.msra.mxu0 0.0
    %3895 = vmatprep.subr.mxu0 0.0
    %3896 = vmatpush1.xpose.msra.mxu0 0.0
    %3897 = vmatprep.subr.mxu0 0.0
    %3898 = vmatpush1.xpose.msra.mxu0 0.0
    %3899 = vmatprep.subr.mxu0 0.0
    %3900 = vmatpush1.xpose.msra.mxu0 0.0
    %3901 = vmatprep.mubr.f32.mxu0 0.0
    %3902 = vmatmul.mubr.f32.gmra.mrb[0].mxu0 %v3833
    %v3903 = vpop.f32.mrb[0].mxu0
    %v3904 = vadd.f32 0.0, %v3903
    %v3905 = vpop.f32.mrb[0].mxu0
    %3906 = vdwg.mxu0
    %v3907 = vmul.f32 %v3904, 0.35355338
    %v3908 = vsel %vm743, %v3907, -inf
    %3909 = vmax.xlane.f32.xlu0 %v3908
    %v3910 = vpop.xlane.xlu0 %3909
    %v3911 = vsub.f32 %v3907, %v3910
    %v3912 = vmul.f32 %v3911, 1.442695
    %v3913 = vpow.pop %v3912
    %v3914 = vsel %vm743, %v3913, 0.0
    %3915 = vadd.xlane.f32.xlu0 %v3914
    %v3916 = vpop.xlane.xlu0 %3915
    %v3917 = vrcp.pop %v3916
    %v3918 = vmul.f32 %v3913, %v3917
    %3919 = vrot.lane.b32.xlu0 %v2998, 112
    %v3920 = vpop.permute.xlu0 %3919
    %v3923 = vsel %vm743, %v3918, 0
    %3925 = vmatprep.subr.mxu0 0.0
    %3926 = vmatpush1.msra.mxu0 %v3920
    %3927 = vmatprep.subr.mxu0 0.0
    %3928 = vmatpush1.msra.mxu0 0.0
    %3929 = vmatprep.subr.mxu0 0.0
    %3930 = vmatpush1.msra.mxu0 0.0
    %3931 = vmatprep.subr.mxu0 0.0
    %3932 = vmatpush1.msra.mxu0 0.0
    %3933 = vmatprep.subr.mxu0 0.0
    %3934 = vmatpush1.msra.mxu0 0.0
    %3935 = vmatprep.subr.mxu0 0.0
    %3936 = vmatpush1.msra.mxu0 0.0
    %3937 = vmatprep.subr.mxu0 0.0
    %3938 = vmatpush1.msra.mxu0 0.0
    %3939 = vmatprep.subr.mxu0 0.0
    %3940 = vmatpush1.msra.mxu0 0.0
    %3941 = vmatprep.subr.mxu0 0.0
    %3942 = vmatpush1.msra.mxu0 0.0
    %3943 = vmatprep.subr.mxu0 0.0
    %3944 = vmatpush1.msra.mxu0 0.0
    %3945 = vmatprep.subr.mxu0 0.0
    %3946 = vmatpush1.msra.mxu0 0.0
    %3947 = vmatprep.subr.mxu0 0.0
    %3948 = vmatpush1.msra.mxu0 0.0
    %3949 = vmatprep.subr.mxu0 0.0
    %3950 = vmatpush1.msra.mxu0 0.0
    %3951 = vmatprep.subr.mxu0 0.0
    %3952 = vmatpush1.msra.mxu0 0.0
    %3953 = vmatprep.subr.mxu0 0.0
    %3954 = vmatpush1.msra.mxu0 0.0
    %3955 = vmatprep.subr.mxu0 0.0
    %3956 = vmatpush1.msra.mxu0 0.0
    %3957 = vmatprep.subr.mxu0 0.0
    %3958 = vmatpush1.msra.mxu0 0.0
    %3959 = vmatprep.subr.mxu0 0.0
    %3960 = vmatpush1.msra.mxu0 0.0
    %3961 = vmatprep.subr.mxu0 0.0
    %3962 = vmatpush1.msra.mxu0 0.0
    %3963 = vmatprep.subr.mxu0 0.0
    %3964 = vmatpush1.msra.mxu0 0.0
    %3965 = vmatprep.subr.mxu0 0.0
    %3966 = vmatpush1.msra.mxu0 0.0
    %3967 = vmatprep.subr.mxu0 0.0
    %3968 = vmatpush1.msra.mxu0 0.0
    %3969 = vmatprep.subr.mxu0 0.0
    %3970 = vmatpush1.msra.mxu0 0.0
    %3971 = vmatprep.subr.mxu0 0.0
    %3972 = vmatpush1.msra.mxu0 0.0
    %3973 = vmatprep.subr.mxu0 0.0
    %3974 = vmatpush1.msra.mxu0 0.0
    %3975 = vmatprep.subr.mxu0 0.0
    %3976 = vmatpush1.msra.mxu0 0.0
    %3977 = vmatprep.subr.mxu0 0.0
    %3978 = vmatpush1.msra.mxu0 0.0
    %3979 = vmatprep.subr.mxu0 0.0
    %3980 = vmatpush1.msra.mxu0 0.0
    %3981 = vmatprep.subr.mxu0 0.0
    %3982 = vmatpush1.msra.mxu0 0.0
    %3983 = vmatprep.subr.mxu0 0.0
    %3984 = vmatpush1.msra.mxu0 0.0
    %3985 = vmatprep.subr.mxu0 0.0
    %3986 = vmatpush1.msra.mxu0 0.0
    %3987 = vmatprep.subr.mxu0 0.0
    %3988 = vmatpush1.msra.mxu0 0.0
    %3989 = vmatprep.mubr.f32.mxu0 0.0
    %3990 = vmatmul.mubr.f32.gmra.mrb[0].mxu0 %v3923
    %v3991 = vpop.f32.mrb[0].mxu0
    %v3992 = vadd.f32 0.0, %v3991
    %v3993 = vpop.f32.mrb[0].mxu0
    %3994 = vdwg.mxu0
    %3995 = vrot.lane.b32.xlu0 %v2827, 112
    %v3996 = vpop.permute.xlu0 %3995
    %3997 = vrot.lane.b32.xlu0 %v2915, 112
    %v3998 = vpop.permute.xlu0 %3997
    %v3999 = vsel %vm743, %v3996, 0
    %v4001 = vsel %vm743, %v3998, 0
    %4003 = vmatprep.subr.mxu0 0.0
    %4004 = vmatpush1.xpose.msra.mxu0 %v4001
    %4005 = vmatprep.subr.mxu0 0.0
    %4006 = vmatpush1.xpose.msra.mxu0 0.0
    %4007 = vmatprep.subr.mxu0 0.0
    %4008 = vmatpush1.xpose.msra.mxu0 0.0
    %4009 = vmatprep.subr.mxu0 0.0
    %4010 = vmatpush1.xpose.msra.mxu0 0.0
    %4011 = vmatprep.subr.mxu0 0.0
    %4012 = vmatpush1.xpose.msra.mxu0 0.0
    %4013 = vmatprep.subr.mxu0 0.0
    %4014 = vmatpush1.xpose.msra.mxu0 0.0
    %4015 = vmatprep.subr.mxu0 0.0
    %4016 = vmatpush1.xpose.msra.mxu0 0.0
    %4017 = vmatprep.subr.mxu0 0.0
    %4018 = vmatpush1.xpose.msra.mxu0 0.0
    %4019 = vmatprep.subr.mxu0 0.0
    %4020 = vmatpush1.xpose.msra.mxu0 0.0
    %4021 = vmatprep.subr.mxu0 0.0
    %4022 = vmatpush1.xpose.msra.mxu0 0.0
    %4023 = vmatprep.subr.mxu0 0.0
    %4024 = vmatpush1.xpose.msra.mxu0 0.0
    %4025 = vmatprep.subr.mxu0 0.0
    %4026 = vmatpush1.xpose.msra.mxu0 0.0
    %4027 = vmatprep.subr.mxu0 0.0
    %4028 = vmatpush1.xpose.msra.mxu0 0.0
    %4029 = vmatprep.subr.mxu0 0.0
    %4030 = vmatpush1.xpose.msra.mxu0 0.0
    %4031 = vmatprep.subr.mxu0 0.0
    %4032 = vmatpush1.xpose.msra.mxu0 0.0
    %4033 = vmatprep.subr.mxu0 0.0
    %4034 = vmatpush1.xpose.msra.mxu0 0.0
    %4035 = vmatprep.subr.mxu0 0.0
    %4036 = vmatpush1.xpose.msra.mxu0 0.0
    %4037 = vmatprep.subr.mxu0 0.0
    %4038 = vmatpush1.xpose.msra.mxu0 0.0
    %4039 = vmatprep.subr.mxu0 0.0
    %4040 = vmatpush1.xpose.msra.mxu0 0.0
    %4041 = vmatprep.subr.mxu0 0.0
    %4042 = vmatpush1.xpose.msra.mxu0 0.0
    %4043 = vmatprep.subr.mxu0 0.0
    %4044 = vmatpush1.xpose.msra.mxu0 0.0
    %4045 = vmatprep.subr.mxu0 0.0
    %4046 = vmatpush1.xpose.msra.mxu0 0.0
    %4047 = vmatprep.subr.mxu0 0.0
    %4048 = vmatpush1.xpose.msra.mxu0 0.0
    %4049 = vmatprep.subr.mxu0 0.0
    %4050 = vmatpush1.xpose.msra.mxu0 0.0
    %4051 = vmatprep.subr.mxu0 0.0
    %4052 = vmatpush1.xpose.msra.mxu0 0.0
    %4053 = vmatprep.subr.mxu0 0.0
    %4054 = vmatpush1.xpose.msra.mxu0 0.0
    %4055 = vmatprep.subr.mxu0 0.0
    %4056 = vmatpush1.xpose.msra.mxu0 0.0
    %4057 = vmatprep.subr.mxu0 0.0
    %4058 = vmatpush1.xpose.msra.mxu0 0.0
    %4059 = vmatprep.subr.mxu0 0.0
    %4060 = vmatpush1.xpose.msra.mxu0 0.0
    %4061 = vmatprep.subr.mxu0 0.0
    %4062 = vmatpush1.xpose.msra.mxu0 0.0
    %4063 = vmatprep.subr.mxu0 0.0
    %4064 = vmatpush1.xpose.msra.mxu0 0.0
    %4065 = vmatprep.subr.mxu0 0.0
    %4066 = vmatpush1.xpose.msra.mxu0 0.0
    %4067 = vmatprep.mubr.f32.mxu0 0.0
    %4068 = vmatmul.mubr.f32.gmra.mrb[0].mxu0 %v3999
    %v4069 = vpop.f32.mrb[0].mxu0
    %v4070 = vadd.f32 0.0, %v4069
    %v4071 = vpop.f32.mrb[0].mxu0
    %4072 = vdwg.mxu0
    %v4073 = vmul.f32 %v4070, 0.35355338
    %v4074 = vsel %vm743, %v4073, -inf
    %4075 = vmax.xlane.f32.xlu0 %v4074
    %v4076 = vpop.xlane.xlu0 %4075
    %v4077 = vsub.f32 %v4073, %v4076
    %v4078 = vmul.f32 %v4077, 1.442695
    %v4079 = vpow.pop %v4078
    %v4080 = vsel %vm743, %v4079, 0.0
    %4081 = vadd.xlane.f32.xlu0 %v4080
    %v4082 = vpop.xlane.xlu0 %4081
    %v4083 = vrcp.pop %v4082
    %v4084 = vmul.f32 %v4079, %v4083
    %4085 = vrot.lane.b32.xlu0 %v3003, 112
    %v4086 = vpop.permute.xlu0 %4085
    %v4089 = vsel %vm743, %v4084, 0
    %4091 = vmatprep.subr.mxu0 0.0
    %4092 = vmatpush1.msra.mxu0 %v4086
    %4093 = vmatprep.subr.mxu0 0.0
    %4094 = vmatpush1.msra.mxu0 0.0
    %4095 = vmatprep.subr.mxu0 0.0
    %4096 = vmatpush1.msra.mxu0 0.0
    %4097 = vmatprep.subr.mxu0 0.0
    %4098 = vmatpush1.msra.mxu0 0.0
    %4099 = vmatprep.subr.mxu0 0.0
    %4100 = vmatpush1.msra.mxu0 0.0
    %4101 = vmatprep.subr.mxu0 0.0
    %4102 = vmatpush1.msra.mxu0 0.0
    %4103 = vmatprep.subr.mxu0 0.0
    %4104 = vmatpush1.msra.mxu0 0.0
    %4105 = vmatprep.subr.mxu0 0.0
    %4106 = vmatpush1.msra.mxu0 0.0
    %4107 = vmatprep.subr.mxu0 0.0
    %4108 = vmatpush1.msra.mxu0 0.0
    %4109 = vmatprep.subr.mxu0 0.0
    %4110 = vmatpush1.msra.mxu0 0.0
    %4111 = vmatprep.subr.mxu0 0.0
    %4112 = vmatpush1.msra.mxu0 0.0
    %4113 = vmatprep.subr.mxu0 0.0
    %4114 = vmatpush1.msra.mxu0 0.0
    %4115 = vmatprep.subr.mxu0 0.0
    %4116 = vmatpush1.msra.mxu0 0.0
    %4117 = vmatprep.subr.mxu0 0.0
    %4118 = vmatpush1.msra.mxu0 0.0
    %4119 = vmatprep.subr.mxu0 0.0
    %4120 = vmatpush1.msra.mxu0 0.0
    %4121 = vmatprep.subr.mxu0 0.0
    %4122 = vmatpush1.msra.mxu0 0.0
    %4123 = vmatprep.subr.mxu0 0.0
    %4124 = vmatpush1.msra.mxu0 0.0
    %4125 = vmatprep.subr.mxu0 0.0
    %4126 = vmatpush1.msra.mxu0 0.0
    %4127 = vmatprep.subr.mxu0 0.0
    %4128 = vmatpush1.msra.mxu0 0.0
    %4129 = vmatprep.subr.mxu0 0.0
    %4130 = vmatpush1.msra.mxu0 0.0
    %4131 = vmatprep.subr.mxu0 0.0
    %4132 = vmatpush1.msra.mxu0 0.0
    %4133 = vmatprep.subr.mxu0 0.0
    %4134 = vmatpush1.msra.mxu0 0.0
    %4135 = vmatprep.subr.mxu0 0.0
    %4136 = vmatpush1.msra.mxu0 0.0
    %4137 = vmatprep.subr.mxu0 0.0
    %4138 = vmatpush1.msra.mxu0 0.0
    %4139 = vmatprep.subr.mxu0 0.0
    %4140 = vmatpush1.msra.mxu0 0.0
    %4141 = vmatprep.subr.mxu0 0.0
    %4142 = vmatpush1.msra.mxu0 0.0
    %4143 = vmatprep.subr.mxu0 0.0
    %4144 = vmatpush1.msra.mxu0 0.0
    %4145 = vmatprep.subr.mxu0 0.0
    %4146 = vmatpush1.msra.mxu0 0.0
    %4147 = vmatprep.subr.mxu0 0.0
    %4148 = vmatpush1.msra.mxu0 0.0
    %4149 = vmatprep.subr.mxu0 0.0
    %4150 = vmatpush1.msra.mxu0 0.0
    %4151 = vmatprep.subr.mxu0 0.0
    %4152 = vmatpush1.msra.mxu0 0.0
    %4153 = vmatprep.subr.mxu0 0.0
    %4154 = vmatpush1.msra.mxu0 0.0
    %4155 = vmatprep.mubr.f32.mxu0 0.0
    %4156 = vmatmul.mubr.f32.gmra.mrb[0].mxu0 %v4089
    %v4157 = vpop.f32.mrb[0].mxu0
    %v4158 = vadd.f32 0.0, %v4157
    %v4159 = vpop.f32.mrb[0].mxu0
    %4160 = vdwg.mxu0
    %v4162 = vsel %vm743, %v3992, 0
    %v4165 = vsel %vm743, %v4158, 0
    %4167 = vmatprep.subr.mxu0 0.0
    %4168 = vmatpush1.msra.mxu0 %v3009
    %4169 = vmatprep.subr.mxu0 0.0
    %4170 = vmatpush1.msra.mxu0 0.0
    %4171 = vmatprep.subr.mxu0 0.0
    %4172 = vmatpush1.msra.mxu0 0.0
    %4173 = vmatprep.subr.mxu0 0.0
    %4174 = vmatpush1.msra.mxu0 0.0
    %4175 = vmatprep.subr.mxu0 0.0
    %4176 = vmatpush1.msra.mxu0 0.0
    %4177 = vmatprep.subr.mxu0 0.0
    %4178 = vmatpush1.msra.mxu0 0.0
    %4179 = vmatprep.subr.mxu0 0.0
    %4180 = vmatpush1.msra.mxu0 0.0
    %4181 = vmatprep.subr.mxu0 0.0
    %4182 = vmatpush1.msra.mxu0 0.0
    %4183 = vmatprep.subr.mxu0 0.0
    %4184 = vmatpush1.msra.mxu0 0.0
    %4185 = vmatprep.subr.mxu0 0.0
    %4186 = vmatpush1.msra.mxu0 0.0
    %4187 = vmatprep.subr.mxu0 0.0
    %4188 = vmatpush1.msra.mxu0 0.0
    %4189 = vmatprep.subr.mxu0 0.0
    %4190 = vmatpush1.msra.mxu0 0.0
    %4191 = vmatprep.subr.mxu0 0.0
    %4192 = vmatpush1.msra.mxu0 0.0
    %4193 = vmatprep.subr.mxu0 0.0
    %4194 = vmatpush1.msra.mxu0 0.0
    %4195 = vmatprep.subr.mxu0 0.0
    %4196 = vmatpush1.msra.mxu0 0.0
    %4197 = vmatprep.subr.mxu0 0.0
    %4198 = vmatpush1.msra.mxu0 0.0
    %4199 = vmatprep.subr.mxu0 0.0
    %4200 = vmatpush1.msra.mxu0 0.0
    %4201 = vmatprep.subr.mxu0 0.0
    %4202 = vmatpush1.msra.mxu0 0.0
    %4203 = vmatprep.subr.mxu0 0.0
    %4204 = vmatpush1.msra.mxu0 0.0
    %4205 = vmatprep.subr.mxu0 0.0
    %4206 = vmatpush1.msra.mxu0 0.0
    %4207 = vmatprep.subr.mxu0 0.0
    %4208 = vmatpush1.msra.mxu0 0.0
    %4209 = vmatprep.subr.mxu0 0.0
    %4210 = vmatpush1.msra.mxu0 0.0
    %4211 = vmatprep.subr.mxu0 0.0
    %4212 = vmatpush1.msra.mxu0 0.0
    %4213 = vmatprep.subr.mxu0 0.0
    %4214 = vmatpush1.msra.mxu0 0.0
    %4215 = vmatprep.subr.mxu0 0.0
    %4216 = vmatpush1.msra.mxu0 0.0
    %4217 = vmatprep.subr.mxu0 0.0
    %4218 = vmatpush1.msra.mxu0 0.0
    %4219 = vmatprep.subr.mxu0 0.0
    %4220 = vmatpush1.msra.mxu0 0.0
    %4221 = vmatprep.subr.mxu0 0.0
    %4222 = vmatpush1.msra.mxu0 0.0
    %4223 = vmatprep.subr.mxu0 0.0
    %4224 = vmatpush1.msra.mxu0 0.0
    %4225 = vmatprep.subr.mxu0 0.0
    %4226 = vmatpush1.msra.mxu0 0.0
    %4227 = vmatprep.subr.mxu0 0.0
    %4228 = vmatpush1.msra.mxu0 0.0
    %4229 = vmatprep.subr.mxu0 0.0
    %4230 = vmatpush1.msra.mxu0 0.0
    %4231 = vmatprep.mubr.f32.mxu0 0.0
    %4232 = vmatmul.mubr.f32.gmra.mrb[0].mxu0 %v4162
    %v4233 = vpop.f32.mrb[0].mxu0
    %v4234 = vadd.f32 0.0, %v4233
    %v4235 = vpop.f32.mrb[0].mxu0
    %4236 = vmatprep.mubr.f32.mxu0 0.0
    %4237 = vmatmul.mubr.f32.gmra.mrb[0].mxu0 %v4165
    %v4238 = vpop.f32.mrb[0].mxu0
    %v4239 = vadd.f32 0.0, %v4238
    %v4240 = vpop.f32.mrb[0].mxu0
    %4241 = vdwg.mxu0
    %v4242 = vadd.f32 %v3821, %v4234
    %v4243 = vadd.f32 %v3826, %v4239
    %4244 = vrot.lane.b32.xlu0 %v2822, 104
    %v4245 = vpop.permute.xlu0 %4244
    %4246 = vrot.lane.b32.xlu0 %v2910, 104
    %v4247 = vpop.permute.xlu0 %4246
    %v4248 = vsel %vm743, %v4245, 0
    %v4250 = vsel %vm743, %v4247, 0
    %4252 = vmatprep.subr.mxu0 0.0
    %4253 = vmatpush1.xpose.msra.mxu0 %v4250
    %4254 = vmatprep.subr.mxu0 0.0
    %4255 = vmatpush1.xpose.msra.mxu0 0.0
    %4256 = vmatprep.subr.mxu0 0.0
    %4257 = vmatpush1.xpose.msra.mxu0 0.0
    %4258 = vmatprep.subr.mxu0 0.0
    %4259 = vmatpush1.xpose.msra.mxu0 0.0
    %4260 = vmatprep.subr.mxu0 0.0
    %4261 = vmatpush1.xpose.msra.mxu0 0.0
    %4262 = vmatprep.subr.mxu0 0.0
    %4263 = vmatpush1.xpose.msra.mxu0 0.0
    %4264 = vmatprep.subr.mxu0 0.0
    %4265 = vmatpush1.xpose.msra.mxu0 0.0
    %4266 = vmatprep.subr.mxu0 0.0
    %4267 = vmatpush1.xpose.msra.mxu0 0.0
    %4268 = vmatprep.subr.mxu0 0.0
    %4269 = vmatpush1.xpose.msra.mxu0 0.0
    %4270 = vmatprep.subr.mxu0 0.0
    %4271 = vmatpush1.xpose.msra.mxu0 0.0
    %4272 = vmatprep.subr.mxu0 0.0
    %4273 = vmatpush1.xpose.msra.mxu0 0.0
    %4274 = vmatprep.subr.mxu0 0.0
    %4275 = vmatpush1.xpose.msra.mxu0 0.0
    %4276 = vmatprep.subr.mxu0 0.0
    %4277 = vmatpush1.xpose.msra.mxu0 0.0
    %4278 = vmatprep.subr.mxu0 0.0
    %4279 = vmatpush1.xpose.msra.mxu0 0.0
    %4280 = vmatprep.subr.mxu0 0.0
    %4281 = vmatpush1.xpose.msra.mxu0 0.0
    %4282 = vmatprep.subr.mxu0 0.0
    %4283 = vmatpush1.xpose.msra.mxu0 0.0
    %4284 = vmatprep.subr.mxu0 0.0
    %4285 = vmatpush1.xpose.msra.mxu0 0.0
    %4286 = vmatprep.subr.mxu0 0.0
    %4287 = vmatpush1.xpose.msra.mxu0 0.0
    %4288 = vmatprep.subr.mxu0 0.0
    %4289 = vmatpush1.xpose.msra.mxu0 0.0
    %4290 = vmatprep.subr.mxu0 0.0
    %4291 = vmatpush1.xpose.msra.mxu0 0.0
    %4292 = vmatprep.subr.mxu0 0.0
    %4293 = vmatpush1.xpose.msra.mxu0 0.0
    %4294 = vmatprep.subr.mxu0 0.0
    %4295 = vmatpush1.xpose.msra.mxu0 0.0
    %4296 = vmatprep.subr.mxu0 0.0
    %4297 = vmatpush1.xpose.msra.mxu0 0.0
    %4298 = vmatprep.subr.mxu0 0.0
    %4299 = vmatpush1.xpose.msra.mxu0 0.0
    %4300 = vmatprep.subr.mxu0 0.0
    %4301 = vmatpush1.xpose.msra.mxu0 0.0
    %4302 = vmatprep.subr.mxu0 0.0
    %4303 = vmatpush1.xpose.msra.mxu0 0.0
    %4304 = vmatprep.subr.mxu0 0.0
    %4305 = vmatpush1.xpose.msra.mxu0 0.0
    %4306 = vmatprep.subr.mxu0 0.0
    %4307 = vmatpush1.xpose.msra.mxu0 0.0
    %4308 = vmatprep.subr.mxu0 0.0
    %4309 = vmatpush1.xpose.msra.mxu0 0.0
    %4310 = vmatprep.subr.mxu0 0.0
    %4311 = vmatpush1.xpose.msra.mxu0 0.0
    %4312 = vmatprep.subr.mxu0 0.0
    %4313 = vmatpush1.xpose.msra.mxu0 0.0
    %4314 = vmatprep.subr.mxu0 0.0
    %4315 = vmatpush1.xpose.msra.mxu0 0.0
    %4316 = vmatprep.mubr.f32.mxu0 0.0
    %4317 = vmatmul.mubr.f32.gmra.mrb[0].mxu0 %v4248
    %v4318 = vpop.f32.mrb[0].mxu0
    %v4319 = vadd.f32 0.0, %v4318
    %v4320 = vpop.f32.mrb[0].mxu0
    %4321 = vdwg.mxu0
    %v4322 = vmul.f32 %v4319, 0.35355338
    %v4323 = vsel %vm743, %v4322, -inf
    %4324 = vmax.xlane.f32.xlu0 %v4323
    %v4325 = vpop.xlane.xlu0 %4324
    %v4326 = vsub.f32 %v4322, %v4325
    %v4327 = vmul.f32 %v4326, 1.442695
    %v4328 = vpow.pop %v4327
    %v4329 = vsel %vm743, %v4328, 0.0
    %4330 = vadd.xlane.f32.xlu0 %v4329
    %v4331 = vpop.xlane.xlu0 %4330
    %v4332 = vrcp.pop %v4331
    %v4333 = vmul.f32 %v4328, %v4332
    %4334 = vrot.lane.b32.xlu0 %v2998, 104
    %v4335 = vpop.permute.xlu0 %4334
    %v4338 = vsel %vm743, %v4333, 0
    %4340 = vmatprep.subr.mxu0 0.0
    %4341 = vmatpush1.msra.mxu0 %v4335
    %4342 = vmatprep.subr.mxu0 0.0
    %4343 = vmatpush1.msra.mxu0 0.0
    %4344 = vmatprep.subr.mxu0 0.0
    %4345 = vmatpush1.msra.mxu0 0.0
    %4346 = vmatprep.subr.mxu0 0.0
    %4347 = vmatpush1.msra.mxu0 0.0
    %4348 = vmatprep.subr.mxu0 0.0
    %4349 = vmatpush1.msra.mxu0 0.0
    %4350 = vmatprep.subr.mxu0 0.0
    %4351 = vmatpush1.msra.mxu0 0.0
    %4352 = vmatprep.subr.mxu0 0.0
    %4353 = vmatpush1.msra.mxu0 0.0
    %4354 = vmatprep.subr.mxu0 0.0
    %4355 = vmatpush1.msra.mxu0 0.0
    %4356 = vmatprep.subr.mxu0 0.0
    %4357 = vmatpush1.msra.mxu0 0.0
    %4358 = vmatprep.subr.mxu0 0.0
    %4359 = vmatpush1.msra.mxu0 0.0
    %4360 = vmatprep.subr.mxu0 0.0
    %4361 = vmatpush1.msra.mxu0 0.0
    %4362 = vmatprep.subr.mxu0 0.0
    %4363 = vmatpush1.msra.mxu0 0.0
    %4364 = vmatprep.subr.mxu0 0.0
    %4365 = vmatpush1.msra.mxu0 0.0
    %4366 = vmatprep.subr.mxu0 0.0
    %4367 = vmatpush1.msra.mxu0 0.0
    %4368 = vmatprep.subr.mxu0 0.0
    %4369 = vmatpush1.msra.mxu0 0.0
    %4370 = vmatprep.subr.mxu0 0.0
    %4371 = vmatpush1.msra.mxu0 0.0
    %4372 = vmatprep.subr.mxu0 0.0
    %4373 = vmatpush1.msra.mxu0 0.0
    %4374 = vmatprep.subr.mxu0 0.0
    %4375 = vmatpush1.msra.mxu0 0.0
    %4376 = vmatprep.subr.mxu0 0.0
    %4377 = vmatpush1.msra.mxu0 0.0
    %4378 = vmatprep.subr.mxu0 0.0
    %4379 = vmatpush1.msra.mxu0 0.0
    %4380 = vmatprep.subr.mxu0 0.0
    %4381 = vmatpush1.msra.mxu0 0.0
    %4382 = vmatprep.subr.mxu0 0.0
    %4383 = vmatpush1.msra.mxu0 0.0
    %4384 = vmatprep.subr.mxu0 0.0
    %4385 = vmatpush1.msra.mxu0 0.0
    %4386 = vmatprep.subr.mxu0 0.0
    %4387 = vmatpush1.msra.mxu0 0.0
    %4388 = vmatprep.subr.mxu0 0.0
    %4389 = vmatpush1.msra.mxu0 0.0
    %4390 = vmatprep.subr.mxu0 0.0
    %4391 = vmatpush1.msra.mxu0 0.0
    %4392 = vmatprep.subr.mxu0 0.0
    %4393 = vmatpush1.msra.mxu0 0.0
    %4394 = vmatprep.subr.mxu0 0.0
    %4395 = vmatpush1.msra.mxu0 0.0
    %4396 = vmatprep.subr.mxu0 0.0
    %4397 = vmatpush1.msra.mxu0 0.0
    %4398 = vmatprep.subr.mxu0 0.0
    %4399 = vmatpush1.msra.mxu0 0.0
    %4400 = vmatprep.subr.mxu0 0.0
    %4401 = vmatpush1.msra.mxu0 0.0
    %4402 = vmatprep.subr.mxu0 0.0
    %4403 = vmatpush1.msra.mxu0 0.0
    %4404 = vmatprep.mubr.f32.mxu0 0.0
    %4405 = vmatmul.mubr.f32.gmra.mrb[0].mxu0 %v4338
    %v4406 = vpop.f32.mrb[0].mxu0
    %v4407 = vadd.f32 0.0, %v4406
    %v4408 = vpop.f32.mrb[0].mxu0
    %4409 = vdwg.mxu0
    %4410 = vrot.lane.b32.xlu0 %v2827, 104
    %v4411 = vpop.permute.xlu0 %4410
    %4412 = vrot.lane.b32.xlu0 %v2915, 104
    %v4413 = vpop.permute.xlu0 %4412
    %v4414 = vsel %vm743, %v4411, 0
    %v4416 = vsel %vm743, %v4413, 0
    %4418 = vmatprep.subr.mxu0 0.0
    %4419 = vmatpush1.xpose.msra.mxu0 %v4416
    %4420 = vmatprep.subr.mxu0 0.0
    %4421 = vmatpush1.xpose.msra.mxu0 0.0
    %4422 = vmatprep.subr.mxu0 0.0
    %4423 = vmatpush1.xpose.msra.mxu0 0.0
    %4424 = vmatprep.subr.mxu0 0.0
    %4425 = vmatpush1.xpose.msra.mxu0 0.0
    %4426 = vmatprep.subr.mxu0 0.0
    %4427 = vmatpush1.xpose.msra.mxu0 0.0
    %4428 = vmatprep.subr.mxu0 0.0
    %4429 = vmatpush1.xpose.msra.mxu0 0.0
    %4430 = vmatprep.subr.mxu0 0.0
    %4431 = vmatpush1.xpose.msra.mxu0 0.0
    %4432 = vmatprep.subr.mxu0 0.0
    %4433 = vmatpush1.xpose.msra.mxu0 0.0
    %4434 = vmatprep.subr.mxu0 0.0
    %4435 = vmatpush1.xpose.msra.mxu0 0.0
    %4436 = vmatprep.subr.mxu0 0.0
    %4437 = vmatpush1.xpose.msra.mxu0 0.0
    %4438 = vmatprep.subr.mxu0 0.0
    %4439 = vmatpush1.xpose.msra.mxu0 0.0
    %4440 = vmatprep.subr.mxu0 0.0
    %4441 = vmatpush1.xpose.msra.mxu0 0.0
    %4442 = vmatprep.subr.mxu0 0.0
    %4443 = vmatpush1.xpose.msra.mxu0 0.0
    %4444 = vmatprep.subr.mxu0 0.0
    %4445 = vmatpush1.xpose.msra.mxu0 0.0
    %4446 = vmatprep.subr.mxu0 0.0
    %4447 = vmatpush1.xpose.msra.mxu0 0.0
    %4448 = vmatprep.subr.mxu0 0.0
    %4449 = vmatpush1.xpose.msra.mxu0 0.0
    %4450 = vmatprep.subr.mxu0 0.0
    %4451 = vmatpush1.xpose.msra.mxu0 0.0
    %4452 = vmatprep.subr.mxu0 0.0
    %4453 = vmatpush1.xpose.msra.mxu0 0.0
    %4454 = vmatprep.subr.mxu0 0.0
    %4455 = vmatpush1.xpose.msra.mxu0 0.0
    %4456 = vmatprep.subr.mxu0 0.0
    %4457 = vmatpush1.xpose.msra.mxu0 0.0
    %4458 = vmatprep.subr.mxu0 0.0
    %4459 = vmatpush1.xpose.msra.mxu0 0.0
    %4460 = vmatprep.subr.mxu0 0.0
    %4461 = vmatpush1.xpose.msra.mxu0 0.0
    %4462 = vmatprep.subr.mxu0 0.0
    %4463 = vmatpush1.xpose.msra.mxu0 0.0
    %4464 = vmatprep.subr.mxu0 0.0
    %4465 = vmatpush1.xpose.msra.mxu0 0.0
    %4466 = vmatprep.subr.mxu0 0.0
    %4467 = vmatpush1.xpose.msra.mxu0 0.0
    %4468 = vmatprep.subr.mxu0 0.0
    %4469 = vmatpush1.xpose.msra.mxu0 0.0
    %4470 = vmatprep.subr.mxu0 0.0
    %4471 = vmatpush1.xpose.msra.mxu0 0.0
    %4472 = vmatprep.subr.mxu0 0.0
    %4473 = vmatpush1.xpose.msra.mxu0 0.0
    %4474 = vmatprep.subr.mxu0 0.0
    %4475 = vmatpush1.xpose.msra.mxu0 0.0
    %4476 = vmatprep.subr.mxu0 0.0
    %4477 = vmatpush1.xpose.msra.mxu0 0.0
    %4478 = vmatprep.subr.mxu0 0.0
    %4479 = vmatpush1.xpose.msra.mxu0 0.0
    %4480 = vmatprep.subr.mxu0 0.0
    %4481 = vmatpush1.xpose.msra.mxu0 0.0
    %4482 = vmatprep.mubr.f32.mxu0 0.0
    %4483 = vmatmul.mubr.f32.gmra.mrb[0].mxu0 %v4414
    %v4484 = vpop.f32.mrb[0].mxu0
    %v4485 = vadd.f32 0.0, %v4484
    %v4486 = vpop.f32.mrb[0].mxu0
    %4487 = vdwg.mxu0
    %v4488 = vmul.f32 %v4485, 0.35355338
    %v4489 = vsel %vm743, %v4488, -inf
    %4490 = vmax.xlane.f32.xlu0 %v4489
    %v4491 = vpop.xlane.xlu0 %4490
    %v4492 = vsub.f32 %v4488, %v4491
    %v4493 = vmul.f32 %v4492, 1.442695
    %v4494 = vpow.pop %v4493
    %v4495 = vsel %vm743, %v4494, 0.0
    %4496 = vadd.xlane.f32.xlu0 %v4495
    %v4497 = vpop.xlane.xlu0 %4496
    %v4498 = vrcp.pop %v4497
    %v4499 = vmul.f32 %v4494, %v4498
    %4500 = vrot.lane.b32.xlu0 %v3003, 104
    %v4501 = vpop.permute.xlu0 %4500
    %v4504 = vsel %vm743, %v4499, 0
    %4506 = vmatprep.subr.mxu0 0.0
    %4507 = vmatpush1.msra.mxu0 %v4501
    %4508 = vmatprep.subr.mxu0 0.0
    %4509 = vmatpush1.msra.mxu0 0.0
    %4510 = vmatprep.subr.mxu0 0.0
    %4511 = vmatpush1.msra.mxu0 0.0
    %4512 = vmatprep.subr.mxu0 0.0
    %4513 = vmatpush1.msra.mxu0 0.0
    %4514 = vmatprep.subr.mxu0 0.0
    %4515 = vmatpush1.msra.mxu0 0.0
    %4516 = vmatprep.subr.mxu0 0.0
    %4517 = vmatpush1.msra.mxu0 0.0
    %4518 = vmatprep.subr.mxu0 0.0
    %4519 = vmatpush1.msra.mxu0 0.0
    %4520 = vmatprep.subr.mxu0 0.0
    %4521 = vmatpush1.msra.mxu0 0.0
    %4522 = vmatprep.subr.mxu0 0.0
    %4523 = vmatpush1.msra.mxu0 0.0
    %4524 = vmatprep.subr.mxu0 0.0
    %4525 = vmatpush1.msra.mxu0 0.0
    %4526 = vmatprep.subr.mxu0 0.0
    %4527 = vmatpush1.msra.mxu0 0.0
    %4528 = vmatprep.subr.mxu0 0.0
    %4529 = vmatpush1.msra.mxu0 0.0
    %4530 = vmatprep.subr.mxu0 0.0
    %4531 = vmatpush1.msra.mxu0 0.0
    %4532 = vmatprep.subr.mxu0 0.0
    %4533 = vmatpush1.msra.mxu0 0.0
    %4534 = vmatprep.subr.mxu0 0.0
    %4535 = vmatpush1.msra.mxu0 0.0
    %4536 = vmatprep.subr.mxu0 0.0
    %4537 = vmatpush1.msra.mxu0 0.0
    %4538 = vmatprep.subr.mxu0 0.0
    %4539 = vmatpush1.msra.mxu0 0.0
    %4540 = vmatprep.subr.mxu0 0.0
    %4541 = vmatpush1.msra.mxu0 0.0
    %4542 = vmatprep.subr.mxu0 0.0
    %4543 = vmatpush1.msra.mxu0 0.0
    %4544 = vmatprep.subr.mxu0 0.0
    %4545 = vmatpush1.msra.mxu0 0.0
    %4546 = vmatprep.subr.mxu0 0.0
    %4547 = vmatpush1.msra.mxu0 0.0
    %4548 = vmatprep.subr.mxu0 0.0
    %4549 = vmatpush1.msra.mxu0 0.0
    %4550 = vmatprep.subr.mxu0 0.0
    %4551 = vmatpush1.msra.mxu0 0.0
    %4552 = vmatprep.subr.mxu0 0.0
    %4553 = vmatpush1.msra.mxu0 0.0
    %4554 = vmatprep.subr.mxu0 0.0
    %4555 = vmatpush1.msra.mxu0 0.0
    %4556 = vmatprep.subr.mxu0 0.0
    %4557 = vmatpush1.msra.mxu0 0.0
    %4558 = vmatprep.subr.mxu0 0.0
    %4559 = vmatpush1.msra.mxu0 0.0
    %4560 = vmatprep.subr.mxu0 0.0
    %4561 = vmatpush1.msra.mxu0 0.0
    %4562 = vmatprep.subr.mxu0 0.0
    %4563 = vmatpush1.msra.mxu0 0.0
    %4564 = vmatprep.subr.mxu0 0.0
    %4565 = vmatpush1.msra.mxu0 0.0
    %4566 = vmatprep.subr.mxu0 0.0
    %4567 = vmatpush1.msra.mxu0 0.0
    %4568 = vmatprep.subr.mxu0 0.0
    %4569 = vmatpush1.msra.mxu0 0.0
    %4570 = vmatprep.mubr.f32.mxu0 0.0
    %4571 = vmatmul.mubr.f32.gmra.mrb[0].mxu0 %v4504
    %v4572 = vpop.f32.mrb[0].mxu0
    %v4573 = vadd.f32 0.0, %v4572
    %v4574 = vpop.f32.mrb[0].mxu0
    %4575 = vdwg.mxu0
    %v4577 = vsel %vm743, %v4407, 0
    %v4580 = vsel %vm743, %v4573, 0
    %4582 = vmatprep.subr.mxu0 0.0
    %4583 = vmatpush1.msra.mxu0 %v3010
    %4584 = vmatprep.subr.mxu0 0.0
    %4585 = vmatpush1.msra.mxu0 0.0
    %4586 = vmatprep.subr.mxu0 0.0
    %4587 = vmatpush1.msra.mxu0 0.0
    %4588 = vmatprep.subr.mxu0 0.0
    %4589 = vmatpush1.msra.mxu0 0.0
    %4590 = vmatprep.subr.mxu0 0.0
    %4591 = vmatpush1.msra.mxu0 0.0
    %4592 = vmatprep.subr.mxu0 0.0
    %4593 = vmatpush1.msra.mxu0 0.0
    %4594 = vmatprep.subr.mxu0 0.0
    %4595 = vmatpush1.msra.mxu0 0.0
    %4596 = vmatprep.subr.mxu0 0.0
    %4597 = vmatpush1.msra.mxu0 0.0
    %4598 = vmatprep.subr.mxu0 0.0
    %4599 = vmatpush1.msra.mxu0 0.0
    %4600 = vmatprep.subr.mxu0 0.0
    %4601 = vmatpush1.msra.mxu0 0.0
    %4602 = vmatprep.subr.mxu0 0.0
    %4603 = vmatpush1.msra.mxu0 0.0
    %4604 = vmatprep.subr.mxu0 0.0
    %4605 = vmatpush1.msra.mxu0 0.0
    %4606 = vmatprep.subr.mxu0 0.0
    %4607 = vmatpush1.msra.mxu0 0.0
    %4608 = vmatprep.subr.mxu0 0.0
    %4609 = vmatpush1.msra.mxu0 0.0
    %4610 = vmatprep.subr.mxu0 0.0
    %4611 = vmatpush1.msra.mxu0 0.0
    %4612 = vmatprep.subr.mxu0 0.0
    %4613 = vmatpush1.msra.mxu0 0.0
    %4614 = vmatprep.subr.mxu0 0.0
    %4615 = vmatpush1.msra.mxu0 0.0
    %4616 = vmatprep.subr.mxu0 0.0
    %4617 = vmatpush1.msra.mxu0 0.0
    %4618 = vmatprep.subr.mxu0 0.0
    %4619 = vmatpush1.msra.mxu0 0.0
    %4620 = vmatprep.subr.mxu0 0.0
    %4621 = vmatpush1.msra.mxu0 0.0
    %4622 = vmatprep.subr.mxu0 0.0
    %4623 = vmatpush1.msra.mxu0 0.0
    %4624 = vmatprep.subr.mxu0 0.0
    %4625 = vmatpush1.msra.mxu0 0.0
    %4626 = vmatprep.subr.mxu0 0.0
    %4627 = vmatpush1.msra.mxu0 0.0
    %4628 = vmatprep.subr.mxu0 0.0
    %4629 = vmatpush1.msra.mxu0 0.0
    %4630 = vmatprep.subr.mxu0 0.0
    %4631 = vmatpush1.msra.mxu0 0.0
    %4632 = vmatprep.subr.mxu0 0.0
    %4633 = vmatpush1.msra.mxu0 0.0
    %4634 = vmatprep.subr.mxu0 0.0
    %4635 = vmatpush1.msra.mxu0 0.0
    %4636 = vmatprep.subr.mxu0 0.0
    %4637 = vmatpush1.msra.mxu0 0.0
    %4638 = vmatprep.subr.mxu0 0.0
    %4639 = vmatpush1.msra.mxu0 0.0
    %4640 = vmatprep.subr.mxu0 0.0
    %4641 = vmatpush1.msra.mxu0 0.0
    %4642 = vmatprep.subr.mxu0 0.0
    %4643 = vmatpush1.msra.mxu0 0.0
    %4644 = vmatprep.subr.mxu0 0.0
    %4645 = vmatpush1.msra.mxu0 0.0
    %4646 = vmatprep.mubr.f32.mxu0 0.0
    %4647 = vmatmul.mubr.f32.gmra.mrb[0].mxu0 %v4577
    %v4648 = vpop.f32.mrb[0].mxu0
    %v4649 = vadd.f32 0.0, %v4648
    %v4650 = vpop.f32.mrb[0].mxu0
    %4651 = vmatprep.mubr.f32.mxu0 0.0
    %4652 = vmatmul.mubr.f32.gmra.mrb[0].mxu0 %v4580
    %v4653 = vpop.f32.mrb[0].mxu0
    %v4654 = vadd.f32 0.0, %v4653
    %v4655 = vpop.f32.mrb[0].mxu0
    %4656 = vdwg.mxu0
    %v4657 = vadd.f32 %v4242, %v4649
    %v4658 = vadd.f32 %v4243, %v4654
    %s4659 = scalar_lea.vmem [#allocation9], 1
    %v4660 = vld [vmem:[%s4659] sm:$0x1]
    %v4662 = vlaneseq
    %v4663 = vshrl.u32 %v4662, 7
    %v4664 = vsub.s32 0, %v4663
    %v4665 = vrot.slane %v4660, %v4664
    %v4667 = vadd.f32 %v4657, %v4665
    %v4668 = vadd.f32 %v4658, %v4665
    %v4669 = vadd.f32 %v4667, %v2734
    %v4670 = vadd.f32 %v4668, %v2735
    %s4671 = scalar_lea.vmem [#allocation10], 1
    %v4672 = vld [vmem:[%s4671] sm:$0x1]
    %s4673 = scalar_lea.vmem [#allocation12], 1
    %v4674 = vld [vmem:[%s4673] sm:$0x1]
    %v4675 = vsel %vm431, %v4669, 0.0
    %4676 = vadd.xlane.f32.xlu0 %v4675
    %v4677 = vpop.xlane.xlu0 %4676
    %v4678 = vsel %vm431, %v4670, 0.0
    %4679 = vadd.xlane.f32.xlu0 %v4678
    %v4680 = vpop.xlane.xlu0 %4679
    %v4681 = vmul.f32 %v4677, %v438
    %v4682 = vmul.f32 %v4680, %v438
    %v4683 = vsub.f32 %v4669, %v4681
    %v4684 = vsub.f32 %v4670, %v4682
    %v4685 = vmul.f32 %v4683, %v4683
    %v4686 = vmul.f32 %v4684, %v4684
    %v4687 = vsel %vm431, %v4685, 0.0
    %4688 = vadd.xlane.f32.xlu0 %v4687
    %v4689 = vpop.xlane.xlu0 %4688
    %v4690 = vsel %vm431, %v4686, 0.0
    %4691 = vadd.xlane.f32.xlu0 %v4690
    %v4692 = vpop.xlane.xlu0 %4691
    %v4693 = vmul.f32 %v4689, %v438
    %v4694 = vmul.f32 %v4692, %v438
    %v4695 = vadd.f32 %v4693, 1e-12
    %v4696 = vadd.f32 %v4694, 1e-12
    %v4697 = vrsqrt.pop %v4695
    %v4698 = vrsqrt.pop %v4696
    %v4699 = vmul.f32 %v4683, %v4697
    %v4700 = vmul.f32 %v4684, %v4698
    %v4702 = vlaneseq
    %v4703 = vshrl.u32 %v4702, 7
    %v4704 = vsub.s32 0, %v4703
    %v4705 = vrot.slane %v4672, %v4704
    %v4707 = vmul.f32 %v4699, %v4705
    %v4708 = vmul.f32 %v4700, %v4705
    %v4710 = vlaneseq
    %v4711 = vshrl.u32 %v4710, 7
    %v4712 = vsub.s32 0, %v4711
    %v4713 = vrot.slane %v4674, %v4712
    %v4715 = vadd.f32 %v4707, %v4713
    %v4716 = vadd.f32 %v4708, %v4713
    %s4717 = scalar_lea.vmem %s33, 32
    %v4718 = vld [vmem:[%s4717] sm:$0xff]
    %v4719 = vld [vmem:[%s4717 + $0x8] sm:$0xff]
    %v4720 = vld [vmem:[%s4717 + $0x10] sm:$0xff]
    %v4721 = vld [vmem:[%s4717 + $0x18] sm:$0xff]
    %s4722 = scalar_lea.vmem [#allocation13], 1
    %v4723 = vld [vmem:[%s4722] sm:$0x1]
    %v4725 = vlaneseq
    %v4726 = vshrl.u32 %v4725, 7
    %v4727 = vsub.s32 0, %v4726
    %v4728 = vrot.slane %v4723, %v4727
    %v4731 = vsel %vm431, %v4715, 0
    %v4734 = vsel %vm431, %v4716, 0
    %4736 = vmatprep.subr.mxu0 0.0
    %4737 = vmatpush1.msra.mxu0 %v4718
    %4738 = vmatprep.subr.mxu0 0.0
    %4739 = vmatpush1.msra.mxu0 %v4719
    %4740 = vmatprep.subr.mxu0 0.0
    %4741 = vmatpush1.msra.mxu0 %v4720
    %4742 = vmatprep.subr.mxu0 0.0
    %4743 = vmatpush1.msra.mxu0 %v4721
    %4744 = vmatprep.subr.mxu0 0.0
    %4745 = vmatpush1.msra.mxu0 0.0
    %4746 = vmatprep.subr.mxu0 0.0
    %4747 = vmatpush1.msra.mxu0 0.0
    %4748 = vmatprep.subr.mxu0 0.0
    %4749 = vmatpush1.msra.mxu0 0.0
    %4750 = vmatprep.subr.mxu0 0.0
    %4751 = vmatpush1.msra.mxu0 0.0
    %4752 = vmatprep.subr.mxu0 0.0
    %4753 = vmatpush1.msra.mxu0 0.0
    %4754 = vmatprep.subr.mxu0 0.0
    %4755 = vmatpush1.msra.mxu0 0.0
    %4756 = vmatprep.subr.mxu0 0.0
    %4757 = vmatpush1.msra.mxu0 0.0
    %4758 = vmatprep.subr.mxu0 0.0
    %4759 = vmatpush1.msra.mxu0 0.0
    %4760 = vmatprep.subr.mxu0 0.0
    %4761 = vmatpush1.msra.mxu0 0.0
    %4762 = vmatprep.subr.mxu0 0.0
    %4763 = vmatpush1.msra.mxu0 0.0
    %4764 = vmatprep.subr.mxu0 0.0
    %4765 = vmatpush1.msra.mxu0 0.0
    %4766 = vmatprep.subr.mxu0 0.0
    %4767 = vmatpush1.msra.mxu0 0.0
    %4768 = vmatprep.subr.mxu0 0.0
    %4769 = vmatpush1.msra.mxu0 0.0
    %4770 = vmatprep.subr.mxu0 0.0
    %4771 = vmatpush1.msra.mxu0 0.0
    %4772 = vmatprep.subr.mxu0 0.0
    %4773 = vmatpush1.msra.mxu0 0.0
    %4774 = vmatprep.subr.mxu0 0.0
    %4775 = vmatpush1.msra.mxu0 0.0
    %4776 = vmatprep.subr.mxu0 0.0
    %4777 = vmatpush1.msra.mxu0 0.0
    %4778 = vmatprep.subr.mxu0 0.0
    %4779 = vmatpush1.msra.mxu0 0.0
    %4780 = vmatprep.subr.mxu0 0.0
    %4781 = vmatpush1.msra.mxu0 0.0
    %4782 = vmatprep.subr.mxu0 0.0
    %4783 = vmatpush1.msra.mxu0 0.0
    %4784 = vmatprep.subr.mxu0 0.0
    %4785 = vmatpush1.msra.mxu0 0.0
    %4786 = vmatprep.subr.mxu0 0.0
    %4787 = vmatpush1.msra.mxu0 0.0
    %4788 = vmatprep.subr.mxu0 0.0
    %4789 = vmatpush1.msra.mxu0 0.0
    %4790 = vmatprep.subr.mxu0 0.0
    %4791 = vmatpush1.msra.mxu0 0.0
    %4792 = vmatprep.subr.mxu0 0.0
    %4793 = vmatpush1.msra.mxu0 0.0
    %4794 = vmatprep.subr.mxu0 0.0
    %4795 = vmatpush1.msra.mxu0 0.0
    %4796 = vmatprep.subr.mxu0 0.0
    %4797 = vmatpush1.msra.mxu0 0.0
    %4798 = vmatprep.subr.mxu0 0.0
    %4799 = vmatpush1.msra.mxu0 0.0
    %4800 = vmatprep.mubr.f32.mxu0 0.0
    %4801 = vmatmul.mubr.f32.gmra.mrb[0].mxu0 %v4731
    %v4802 = vpop.f32.mrb[0].mxu0
    %v4803 = vadd.f32 %v4728, %v4802
    %v4804 = vpop.f32.mrb[0].mxu0
    %4805 = vmatprep.mubr.f32.mxu0 0.0
    %4806 = vmatmul.mubr.f32.gmra.mrb[0].mxu0 %v4734
    %v4807 = vpop.f32.mrb[0].mxu0
    %v4808 = vadd.f32 %v4728, %v4807
    %v4809 = vpop.f32.mrb[0].mxu0
    %4810 = vdwg.mxu0
    %v4811 = vmul.f32 %v4803, 0.5
    %v4812 = vmul.f32 %v4808, 0.5
    %v4813 = vmul.f32 %v4803, 0.70710677
    %v4814 = vmul.f32 %v4808, 0.70710677
    %vm4815 = vcmp.ge.f32.partialorder %v4813, 0.0
    %vm4816 = vcmp.ge.f32.partialorder %v4814, 0.0
    %v4817 = vsel %vm4815, 1.0, -1.0
    %v4818 = vsel %vm4816, 1.0, -1.0
    %v4819 = vand.u32 2147483647, %v4813
    %v4820 = vand.u32 2147483647, %v4814
    %v4821 = vmul.f32 %v4819, 0.3275911
    %v4822 = vmul.f32 %v4820, 0.3275911
    %v4823 = vadd.f32 %v4821, 1.0
    %v4824 = vadd.f32 %v4822, 1.0
    %v4825 = vrcp.pop %v4823
    %v4826 = vmul.f32 1.0, %v4825
    %v4827 = vrcp.pop %v4824
    %v4828 = vmul.f32 1.0, %v4827
    %v4829 = vmul.f32 %v4826, 1.0614054
    %v4830 = vmul.f32 %v4828, 1.0614054
    %v4831 = vadd.f32 %v4829, -1.4531521
    %v4832 = vadd.f32 %v4830, -1.4531521
    %v4833 = vmul.f32 %v4831, %v4826
    %v4834 = vmul.f32 %v4832, %v4828
    %v4835 = vadd.f32 %v4833, 1.4214138
    %v4836 = vadd.f32 %v4834, 1.4214138
    %v4837 = vmul.f32 %v4835, %v4826
    %v4838 = vmul.f32 %v4836, %v4828
    %v4839 = vadd.f32 %v4837, -0.28449672
    %v4840 = vadd.f32 %v4838, -0.28449672
    %v4841 = vmul.f32 %v4839, %v4826
    %v4842 = vmul.f32 %v4840, %v4828
    %v4843 = vadd.f32 %v4841, 0.2548296
    %v4844 = vadd.f32 %v4842, 0.2548296
    %v4845 = vmul.f32 %v4843, %v4826
    %v4846 = vmul.f32 %v4844, %v4828
    %v4847 = vsub.f32 0.0, %v4819
    %v4848 = vsub.f32 0.0, %v4820
    %v4849 = vmul.f32 %v4847, %v4819
    %v4850 = vmul.f32 %v4848, %v4820
    %v4851 = vmul.f32 %v4849, 1.442695
    %v4852 = vpow.pop %v4851
    %v4853 = vmul.f32 %v4850, 1.442695
    %v4854 = vpow.pop %v4853
    %v4855 = vmul.f32 %v4845, %v4852
    %v4856 = vmul.f32 %v4846, %v4854
    %v4857 = vsub.f32 1.0, %v4855
    %v4858 = vsub.f32 1.0, %v4856
    %v4859 = vmul.f32 %v4817, %v4857
    %v4860 = vmul.f32 %v4818, %v4858
    %v4861 = vadd.f32 %v4859, 1.0
    %v4862 = vadd.f32 %v4860, 1.0
    %v4863 = vmul.f32 %v4811, %v4861
    %v4864 = vmul.f32 %v4812, %v4862
    %s4865 = scalar_lea.vmem %s37, 64
    %v4866 = vld [vmem:[%s4865] sm:$0xff]
    %v4867 = vld [vmem:[%s4865 + $0x8] sm:$0xff]
    %v4868 = vld [vmem:[%s4865 + $0x10] sm:$0xff]
    %v4869 = vld [vmem:[%s4865 + $0x18] sm:$0xff]
    %v4870 = vld [vmem:[%s4865 + $0x20] sm:$0xff]
    %v4871 = vld [vmem:[%s4865 + $0x28] sm:$0xff]
    %v4872 = vld [vmem:[%s4865 + $0x30] sm:$0xff]
    %v4873 = vld [vmem:[%s4865 + $0x38] sm:$0xff]
    %s4874 = scalar_lea.vmem [#allocation15], 1
    %v4875 = vld [vmem:[%s4874] sm:$0x1]
    %v4877 = vlaneseq
    %v4878 = vshrl.u32 %v4877, 7
    %v4879 = vsub.s32 0, %v4878
    %v4880 = vrot.slane %v4875, %v4879
    %v4883 = vsel %vm2608, %v4863, 0
    %v4886 = vsel %vm2608, %v4864, 0
    %4888 = vmatprep.subr.mxu0 0.0
    %4889 = vmatpush1.msra.mxu0 %v4866
    %4890 = vmatprep.subr.mxu0 0.0
    %4891 = vmatpush1.msra.mxu0 %v4867
    %4892 = vmatprep.subr.mxu0 0.0
    %4893 = vmatpush1.msra.mxu0 %v4868
    %4894 = vmatprep.subr.mxu0 0.0
    %4895 = vmatpush1.msra.mxu0 %v4869
    %4896 = vmatprep.subr.mxu0 0.0
    %4897 = vmatpush1.msra.mxu0 %v4870
    %4898 = vmatprep.subr.mxu0 0.0
    %4899 = vmatpush1.msra.mxu0 %v4871
    %4900 = vmatprep.subr.mxu0 0.0
    %4901 = vmatpush1.msra.mxu0 %v4872
    %4902 = vmatprep.subr.mxu0 0.0
    %4903 = vmatpush1.msra.mxu0 %v4873
    %4904 = vmatprep.subr.mxu0 0.0
    %4905 = vmatpush1.msra.mxu0 0.0
    %4906 = vmatprep.subr.mxu0 0.0
    %4907 = vmatpush1.msra.mxu0 0.0
    %4908 = vmatprep.subr.mxu0 0.0
    %4909 = vmatpush1.msra.mxu0 0.0
    %4910 = vmatprep.subr.mxu0 0.0
    %4911 = vmatpush1.msra.mxu0 0.0
    %4912 = vmatprep.subr.mxu0 0.0
    %4913 = vmatpush1.msra.mxu0 0.0
    %4914 = vmatprep.subr.mxu0 0.0
    %4915 = vmatpush1.msra.mxu0 0.0
    %4916 = vmatprep.subr.mxu0 0.0
    %4917 = vmatpush1.msra.mxu0 0.0
    %4918 = vmatprep.subr.mxu0 0.0
    %4919 = vmatpush1.msra.mxu0 0.0
    %4920 = vmatprep.subr.mxu0 0.0
    %4921 = vmatpush1.msra.mxu0 0.0
    %4922 = vmatprep.subr.mxu0 0.0
    %4923 = vmatpush1.msra.mxu0 0.0
    %4924 = vmatprep.subr.mxu0 0.0
    %4925 = vmatpush1.msra.mxu0 0.0
    %4926 = vmatprep.subr.mxu0 0.0
    %4927 = vmatpush1.msra.mxu0 0.0
    %4928 = vmatprep.subr.mxu0 0.0
    %4929 = vmatpush1.msra.mxu0 0.0
    %4930 = vmatprep.subr.mxu0 0.0
    %4931 = vmatpush1.msra.mxu0 0.0
    %4932 = vmatprep.subr.mxu0 0.0
    %4933 = vmatpush1.msra.mxu0 0.0
    %4934 = vmatprep.subr.mxu0 0.0
    %4935 = vmatpush1.msra.mxu0 0.0
    %4936 = vmatprep.subr.mxu0 0.0
    %4937 = vmatpush1.msra.mxu0 0.0
    %4938 = vmatprep.subr.mxu0 0.0
    %4939 = vmatpush1.msra.mxu0 0.0
    %4940 = vmatprep.subr.mxu0 0.0
    %4941 = vmatpush1.msra.mxu0 0.0
    %4942 = vmatprep.subr.mxu0 0.0
    %4943 = vmatpush1.msra.mxu0 0.0
    %4944 = vmatprep.subr.mxu0 0.0
    %4945 = vmatpush1.msra.mxu0 0.0
    %4946 = vmatprep.subr.mxu0 0.0
    %4947 = vmatpush1.msra.mxu0 0.0
    %4948 = vmatprep.subr.mxu0 0.0
    %4949 = vmatpush1.msra.mxu0 0.0
    %4950 = vmatprep.subr.mxu0 0.0
    %4951 = vmatpush1.msra.mxu0 0.0
    %4952 = vmatprep.mubr.f32.mxu0 0.0
    %4953 = vmatmul.mubr.f32.gmra.mrb[0].mxu0 %v4883
    %v4954 = vpop.f32.mrb[0].mxu0
    %v4955 = vadd.f32 %v4880, %v4954
    %v4956 = vpop.f32.mrb[0].mxu0
    %4957 = vmatprep.mubr.f32.mxu0 0.0
    %4958 = vmatmul.mubr.f32.gmra.mrb[0].mxu0 %v4886
    %v4959 = vpop.f32.mrb[0].mxu0
    %v4960 = vadd.f32 %v4880, %v4959
    %v4961 = vpop.f32.mrb[0].mxu0
    %4962 = vdwg.mxu0
    %v4963 = vadd.f32 %v4955, %v4715
    %v4964 = vadd.f32 %v4960, %v4716
    %s4965 = scalar_lea.vmem %s41, 1
    %v4966 = vld [vmem:[%s4965] sm:$0x1]
    %s4967 = scalar_lea.vmem [#allocation16], 1
    %v4968 = vld [vmem:[%s4967] sm:$0x1]
    %v4969 = vsel %vm431, %v4963, 0.0
    %4970 = vadd.xlane.f32.xlu0 %v4969
    %v4971 = vpop.xlane.xlu0 %4970
    %v4972 = vsel %vm431, %v4964, 0.0
    %4973 = vadd.xlane.f32.xlu0 %v4972
    %v4974 = vpop.xlane.xlu0 %4973
    %v4975 = vmul.f32 %v4971, %v438
    %v4976 = vmul.f32 %v4974, %v438
    %v4977 = vsub.f32 %v4963, %v4975
    %v4978 = vsub.f32 %v4964, %v4976
    %v4979 = vmul.f32 %v4977, %v4977
    %v4980 = vmul.f32 %v4978, %v4978
    %v4981 = vsel %vm431, %v4979, 0.0
    %4982 = vadd.xlane.f32.xlu0 %v4981
    %v4983 = vpop.xlane.xlu0 %4982
    %v4984 = vsel %vm431, %v4980, 0.0
    %4985 = vadd.xlane.f32.xlu0 %v4984
    %v4986 = vpop.xlane.xlu0 %4985
    %v4987 = vmul.f32 %v4983, %v438
    %v4988 = vmul.f32 %v4986, %v438
    %v4989 = vadd.f32 %v4987, 1e-12
    %v4990 = vadd.f32 %v4988, 1e-12
    %v4991 = vrsqrt.pop %v4989
    %v4992 = vrsqrt.pop %v4990
    %v4993 = vmul.f32 %v4977, %v4991
    %v4994 = vmul.f32 %v4978, %v4992
    %v4996 = vlaneseq
    %v4997 = vshrl.u32 %v4996, 7
    %v4998 = vsub.s32 0, %v4997
    %v4999 = vrot.slane %v4966, %v4998
    %v5001 = vmul.f32 %v4993, %v4999
    %v5002 = vmul.f32 %v4994, %v4999
    %v5004 = vlaneseq
    %v5005 = vshrl.u32 %v5004, 7
    %v5006 = vsub.s32 0, %v5005
    %v5007 = vrot.slane %v4968, %v5006
    %v5009 = vadd.f32 %v5001, %v5007
    %v5010 = vadd.f32 %v5002, %v5007
    %v5011 = vld [vmem:[%s3] sm:$0xff]
    %v5012 = vld [vmem:[%s3 + $0x8] sm:$0xff]
    %5014 = vset.pattern.permute.xlu0 0
    %5015 = vperm.xlu0 %5014, %v5011
    %v5016 = vpop.permute.xlu0 %5015
    %5019 = vset.pattern.permute.xlu0 0
    %5020 = vperm.xlu0 %5019, %v5012
    %v5021 = vpop.permute.xlu0 %5020
    %v5023 = vmul.f32 %v5009, %v5016
    %v5024 = vmul.f32 %v5010, %v5021
    %v5025 = vld [vmem:[%s45] sm:$0xff]
    %v5026 = vld [vmem:[%s45 + $0x8] sm:$0xff]
    %v5027 = vld [vmem:[%s45 + $0x10] sm:$0xff]
    %v5028 = vld [vmem:[%s45 + $0x18] sm:$0xff]
    %v5029 = vld [vmem:[#allocation18] sm:$0x1]
    %v5031 = vlaneseq
    %v5032 = vshrl.u32 %v5031, 7
    %v5033 = vsub.s32 0, %v5032
    %v5034 = vrot.slane %v5029, %v5033
    %v5037 = vsel %vm431, %v5023, 0
    %v5040 = vsel %vm431, %v5024, 0
    %5042 = vmatprep.subr.mxu0 0.0
    %5043 = vmatpush1.msra.mxu0 %v5025
    %5044 = vmatprep.subr.mxu0 0.0
    %5045 = vmatpush1.msra.mxu0 %v5026
    %5046 = vmatprep.subr.mxu0 0.0
    %5047 = vmatpush1.msra.mxu0 %v5027
    %5048 = vmatprep.subr.mxu0 0.0
    %5049 = vmatpush1.msra.mxu0 %v5028
    %5050 = vmatprep.subr.mxu0 0.0
    %5051 = vmatpush1.msra.mxu0 0.0
    %5052 = vmatprep.subr.mxu0 0.0
    %5053 = vmatpush1.msra.mxu0 0.0
    %5054 = vmatprep.subr.mxu0 0.0
    %5055 = vmatpush1.msra.mxu0 0.0
    %5056 = vmatprep.subr.mxu0 0.0
    %5057 = vmatpush1.msra.mxu0 0.0
    %5058 = vmatprep.subr.mxu0 0.0
    %5059 = vmatpush1.msra.mxu0 0.0
    %5060 = vmatprep.subr.mxu0 0.0
    %5061 = vmatpush1.msra.mxu0 0.0
    %5062 = vmatprep.subr.mxu0 0.0
    %5063 = vmatpush1.msra.mxu0 0.0
    %5064 = vmatprep.subr.mxu0 0.0
    %5065 = vmatpush1.msra.mxu0 0.0
    %5066 = vmatprep.subr.mxu0 0.0
    %5067 = vmatpush1.msra.mxu0 0.0
    %5068 = vmatprep.subr.mxu0 0.0
    %5069 = vmatpush1.msra.mxu0 0.0
    %5070 = vmatprep.subr.mxu0 0.0
    %5071 = vmatpush1.msra.mxu0 0.0
    %5072 = vmatprep.subr.mxu0 0.0
    %5073 = vmatpush1.msra.mxu0 0.0
    %5074 = vmatprep.subr.mxu0 0.0
    %5075 = vmatpush1.msra.mxu0 0.0
    %5076 = vmatprep.subr.mxu0 0.0
    %5077 = vmatpush1.msra.mxu0 0.0
    %5078 = vmatprep.subr.mxu0 0.0
    %5079 = vmatpush1.msra.mxu0 0.0
    %5080 = vmatprep.subr.mxu0 0.0
    %5081 = vmatpush1.msra.mxu0 0.0
    %5082 = vmatprep.subr.mxu0 0.0
    %5083 = vmatpush1.msra.mxu0 0.0
    %5084 = vmatprep.subr.mxu0 0.0
    %5085 = vmatpush1.msra.mxu0 0.0
    %5086 = vmatprep.subr.mxu0 0.0
    %5087 = vmatpush1.msra.mxu0 0.0
    %5088 = vmatprep.subr.mxu0 0.0
    %5089 = vmatpush1.msra.mxu0 0.0
    %5090 = vmatprep.subr.mxu0 0.0
    %5091 = vmatpush1.msra.mxu0 0.0
    %5092 = vmatprep.subr.mxu0 0.0
    %5093 = vmatpush1.msra.mxu0 0.0
    %5094 = vmatprep.subr.mxu0 0.0
    %5095 = vmatpush1.msra.mxu0 0.0
    %5096 = vmatprep.subr.mxu0 0.0
    %5097 = vmatpush1.msra.mxu0 0.0
    %5098 = vmatprep.subr.mxu0 0.0
    %5099 = vmatpush1.msra.mxu0 0.0
    %5100 = vmatprep.subr.mxu0 0.0
    %5101 = vmatpush1.msra.mxu0 0.0
    %5102 = vmatprep.subr.mxu0 0.0
    %5103 = vmatpush1.msra.mxu0 0.0
    %5104 = vmatprep.subr.mxu0 0.0
    %5105 = vmatpush1.msra.mxu0 0.0
    %5106 = vmatprep.mubr.f32.mxu0 0.0
    %5107 = vmatmul.mubr.f32.gmra.mrb[0].mxu0 %v5037
    %v5108 = vpop.f32.mrb[0].mxu0
    %v5109 = vadd.f32 %v5034, %v5108
    %v5110 = vpop.f32.mrb[0].mxu0
    %5111 = vmatprep.mubr.f32.mxu0 0.0
    %5112 = vmatmul.mubr.f32.gmra.mrb[0].mxu0 %v5040
    %v5113 = vpop.f32.mrb[0].mxu0
    %v5114 = vadd.f32 %v5034, %v5113
    %v5115 = vpop.f32.mrb[0].mxu0
    %5116 = vdwg.mxu0
    %v5117 = vld [vmem:[%s53] sm:$0xff]
    %v5118 = vld [vmem:[%s53 + $0x8] sm:$0xff]
    %v5119 = vld [vmem:[%s53 + $0x10] sm:$0xff]
    %v5120 = vld [vmem:[%s53 + $0x18] sm:$0xff]
    %v5121 = vld [vmem:[%s55] sm:$0x1]
    %v5123 = vlaneseq
    %v5124 = vshrl.u32 %v5123, 7
    %v5125 = vsub.s32 0, %v5124
    %v5126 = vrot.slane %v5121, %v5125
    %v5129 = vsel %vm431, %v5109, 0
    %v5132 = vsel %vm431, %v5114, 0
    %5134 = vmatprep.subr.mxu0 0.0
    %5135 = vmatpush1.msra.mxu0 %v5117
    %5136 = vmatprep.subr.mxu0 0.0
    %5137 = vmatpush1.msra.mxu0 %v5118
    %5138 = vmatprep.subr.mxu0 0.0
    %5139 = vmatpush1.msra.mxu0 %v5119
    %5140 = vmatprep.subr.mxu0 0.0
    %5141 = vmatpush1.msra.mxu0 %v5120
    %5142 = vmatprep.subr.mxu0 0.0
    %5143 = vmatpush1.msra.mxu0 0.0
    %5144 = vmatprep.subr.mxu0 0.0
    %5145 = vmatpush1.msra.mxu0 0.0
    %5146 = vmatprep.subr.mxu0 0.0
    %5147 = vmatpush1.msra.mxu0 0.0
    %5148 = vmatprep.subr.mxu0 0.0
    %5149 = vmatpush1.msra.mxu0 0.0
    %5150 = vmatprep.subr.mxu0 0.0
    %5151 = vmatpush1.msra.mxu0 0.0
    %5152 = vmatprep.subr.mxu0 0.0
    %5153 = vmatpush1.msra.mxu0 0.0
    %5154 = vmatprep.subr.mxu0 0.0
    %5155 = vmatpush1.msra.mxu0 0.0
    %5156 = vmatprep.subr.mxu0 0.0
    %5157 = vmatpush1.msra.mxu0 0.0
    %5158 = vmatprep.subr.mxu0 0.0
    %5159 = vmatpush1.msra.mxu0 0.0
    %5160 = vmatprep.subr.mxu0 0.0
    %5161 = vmatpush1.msra.mxu0 0.0
    %5162 = vmatprep.subr.mxu0 0.0
    %5163 = vmatpush1.msra.mxu0 0.0
    %5164 = vmatprep.subr.mxu0 0.0
    %5165 = vmatpush1.msra.mxu0 0.0
    %5166 = vmatprep.subr.mxu0 0.0
    %5167 = vmatpush1.msra.mxu0 0.0
    %5168 = vmatprep.subr.mxu0 0.0
    %5169 = vmatpush1.msra.mxu0 0.0
    %5170 = vmatprep.subr.mxu0 0.0
    %5171 = vmatpush1.msra.mxu0 0.0
    %5172 = vmatprep.subr.mxu0 0.0
    %5173 = vmatpush1.msra.mxu0 0.0
    %5174 = vmatprep.subr.mxu0 0.0
    %5175 = vmatpush1.msra.mxu0 0.0
    %5176 = vmatprep.subr.mxu0 0.0
    %5177 = vmatpush1.msra.mxu0 0.0
    %5178 = vmatprep.subr.mxu0 0.0
    %5179 = vmatpush1.msra.mxu0 0.0
    %5180 = vmatprep.subr.mxu0 0.0
    %5181 = vmatpush1.msra.mxu0 0.0
    %5182 = vmatprep.subr.mxu0 0.0
    %5183 = vmatpush1.msra.mxu0 0.0
    %5184 = vmatprep.subr.mxu0 0.0
    %5185 = vmatpush1.msra.mxu0 0.0
    %5186 = vmatprep.subr.mxu0 0.0
    %5187 = vmatpush1.msra.mxu0 0.0
    %5188 = vmatprep.subr.mxu0 0.0
    %5189 = vmatpush1.msra.mxu0 0.0
    %5190 = vmatprep.subr.mxu0 0.0
    %5191 = vmatpush1.msra.mxu0 0.0
    %5192 = vmatprep.subr.mxu0 0.0
    %5193 = vmatpush1.msra.mxu0 0.0
    %5194 = vmatprep.subr.mxu0 0.0
    %5195 = vmatpush1.msra.mxu0 0.0
    %5196 = vmatprep.subr.mxu0 0.0
    %5197 = vmatpush1.msra.mxu0 0.0
    %5198 = vmatprep.mubr.f32.mxu0 0.0
    %5199 = vmatmul.mubr.f32.gmra.mrb[0].mxu0 %v5129
    %v5200 = vpop.f32.mrb[0].mxu0
    %v5201 = vadd.f32 %v5126, %v5200
    %v5202 = vpop.f32.mrb[0].mxu0
    %5203 = vmatprep.mubr.f32.mxu0 0.0
    %5204 = vmatmul.mubr.f32.gmra.mrb[0].mxu0 %v5132
    %v5205 = vpop.f32.mrb[0].mxu0
    %v5206 = vadd.f32 %v5126, %v5205
    %v5207 = vpop.f32.mrb[0].mxu0
    %5208 = vdwg.mxu0
    %v5209 = vld [vmem:[%s57] sm:$0xff]
    %v5210 = vld [vmem:[%s57 + $0x8] sm:$0xff]
    %v5211 = vld [vmem:[%s57 + $0x10] sm:$0xff]
    %v5212 = vld [vmem:[%s57 + $0x18] sm:$0xff]
    %v5213 = vld [vmem:[%s59] sm:$0x1]
    %v5215 = vlaneseq
    %v5216 = vshrl.u32 %v5215, 7
    %v5217 = vsub.s32 0, %v5216
    %v5218 = vrot.slane %v5213, %v5217
    %5220 = vmatprep.subr.mxu0 0.0
    %5221 = vmatpush1.msra.mxu0 %v5209
    %5222 = vmatprep.subr.mxu0 0.0
    %5223 = vmatpush1.msra.mxu0 %v5210
    %5224 = vmatprep.subr.mxu0 0.0
    %5225 = vmatpush1.msra.mxu0 %v5211
    %5226 = vmatprep.subr.mxu0 0.0
    %5227 = vmatpush1.msra.mxu0 %v5212
    %5228 = vmatprep.subr.mxu0 0.0
    %5229 = vmatpush1.msra.mxu0 0.0
    %5230 = vmatprep.subr.mxu0 0.0
    %5231 = vmatpush1.msra.mxu0 0.0
    %5232 = vmatprep.subr.mxu0 0.0
    %5233 = vmatpush1.msra.mxu0 0.0
    %5234 = vmatprep.subr.mxu0 0.0
    %5235 = vmatpush1.msra.mxu0 0.0
    %5236 = vmatprep.subr.mxu0 0.0
    %5237 = vmatpush1.msra.mxu0 0.0
    %5238 = vmatprep.subr.mxu0 0.0
    %5239 = vmatpush1.msra.mxu0 0.0
    %5240 = vmatprep.subr.mxu0 0.0
    %5241 = vmatpush1.msra.mxu0 0.0
    %5242 = vmatprep.subr.mxu0 0.0
    %5243 = vmatpush1.msra.mxu0 0.0
    %5244 = vmatprep.subr.mxu0 0.0
    %5245 = vmatpush1.msra.mxu0 0.0
    %5246 = vmatprep.subr.mxu0 0.0
    %5247 = vmatpush1.msra.mxu0 0.0
    %5248 = vmatprep.subr.mxu0 0.0
    %5249 = vmatpush1.msra.mxu0 0.0
    %5250 = vmatprep.subr.mxu0 0.0
    %5251 = vmatpush1.msra.mxu0 0.0
    %5252 = vmatprep.subr.mxu0 0.0
    %5253 = vmatpush1.msra.mxu0 0.0
    %5254 = vmatprep.subr.mxu0 0.0
    %5255 = vmatpush1.msra.mxu0 0.0
    %5256 = vmatprep.subr.mxu0 0.0
    %5257 = vmatpush1.msra.mxu0 0.0
    %5258 = vmatprep.subr.mxu0 0.0
    %5259 = vmatpush1.msra.mxu0 0.0
    %5260 = vmatprep.subr.mxu0 0.0
    %5261 = vmatpush1.msra.mxu0 0.0
    %5262 = vmatprep.subr.mxu0 0.0
    %5263 = vmatpush1.msra.mxu0 0.0
    %5264 = vmatprep.subr.mxu0 0.0
    %5265 = vmatpush1.msra.mxu0 0.0
    %5266 = vmatprep.subr.mxu0 0.0
    %5267 = vmatpush1.msra.mxu0 0.0
    %5268 = vmatprep.subr.mxu0 0.0
    %5269 = vmatpush1.msra.mxu0 0.0
    %5270 = vmatprep.subr.mxu0 0.0
    %5271 = vmatpush1.msra.mxu0 0.0
    %5272 = vmatprep.subr.mxu0 0.0
    %5273 = vmatpush1.msra.mxu0 0.0
    %5274 = vmatprep.subr.mxu0 0.0
    %5275 = vmatpush1.msra.mxu0 0.0
    %5276 = vmatprep.subr.mxu0 0.0
    %5277 = vmatpush1.msra.mxu0 0.0
    %5278 = vmatprep.subr.mxu0 0.0
    %5279 = vmatpush1.msra.mxu0 0.0
    %5280 = vmatprep.subr.mxu0 0.0
    %5281 = vmatpush1.msra.mxu0 0.0
    %5282 = vmatprep.subr.mxu0 0.0
    %5283 = vmatpush1.msra.mxu0 0.0
    %5284 = vmatprep.mubr.f32.mxu0 0.0
    %5285 = vmatmul.mubr.f32.gmra.mrb[0].mxu0 %v5129
    %v5286 = vpop.f32.mrb[0].mxu0
    %v5287 = vadd.f32 %v5218, %v5286
    %v5288 = vpop.f32.mrb[0].mxu0
    %5289 = vmatprep.mubr.f32.mxu0 0.0
    %5290 = vmatmul.mubr.f32.gmra.mrb[0].mxu0 %v5132
    %v5291 = vpop.f32.mrb[0].mxu0
    %v5292 = vadd.f32 %v5218, %v5291
    %v5293 = vpop.f32.mrb[0].mxu0
    %5294 = vdwg.mxu0
    %v5295 = vrot.slane %v5114, 7
    %vm5297 = vcmask 1040384
    %v5298 = vsel %vm5297, %v5109, %v5295
    %v5299 = vld [vmem:[%s49] sm:$0xff]
    %v5300 = vld [vmem:[%s49 + $0x8] sm:$0xff]
    %v5301 = vld [vmem:[%s49 + $0x10] sm:$0xff]
    %v5302 = vld [vmem:[%s49 + $0x18] sm:$0xff]
    %v5303 = vld [vmem:[%s51] sm:$0x1]
    %v5305 = vlaneseq
    %v5306 = vshrl.u32 %v5305, 7
    %v5307 = vsub.s32 0, %v5306
    %v5308 = vrot.slane %v5303, %v5307
    %v5311 = vsel %vm431, %v5298, 0
    %5313 = vmatprep.subr.mxu0 0.0
    %5314 = vmatpush1.msra.mxu0 %v5299
    %5315 = vmatprep.subr.mxu0 0.0
    %5316 = vmatpush1.msra.mxu0 %v5300
    %5317 = vmatprep.subr.mxu0 0.0
    %5318 = vmatpush1.msra.mxu0 %v5301
    %5319 = vmatprep.subr.mxu0 0.0
    %5320 = vmatpush1.msra.mxu0 %v5302
    %5321 = vmatprep.subr.mxu0 0.0
    %5322 = vmatpush1.msra.mxu0 0.0
    %5323 = vmatprep.subr.mxu0 0.0
    %5324 = vmatpush1.msra.mxu0 0.0
    %5325 = vmatprep.subr.mxu0 0.0
    %5326 = vmatpush1.msra.mxu0 0.0
    %5327 = vmatprep.subr.mxu0 0.0
    %5328 = vmatpush1.msra.mxu0 0.0
    %5329 = vmatprep.subr.mxu0 0.0
    %5330 = vmatpush1.msra.mxu0 0.0
    %5331 = vmatprep.subr.mxu0 0.0
    %5332 = vmatpush1.msra.mxu0 0.0
    %5333 = vmatprep.subr.mxu0 0.0
    %5334 = vmatpush1.msra.mxu0 0.0
    %5335 = vmatprep.subr.mxu0 0.0
    %5336 = vmatpush1.msra.mxu0 0.0
    %5337 = vmatprep.subr.mxu0 0.0
    %5338 = vmatpush1.msra.mxu0 0.0
    %5339 = vmatprep.subr.mxu0 0.0
    %5340 = vmatpush1.msra.mxu0 0.0
    %5341 = vmatprep.subr.mxu0 0.0
    %5342 = vmatpush1.msra.mxu0 0.0
    %5343 = vmatprep.subr.mxu0 0.0
    %5344 = vmatpush1.msra.mxu0 0.0
    %5345 = vmatprep.subr.mxu0 0.0
    %5346 = vmatpush1.msra.mxu0 0.0
    %5347 = vmatprep.subr.mxu0 0.0
    %5348 = vmatpush1.msra.mxu0 0.0
    %5349 = vmatprep.subr.mxu0 0.0
    %5350 = vmatpush1.msra.mxu0 0.0
    %5351 = vmatprep.subr.mxu0 0.0
    %5352 = vmatpush1.msra.mxu0 0.0
    %5353 = vmatprep.subr.mxu0 0.0
    %5354 = vmatpush1.msra.mxu0 0.0
    %5355 = vmatprep.subr.mxu0 0.0
    %5356 = vmatpush1.msra.mxu0 0.0
    %5357 = vmatprep.subr.mxu0 0.0
    %5358 = vmatpush1.msra.mxu0 0.0
    %5359 = vmatprep.subr.mxu0 0.0
    %5360 = vmatpush1.msra.mxu0 0.0
    %5361 = vmatprep.subr.mxu0 0.0
    %5362 = vmatpush1.msra.mxu0 0.0
    %5363 = vmatprep.subr.mxu0 0.0
    %5364 = vmatpush1.msra.mxu0 0.0
    %5365 = vmatprep.subr.mxu0 0.0
    %5366 = vmatpush1.msra.mxu0 0.0
    %5367 = vmatprep.subr.mxu0 0.0
    %5368 = vmatpush1.msra.mxu0 0.0
    %5369 = vmatprep.subr.mxu0 0.0
    %5370 = vmatpush1.msra.mxu0 0.0
    %5371 = vmatprep.subr.mxu0 0.0
    %5372 = vmatpush1.msra.mxu0 0.0
    %5373 = vmatprep.subr.mxu0 0.0
    %5374 = vmatpush1.msra.mxu0 0.0
    %5375 = vmatprep.subr.mxu0 0.0
    %5376 = vmatpush1.msra.mxu0 0.0
    %5377 = vmatprep.mubr.f32.mxu0 0.0
    %5378 = vmatmul.mubr.f32.gmra.mrb[0].mxu0 %v5311
    %v5379 = vpop.f32.mrb[0].mxu0
    %v5380 = vadd.f32 %v5308, %v5379
    %v5381 = vpop.f32.mrb[0].mxu0
    %5382 = vdwg.mxu0
    %v5384 = vsel %vm743, %v5380, 0
    %v5387 = vsel %vm743, %v5201, 0
    %5389 = vmatprep.subr.mxu0 0.0
    %5390 = vmatpush1.xpose.msra.mxu0 %v5387
    %5391 = vmatprep.subr.mxu0 0.0
    %5392 = vmatpush1.xpose.msra.mxu0 0.0
    %5393 = vmatprep.subr.mxu0 0.0
    %5394 = vmatpush1.xpose.msra.mxu0 0.0
    %5395 = vmatprep.subr.mxu0 0.0
    %5396 = vmatpush1.xpose.msra.mxu0 0.0
    %5397 = vmatprep.subr.mxu0 0.0
    %5398 = vmatpush1.xpose.msra.mxu0 0.0
    %5399 = vmatprep.subr.mxu0 0.0
    %5400 = vmatpush1.xpose.msra.mxu0 0.0
    %5401 = vmatprep.subr.mxu0 0.0
    %5402 = vmatpush1.xpose.msra.mxu0 0.0
    %5403 = vmatprep.subr.mxu0 0.0
    %5404 = vmatpush1.xpose.msra.mxu0 0.0
    %5405 = vmatprep.subr.mxu0 0.0
    %5406 = vmatpush1.xpose.msra.mxu0 0.0
    %5407 = vmatprep.subr.mxu0 0.0
    %5408 = vmatpush1.xpose.msra.mxu0 0.0
    %5409 = vmatprep.subr.mxu0 0.0
    %5410 = vmatpush1.xpose.msra.mxu0 0.0
    %5411 = vmatprep.subr.mxu0 0.0
    %5412 = vmatpush1.xpose.msra.mxu0 0.0
    %5413 = vmatprep.subr.mxu0 0.0
    %5414 = vmatpush1.xpose.msra.mxu0 0.0
    %5415 = vmatprep.subr.mxu0 0.0
    %5416 = vmatpush1.xpose.msra.mxu0 0.0
    %5417 = vmatprep.subr.mxu0 0.0
    %5418 = vmatpush1.xpose.msra.mxu0 0.0
    %5419 = vmatprep.subr.mxu0 0.0
    %5420 = vmatpush1.xpose.msra.mxu0 0.0
    %5421 = vmatprep.subr.mxu0 0.0
    %5422 = vmatpush1.xpose.msra.mxu0 0.0
    %5423 = vmatprep.subr.mxu0 0.0
    %5424 = vmatpush1.xpose.msra.mxu0 0.0
    %5425 = vmatprep.subr.mxu0 0.0
    %5426 = vmatpush1.xpose.msra.mxu0 0.0
    %5427 = vmatprep.subr.mxu0 0.0
    %5428 = vmatpush1.xpose.msra.mxu0 0.0
    %5429 = vmatprep.subr.mxu0 0.0
    %5430 = vmatpush1.xpose.msra.mxu0 0.0
    %5431 = vmatprep.subr.mxu0 0.0
    %5432 = vmatpush1.xpose.msra.mxu0 0.0
    %5433 = vmatprep.subr.mxu0 0.0
    %5434 = vmatpush1.xpose.msra.mxu0 0.0
    %5435 = vmatprep.subr.mxu0 0.0
    %5436 = vmatpush1.xpose.msra.mxu0 0.0
    %5437 = vmatprep.subr.mxu0 0.0
    %5438 = vmatpush1.xpose.msra.mxu0 0.0
    %5439 = vmatprep.subr.mxu0 0.0
    %5440 = vmatpush1.xpose.msra.mxu0 0.0
    %5441 = vmatprep.subr.mxu0 0.0
    %5442 = vmatpush1.xpose.msra.mxu0 0.0
    %5443 = vmatprep.subr.mxu0 0.0
    %5444 = vmatpush1.xpose.msra.mxu0 0.0
    %5445 = vmatprep.subr.mxu0 0.0
    %5446 = vmatpush1.xpose.msra.mxu0 0.0
    %5447 = vmatprep.subr.mxu0 0.0
    %5448 = vmatpush1.xpose.msra.mxu0 0.0
    %5449 = vmatprep.subr.mxu0 0.0
    %5450 = vmatpush1.xpose.msra.mxu0 0.0
    %5451 = vmatprep.subr.mxu0 0.0
    %5452 = vmatpush1.xpose.msra.mxu0 0.0
    %5453 = vmatprep.mubr.f32.mxu0 0.0
    %5454 = vmatmul.mubr.f32.gmra.mrb[0].mxu0 %v5384
    %v5455 = vpop.f32.mrb[0].mxu0
    %v5456 = vadd.f32 0.0, %v5455
    %v5457 = vpop.f32.mrb[0].mxu0
    %5458 = vdwg.mxu0
    %v5459 = vmul.f32 %v5456, 0.35355338
    %vm5460 = vcmask 57344
    %v5461 = vsel %vm5460, %v5459, -inf
    %5462 = vmax.xlane.f32.xlu0 %v5461
    %v5463 = vpop.xlane.xlu0 %5462
    %v5464 = vsub.f32 %v5459, %v5463
    %v5465 = vmul.f32 %v5464, 1.442695
    %v5466 = vpow.pop %v5465
    %v5467 = vsel %vm5460, %v5466, 0.0
    %5468 = vadd.xlane.f32.xlu0 %v5467
    %v5469 = vpop.xlane.xlu0 %5468
    %v5470 = vrcp.pop %v5469
    %v5471 = vmul.f32 %v5466, %v5470
    %v5473 = vsel %vm743, %v5471, 0
    %5475 = vmatprep.subr.mxu0 0.0
    %5476 = vmatpush1.msra.mxu0 %v5287
    %5477 = vmatprep.subr.mxu0 0.0
    %5478 = vmatpush1.msra.mxu0 0.0
    %5479 = vmatprep.subr.mxu0 0.0
    %5480 = vmatpush1.msra.mxu0 0.0
    %5481 = vmatprep.subr.mxu0 0.0
    %5482 = vmatpush1.msra.mxu0 0.0
    %5483 = vmatprep.subr.mxu0 0.0
    %5484 = vmatpush1.msra.mxu0 0.0
    %5485 = vmatprep.subr.mxu0 0.0
    %5486 = vmatpush1.msra.mxu0 0.0
    %5487 = vmatprep.subr.mxu0 0.0
    %5488 = vmatpush1.msra.mxu0 0.0
    %5489 = vmatprep.subr.mxu0 0.0
    %5490 = vmatpush1.msra.mxu0 0.0
    %5491 = vmatprep.subr.mxu0 0.0
    %5492 = vmatpush1.msra.mxu0 0.0
    %5493 = vmatprep.subr.mxu0 0.0
    %5494 = vmatpush1.msra.mxu0 0.0
    %5495 = vmatprep.subr.mxu0 0.0
    %5496 = vmatpush1.msra.mxu0 0.0
    %5497 = vmatprep.subr.mxu0 0.0
    %5498 = vmatpush1.msra.mxu0 0.0
    %5499 = vmatprep.subr.mxu0 0.0
    %5500 = vmatpush1.msra.mxu0 0.0
    %5501 = vmatprep.subr.mxu0 0.0
    %5502 = vmatpush1.msra.mxu0 0.0
    %5503 = vmatprep.subr.mxu0 0.0
    %5504 = vmatpush1.msra.mxu0 0.0
    %5505 = vmatprep.subr.mxu0 0.0
    %5506 = vmatpush1.msra.mxu0 0.0
    %5507 = vmatprep.subr.mxu0 0.0
    %5508 = vmatpush1.msra.mxu0 0.0
    %5509 = vmatprep.subr.mxu0 0.0
    %5510 = vmatpush1.msra.mxu0 0.0
    %5511 = vmatprep.subr.mxu0 0.0
    %5512 = vmatpush1.msra.mxu0 0.0
    %5513 = vmatprep.subr.mxu0 0.0
    %5514 = vmatpush1.msra.mxu0 0.0
    %5515 = vmatprep.subr.mxu0 0.0
    %5516 = vmatpush1.msra.mxu0 0.0
    %5517 = vmatprep.subr.mxu0 0.0
    %5518 = vmatpush1.msra.mxu0 0.0
    %5519 = vmatprep.subr.mxu0 0.0
    %5520 = vmatpush1.msra.mxu0 0.0
    %5521 = vmatprep.subr.mxu0 0.0
    %5522 = vmatpush1.msra.mxu0 0.0
    %5523 = vmatprep.subr.mxu0 0.0
    %5524 = vmatpush1.msra.mxu0 0.0
    %5525 = vmatprep.subr.mxu0 0.0
    %5526 = vmatpush1.msra.mxu0 0.0
    %5527 = vmatprep.subr.mxu0 0.0
    %5528 = vmatpush1.msra.mxu0 0.0
    %5529 = vmatprep.subr.mxu0 0.0
    %5530 = vmatpush1.msra.mxu0 0.0
    %5531 = vmatprep.subr.mxu0 0.0
    %5532 = vmatpush1.msra.mxu0 0.0
    %5533 = vmatprep.subr.mxu0 0.0
    %5534 = vmatpush1.msra.mxu0 0.0
    %5535 = vmatprep.subr.mxu0 0.0
    %5536 = vmatpush1.msra.mxu0 0.0
    %5537 = vmatprep.subr.mxu0 0.0
    %5538 = vmatpush1.msra.mxu0 0.0
    %5539 = vmatprep.mubr.f32.mxu0 0.0
    %5540 = vmatmul.mubr.f32.gmra.mrb[0].mxu0 %v5473
    %v5541 = vpop.f32.mrb[0].mxu0
    %v5542 = vadd.f32 0.0, %v5541
    %v5543 = vpop.f32.mrb[0].mxu0
    %5544 = vdwg.mxu0
    %v5545 = vtanh.pop %v5542
    %v5546 = vld [vmem:[#allocation19] sm:$0xff]
    %5547 = vrot.lane.b32.xlu0 %v5380, 120
    %v5548 = vpop.permute.xlu0 %5547
    %5549 = vrot.lane.b32.xlu0 %v5201, 120
    %v5550 = vpop.permute.xlu0 %5549
    %v5551 = vsel %vm743, %v5548, 0
    %v5553 = vsel %vm743, %v5550, 0
    %5555 = vmatprep.subr.mxu0 0.0
    %5556 = vmatpush1.xpose.msra.mxu0 %v5553
    %5557 = vmatprep.subr.mxu0 0.0
    %5558 = vmatpush1.xpose.msra.mxu0 0.0
    %5559 = vmatprep.subr.mxu0 0.0
    %5560 = vmatpush1.xpose.msra.mxu0 0.0
    %5561 = vmatprep.subr.mxu0 0.0
    %5562 = vmatpush1.xpose.msra.mxu0 0.0
    %5563 = vmatprep.subr.mxu0 0.0
    %5564 = vmatpush1.xpose.msra.mxu0 0.0
    %5565 = vmatprep.subr.mxu0 0.0
    %5566 = vmatpush1.xpose.msra.mxu0 0.0
    %5567 = vmatprep.subr.mxu0 0.0
    %5568 = vmatpush1.xpose.msra.mxu0 0.0
    %5569 = vmatprep.subr.mxu0 0.0
    %5570 = vmatpush1.xpose.msra.mxu0 0.0
    %5571 = vmatprep.subr.mxu0 0.0
    %5572 = vmatpush1.xpose.msra.mxu0 0.0
    %5573 = vmatprep.subr.mxu0 0.0
    %5574 = vmatpush1.xpose.msra.mxu0 0.0
    %5575 = vmatprep.subr.mxu0 0.0
    %5576 = vmatpush1.xpose.msra.mxu0 0.0
    %5577 = vmatprep.subr.mxu0 0.0
    %5578 = vmatpush1.xpose.msra.mxu0 0.0
    %5579 = vmatprep.subr.mxu0 0.0
    %5580 = vmatpush1.xpose.msra.mxu0 0.0
    %5581 = vmatprep.subr.mxu0 0.0
    %5582 = vmatpush1.xpose.msra.mxu0 0.0
    %5583 = vmatprep.subr.mxu0 0.0
    %5584 = vmatpush1.xpose.msra.mxu0 0.0
    %5585 = vmatprep.subr.mxu0 0.0
    %5586 = vmatpush1.xpose.msra.mxu0 0.0
    %5587 = vmatprep.subr.mxu0 0.0
    %5588 = vmatpush1.xpose.msra.mxu0 0.0
    %5589 = vmatprep.subr.mxu0 0.0
    %5590 = vmatpush1.xpose.msra.mxu0 0.0
    %5591 = vmatprep.subr.mxu0 0.0
    %5592 = vmatpush1.xpose.msra.mxu0 0.0
    %5593 = vmatprep.subr.mxu0 0.0
    %5594 = vmatpush1.xpose.msra.mxu0 0.0
    %5595 = vmatprep.subr.mxu0 0.0
    %5596 = vmatpush1.xpose.msra.mxu0 0.0
    %5597 = vmatprep.subr.mxu0 0.0
    %5598 = vmatpush1.xpose.msra.mxu0 0.0
    %5599 = vmatprep.subr.mxu0 0.0
    %5600 = vmatpush1.xpose.msra.mxu0 0.0
    %5601 = vmatprep.subr.mxu0 0.0
    %5602 = vmatpush1.xpose.msra.mxu0 0.0
    %5603 = vmatprep.subr.mxu0 0.0
    %5604 = vmatpush1.xpose.msra.mxu0 0.0
    %5605 = vmatprep.subr.mxu0 0.0
    %5606 = vmatpush1.xpose.msra.mxu0 0.0
    %5607 = vmatprep.subr.mxu0 0.0
    %5608 = vmatpush1.xpose.msra.mxu0 0.0
    %5609 = vmatprep.subr.mxu0 0.0
    %5610 = vmatpush1.xpose.msra.mxu0 0.0
    %5611 = vmatprep.subr.mxu0 0.0
    %5612 = vmatpush1.xpose.msra.mxu0 0.0
    %5613 = vmatprep.subr.mxu0 0.0
    %5614 = vmatpush1.xpose.msra.mxu0 0.0
    %5615 = vmatprep.subr.mxu0 0.0
    %5616 = vmatpush1.xpose.msra.mxu0 0.0
    %5617 = vmatprep.subr.mxu0 0.0
    %5618 = vmatpush1.xpose.msra.mxu0 0.0
    %5619 = vmatprep.mubr.f32.mxu0 0.0
    %5620 = vmatmul.mubr.f32.gmra.mrb[0].mxu0 %v5551
    %v5621 = vpop.f32.mrb[0].mxu0
    %v5622 = vadd.f32 0.0, %v5621
    %v5623 = vpop.f32.mrb[0].mxu0
    %5624 = vdwg.mxu0
    %v5625 = vmul.f32 %v5622, 0.35355338
    %v5626 = vsel %vm5460, %v5625, -inf
    %5627 = vmax.xlane.f32.xlu0 %v5626
    %v5628 = vpop.xlane.xlu0 %5627
    %v5629 = vsub.f32 %v5625, %v5628
    %v5630 = vmul.f32 %v5629, 1.442695
    %v5631 = vpow.pop %v5630
    %v5632 = vsel %vm5460, %v5631, 0.0
    %5633 = vadd.xlane.f32.xlu0 %v5632
    %v5634 = vpop.xlane.xlu0 %5633
    %v5635 = vrcp.pop %v5634
    %v5636 = vmul.f32 %v5631, %v5635
    %5638 = vrot.lane.b32.xlu0 %v5287, 120
    %v5639 = vpop.permute.xlu0 %5638
    %v5642 = vsel %vm743, %v5636, 0
    %5644 = vmatprep.subr.mxu0 0.0
    %5645 = vmatpush1.msra.mxu0 %v5639
    %5646 = vmatprep.subr.mxu0 0.0
    %5647 = vmatpush1.msra.mxu0 0.0
    %5648 = vmatprep.subr.mxu0 0.0
    %5649 = vmatpush1.msra.mxu0 0.0
    %5650 = vmatprep.subr.mxu0 0.0
    %5651 = vmatpush1.msra.mxu0 0.0
    %5652 = vmatprep.subr.mxu0 0.0
    %5653 = vmatpush1.msra.mxu0 0.0
    %5654 = vmatprep.subr.mxu0 0.0
    %5655 = vmatpush1.msra.mxu0 0.0
    %5656 = vmatprep.subr.mxu0 0.0
    %5657 = vmatpush1.msra.mxu0 0.0
    %5658 = vmatprep.subr.mxu0 0.0
    %5659 = vmatpush1.msra.mxu0 0.0
    %5660 = vmatprep.subr.mxu0 0.0
    %5661 = vmatpush1.msra.mxu0 0.0
    %5662 = vmatprep.subr.mxu0 0.0
    %5663 = vmatpush1.msra.mxu0 0.0
    %5664 = vmatprep.subr.mxu0 0.0
    %5665 = vmatpush1.msra.mxu0 0.0
    %5666 = vmatprep.subr.mxu0 0.0
    %5667 = vmatpush1.msra.mxu0 0.0
    %5668 = vmatprep.subr.mxu0 0.0
    %5669 = vmatpush1.msra.mxu0 0.0
    %5670 = vmatprep.subr.mxu0 0.0
    %5671 = vmatpush1.msra.mxu0 0.0
    %5672 = vmatprep.subr.mxu0 0.0
    %5673 = vmatpush1.msra.mxu0 0.0
    %5674 = vmatprep.subr.mxu0 0.0
    %5675 = vmatpush1.msra.mxu0 0.0
    %5676 = vmatprep.subr.mxu0 0.0
    %5677 = vmatpush1.msra.mxu0 0.0
    %5678 = vmatprep.subr.mxu0 0.0
    %5679 = vmatpush1.msra.mxu0 0.0
    %5680 = vmatprep.subr.mxu0 0.0
    %5681 = vmatpush1.msra.mxu0 0.0
    %5682 = vmatprep.subr.mxu0 0.0
    %5683 = vmatpush1.msra.mxu0 0.0
    %5684 = vmatprep.subr.mxu0 0.0
    %5685 = vmatpush1.msra.mxu0 0.0
    %5686 = vmatprep.subr.mxu0 0.0
    %5687 = vmatpush1.msra.mxu0 0.0
    %5688 = vmatprep.subr.mxu0 0.0
    %5689 = vmatpush1.msra.mxu0 0.0
    %5690 = vmatprep.subr.mxu0 0.0
    %5691 = vmatpush1.msra.mxu0 0.0
    %5692 = vmatprep.subr.mxu0 0.0
    %5693 = vmatpush1.msra.mxu0 0.0
    %5694 = vmatprep.subr.mxu0 0.0
    %5695 = vmatpush1.msra.mxu0 0.0
    %5696 = vmatprep.subr.mxu0 0.0
    %5697 = vmatpush1.msra.mxu0 0.0
    %5698 = vmatprep.subr.mxu0 0.0
    %5699 = vmatpush1.msra.mxu0 0.0
    %5700 = vmatprep.subr.mxu0 0.0
    %5701 = vmatpush1.msra.mxu0 0.0
    %5702 = vmatprep.subr.mxu0 0.0
    %5703 = vmatpush1.msra.mxu0 0.0
    %5704 = vmatprep.subr.mxu0 0.0
    %5705 = vmatpush1.msra.mxu0 0.0
    %5706 = vmatprep.subr.mxu0 0.0
    %5707 = vmatpush1.msra.mxu0 0.0
    %5708 = vmatprep.mubr.f32.mxu0 0.0
    %5709 = vmatmul.mubr.f32.gmra.mrb[0].mxu0 %v5642
    %v5710 = vpop.f32.mrb[0].mxu0
    %v5711 = vadd.f32 0.0, %v5710
    %v5712 = vpop.f32.mrb[0].mxu0
    %5713 = vdwg.mxu0
    %v5714 = vtanh.pop %v5711
    %v5715 = vld [vmem:[#allocation19 + $0x8] sm:$0xff]
    %v5717 = vsel %vm743, %v5714, 0
    %5719 = vmatprep.subr.mxu0 0.0
    %5720 = vmatpush1.msra.mxu0 %v5715
    %5721 = vmatprep.subr.mxu0 0.0
    %5722 = vmatpush1.msra.mxu0 0.0
    %5723 = vmatprep.subr.mxu0 0.0
    %5724 = vmatpush1.msra.mxu0 0.0
    %5725 = vmatprep.subr.mxu0 0.0
    %5726 = vmatpush1.msra.mxu0 0.0
    %5727 = vmatprep.subr.mxu0 0.0
    %5728 = vmatpush1.msra.mxu0 0.0
    %5729 = vmatprep.subr.mxu0 0.0
    %5730 = vmatpush1.msra.mxu0 0.0
    %5731 = vmatprep.subr.mxu0 0.0
    %5732 = vmatpush1.msra.mxu0 0.0
    %5733 = vmatprep.subr.mxu0 0.0
    %5734 = vmatpush1.msra.mxu0 0.0
    %5735 = vmatprep.subr.mxu0 0.0
    %5736 = vmatpush1.msra.mxu0 0.0
    %5737 = vmatprep.subr.mxu0 0.0
    %5738 = vmatpush1.msra.mxu0 0.0
    %5739 = vmatprep.subr.mxu0 0.0
    %5740 = vmatpush1.msra.mxu0 0.0
    %5741 = vmatprep.subr.mxu0 0.0
    %5742 = vmatpush1.msra.mxu0 0.0
    %5743 = vmatprep.subr.mxu0 0.0
    %5744 = vmatpush1.msra.mxu0 0.0
    %5745 = vmatprep.subr.mxu0 0.0
    %5746 = vmatpush1.msra.mxu0 0.0
    %5747 = vmatprep.subr.mxu0 0.0
    %5748 = vmatpush1.msra.mxu0 0.0
    %5749 = vmatprep.subr.mxu0 0.0
    %5750 = vmatpush1.msra.mxu0 0.0
    %5751 = vmatprep.subr.mxu0 0.0
    %5752 = vmatpush1.msra.mxu0 0.0
    %5753 = vmatprep.subr.mxu0 0.0
    %5754 = vmatpush1.msra.mxu0 0.0
    %5755 = vmatprep.subr.mxu0 0.0
    %5756 = vmatpush1.msra.mxu0 0.0
    %5757 = vmatprep.subr.mxu0 0.0
    %5758 = vmatpush1.msra.mxu0 0.0
    %5759 = vmatprep.subr.mxu0 0.0
    %5760 = vmatpush1.msra.mxu0 0.0
    %5761 = vmatprep.subr.mxu0 0.0
    %5762 = vmatpush1.msra.mxu0 0.0
    %5763 = vmatprep.subr.mxu0 0.0
    %5764 = vmatpush1.msra.mxu0 0.0
    %5765 = vmatprep.subr.mxu0 0.0
    %5766 = vmatpush1.msra.mxu0 0.0
    %5767 = vmatprep.subr.mxu0 0.0
    %5768 = vmatpush1.msra.mxu0 0.0
    %5769 = vmatprep.subr.mxu0 0.0
    %5770 = vmatpush1.msra.mxu0 0.0
    %5771 = vmatprep.subr.mxu0 0.0
    %5772 = vmatpush1.msra.mxu0 0.0
    %5773 = vmatprep.subr.mxu0 0.0
    %5774 = vmatpush1.msra.mxu0 0.0
    %5775 = vmatprep.subr.mxu0 0.0
    %5776 = vmatpush1.msra.mxu0 0.0
    %5777 = vmatprep.subr.mxu0 0.0
    %5778 = vmatpush1.msra.mxu0 0.0
    %5779 = vmatprep.subr.mxu0 0.0
    %5780 = vmatpush1.msra.mxu0 0.0
    %5781 = vmatprep.subr.mxu0 0.0
    %5782 = vmatpush1.msra.mxu0 0.0
    %5783 = vmatprep.mubr.f32.mxu0 0.0
    %5784 = vmatmul.mubr.f32.gmra.mrb[0].mxu0 %v5717
    %v5785 = vpop.f32.mrb[0].mxu0
    %v5786 = vadd.f32 0.0, %v5785
    %v5787 = vpop.f32.mrb[0].mxu0
    %5788 = vdwg.mxu0
    %v5790 = vsel %vm743, %v5545, 0
    %5792 = vmatprep.subr.mxu0 0.0
    %5793 = vmatpush1.msra.mxu0 %v5546
    %5794 = vmatprep.subr.mxu0 0.0
    %5795 = vmatpush1.msra.mxu0 0.0
    %5796 = vmatprep.subr.mxu0 0.0
    %5797 = vmatpush1.msra.mxu0 0.0
    %5798 = vmatprep.subr.mxu0 0.0
    %5799 = vmatpush1.msra.mxu0 0.0
    %5800 = vmatprep.subr.mxu0 0.0
    %5801 = vmatpush1.msra.mxu0 0.0
    %5802 = vmatprep.subr.mxu0 0.0
    %5803 = vmatpush1.msra.mxu0 0.0
    %5804 = vmatprep.subr.mxu0 0.0
    %5805 = vmatpush1.msra.mxu0 0.0
    %5806 = vmatprep.subr.mxu0 0.0
    %5807 = vmatpush1.msra.mxu0 0.0
    %5808 = vmatprep.subr.mxu0 0.0
    %5809 = vmatpush1.msra.mxu0 0.0
    %5810 = vmatprep.subr.mxu0 0.0
    %5811 = vmatpush1.msra.mxu0 0.0
    %5812 = vmatprep.subr.mxu0 0.0
    %5813 = vmatpush1.msra.mxu0 0.0
    %5814 = vmatprep.subr.mxu0 0.0
    %5815 = vmatpush1.msra.mxu0 0.0
    %5816 = vmatprep.subr.mxu0 0.0
    %5817 = vmatpush1.msra.mxu0 0.0
    %5818 = vmatprep.subr.mxu0 0.0
    %5819 = vmatpush1.msra.mxu0 0.0
    %5820 = vmatprep.subr.mxu0 0.0
    %5821 = vmatpush1.msra.mxu0 0.0
    %5822 = vmatprep.subr.mxu0 0.0
    %5823 = vmatpush1.msra.mxu0 0.0
    %5824 = vmatprep.subr.mxu0 0.0
    %5825 = vmatpush1.msra.mxu0 0.0
    %5826 = vmatprep.subr.mxu0 0.0
    %5827 = vmatpush1.msra.mxu0 0.0
    %5828 = vmatprep.subr.mxu0 0.0
    %5829 = vmatpush1.msra.mxu0 0.0
    %5830 = vmatprep.subr.mxu0 0.0
    %5831 = vmatpush1.msra.mxu0 0.0
    %5832 = vmatprep.subr.mxu0 0.0
    %5833 = vmatpush1.msra.mxu0 0.0
    %5834 = vmatprep.subr.mxu0 0.0
    %5835 = vmatpush1.msra.mxu0 0.0
    %5836 = vmatprep.subr.mxu0 0.0
    %5837 = vmatpush1.msra.mxu0 0.0
    %5838 = vmatprep.subr.mxu0 0.0
    %5839 = vmatpush1.msra.mxu0 0.0
    %5840 = vmatprep.subr.mxu0 0.0
    %5841 = vmatpush1.msra.mxu0 0.0
    %5842 = vmatprep.subr.mxu0 0.0
    %5843 = vmatpush1.msra.mxu0 0.0
    %5844 = vmatprep.subr.mxu0 0.0
    %5845 = vmatpush1.msra.mxu0 0.0
    %5846 = vmatprep.subr.mxu0 0.0
    %5847 = vmatpush1.msra.mxu0 0.0
    %5848 = vmatprep.subr.mxu0 0.0
    %5849 = vmatpush1.msra.mxu0 0.0
    %5850 = vmatprep.subr.mxu0 0.0
    %5851 = vmatpush1.msra.mxu0 0.0
    %5852 = vmatprep.subr.mxu0 0.0
    %5853 = vmatpush1.msra.mxu0 0.0
    %5854 = vmatprep.subr.mxu0 0.0
    %5855 = vmatpush1.msra.mxu0 0.0
    %5856 = vmatprep.mubr.f32.mxu0 0.0
    %5857 = vmatmul.mubr.f32.gmra.mrb[0].mxu0 %v5790
    %v5858 = vpop.f32.mrb[0].mxu0
    %v5859 = vadd.f32 %v5786, %v5858
    %v5860 = vpop.f32.mrb[0].mxu0
    %5861 = vdwg.mxu0
    %5862 = vrot.lane.b32.xlu0 %v5380, 112
    %v5863 = vpop.permute.xlu0 %5862
    %5864 = vrot.lane.b32.xlu0 %v5201, 112
    %v5865 = vpop.permute.xlu0 %5864
    %v5866 = vsel %vm743, %v5863, 0
    %v5868 = vsel %vm743, %v5865, 0
    %5870 = vmatprep.subr.mxu0 0.0
    %5871 = vmatpush1.xpose.msra.mxu0 %v5868
    %5872 = vmatprep.subr.mxu0 0.0
    %5873 = vmatpush1.xpose.msra.mxu0 0.0
    %5874 = vmatprep.subr.mxu0 0.0
    %5875 = vmatpush1.xpose.msra.mxu0 0.0
    %5876 = vmatprep.subr.mxu0 0.0
    %5877 = vmatpush1.xpose.msra.mxu0 0.0
    %5878 = vmatprep.subr.mxu0 0.0
    %5879 = vmatpush1.xpose.msra.mxu0 0.0
    %5880 = vmatprep.subr.mxu0 0.0
    %5881 = vmatpush1.xpose.msra.mxu0 0.0
    %5882 = vmatprep.subr.mxu0 0.0
    %5883 = vmatpush1.xpose.msra.mxu0 0.0
    %5884 = vmatprep.subr.mxu0 0.0
    %5885 = vmatpush1.xpose.msra.mxu0 0.0
    %5886 = vmatprep.subr.mxu0 0.0
    %5887 = vmatpush1.xpose.msra.mxu0 0.0
    %5888 = vmatprep.subr.mxu0 0.0
    %5889 = vmatpush1.xpose.msra.mxu0 0.0
    %5890 = vmatprep.subr.mxu0 0.0
    %5891 = vmatpush1.xpose.msra.mxu0 0.0
    %5892 = vmatprep.subr.mxu0 0.0
    %5893 = vmatpush1.xpose.msra.mxu0 0.0
    %5894 = vmatprep.subr.mxu0 0.0
    %5895 = vmatpush1.xpose.msra.mxu0 0.0
    %5896 = vmatprep.subr.mxu0 0.0
    %5897 = vmatpush1.xpose.msra.mxu0 0.0
    %5898 = vmatprep.subr.mxu0 0.0
    %5899 = vmatpush1.xpose.msra.mxu0 0.0
    %5900 = vmatprep.subr.mxu0 0.0
    %5901 = vmatpush1.xpose.msra.mxu0 0.0
    %5902 = vmatprep.subr.mxu0 0.0
    %5903 = vmatpush1.xpose.msra.mxu0 0.0
    %5904 = vmatprep.subr.mxu0 0.0
    %5905 = vmatpush1.xpose.msra.mxu0 0.0
    %5906 = vmatprep.subr.mxu0 0.0
    %5907 = vmatpush1.xpose.msra.mxu0 0.0
    %5908 = vmatprep.subr.mxu0 0.0
    %5909 = vmatpush1.xpose.msra.mxu0 0.0
    %5910 = vmatprep.subr.mxu0 0.0
    %5911 = vmatpush1.xpose.msra.mxu0 0.0
    %5912 = vmatprep.subr.mxu0 0.0
    %5913 = vmatpush1.xpose.msra.mxu0 0.0
    %5914 = vmatprep.subr.mxu0 0.0
    %5915 = vmatpush1.xpose.msra.mxu0 0.0
    %5916 = vmatprep.subr.mxu0 0.0
    %5917 = vmatpush1.xpose.msra.mxu0 0.0
    %5918 = vmatprep.subr.mxu0 0.0
    %5919 = vmatpush1.xpose.msra.mxu0 0.0
    %5920 = vmatprep.subr.mxu0 0.0
    %5921 = vmatpush1.xpose.msra.mxu0 0.0
    %5922 = vmatprep.subr.mxu0 0.0
    %5923 = vmatpush1.xpose.msra.mxu0 0.0
    %5924 = vmatprep.subr.mxu0 0.0
    %5925 = vmatpush1.xpose.msra.mxu0 0.0
    %5926 = vmatprep.subr.mxu0 0.0
    %5927 = vmatpush1.xpose.msra.mxu0 0.0
    %5928 = vmatprep.subr.mxu0 0.0
    %5929 = vmatpush1.xpose.msra.mxu0 0.0
    %5930 = vmatprep.subr.mxu0 0.0
    %5931 = vmatpush1.xpose.msra.mxu0 0.0
    %5932 = vmatprep.subr.mxu0 0.0
    %5933 = vmatpush1.xpose.msra.mxu0 0.0
    %5934 = vmatprep.mubr.f32.mxu0 0.0
    %5935 = vmatmul.mubr.f32.gmra.mrb[0].mxu0 %v5866
    %v5936 = vpop.f32.mrb[0].mxu0
    %v5937 = vadd.f32 0.0, %v5936
    %v5938 = vpop.f32.mrb[0].mxu0
    %5939 = vdwg.mxu0
    %v5940 = vmul.f32 %v5937, 0.35355338
    %v5941 = vsel %vm5460, %v5940, -inf
    %5942 = vmax.xlane.f32.xlu0 %v5941
    %v5943 = vpop.xlane.xlu0 %5942
    %v5944 = vsub.f32 %v5940, %v5943
    %v5945 = vmul.f32 %v5944, 1.442695
    %v5946 = vpow.pop %v5945
    %v5947 = vsel %vm5460, %v5946, 0.0
    %5948 = vadd.xlane.f32.xlu0 %v5947
    %v5949 = vpop.xlane.xlu0 %5948
    %v5950 = vrcp.pop %v5949
    %v5951 = vmul.f32 %v5946, %v5950
    %5952 = vrot.lane.b32.xlu0 %v5287, 112
    %v5953 = vpop.permute.xlu0 %5952
    %v5956 = vsel %vm743, %v5951, 0
    %5958 = vmatprep.subr.mxu0 0.0
    %5959 = vmatpush1.msra.mxu0 %v5953
    %5960 = vmatprep.subr.mxu0 0.0
    %5961 = vmatpush1.msra.mxu0 0.0
    %5962 = vmatprep.subr.mxu0 0.0
    %5963 = vmatpush1.msra.mxu0 0.0
    %5964 = vmatprep.subr.mxu0 0.0
    %5965 = vmatpush1.msra.mxu0 0.0
    %5966 = vmatprep.subr.mxu0 0.0
    %5967 = vmatpush1.msra.mxu0 0.0
    %5968 = vmatprep.subr.mxu0 0.0
    %5969 = vmatpush1.msra.mxu0 0.0
    %5970 = vmatprep.subr.mxu0 0.0
    %5971 = vmatpush1.msra.mxu0 0.0
    %5972 = vmatprep.subr.mxu0 0.0
    %5973 = vmatpush1.msra.mxu0 0.0
    %5974 = vmatprep.subr.mxu0 0.0
    %5975 = vmatpush1.msra.mxu0 0.0
    %5976 = vmatprep.subr.mxu0 0.0
    %5977 = vmatpush1.msra.mxu0 0.0
    %5978 = vmatprep.subr.mxu0 0.0
    %5979 = vmatpush1.msra.mxu0 0.0
    %5980 = vmatprep.subr.mxu0 0.0
    %5981 = vmatpush1.msra.mxu0 0.0
    %5982 = vmatprep.subr.mxu0 0.0
    %5983 = vmatpush1.msra.mxu0 0.0
    %5984 = vmatprep.subr.mxu0 0.0
    %5985 = vmatpush1.msra.mxu0 0.0
    %5986 = vmatprep.subr.mxu0 0.0
    %5987 = vmatpush1.msra.mxu0 0.0
    %5988 = vmatprep.subr.mxu0 0.0
    %5989 = vmatpush1.msra.mxu0 0.0
    %5990 = vmatprep.subr.mxu0 0.0
    %5991 = vmatpush1.msra.mxu0 0.0
    %5992 = vmatprep.subr.mxu0 0.0
    %5993 = vmatpush1.msra.mxu0 0.0
    %5994 = vmatprep.subr.mxu0 0.0
    %5995 = vmatpush1.msra.mxu0 0.0
    %5996 = vmatprep.subr.mxu0 0.0
    %5997 = vmatpush1.msra.mxu0 0.0
    %5998 = vmatprep.subr.mxu0 0.0
    %5999 = vmatpush1.msra.mxu0 0.0
    %6000 = vmatprep.subr.mxu0 0.0
    %6001 = vmatpush1.msra.mxu0 0.0
    %6002 = vmatprep.subr.mxu0 0.0
    %6003 = vmatpush1.msra.mxu0 0.0
    %6004 = vmatprep.subr.mxu0 0.0
    %6005 = vmatpush1.msra.mxu0 0.0
    %6006 = vmatprep.subr.mxu0 0.0
    %6007 = vmatpush1.msra.mxu0 0.0
    %6008 = vmatprep.subr.mxu0 0.0
    %6009 = vmatpush1.msra.mxu0 0.0
    %6010 = vmatprep.subr.mxu0 0.0
    %6011 = vmatpush1.msra.mxu0 0.0
    %6012 = vmatprep.subr.mxu0 0.0
    %6013 = vmatpush1.msra.mxu0 0.0
    %6014 = vmatprep.subr.mxu0 0.0
    %6015 = vmatpush1.msra.mxu0 0.0
    %6016 = vmatprep.subr.mxu0 0.0
    %6017 = vmatpush1.msra.mxu0 0.0
    %6018 = vmatprep.subr.mxu0 0.0
    %6019 = vmatpush1.msra.mxu0 0.0
    %6020 = vmatprep.subr.mxu0 0.0
    %6021 = vmatpush1.msra.mxu0 0.0
    %6022 = vmatprep.mubr.f32.mxu0 0.0
    %6023 = vmatmul.mubr.f32.gmra.mrb[0].mxu0 %v5956
    %v6024 = vpop.f32.mrb[0].mxu0
    %v6025 = vadd.f32 0.0, %v6024
    %v6026 = vpop.f32.mrb[0].mxu0
    %6027 = vdwg.mxu0
    %v6028 = vtanh.pop %v6025
    %v6029 = vld [vmem:[#allocation19 + $0x10] sm:$0xff]
    %v6031 = vsel %vm743, %v6028, 0
    %6033 = vmatprep.subr.mxu0 0.0
    %6034 = vmatpush1.msra.mxu0 %v6029
    %6035 = vmatprep.subr.mxu0 0.0
    %6036 = vmatpush1.msra.mxu0 0.0
    %6037 = vmatprep.subr.mxu0 0.0
    %6038 = vmatpush1.msra.mxu0 0.0
    %6039 = vmatprep.subr.mxu0 0.0
    %6040 = vmatpush1.msra.mxu0 0.0
    %6041 = vmatprep.subr.mxu0 0.0
    %6042 = vmatpush1.msra.mxu0 0.0
    %6043 = vmatprep.subr.mxu0 0.0
    %6044 = vmatpush1.msra.mxu0 0.0
    %6045 = vmatprep.subr.mxu0 0.0
    %6046 = vmatpush1.msra.mxu0 0.0
    %6047 = vmatprep.subr.mxu0 0.0
    %6048 = vmatpush1.msra.mxu0 0.0
    %6049 = vmatprep.subr.mxu0 0.0
    %6050 = vmatpush1.msra.mxu0 0.0
    %6051 = vmatprep.subr.mxu0 0.0
    %6052 = vmatpush1.msra.mxu0 0.0
    %6053 = vmatprep.subr.mxu0 0.0
    %6054 = vmatpush1.msra.mxu0 0.0
    %6055 = vmatprep.subr.mxu0 0.0
    %6056 = vmatpush1.msra.mxu0 0.0
    %6057 = vmatprep.subr.mxu0 0.0
    %6058 = vmatpush1.msra.mxu0 0.0
    %6059 = vmatprep.subr.mxu0 0.0
    %6060 = vmatpush1.msra.mxu0 0.0
    %6061 = vmatprep.subr.mxu0 0.0
    %6062 = vmatpush1.msra.mxu0 0.0
    %6063 = vmatprep.subr.mxu0 0.0
    %6064 = vmatpush1.msra.mxu0 0.0
    %6065 = vmatprep.subr.mxu0 0.0
    %6066 = vmatpush1.msra.mxu0 0.0
    %6067 = vmatprep.subr.mxu0 0.0
    %6068 = vmatpush1.msra.mxu0 0.0
    %6069 = vmatprep.subr.mxu0 0.0
    %6070 = vmatpush1.msra.mxu0 0.0
    %6071 = vmatprep.subr.mxu0 0.0
    %6072 = vmatpush1.msra.mxu0 0.0
    %6073 = vmatprep.subr.mxu0 0.0
    %6074 = vmatpush1.msra.mxu0 0.0
    %6075 = vmatprep.subr.mxu0 0.0
    %6076 = vmatpush1.msra.mxu0 0.0
    %6077 = vmatprep.subr.mxu0 0.0
    %6078 = vmatpush1.msra.mxu0 0.0
    %6079 = vmatprep.subr.mxu0 0.0
    %6080 = vmatpush1.msra.mxu0 0.0
    %6081 = vmatprep.subr.mxu0 0.0
    %6082 = vmatpush1.msra.mxu0 0.0
    %6083 = vmatprep.subr.mxu0 0.0
    %6084 = vmatpush1.msra.mxu0 0.0
    %6085 = vmatprep.subr.mxu0 0.0
    %6086 = vmatpush1.msra.mxu0 0.0
    %6087 = vmatprep.subr.mxu0 0.0
    %6088 = vmatpush1.msra.mxu0 0.0
    %6089 = vmatprep.subr.mxu0 0.0
    %6090 = vmatpush1.msra.mxu0 0.0
    %6091 = vmatprep.subr.mxu0 0.0
    %6092 = vmatpush1.msra.mxu0 0.0
    %6093 = vmatprep.subr.mxu0 0.0
    %6094 = vmatpush1.msra.mxu0 0.0
    %6095 = vmatprep.subr.mxu0 0.0
    %6096 = vmatpush1.msra.mxu0 0.0
    %6097 = vmatprep.mubr.f32.mxu0 0.0
    %6098 = vmatmul.mubr.f32.gmra.mrb[0].mxu0 %v6031
    %v6099 = vpop.f32.mrb[0].mxu0
    %v6100 = vadd.f32 0.0, %v6099
    %v6101 = vpop.f32.mrb[0].mxu0
    %6102 = vdwg.mxu0
    %v6103 = vadd.f32 %v5859, %v6100
    %6104 = vrot.lane.b32.xlu0 %v5380, 104
    %v6105 = vpop.permute.xlu0 %6104
    %6106 = vrot.lane.b32.xlu0 %v5201, 104
    %v6107 = vpop.permute.xlu0 %6106
    %v6108 = vsel %vm743, %v6105, 0
    %v6110 = vsel %vm743, %v6107, 0
    %6112 = vmatprep.subr.mxu0 0.0
    %6113 = vmatpush1.xpose.msra.mxu0 %v6110
    %6114 = vmatprep.subr.mxu0 0.0
    %6115 = vmatpush1.xpose.msra.mxu0 0.0
    %6116 = vmatprep.subr.mxu0 0.0
    %6117 = vmatpush1.xpose.msra.mxu0 0.0
    %6118 = vmatprep.subr.mxu0 0.0
    %6119 = vmatpush1.xpose.msra.mxu0 0.0
    %6120 = vmatprep.subr.mxu0 0.0
    %6121 = vmatpush1.xpose.msra.mxu0 0.0
    %6122 = vmatprep.subr.mxu0 0.0
    %6123 = vmatpush1.xpose.msra.mxu0 0.0
    %6124 = vmatprep.subr.mxu0 0.0
    %6125 = vmatpush1.xpose.msra.mxu0 0.0
    %6126 = vmatprep.subr.mxu0 0.0
    %6127 = vmatpush1.xpose.msra.mxu0 0.0
    %6128 = vmatprep.subr.mxu0 0.0
    %6129 = vmatpush1.xpose.msra.mxu0 0.0
    %6130 = vmatprep.subr.mxu0 0.0
    %6131 = vmatpush1.xpose.msra.mxu0 0.0
    %6132 = vmatprep.subr.mxu0 0.0
    %6133 = vmatpush1.xpose.msra.mxu0 0.0
    %6134 = vmatprep.subr.mxu0 0.0
    %6135 = vmatpush1.xpose.msra.mxu0 0.0
    %6136 = vmatprep.subr.mxu0 0.0
    %6137 = vmatpush1.xpose.msra.mxu0 0.0
    %6138 = vmatprep.subr.mxu0 0.0
    %6139 = vmatpush1.xpose.msra.mxu0 0.0
    %6140 = vmatprep.subr.mxu0 0.0
    %6141 = vmatpush1.xpose.msra.mxu0 0.0
    %6142 = vmatprep.subr.mxu0 0.0
    %6143 = vmatpush1.xpose.msra.mxu0 0.0
    %6144 = vmatprep.subr.mxu0 0.0
    %6145 = vmatpush1.xpose.msra.mxu0 0.0
    %6146 = vmatprep.subr.mxu0 0.0
    %6147 = vmatpush1.xpose.msra.mxu0 0.0
    %6148 = vmatprep.subr.mxu0 0.0
    %6149 = vmatpush1.xpose.msra.mxu0 0.0
    %6150 = vmatprep.subr.mxu0 0.0
    %6151 = vmatpush1.xpose.msra.mxu0 0.0
    %6152 = vmatprep.subr.mxu0 0.0
    %6153 = vmatpush1.xpose.msra.mxu0 0.0
    %6154 = vmatprep.subr.mxu0 0.0
    %6155 = vmatpush1.xpose.msra.mxu0 0.0
    %6156 = vmatprep.subr.mxu0 0.0
    %6157 = vmatpush1.xpose.msra.mxu0 0.0
    %6158 = vmatprep.subr.mxu0 0.0
    %6159 = vmatpush1.xpose.msra.mxu0 0.0
    %6160 = vmatprep.subr.mxu0 0.0
    %6161 = vmatpush1.xpose.msra.mxu0 0.0
    %6162 = vmatprep.subr.mxu0 0.0
    %6163 = vmatpush1.xpose.msra.mxu0 0.0
    %6164 = vmatprep.subr.mxu0 0.0
    %6165 = vmatpush1.xpose.msra.mxu0 0.0
    %6166 = vmatprep.subr.mxu0 0.0
    %6167 = vmatpush1.xpose.msra.mxu0 0.0
    %6168 = vmatprep.subr.mxu0 0.0
    %6169 = vmatpush1.xpose.msra.mxu0 0.0
    %6170 = vmatprep.subr.mxu0 0.0
    %6171 = vmatpush1.xpose.msra.mxu0 0.0
    %6172 = vmatprep.subr.mxu0 0.0
    %6173 = vmatpush1.xpose.msra.mxu0 0.0
    %6174 = vmatprep.subr.mxu0 0.0
    %6175 = vmatpush1.xpose.msra.mxu0 0.0
    %6176 = vmatprep.mubr.f32.mxu0 0.0
    %6177 = vmatmul.mubr.f32.gmra.mrb[0].mxu0 %v6108
    %v6178 = vpop.f32.mrb[0].mxu0
    %v6179 = vadd.f32 0.0, %v6178
    %v6180 = vpop.f32.mrb[0].mxu0
    %6181 = vdwg.mxu0
    %v6182 = vmul.f32 %v6179, 0.35355338
    %v6183 = vsel %vm5460, %v6182, -inf
    %6184 = vmax.xlane.f32.xlu0 %v6183
    %v6185 = vpop.xlane.xlu0 %6184
    %v6186 = vsub.f32 %v6182, %v6185
    %v6187 = vmul.f32 %v6186, 1.442695
    %v6188 = vpow.pop %v6187
    %v6189 = vsel %vm5460, %v6188, 0.0
    %6190 = vadd.xlane.f32.xlu0 %v6189
    %v6191 = vpop.xlane.xlu0 %6190
    %v6192 = vrcp.pop %v6191
    %v6193 = vmul.f32 %v6188, %v6192
    %6194 = vrot.lane.b32.xlu0 %v5287, 104
    %v6195 = vpop.permute.xlu0 %6194
    %v6198 = vsel %vm743, %v6193, 0
    %6200 = vmatprep.subr.mxu0 0.0
    %6201 = vmatpush1.msra.mxu0 %v6195
    %6202 = vmatprep.subr.mxu0 0.0
    %6203 = vmatpush1.msra.mxu0 0.0
    %6204 = vmatprep.subr.mxu0 0.0
    %6205 = vmatpush1.msra.mxu0 0.0
    %6206 = vmatprep.subr.mxu0 0.0
    %6207 = vmatpush1.msra.mxu0 0.0
    %6208 = vmatprep.subr.mxu0 0.0
    %6209 = vmatpush1.msra.mxu0 0.0
    %6210 = vmatprep.subr.mxu0 0.0
    %6211 = vmatpush1.msra.mxu0 0.0
    %6212 = vmatprep.subr.mxu0 0.0
    %6213 = vmatpush1.msra.mxu0 0.0
    %6214 = vmatprep.subr.mxu0 0.0
    %6215 = vmatpush1.msra.mxu0 0.0
    %6216 = vmatprep.subr.mxu0 0.0
    %6217 = vmatpush1.msra.mxu0 0.0
    %6218 = vmatprep.subr.mxu0 0.0
    %6219 = vmatpush1.msra.mxu0 0.0
    %6220 = vmatprep.subr.mxu0 0.0
    %6221 = vmatpush1.msra.mxu0 0.0
    %6222 = vmatprep.subr.mxu0 0.0
    %6223 = vmatpush1.msra.mxu0 0.0
    %6224 = vmatprep.subr.mxu0 0.0
    %6225 = vmatpush1.msra.mxu0 0.0
    %6226 = vmatprep.subr.mxu0 0.0
    %6227 = vmatpush1.msra.mxu0 0.0
    %6228 = vmatprep.subr.mxu0 0.0
    %6229 = vmatpush1.msra.mxu0 0.0
    %6230 = vmatprep.subr.mxu0 0.0
    %6231 = vmatpush1.msra.mxu0 0.0
    %6232 = vmatprep.subr.mxu0 0.0
    %6233 = vmatpush1.msra.mxu0 0.0
    %6234 = vmatprep.subr.mxu0 0.0
    %6235 = vmatpush1.msra.mxu0 0.0
    %6236 = vmatprep.subr.mxu0 0.0
    %6237 = vmatpush1.msra.mxu0 0.0
    %6238 = vmatprep.subr.mxu0 0.0
    %6239 = vmatpush1.msra.mxu0 0.0
    %6240 = vmatprep.subr.mxu0 0.0
    %6241 = vmatpush1.msra.mxu0 0.0
    %6242 = vmatprep.subr.mxu0 0.0
    %6243 = vmatpush1.msra.mxu0 0.0
    %6244 = vmatprep.subr.mxu0 0.0
    %6245 = vmatpush1.msra.mxu0 0.0
    %6246 = vmatprep.subr.mxu0 0.0
    %6247 = vmatpush1.msra.mxu0 0.0
    %6248 = vmatprep.subr.mxu0 0.0
    %6249 = vmatpush1.msra.mxu0 0.0
    %6250 = vmatprep.subr.mxu0 0.0
    %6251 = vmatpush1.msra.mxu0 0.0
    %6252 = vmatprep.subr.mxu0 0.0
    %6253 = vmatpush1.msra.mxu0 0.0
    %6254 = vmatprep.subr.mxu0 0.0
    %6255 = vmatpush1.msra.mxu0 0.0
    %6256 = vmatprep.subr.mxu0 0.0
    %6257 = vmatpush1.msra.mxu0 0.0
    %6258 = vmatprep.subr.mxu0 0.0
    %6259 = vmatpush1.msra.mxu0 0.0
    %6260 = vmatprep.subr.mxu0 0.0
    %6261 = vmatpush1.msra.mxu0 0.0
    %6262 = vmatprep.subr.mxu0 0.0
    %6263 = vmatpush1.msra.mxu0 0.0
    %6264 = vmatprep.mubr.f32.mxu0 0.0
    %6265 = vmatmul.mubr.f32.gmra.mrb[0].mxu0 %v6198
    %v6266 = vpop.f32.mrb[0].mxu0
    %v6267 = vadd.f32 0.0, %v6266
    %v6268 = vpop.f32.mrb[0].mxu0
    %6269 = vdwg.mxu0
    %v6270 = vtanh.pop %v6267
    %v6271 = vld [vmem:[#allocation19 + $0x18] sm:$0xff]
    %v6273 = vsel %vm743, %v6270, 0
    %6275 = vmatprep.subr.mxu0 0.0
    %6276 = vmatpush1.msra.mxu0 %v6271
    %6277 = vmatprep.subr.mxu0 0.0
    %6278 = vmatpush1.msra.mxu0 0.0
    %6279 = vmatprep.subr.mxu0 0.0
    %6280 = vmatpush1.msra.mxu0 0.0
    %6281 = vmatprep.subr.mxu0 0.0
    %6282 = vmatpush1.msra.mxu0 0.0
    %6283 = vmatprep.subr.mxu0 0.0
    %6284 = vmatpush1.msra.mxu0 0.0
    %6285 = vmatprep.subr.mxu0 0.0
    %6286 = vmatpush1.msra.mxu0 0.0
    %6287 = vmatprep.subr.mxu0 0.0
    %6288 = vmatpush1.msra.mxu0 0.0
    %6289 = vmatprep.subr.mxu0 0.0
    %6290 = vmatpush1.msra.mxu0 0.0
    %6291 = vmatprep.subr.mxu0 0.0
    %6292 = vmatpush1.msra.mxu0 0.0
    %6293 = vmatprep.subr.mxu0 0.0
    %6294 = vmatpush1.msra.mxu0 0.0
    %6295 = vmatprep.subr.mxu0 0.0
    %6296 = vmatpush1.msra.mxu0 0.0
    %6297 = vmatprep.subr.mxu0 0.0
    %6298 = vmatpush1.msra.mxu0 0.0
    %6299 = vmatprep.subr.mxu0 0.0
    %6300 = vmatpush1.msra.mxu0 0.0
    %6301 = vmatprep.subr.mxu0 0.0
    %6302 = vmatpush1.msra.mxu0 0.0
    %6303 = vmatprep.subr.mxu0 0.0
    %6304 = vmatpush1.msra.mxu0 0.0
    %6305 = vmatprep.subr.mxu0 0.0
    %6306 = vmatpush1.msra.mxu0 0.0
    %6307 = vmatprep.subr.mxu0 0.0
    %6308 = vmatpush1.msra.mxu0 0.0
    %6309 = vmatprep.subr.mxu0 0.0
    %6310 = vmatpush1.msra.mxu0 0.0
    %6311 = vmatprep.subr.mxu0 0.0
    %6312 = vmatpush1.msra.mxu0 0.0
    %6313 = vmatprep.subr.mxu0 0.0
    %6314 = vmatpush1.msra.mxu0 0.0
    %6315 = vmatprep.subr.mxu0 0.0
    %6316 = vmatpush1.msra.mxu0 0.0
    %6317 = vmatprep.subr.mxu0 0.0
    %6318 = vmatpush1.msra.mxu0 0.0
    %6319 = vmatprep.subr.mxu0 0.0
    %6320 = vmatpush1.msra.mxu0 0.0
    %6321 = vmatprep.subr.mxu0 0.0
    %6322 = vmatpush1.msra.mxu0 0.0
    %6323 = vmatprep.subr.mxu0 0.0
    %6324 = vmatpush1.msra.mxu0 0.0
    %6325 = vmatprep.subr.mxu0 0.0
    %6326 = vmatpush1.msra.mxu0 0.0
    %6327 = vmatprep.subr.mxu0 0.0
    %6328 = vmatpush1.msra.mxu0 0.0
    %6329 = vmatprep.subr.mxu0 0.0
    %6330 = vmatpush1.msra.mxu0 0.0
    %6331 = vmatprep.subr.mxu0 0.0
    %6332 = vmatpush1.msra.mxu0 0.0
    %6333 = vmatprep.subr.mxu0 0.0
    %6334 = vmatpush1.msra.mxu0 0.0
    %6335 = vmatprep.subr.mxu0 0.0
    %6336 = vmatpush1.msra.mxu0 0.0
    %6337 = vmatprep.subr.mxu0 0.0
    %6338 = vmatpush1.msra.mxu0 0.0
    %6339 = vmatprep.mubr.f32.mxu0 0.0
    %6340 = vmatmul.mubr.f32.gmra.mrb[0].mxu0 %v6273
    %v6341 = vpop.f32.mrb[0].mxu0
    %v6342 = vadd.f32 0.0, %v6341
    %v6343 = vpop.f32.mrb[0].mxu0
    %6344 = vdwg.mxu0
    %v6345 = vadd.f32 %v6103, %v6342
    %v6346 = vld [vmem:[#allocation21] sm:$0x1]
    %v6347 = vadd.f32 %v6345, %v6346
    %v6348 = vtanh.pop %v6347
    %v6349 = vrot.slane %v5380, 1
    %v6350 = vsel %vm743, %v6349, 0
    %v6353 = vsel %vm743, %v5206, 0
    %6355 = vmatprep.subr.mxu0 0.0
    %6356 = vmatpush1.xpose.msra.mxu0 %v6353
    %6357 = vmatprep.subr.mxu0 0.0
    %6358 = vmatpush1.xpose.msra.mxu0 0.0
    %6359 = vmatprep.subr.mxu0 0.0
    %6360 = vmatpush1.xpose.msra.mxu0 0.0
    %6361 = vmatprep.subr.mxu0 0.0
    %6362 = vmatpush1.xpose.msra.mxu0 0.0
    %6363 = vmatprep.subr.mxu0 0.0
    %6364 = vmatpush1.xpose.msra.mxu0 0.0
    %6365 = vmatprep.subr.mxu0 0.0
    %6366 = vmatpush1.xpose.msra.mxu0 0.0
    %6367 = vmatprep.subr.mxu0 0.0
    %6368 = vmatpush1.xpose.msra.mxu0 0.0
    %6369 = vmatprep.subr.mxu0 0.0
    %6370 = vmatpush1.xpose.msra.mxu0 0.0
    %6371 = vmatprep.subr.mxu0 0.0
    %6372 = vmatpush1.xpose.msra.mxu0 0.0
    %6373 = vmatprep.subr.mxu0 0.0
    %6374 = vmatpush1.xpose.msra.mxu0 0.0
    %6375 = vmatprep.subr.mxu0 0.0
    %6376 = vmatpush1.xpose.msra.mxu0 0.0
    %6377 = vmatprep.subr.mxu0 0.0
    %6378 = vmatpush1.xpose.msra.mxu0 0.0
    %6379 = vmatprep.subr.mxu0 0.0
    %6380 = vmatpush1.xpose.msra.mxu0 0.0
    %6381 = vmatprep.subr.mxu0 0.0
    %6382 = vmatpush1.xpose.msra.mxu0 0.0
    %6383 = vmatprep.subr.mxu0 0.0
    %6384 = vmatpush1.xpose.msra.mxu0 0.0
    %6385 = vmatprep.subr.mxu0 0.0
    %6386 = vmatpush1.xpose.msra.mxu0 0.0
    %6387 = vmatprep.subr.mxu0 0.0
    %6388 = vmatpush1.xpose.msra.mxu0 0.0
    %6389 = vmatprep.subr.mxu0 0.0
    %6390 = vmatpush1.xpose.msra.mxu0 0.0
    %6391 = vmatprep.subr.mxu0 0.0
    %6392 = vmatpush1.xpose.msra.mxu0 0.0
    %6393 = vmatprep.subr.mxu0 0.0
    %6394 = vmatpush1.xpose.msra.mxu0 0.0
    %6395 = vmatprep.subr.mxu0 0.0
    %6396 = vmatpush1.xpose.msra.mxu0 0.0
    %6397 = vmatprep.subr.mxu0 0.0
    %6398 = vmatpush1.xpose.msra.mxu0 0.0
    %6399 = vmatprep.subr.mxu0 0.0
    %6400 = vmatpush1.xpose.msra.mxu0 0.0
    %6401 = vmatprep.subr.mxu0 0.0
    %6402 = vmatpush1.xpose.msra.mxu0 0.0
    %6403 = vmatprep.subr.mxu0 0.0
    %6404 = vmatpush1.xpose.msra.mxu0 0.0
    %6405 = vmatprep.subr.mxu0 0.0
    %6406 = vmatpush1.xpose.msra.mxu0 0.0
    %6407 = vmatprep.subr.mxu0 0.0
    %6408 = vmatpush1.xpose.msra.mxu0 0.0
    %6409 = vmatprep.subr.mxu0 0.0
    %6410 = vmatpush1.xpose.msra.mxu0 0.0
    %6411 = vmatprep.subr.mxu0 0.0
    %6412 = vmatpush1.xpose.msra.mxu0 0.0
    %6413 = vmatprep.subr.mxu0 0.0
    %6414 = vmatpush1.xpose.msra.mxu0 0.0
    %6415 = vmatprep.subr.mxu0 0.0
    %6416 = vmatpush1.xpose.msra.mxu0 0.0
    %6417 = vmatprep.subr.mxu0 0.0
    %6418 = vmatpush1.xpose.msra.mxu0 0.0
    %6419 = vmatprep.mubr.f32.mxu0 0.0
    %6420 = vmatmul.mubr.f32.gmra.mrb[0].mxu0 %v6350
    %v6421 = vpop.f32.mrb[0].mxu0
    %v6422 = vadd.f32 0.0, %v6421
    %v6423 = vpop.f32.mrb[0].mxu0
    %6424 = vdwg.mxu0
    %v6425 = vmul.f32 %v6422, 0.35355338
    %v6426 = vsel %vm5460, %v6425, -inf
    %6427 = vmax.xlane.f32.xlu0 %v6426
    %v6428 = vpop.xlane.xlu0 %6427
    %v6429 = vsub.f32 %v6425, %v6428
    %v6430 = vmul.f32 %v6429, 1.442695
    %v6431 = vpow.pop %v6430
    %v6432 = vsel %vm5460, %v6431, 0.0
    %6433 = vadd.xlane.f32.xlu0 %v6432
    %v6434 = vpop.xlane.xlu0 %6433
    %v6435 = vrcp.pop %v6434
    %v6436 = vmul.f32 %v6431, %v6435
    %v6438 = vsel %vm743, %v6436, 0
    %6440 = vmatprep.subr.mxu0 0.0
    %6441 = vmatpush1.msra.mxu0 %v5292
    %6442 = vmatprep.subr.mxu0 0.0
    %6443 = vmatpush1.msra.mxu0 0.0
    %6444 = vmatprep.subr.mxu0 0.0
    %6445 = vmatpush1.msra.mxu0 0.0
    %6446 = vmatprep.subr.mxu0 0.0
    %6447 = vmatpush1.msra.mxu0 0.0
    %6448 = vmatprep.subr.mxu0 0.0
    %6449 = vmatpush1.msra.mxu0 0.0
    %6450 = vmatprep.subr.mxu0 0.0
    %6451 = vmatpush1.msra.mxu0 0.0
    %6452 = vmatprep.subr.mxu0 0.0
    %6453 = vmatpush1.msra.mxu0 0.0
    %6454 = vmatprep.subr.mxu0 0.0
    %6455 = vmatpush1.msra.mxu0 0.0
    %6456 = vmatprep.subr.mxu0 0.0
    %6457 = vmatpush1.msra.mxu0 0.0
    %6458 = vmatprep.subr.mxu0 0.0
    %6459 = vmatpush1.msra.mxu0 0.0
    %6460 = vmatprep.subr.mxu0 0.0
    %6461 = vmatpush1.msra.mxu0 0.0
    %6462 = vmatprep.subr.mxu0 0.0
    %6463 = vmatpush1.msra.mxu0 0.0
    %6464 = vmatprep.subr.mxu0 0.0
    %6465 = vmatpush1.msra.mxu0 0.0
    %6466 = vmatprep.subr.mxu0 0.0
    %6467 = vmatpush1.msra.mxu0 0.0
    %6468 = vmatprep.subr.mxu0 0.0
    %6469 = vmatpush1.msra.mxu0 0.0
    %6470 = vmatprep.subr.mxu0 0.0
    %6471 = vmatpush1.msra.mxu0 0.0
    %6472 = vmatprep.subr.mxu0 0.0
    %6473 = vmatpush1.msra.mxu0 0.0
    %6474 = vmatprep.subr.mxu0 0.0
    %6475 = vmatpush1.msra.mxu0 0.0
    %6476 = vmatprep.subr.mxu0 0.0
    %6477 = vmatpush1.msra.mxu0 0.0
    %6478 = vmatprep.subr.mxu0 0.0
    %6479 = vmatpush1.msra.mxu0 0.0
    %6480 = vmatprep.subr.mxu0 0.0
    %6481 = vmatpush1.msra.mxu0 0.0
    %6482 = vmatprep.subr.mxu0 0.0
    %6483 = vmatpush1.msra.mxu0 0.0
    %6484 = vmatprep.subr.mxu0 0.0
    %6485 = vmatpush1.msra.mxu0 0.0
    %6486 = vmatprep.subr.mxu0 0.0
    %6487 = vmatpush1.msra.mxu0 0.0
    %6488 = vmatprep.subr.mxu0 0.0
    %6489 = vmatpush1.msra.mxu0 0.0
    %6490 = vmatprep.subr.mxu0 0.0
    %6491 = vmatpush1.msra.mxu0 0.0
    %6492 = vmatprep.subr.mxu0 0.0
    %6493 = vmatpush1.msra.mxu0 0.0
    %6494 = vmatprep.subr.mxu0 0.0
    %6495 = vmatpush1.msra.mxu0 0.0
    %6496 = vmatprep.subr.mxu0 0.0
    %6497 = vmatpush1.msra.mxu0 0.0
    %6498 = vmatprep.subr.mxu0 0.0
    %6499 = vmatpush1.msra.mxu0 0.0
    %6500 = vmatprep.subr.mxu0 0.0
    %6501 = vmatpush1.msra.mxu0 0.0
    %6502 = vmatprep.subr.mxu0 0.0
    %6503 = vmatpush1.msra.mxu0 0.0
    %6504 = vmatprep.mubr.f32.mxu0 0.0
    %6505 = vmatmul.mubr.f32.gmra.mrb[0].mxu0 %v6438
    %v6506 = vpop.f32.mrb[0].mxu0
    %v6507 = vadd.f32 0.0, %v6506
    %v6508 = vpop.f32.mrb[0].mxu0
    %6509 = vdwg.mxu0
    %v6510 = vtanh.pop %v6507
    %6511 = vrot.lane.b32.xlu0 %v6349, 120
    %v6512 = vpop.permute.xlu0 %6511
    %6513 = vrot.lane.b32.xlu0 %v5206, 120
    %v6514 = vpop.permute.xlu0 %6513
    %v6515 = vsel %vm743, %v6512, 0
    %v6517 = vsel %vm743, %v6514, 0
    %6519 = vmatprep.subr.mxu0 0.0
    %6520 = vmatpush1.xpose.msra.mxu0 %v6517
    %6521 = vmatprep.subr.mxu0 0.0
    %6522 = vmatpush1.xpose.msra.mxu0 0.0
    %6523 = vmatprep.subr.mxu0 0.0
    %6524 = vmatpush1.xpose.msra.mxu0 0.0
    %6525 = vmatprep.subr.mxu0 0.0
    %6526 = vmatpush1.xpose.msra.mxu0 0.0
    %6527 = vmatprep.subr.mxu0 0.0
    %6528 = vmatpush1.xpose.msra.mxu0 0.0
    %6529 = vmatprep.subr.mxu0 0.0
    %6530 = vmatpush1.xpose.msra.mxu0 0.0
    %6531 = vmatprep.subr.mxu0 0.0
    %6532 = vmatpush1.xpose.msra.mxu0 0.0
    %6533 = vmatprep.subr.mxu0 0.0
    %6534 = vmatpush1.xpose.msra.mxu0 0.0
    %6535 = vmatprep.subr.mxu0 0.0
    %6536 = vmatpush1.xpose.msra.mxu0 0.0
    %6537 = vmatprep.subr.mxu0 0.0
    %6538 = vmatpush1.xpose.msra.mxu0 0.0
    %6539 = vmatprep.subr.mxu0 0.0
    %6540 = vmatpush1.xpose.msra.mxu0 0.0
    %6541 = vmatprep.subr.mxu0 0.0
    %6542 = vmatpush1.xpose.msra.mxu0 0.0
    %6543 = vmatprep.subr.mxu0 0.0
    %6544 = vmatpush1.xpose.msra.mxu0 0.0
    %6545 = vmatprep.subr.mxu0 0.0
    %6546 = vmatpush1.xpose.msra.mxu0 0.0
    %6547 = vmatprep.subr.mxu0 0.0
    %6548 = vmatpush1.xpose.msra.mxu0 0.0
    %6549 = vmatprep.subr.mxu0 0.0
    %6550 = vmatpush1.xpose.msra.mxu0 0.0
    %6551 = vmatprep.subr.mxu0 0.0
    %6552 = vmatpush1.xpose.msra.mxu0 0.0
    %6553 = vmatprep.subr.mxu0 0.0
    %6554 = vmatpush1.xpose.msra.mxu0 0.0
    %6555 = vmatprep.subr.mxu0 0.0
    %6556 = vmatpush1.xpose.msra.mxu0 0.0
    %6557 = vmatprep.subr.mxu0 0.0
    %6558 = vmatpush1.xpose.msra.mxu0 0.0
    %6559 = vmatprep.subr.mxu0 0.0
    %6560 = vmatpush1.xpose.msra.mxu0 0.0
    %6561 = vmatprep.subr.mxu0 0.0
    %6562 = vmatpush1.xpose.msra.mxu0 0.0
    %6563 = vmatprep.subr.mxu0 0.0
    %6564 = vmatpush1.xpose.msra.mxu0 0.0
    %6565 = vmatprep.subr.mxu0 0.0
    %6566 = vmatpush1.xpose.msra.mxu0 0.0
    %6567 = vmatprep.subr.mxu0 0.0
    %6568 = vmatpush1.xpose.msra.mxu0 0.0
    %6569 = vmatprep.subr.mxu0 0.0
    %6570 = vmatpush1.xpose.msra.mxu0 0.0
    %6571 = vmatprep.subr.mxu0 0.0
    %6572 = vmatpush1.xpose.msra.mxu0 0.0
    %6573 = vmatprep.subr.mxu0 0.0
    %6574 = vmatpush1.xpose.msra.mxu0 0.0
    %6575 = vmatprep.subr.mxu0 0.0
    %6576 = vmatpush1.xpose.msra.mxu0 0.0
    %6577 = vmatprep.subr.mxu0 0.0
    %6578 = vmatpush1.xpose.msra.mxu0 0.0
    %6579 = vmatprep.subr.mxu0 0.0
    %6580 = vmatpush1.xpose.msra.mxu0 0.0
    %6581 = vmatprep.subr.mxu0 0.0
    %6582 = vmatpush1.xpose.msra.mxu0 0.0
    %6583 = vmatprep.mubr.f32.mxu0 0.0
    %6584 = vmatmul.mubr.f32.gmra.mrb[0].mxu0 %v6515
    %v6585 = vpop.f32.mrb[0].mxu0
    %v6586 = vadd.f32 0.0, %v6585
    %v6587 = vpop.f32.mrb[0].mxu0
    %6588 = vdwg.mxu0
    %v6589 = vmul.f32 %v6586, 0.35355338
    %v6590 = vsel %vm5460, %v6589, -inf
    %6591 = vmax.xlane.f32.xlu0 %v6590
    %v6592 = vpop.xlane.xlu0 %6591
    %v6593 = vsub.f32 %v6589, %v6592
    %v6594 = vmul.f32 %v6593, 1.442695
    %v6595 = vpow.pop %v6594
    %v6596 = vsel %vm5460, %v6595, 0.0
    %6597 = vadd.xlane.f32.xlu0 %v6596
    %v6598 = vpop.xlane.xlu0 %6597
    %v6599 = vrcp.pop %v6598
    %v6600 = vmul.f32 %v6595, %v6599
    %6602 = vrot.lane.b32.xlu0 %v5292, 120
    %v6603 = vpop.permute.xlu0 %6602
    %v6606 = vsel %vm743, %v6600, 0
    %6608 = vmatprep.subr.mxu0 0.0
    %6609 = vmatpush1.msra.mxu0 %v6603
    %6610 = vmatprep.subr.mxu0 0.0
    %6611 = vmatpush1.msra.mxu0 0.0
    %6612 = vmatprep.subr.mxu0 0.0
    %6613 = vmatpush1.msra.mxu0 0.0
    %6614 = vmatprep.subr.mxu0 0.0
    %6615 = vmatpush1.msra.mxu0 0.0
    %6616 = vmatprep.subr.mxu0 0.0
    %6617 = vmatpush1.msra.mxu0 0.0
    %6618 = vmatprep.subr.mxu0 0.0
    %6619 = vmatpush1.msra.mxu0 0.0
    %6620 = vmatprep.subr.mxu0 0.0
    %6621 = vmatpush1.msra.mxu0 0.0
    %6622 = vmatprep.subr.mxu0 0.0
    %6623 = vmatpush1.msra.mxu0 0.0
    %6624 = vmatprep.subr.mxu0 0.0
    %6625 = vmatpush1.msra.mxu0 0.0
    %6626 = vmatprep.subr.mxu0 0.0
    %6627 = vmatpush1.msra.mxu0 0.0
    %6628 = vmatprep.subr.mxu0 0.0
    %6629 = vmatpush1.msra.mxu0 0.0
    %6630 = vmatprep.subr.mxu0 0.0
    %6631 = vmatpush1.msra.mxu0 0.0
    %6632 = vmatprep.subr.mxu0 0.0
    %6633 = vmatpush1.msra.mxu0 0.0
    %6634 = vmatprep.subr.mxu0 0.0
    %6635 = vmatpush1.msra.mxu0 0.0
    %6636 = vmatprep.subr.mxu0 0.0
    %6637 = vmatpush1.msra.mxu0 0.0
    %6638 = vmatprep.subr.mxu0 0.0
    %6639 = vmatpush1.msra.mxu0 0.0
    %6640 = vmatprep.subr.mxu0 0.0
    %6641 = vmatpush1.msra.mxu0 0.0
    %6642 = vmatprep.subr.mxu0 0.0
    %6643 = vmatpush1.msra.mxu0 0.0
    %6644 = vmatprep.subr.mxu0 0.0
    %6645 = vmatpush1.msra.mxu0 0.0
    %6646 = vmatprep.subr.mxu0 0.0
    %6647 = vmatpush1.msra.mxu0 0.0
    %6648 = vmatprep.subr.mxu0 0.0
    %6649 = vmatpush1.msra.mxu0 0.0
    %6650 = vmatprep.subr.mxu0 0.0
    %6651 = vmatpush1.msra.mxu0 0.0
    %6652 = vmatprep.subr.mxu0 0.0
    %6653 = vmatpush1.msra.mxu0 0.0
    %6654 = vmatprep.subr.mxu0 0.0
    %6655 = vmatpush1.msra.mxu0 0.0
    %6656 = vmatprep.subr.mxu0 0.0
    %6657 = vmatpush1.msra.mxu0 0.0
    %6658 = vmatprep.subr.mxu0 0.0
    %6659 = vmatpush1.msra.mxu0 0.0
    %6660 = vmatprep.subr.mxu0 0.0
    %6661 = vmatpush1.msra.mxu0 0.0
    %6662 = vmatprep.subr.mxu0 0.0
    %6663 = vmatpush1.msra.mxu0 0.0
    %6664 = vmatprep.subr.mxu0 0.0
    %6665 = vmatpush1.msra.mxu0 0.0
    %6666 = vmatprep.subr.mxu0 0.0
    %6667 = vmatpush1.msra.mxu0 0.0
    %6668 = vmatprep.subr.mxu0 0.0
    %6669 = vmatpush1.msra.mxu0 0.0
    %6670 = vmatprep.subr.mxu0 0.0
    %6671 = vmatpush1.msra.mxu0 0.0
    %6672 = vmatprep.mubr.f32.mxu0 0.0
    %6673 = vmatmul.mubr.f32.gmra.mrb[0].mxu0 %v6606
    %v6674 = vpop.f32.mrb[0].mxu0
    %v6675 = vadd.f32 0.0, %v6674
    %v6676 = vpop.f32.mrb[0].mxu0
    %6677 = vdwg.mxu0
    %v6678 = vtanh.pop %v6675
    %v6680 = vsel %vm743, %v6678, 0
    %6682 = vmatprep.subr.mxu0 0.0
    %6683 = vmatpush1.msra.mxu0 %v5715
    %6684 = vmatprep.subr.mxu0 0.0
    %6685 = vmatpush1.msra.mxu0 0.0
    %6686 = vmatprep.subr.mxu0 0.0
    %6687 = vmatpush1.msra.mxu0 0.0
    %6688 = vmatprep.subr.mxu0 0.0
    %6689 = vmatpush1.msra.mxu0 0.0
    %6690 = vmatprep.subr.mxu0 0.0
    %6691 = vmatpush1.msra.mxu0 0.0
    %6692 = vmatprep.subr.mxu0 0.0
    %6693 = vmatpush1.msra.mxu0 0.0
    %6694 = vmatprep.subr.mxu0 0.0
    %6695 = vmatpush1.msra.mxu0 0.0
    %6696 = vmatprep.subr.mxu0 0.0
    %6697 = vmatpush1.msra.mxu0 0.0
    %6698 = vmatprep.subr.mxu0 0.0
    %6699 = vmatpush1.msra.mxu0 0.0
    %6700 = vmatprep.subr.mxu0 0.0
    %6701 = vmatpush1.msra.mxu0 0.0
    %6702 = vmatprep.subr.mxu0 0.0
    %6703 = vmatpush1.msra.mxu0 0.0
    %6704 = vmatprep.subr.mxu0 0.0
    %6705 = vmatpush1.msra.mxu0 0.0
    %6706 = vmatprep.subr.mxu0 0.0
    %6707 = vmatpush1.msra.mxu0 0.0
    %6708 = vmatprep.subr.mxu0 0.0
    %6709 = vmatpush1.msra.mxu0 0.0
    %6710 = vmatprep.subr.mxu0 0.0
    %6711 = vmatpush1.msra.mxu0 0.0
    %6712 = vmatprep.subr.mxu0 0.0
    %6713 = vmatpush1.msra.mxu0 0.0
    %6714 = vmatprep.subr.mxu0 0.0
    %6715 = vmatpush1.msra.mxu0 0.0
    %6716 = vmatprep.subr.mxu0 0.0
    %6717 = vmatpush1.msra.mxu0 0.0
    %6718 = vmatprep.subr.mxu0 0.0
    %6719 = vmatpush1.msra.mxu0 0.0
    %6720 = vmatprep.subr.mxu0 0.0
    %6721 = vmatpush1.msra.mxu0 0.0
    %6722 = vmatprep.subr.mxu0 0.0
    %6723 = vmatpush1.msra.mxu0 0.0
    %6724 = vmatprep.subr.mxu0 0.0
    %6725 = vmatpush1.msra.mxu0 0.0
    %6726 = vmatprep.subr.mxu0 0.0
    %6727 = vmatpush1.msra.mxu0 0.0
    %6728 = vmatprep.subr.mxu0 0.0
    %6729 = vmatpush1.msra.mxu0 0.0
    %6730 = vmatprep.subr.mxu0 0.0
    %6731 = vmatpush1.msra.mxu0 0.0
    %6732 = vmatprep.subr.mxu0 0.0
    %6733 = vmatpush1.msra.mxu0 0.0
    %6734 = vmatprep.subr.mxu0 0.0
    %6735 = vmatpush1.msra.mxu0 0.0
    %6736 = vmatprep.subr.mxu0 0.0
    %6737 = vmatpush1.msra.mxu0 0.0
    %6738 = vmatprep.subr.mxu0 0.0
    %6739 = vmatpush1.msra.mxu0 0.0
    %6740 = vmatprep.subr.mxu0 0.0
    %6741 = vmatpush1.msra.mxu0 0.0
    %6742 = vmatprep.subr.mxu0 0.0
    %6743 = vmatpush1.msra.mxu0 0.0
    %6744 = vmatprep.subr.mxu0 0.0
    %6745 = vmatpush1.msra.mxu0 0.0
    %6746 = vmatprep.mubr.f32.mxu0 0.0
    %6747 = vmatmul.mubr.f32.gmra.mrb[0].mxu0 %v6680
    %v6748 = vpop.f32.mrb[0].mxu0
    %v6749 = vadd.f32 0.0, %v6748
    %v6750 = vpop.f32.mrb[0].mxu0
    %6751 = vdwg.mxu0
    %v6753 = vsel %vm743, %v6510, 0
    %6755 = vmatprep.subr.mxu0 0.0
    %6756 = vmatpush1.msra.mxu0 %v5546
    %6757 = vmatprep.subr.mxu0 0.0
    %6758 = vmatpush1.msra.mxu0 0.0
    %6759 = vmatprep.subr.mxu0 0.0
    %6760 = vmatpush1.msra.mxu0 0.0
    %6761 = vmatprep.subr.mxu0 0.0
    %6762 = vmatpush1.msra.mxu0 0.0
    %6763 = vmatprep.subr.mxu0 0.0
    %6764 = vmatpush1.msra.mxu0 0.0
    %6765 = vmatprep.subr.mxu0 0.0
    %6766 = vmatpush1.msra.mxu0 0.0
    %6767 = vmatprep.subr.mxu0 0.0
    %6768 = vmatpush1.msra.mxu0 0.0
    %6769 = vmatprep.subr.mxu0 0.0
    %6770 = vmatpush1.msra.mxu0 0.0
    %6771 = vmatprep.subr.mxu0 0.0
    %6772 = vmatpush1.msra.mxu0 0.0
    %6773 = vmatprep.subr.mxu0 0.0
    %6774 = vmatpush1.msra.mxu0 0.0
    %6775 = vmatprep.subr.mxu0 0.0
    %6776 = vmatpush1.msra.mxu0 0.0
    %6777 = vmatprep.subr.mxu0 0.0
    %6778 = vmatpush1.msra.mxu0 0.0
    %6779 = vmatprep.subr.mxu0 0.0
    %6780 = vmatpush1.msra.mxu0 0.0
    %6781 = vmatprep.subr.mxu0 0.0
    %6782 = vmatpush1.msra.mxu0 0.0
    %6783 = vmatprep.subr.mxu0 0.0
    %6784 = vmatpush1.msra.mxu0 0.0
    %6785 = vmatprep.subr.mxu0 0.0
    %6786 = vmatpush1.msra.mxu0 0.0
    %6787 = vmatprep.subr.mxu0 0.0
    %6788 = vmatpush1.msra.mxu0 0.0
    %6789 = vmatprep.subr.mxu0 0.0
    %6790 = vmatpush1.msra.mxu0 0.0
    %6791 = vmatprep.subr.mxu0 0.0
    %6792 = vmatpush1.msra.mxu0 0.0
    %6793 = vmatprep.subr.mxu0 0.0
    %6794 = vmatpush1.msra.mxu0 0.0
    %6795 = vmatprep.subr.mxu0 0.0
    %6796 = vmatpush1.msra.mxu0 0.0
    %6797 = vmatprep.subr.mxu0 0.0
    %6798 = vmatpush1.msra.mxu0 0.0
    %6799 = vmatprep.subr.mxu0 0.0
    %6800 = vmatpush1.msra.mxu0 0.0
    %6801 = vmatprep.subr.mxu0 0.0
    %6802 = vmatpush1.msra.mxu0 0.0
    %6803 = vmatprep.subr.mxu0 0.0
    %6804 = vmatpush1.msra.mxu0 0.0
    %6805 = vmatprep.subr.mxu0 0.0
    %6806 = vmatpush1.msra.mxu0 0.0
    %6807 = vmatprep.subr.mxu0 0.0
    %6808 = vmatpush1.msra.mxu0 0.0
    %6809 = vmatprep.subr.mxu0 0.0
    %6810 = vmatpush1.msra.mxu0 0.0
    %6811 = vmatprep.subr.mxu0 0.0
    %6812 = vmatpush1.msra.mxu0 0.0
    %6813 = vmatprep.subr.mxu0 0.0
    %6814 = vmatpush1.msra.mxu0 0.0
    %6815 = vmatprep.subr.mxu0 0.0
    %6816 = vmatpush1.msra.mxu0 0.0
    %6817 = vmatprep.subr.mxu0 0.0
    %6818 = vmatpush1.msra.mxu0 0.0
    %6819 = vmatprep.mubr.f32.mxu0 0.0
    %6820 = vmatmul.mubr.f32.gmra.mrb[0].mxu0 %v6753
    %v6821 = vpop.f32.mrb[0].mxu0
    %v6822 = vadd.f32 %v6749, %v6821
    %v6823 = vpop.f32.mrb[0].mxu0
    %6824 = vdwg.mxu0
    %6825 = vrot.lane.b32.xlu0 %v6349, 112
    %v6826 = vpop.permute.xlu0 %6825
    %6827 = vrot.lane.b32.xlu0 %v5206, 112
    %v6828 = vpop.permute.xlu0 %6827
    %v6829 = vsel %vm743, %v6826, 0
    %v6831 = vsel %vm743, %v6828, 0
    %6833 = vmatprep.subr.mxu0 0.0
    %6834 = vmatpush1.xpose.msra.mxu0 %v6831
    %6835 = vmatprep.subr.mxu0 0.0
    %6836 = vmatpush1.xpose.msra.mxu0 0.0
    %6837 = vmatprep.subr.mxu0 0.0
    %6838 = vmatpush1.xpose.msra.mxu0 0.0
    %6839 = vmatprep.subr.mxu0 0.0
    %6840 = vmatpush1.xpose.msra.mxu0 0.0
    %6841 = vmatprep.subr.mxu0 0.0
    %6842 = vmatpush1.xpose.msra.mxu0 0.0
    %6843 = vmatprep.subr.mxu0 0.0
    %6844 = vmatpush1.xpose.msra.mxu0 0.0
    %6845 = vmatprep.subr.mxu0 0.0
    %6846 = vmatpush1.xpose.msra.mxu0 0.0
    %6847 = vmatprep.subr.mxu0 0.0
    %6848 = vmatpush1.xpose.msra.mxu0 0.0
    %6849 = vmatprep.subr.mxu0 0.0
    %6850 = vmatpush1.xpose.msra.mxu0 0.0
    %6851 = vmatprep.subr.mxu0 0.0
    %6852 = vmatpush1.xpose.msra.mxu0 0.0
    %6853 = vmatprep.subr.mxu0 0.0
    %6854 = vmatpush1.xpose.msra.mxu0 0.0
    %6855 = vmatprep.subr.mxu0 0.0
    %6856 = vmatpush1.xpose.msra.mxu0 0.0
    %6857 = vmatprep.subr.mxu0 0.0
    %6858 = vmatpush1.xpose.msra.mxu0 0.0
    %6859 = vmatprep.subr.mxu0 0.0
    %6860 = vmatpush1.xpose.msra.mxu0 0.0
    %6861 = vmatprep.subr.mxu0 0.0
    %6862 = vmatpush1.xpose.msra.mxu0 0.0
    %6863 = vmatprep.subr.mxu0 0.0
    %6864 = vmatpush1.xpose.msra.mxu0 0.0
    %6865 = vmatprep.subr.mxu0 0.0
    %6866 = vmatpush1.xpose.msra.mxu0 0.0
    %6867 = vmatprep.subr.mxu0 0.0
    %6868 = vmatpush1.xpose.msra.mxu0 0.0
    %6869 = vmatprep.subr.mxu0 0.0
    %6870 = vmatpush1.xpose.msra.mxu0 0.0
    %6871 = vmatprep.subr.mxu0 0.0
    %6872 = vmatpush1.xpose.msra.mxu0 0.0
    %6873 = vmatprep.subr.mxu0 0.0
    %6874 = vmatpush1.xpose.msra.mxu0 0.0
    %6875 = vmatprep.subr.mxu0 0.0
    %6876 = vmatpush1.xpose.msra.mxu0 0.0
    %6877 = vmatprep.subr.mxu0 0.0
    %6878 = vmatpush1.xpose.msra.mxu0 0.0
    %6879 = vmatprep.subr.mxu0 0.0
    %6880 = vmatpush1.xpose.msra.mxu0 0.0
    %6881 = vmatprep.subr.mxu0 0.0
    %6882 = vmatpush1.xpose.msra.mxu0 0.0
    %6883 = vmatprep.subr.mxu0 0.0
    %6884 = vmatpush1.xpose.msra.mxu0 0.0
    %6885 = vmatprep.subr.mxu0 0.0
    %6886 = vmatpush1.xpose.msra.mxu0 0.0
    %6887 = vmatprep.subr.mxu0 0.0
    %6888 = vmatpush1.xpose.msra.mxu0 0.0
    %6889 = vmatprep.subr.mxu0 0.0
    %6890 = vmatpush1.xpose.msra.mxu0 0.0
    %6891 = vmatprep.subr.mxu0 0.0
    %6892 = vmatpush1.xpose.msra.mxu0 0.0
    %6893 = vmatprep.subr.mxu0 0.0
    %6894 = vmatpush1.xpose.msra.mxu0 0.0
    %6895 = vmatprep.subr.mxu0 0.0
    %6896 = vmatpush1.xpose.msra.mxu0 0.0
    %6897 = vmatprep.mubr.f32.mxu0 0.0
    %6898 = vmatmul.mubr.f32.gmra.mrb[0].mxu0 %v6829
    %v6899 = vpop.f32.mrb[0].mxu0
    %v6900 = vadd.f32 0.0, %v6899
    %v6901 = vpop.f32.mrb[0].mxu0
    %6902 = vdwg.mxu0
    %v6903 = vmul.f32 %v6900, 0.35355338
    %v6904 = vsel %vm5460, %v6903, -inf
    %6905 = vmax.xlane.f32.xlu0 %v6904
    %v6906 = vpop.xlane.xlu0 %6905
    %v6907 = vsub.f32 %v6903, %v6906
    %v6908 = vmul.f32 %v6907, 1.442695
    %v6909 = vpow.pop %v6908
    %v6910 = vsel %vm5460, %v6909, 0.0
    %6911 = vadd.xlane.f32.xlu0 %v6910
    %v6912 = vpop.xlane.xlu0 %6911
    %v6913 = vrcp.pop %v6912
    %v6914 = vmul.f32 %v6909, %v6913
    %6915 = vrot.lane.b32.xlu0 %v5292, 112
    %v6916 = vpop.permute.xlu0 %6915
    %v6919 = vsel %vm743, %v6914, 0
    %6921 = vmatprep.subr.mxu0 0.0
    %6922 = vmatpush1.msra.mxu0 %v6916
    %6923 = vmatprep.subr.mxu0 0.0
    %6924 = vmatpush1.msra.mxu0 0.0
    %6925 = vmatprep.subr.mxu0 0.0
    %6926 = vmatpush1.msra.mxu0 0.0
    %6927 = vmatprep.subr.mxu0 0.0
    %6928 = vmatpush1.msra.mxu0 0.0
    %6929 = vmatprep.subr.mxu0 0.0
    %6930 = vmatpush1.msra.mxu0 0.0
    %6931 = vmatprep.subr.mxu0 0.0
    %6932 = vmatpush1.msra.mxu0 0.0
    %6933 = vmatprep.subr.mxu0 0.0
    %6934 = vmatpush1.msra.mxu0 0.0
    %6935 = vmatprep.subr.mxu0 0.0
    %6936 = vmatpush1.msra.mxu0 0.0
    %6937 = vmatprep.subr.mxu0 0.0
    %6938 = vmatpush1.msra.mxu0 0.0
    %6939 = vmatprep.subr.mxu0 0.0
    %6940 = vmatpush1.msra.mxu0 0.0
    %6941 = vmatprep.subr.mxu0 0.0
    %6942 = vmatpush1.msra.mxu0 0.0
    %6943 = vmatprep.subr.mxu0 0.0
    %6944 = vmatpush1.msra.mxu0 0.0
    %6945 = vmatprep.subr.mxu0 0.0
    %6946 = vmatpush1.msra.mxu0 0.0
    %6947 = vmatprep.subr.mxu0 0.0
    %6948 = vmatpush1.msra.mxu0 0.0
    %6949 = vmatprep.subr.mxu0 0.0
    %6950 = vmatpush1.msra.mxu0 0.0
    %6951 = vmatprep.subr.mxu0 0.0
    %6952 = vmatpush1.msra.mxu0 0.0
    %6953 = vmatprep.subr.mxu0 0.0
    %6954 = vmatpush1.msra.mxu0 0.0
    %6955 = vmatprep.subr.mxu0 0.0
    %6956 = vmatpush1.msra.mxu0 0.0
    %6957 = vmatprep.subr.mxu0 0.0
    %6958 = vmatpush1.msra.mxu0 0.0
    %6959 = vmatprep.subr.mxu0 0.0
    %6960 = vmatpush1.msra.mxu0 0.0
    %6961 = vmatprep.subr.mxu0 0.0
    %6962 = vmatpush1.msra.mxu0 0.0
    %6963 = vmatprep.subr.mxu0 0.0
    %6964 = vmatpush1.msra.mxu0 0.0
    %6965 = vmatprep.subr.mxu0 0.0
    %6966 = vmatpush1.msra.mxu0 0.0
    %6967 = vmatprep.subr.mxu0 0.0
    %6968 = vmatpush1.msra.mxu0 0.0
    %6969 = vmatprep.subr.mxu0 0.0
    %6970 = vmatpush1.msra.mxu0 0.0
    %6971 = vmatprep.subr.mxu0 0.0
    %6972 = vmatpush1.msra.mxu0 0.0
    %6973 = vmatprep.subr.mxu0 0.0
    %6974 = vmatpush1.msra.mxu0 0.0
    %6975 = vmatprep.subr.mxu0 0.0
    %6976 = vmatpush1.msra.mxu0 0.0
    %6977 = vmatprep.subr.mxu0 0.0
    %6978 = vmatpush1.msra.mxu0 0.0
    %6979 = vmatprep.subr.mxu0 0.0
    %6980 = vmatpush1.msra.mxu0 0.0
    %6981 = vmatprep.subr.mxu0 0.0
    %6982 = vmatpush1.msra.mxu0 0.0
    %6983 = vmatprep.subr.mxu0 0.0
    %6984 = vmatpush1.msra.mxu0 0.0
    %6985 = vmatprep.mubr.f32.mxu0 0.0
    %6986 = vmatmul.mubr.f32.gmra.mrb[0].mxu0 %v6919
    %v6987 = vpop.f32.mrb[0].mxu0
    %v6988 = vadd.f32 0.0, %v6987
    %v6989 = vpop.f32.mrb[0].mxu0
    %6990 = vdwg.mxu0
    %v6991 = vtanh.pop %v6988
    %v6993 = vsel %vm743, %v6991, 0
    %6995 = vmatprep.subr.mxu0 0.0
    %6996 = vmatpush1.msra.mxu0 %v6029
    %6997 = vmatprep.subr.mxu0 0.0
    %6998 = vmatpush1.msra.mxu0 0.0
    %6999 = vmatprep.subr.mxu0 0.0
    %7000 = vmatpush1.msra.mxu0 0.0
    %7001 = vmatprep.subr.mxu0 0.0
    %7002 = vmatpush1.msra.mxu0 0.0
    %7003 = vmatprep.subr.mxu0 0.0
    %7004 = vmatpush1.msra.mxu0 0.0
    %7005 = vmatprep.subr.mxu0 0.0
    %7006 = vmatpush1.msra.mxu0 0.0
    %7007 = vmatprep.subr.mxu0 0.0
    %7008 = vmatpush1.msra.mxu0 0.0
    %7009 = vmatprep.subr.mxu0 0.0
    %7010 = vmatpush1.msra.mxu0 0.0
    %7011 = vmatprep.subr.mxu0 0.0
    %7012 = vmatpush1.msra.mxu0 0.0
    %7013 = vmatprep.subr.mxu0 0.0
    %7014 = vmatpush1.msra.mxu0 0.0
    %7015 = vmatprep.subr.mxu0 0.0
    %7016 = vmatpush1.msra.mxu0 0.0
    %7017 = vmatprep.subr.mxu0 0.0
    %7018 = vmatpush1.msra.mxu0 0.0
    %7019 = vmatprep.subr.mxu0 0.0
    %7020 = vmatpush1.msra.mxu0 0.0
    %7021 = vmatprep.subr.mxu0 0.0
    %7022 = vmatpush1.msra.mxu0 0.0
    %7023 = vmatprep.subr.mxu0 0.0
    %7024 = vmatpush1.msra.mxu0 0.0
    %7025 = vmatprep.subr.mxu0 0.0
    %7026 = vmatpush1.msra.mxu0 0.0
    %7027 = vmatprep.subr.mxu0 0.0
    %7028 = vmatpush1.msra.mxu0 0.0
    %7029 = vmatprep.subr.mxu0 0.0
    %7030 = vmatpush1.msra.mxu0 0.0
    %7031 = vmatprep.subr.mxu0 0.0
    %7032 = vmatpush1.msra.mxu0 0.0
    %7033 = vmatprep.subr.mxu0 0.0
    %7034 = vmatpush1.msra.mxu0 0.0
    %7035 = vmatprep.subr.mxu0 0.0
    %7036 = vmatpush1.msra.mxu0 0.0
    %7037 = vmatprep.subr.mxu0 0.0
    %7038 = vmatpush1.msra.mxu0 0.0
    %7039 = vmatprep.subr.mxu0 0.0
    %7040 = vmatpush1.msra.mxu0 0.0
    %7041 = vmatprep.subr.mxu0 0.0
    %7042 = vmatpush1.msra.mxu0 0.0
    %7043 = vmatprep.subr.mxu0 0.0
    %7044 = vmatpush1.msra.mxu0 0.0
    %7045 = vmatprep.subr.mxu0 0.0
    %7046 = vmatpush1.msra.mxu0 0.0
    %7047 = vmatprep.subr.mxu0 0.0
    %7048 = vmatpush1.msra.mxu0 0.0
    %7049 = vmatprep.subr.mxu0 0.0
    %7050 = vmatpush1.msra.mxu0 0.0
    %7051 = vmatprep.subr.mxu0 0.0
    %7052 = vmatpush1.msra.mxu0 0.0
    %7053 = vmatprep.subr.mxu0 0.0
    %7054 = vmatpush1.msra.mxu0 0.0
    %7055 = vmatprep.subr.mxu0 0.0
    %7056 = vmatpush1.msra.mxu0 0.0
    %7057 = vmatprep.subr.mxu0 0.0
    %7058 = vmatpush1.msra.mxu0 0.0
    %7059 = vmatprep.mubr.f32.mxu0 0.0
    %7060 = vmatmul.mubr.f32.gmra.mrb[0].mxu0 %v6993
    %v7061 = vpop.f32.mrb[0].mxu0
    %v7062 = vadd.f32 0.0, %v7061
    %v7063 = vpop.f32.mrb[0].mxu0
    %7064 = vdwg.mxu0
    %v7065 = vadd.f32 %v6822, %v7062
    %7066 = vrot.lane.b32.xlu0 %v6349, 104
    %v7067 = vpop.permute.xlu0 %7066
    %7068 = vrot.lane.b32.xlu0 %v5206, 104
    %v7069 = vpop.permute.xlu0 %7068
    %v7070 = vsel %vm743, %v7067, 0
    %v7072 = vsel %vm743, %v7069, 0
    %7074 = vmatprep.subr.mxu0 0.0
    %7075 = vmatpush1.xpose.msra.mxu0 %v7072
    %7076 = vmatprep.subr.mxu0 0.0
    %7077 = vmatpush1.xpose.msra.mxu0 0.0
    %7078 = vmatprep.subr.mxu0 0.0
    %7079 = vmatpush1.xpose.msra.mxu0 0.0
    %7080 = vmatprep.subr.mxu0 0.0
    %7081 = vmatpush1.xpose.msra.mxu0 0.0
    %7082 = vmatprep.subr.mxu0 0.0
    %7083 = vmatpush1.xpose.msra.mxu0 0.0
    %7084 = vmatprep.subr.mxu0 0.0
    %7085 = vmatpush1.xpose.msra.mxu0 0.0
    %7086 = vmatprep.subr.mxu0 0.0
    %7087 = vmatpush1.xpose.msra.mxu0 0.0
    %7088 = vmatprep.subr.mxu0 0.0
    %7089 = vmatpush1.xpose.msra.mxu0 0.0
    %7090 = vmatprep.subr.mxu0 0.0
    %7091 = vmatpush1.xpose.msra.mxu0 0.0
    %7092 = vmatprep.subr.mxu0 0.0
    %7093 = vmatpush1.xpose.msra.mxu0 0.0
    %7094 = vmatprep.subr.mxu0 0.0
    %7095 = vmatpush1.xpose.msra.mxu0 0.0
    %7096 = vmatprep.subr.mxu0 0.0
    %7097 = vmatpush1.xpose.msra.mxu0 0.0
    %7098 = vmatprep.subr.mxu0 0.0
    %7099 = vmatpush1.xpose.msra.mxu0 0.0
    %7100 = vmatprep.subr.mxu0 0.0
    %7101 = vmatpush1.xpose.msra.mxu0 0.0
    %7102 = vmatprep.subr.mxu0 0.0
    %7103 = vmatpush1.xpose.msra.mxu0 0.0
    %7104 = vmatprep.subr.mxu0 0.0
    %7105 = vmatpush1.xpose.msra.mxu0 0.0
    %7106 = vmatprep.subr.mxu0 0.0
    %7107 = vmatpush1.xpose.msra.mxu0 0.0
    %7108 = vmatprep.subr.mxu0 0.0
    %7109 = vmatpush1.xpose.msra.mxu0 0.0
    %7110 = vmatprep.subr.mxu0 0.0
    %7111 = vmatpush1.xpose.msra.mxu0 0.0
    %7112 = vmatprep.subr.mxu0 0.0
    %7113 = vmatpush1.xpose.msra.mxu0 0.0
    %7114 = vmatprep.subr.mxu0 0.0
    %7115 = vmatpush1.xpose.msra.mxu0 0.0
    %7116 = vmatprep.subr.mxu0 0.0
    %7117 = vmatpush1.xpose.msra.mxu0 0.0
    %7118 = vmatprep.subr.mxu0 0.0
    %7119 = vmatpush1.xpose.msra.mxu0 0.0
    %7120 = vmatprep.subr.mxu0 0.0
    %7121 = vmatpush1.xpose.msra.mxu0 0.0
    %7122 = vmatprep.subr.mxu0 0.0
    %7123 = vmatpush1.xpose.msra.mxu0 0.0
    %7124 = vmatprep.subr.mxu0 0.0
    %7125 = vmatpush1.xpose.msra.mxu0 0.0
    %7126 = vmatprep.subr.mxu0 0.0
    %7127 = vmatpush1.xpose.msra.mxu0 0.0
    %7128 = vmatprep.subr.mxu0 0.0
    %7129 = vmatpush1.xpose.msra.mxu0 0.0
    %7130 = vmatprep.subr.mxu0 0.0
    %7131 = vmatpush1.xpose.msra.mxu0 0.0
    %7132 = vmatprep.subr.mxu0 0.0
    %7133 = vmatpush1.xpose.msra.mxu0 0.0
    %7134 = vmatprep.subr.mxu0 0.0
    %7135 = vmatpush1.xpose.msra.mxu0 0.0
    %7136 = vmatprep.subr.mxu0 0.0
    %7137 = vmatpush1.xpose.msra.mxu0 0.0
    %7138 = vmatprep.mubr.f32.mxu0 0.0
    %7139 = vmatmul.mubr.f32.gmra.mrb[0].mxu0 %v7070
    %v7140 = vpop.f32.mrb[0].mxu0
    %v7141 = vadd.f32 0.0, %v7140
    %v7142 = vpop.f32.mrb[0].mxu0
    %7143 = vdwg.mxu0
    %v7144 = vmul.f32 %v7141, 0.35355338
    %v7145 = vsel %vm5460, %v7144, -inf
    %7146 = vmax.xlane.f32.xlu0 %v7145
    %v7147 = vpop.xlane.xlu0 %7146
    %v7148 = vsub.f32 %v7144, %v7147
    %v7149 = vmul.f32 %v7148, 1.442695
    %v7150 = vpow.pop %v7149
    %v7151 = vsel %vm5460, %v7150, 0.0
    %7152 = vadd.xlane.f32.xlu0 %v7151
    %v7153 = vpop.xlane.xlu0 %7152
    %v7154 = vrcp.pop %v7153
    %v7155 = vmul.f32 %v7150, %v7154
    %7156 = vrot.lane.b32.xlu0 %v5292, 104
    %v7157 = vpop.permute.xlu0 %7156
    %v7160 = vsel %vm743, %v7155, 0
    %7162 = vmatprep.subr.mxu0 0.0
    %7163 = vmatpush1.msra.mxu0 %v7157
    %7164 = vmatprep.subr.mxu0 0.0
    %7165 = vmatpush1.msra.mxu0 0.0
    %7166 = vmatprep.subr.mxu0 0.0
    %7167 = vmatpush1.msra.mxu0 0.0
    %7168 = vmatprep.subr.mxu0 0.0
    %7169 = vmatpush1.msra.mxu0 0.0
    %7170 = vmatprep.subr.mxu0 0.0
    %7171 = vmatpush1.msra.mxu0 0.0
    %7172 = vmatprep.subr.mxu0 0.0
    %7173 = vmatpush1.msra.mxu0 0.0
    %7174 = vmatprep.subr.mxu0 0.0
    %7175 = vmatpush1.msra.mxu0 0.0
    %7176 = vmatprep.subr.mxu0 0.0
    %7177 = vmatpush1.msra.mxu0 0.0
    %7178 = vmatprep.subr.mxu0 0.0
    %7179 = vmatpush1.msra.mxu0 0.0
    %7180 = vmatprep.subr.mxu0 0.0
    %7181 = vmatpush1.msra.mxu0 0.0
    %7182 = vmatprep.subr.mxu0 0.0
    %7183 = vmatpush1.msra.mxu0 0.0
    %7184 = vmatprep.subr.mxu0 0.0
    %7185 = vmatpush1.msra.mxu0 0.0
    %7186 = vmatprep.subr.mxu0 0.0
    %7187 = vmatpush1.msra.mxu0 0.0
    %7188 = vmatprep.subr.mxu0 0.0
    %7189 = vmatpush1.msra.mxu0 0.0
    %7190 = vmatprep.subr.mxu0 0.0
    %7191 = vmatpush1.msra.mxu0 0.0
    %7192 = vmatprep.subr.mxu0 0.0
    %7193 = vmatpush1.msra.mxu0 0.0
    %7194 = vmatprep.subr.mxu0 0.0
    %7195 = vmatpush1.msra.mxu0 0.0
    %7196 = vmatprep.subr.mxu0 0.0
    %7197 = vmatpush1.msra.mxu0 0.0
    %7198 = vmatprep.subr.mxu0 0.0
    %7199 = vmatpush1.msra.mxu0 0.0
    %7200 = vmatprep.subr.mxu0 0.0
    %7201 = vmatpush1.msra.mxu0 0.0
    %7202 = vmatprep.subr.mxu0 0.0
    %7203 = vmatpush1.msra.mxu0 0.0
    %7204 = vmatprep.subr.mxu0 0.0
    %7205 = vmatpush1.msra.mxu0 0.0
    %7206 = vmatprep.subr.mxu0 0.0
    %7207 = vmatpush1.msra.mxu0 0.0
    %7208 = vmatprep.subr.mxu0 0.0
    %7209 = vmatpush1.msra.mxu0 0.0
    %7210 = vmatprep.subr.mxu0 0.0
    %7211 = vmatpush1.msra.mxu0 0.0
    %7212 = vmatprep.subr.mxu0 0.0
    %7213 = vmatpush1.msra.mxu0 0.0
    %7214 = vmatprep.subr.mxu0 0.0
    %7215 = vmatpush1.msra.mxu0 0.0
    %7216 = vmatprep.subr.mxu0 0.0
    %7217 = vmatpush1.msra.mxu0 0.0
    %7218 = vmatprep.subr.mxu0 0.0
    %7219 = vmatpush1.msra.mxu0 0.0
    %7220 = vmatprep.subr.mxu0 0.0
    %7221 = vmatpush1.msra.mxu0 0.0
    %7222 = vmatprep.subr.mxu0 0.0
    %7223 = vmatpush1.msra.mxu0 0.0
    %7224 = vmatprep.subr.mxu0 0.0
    %7225 = vmatpush1.msra.mxu0 0.0
    %7226 = vmatprep.mubr.f32.mxu0 0.0
    %7227 = vmatmul.mubr.f32.gmra.mrb[0].mxu0 %v7160
    %v7228 = vpop.f32.mrb[0].mxu0
    %v7229 = vadd.f32 0.0, %v7228
    %v7230 = vpop.f32.mrb[0].mxu0
    %7231 = vdwg.mxu0
    %v7232 = vtanh.pop %v7229
    %v7234 = vsel %vm743, %v7232, 0
    %7236 = vmatprep.subr.mxu0 0.0
    %7237 = vmatpush1.msra.mxu0 %v6271
    %7238 = vmatprep.subr.mxu0 0.0
    %7239 = vmatpush1.msra.mxu0 0.0
    %7240 = vmatprep.subr.mxu0 0.0
    %7241 = vmatpush1.msra.mxu0 0.0
    %7242 = vmatprep.subr.mxu0 0.0
    %7243 = vmatpush1.msra.mxu0 0.0
    %7244 = vmatprep.subr.mxu0 0.0
    %7245 = vmatpush1.msra.mxu0 0.0
    %7246 = vmatprep.subr.mxu0 0.0
    %7247 = vmatpush1.msra.mxu0 0.0
    %7248 = vmatprep.subr.mxu0 0.0
    %7249 = vmatpush1.msra.mxu0 0.0
    %7250 = vmatprep.subr.mxu0 0.0
    %7251 = vmatpush1.msra.mxu0 0.0
    %7252 = vmatprep.subr.mxu0 0.0
    %7253 = vmatpush1.msra.mxu0 0.0
    %7254 = vmatprep.subr.mxu0 0.0
    %7255 = vmatpush1.msra.mxu0 0.0
    %7256 = vmatprep.subr.mxu0 0.0
    %7257 = vmatpush1.msra.mxu0 0.0
    %7258 = vmatprep.subr.mxu0 0.0
    %7259 = vmatpush1.msra.mxu0 0.0
    %7260 = vmatprep.subr.mxu0 0.0
    %7261 = vmatpush1.msra.mxu0 0.0
    %7262 = vmatprep.subr.mxu0 0.0
    %7263 = vmatpush1.msra.mxu0 0.0
    %7264 = vmatprep.subr.mxu0 0.0
    %7265 = vmatpush1.msra.mxu0 0.0
    %7266 = vmatprep.subr.mxu0 0.0
    %7267 = vmatpush1.msra.mxu0 0.0
    %7268 = vmatprep.subr.mxu0 0.0
    %7269 = vmatpush1.msra.mxu0 0.0
    %7270 = vmatprep.subr.mxu0 0.0
    %7271 = vmatpush1.msra.mxu0 0.0
    %7272 = vmatprep.subr.mxu0 0.0
    %7273 = vmatpush1.msra.mxu0 0.0
    %7274 = vmatprep.subr.mxu0 0.0
    %7275 = vmatpush1.msra.mxu0 0.0
    %7276 = vmatprep.subr.mxu0 0.0
    %7277 = vmatpush1.msra.mxu0 0.0
    %7278 = vmatprep.subr.mxu0 0.0
    %7279 = vmatpush1.msra.mxu0 0.0
    %7280 = vmatprep.subr.mxu0 0.0
    %7281 = vmatpush1.msra.mxu0 0.0
    %7282 = vmatprep.subr.mxu0 0.0
    %7283 = vmatpush1.msra.mxu0 0.0
    %7284 = vmatprep.subr.mxu0 0.0
    %7285 = vmatpush1.msra.mxu0 0.0
    %7286 = vmatprep.subr.mxu0 0.0
    %7287 = vmatpush1.msra.mxu0 0.0
    %7288 = vmatprep.subr.mxu0 0.0
    %7289 = vmatpush1.msra.mxu0 0.0
    %7290 = vmatprep.subr.mxu0 0.0
    %7291 = vmatpush1.msra.mxu0 0.0
    %7292 = vmatprep.subr.mxu0 0.0
    %7293 = vmatpush1.msra.mxu0 0.0
    %7294 = vmatprep.subr.mxu0 0.0
    %7295 = vmatpush1.msra.mxu0 0.0
    %7296 = vmatprep.subr.mxu0 0.0
    %7297 = vmatpush1.msra.mxu0 0.0
    %7298 = vmatprep.subr.mxu0 0.0
    %7299 = vmatpush1.msra.mxu0 0.0
    %7300 = vmatprep.mubr.f32.mxu0 0.0
    %7301 = vmatmul.mubr.f32.gmra.mrb[0].mxu0 %v7234
    %v7302 = vpop.f32.mrb[0].mxu0
    %v7303 = vadd.f32 0.0, %v7302
    %v7304 = vpop.f32.mrb[0].mxu0
    %7305 = vdwg.mxu0
    %v7306 = vadd.f32 %v7065, %v7303
    %v7307 = vadd.f32 %v7306, %v6346
    %v7308 = vtanh.pop %v7307
    %v7310 = vrot.slane %v7308, 7
    %v7312 = vsel %vm5297, %v6348, %v7310
    %v7313 = vld [vmem:[%s65] sm:$0xff]
    %v7314 = vld [vmem:[%s65 + $0x8] sm:$0xff]
    %v7315 = vld [vmem:[%s65 + $0x10] sm:$0xff]
    %v7316 = vld [vmem:[%s65 + $0x18] sm:$0xff]
    %v7317 = vld [vmem:[#allocation22] sm:$0x1]
    %v7319 = vlaneseq
    %v7320 = vshrl.u32 %v7319, 7
    %v7321 = vsub.s32 0, %v7320
    %v7322 = vrot.slane %v7317, %v7321
    %v7325 = vsel %vm431, %v7312, 0
    %7327 = vmatprep.subr.mxu0 0.0
    %7328 = vmatpush1.msra.mxu0 %v7313
    %7329 = vmatprep.subr.mxu0 0.0
    %7330 = vmatpush1.msra.mxu0 %v7314
    %7331 = vmatprep.subr.mxu0 0.0
    %7332 = vmatpush1.msra.mxu0 %v7315
    %7333 = vmatprep.subr.mxu0 0.0
    %7334 = vmatpush1.msra.mxu0 %v7316
    %7335 = vmatprep.subr.mxu0 0.0
    %7336 = vmatpush1.msra.mxu0 0.0
    %7337 = vmatprep.subr.mxu0 0.0
    %7338 = vmatpush1.msra.mxu0 0.0
    %7339 = vmatprep.subr.mxu0 0.0
    %7340 = vmatpush1.msra.mxu0 0.0
    %7341 = vmatprep.subr.mxu0 0.0
    %7342 = vmatpush1.msra.mxu0 0.0
    %7343 = vmatprep.subr.mxu0 0.0
    %7344 = vmatpush1.msra.mxu0 0.0
    %7345 = vmatprep.subr.mxu0 0.0
    %7346 = vmatpush1.msra.mxu0 0.0
    %7347 = vmatprep.subr.mxu0 0.0
    %7348 = vmatpush1.msra.mxu0 0.0
    %7349 = vmatprep.subr.mxu0 0.0
    %7350 = vmatpush1.msra.mxu0 0.0
    %7351 = vmatprep.subr.mxu0 0.0
    %7352 = vmatpush1.msra.mxu0 0.0
    %7353 = vmatprep.subr.mxu0 0.0
    %7354 = vmatpush1.msra.mxu0 0.0
    %7355 = vmatprep.subr.mxu0 0.0
    %7356 = vmatpush1.msra.mxu0 0.0
    %7357 = vmatprep.subr.mxu0 0.0
    %7358 = vmatpush1.msra.mxu0 0.0
    %7359 = vmatprep.subr.mxu0 0.0
    %7360 = vmatpush1.msra.mxu0 0.0
    %7361 = vmatprep.subr.mxu0 0.0
    %7362 = vmatpush1.msra.mxu0 0.0
    %7363 = vmatprep.subr.mxu0 0.0
    %7364 = vmatpush1.msra.mxu0 0.0
    %7365 = vmatprep.subr.mxu0 0.0
    %7366 = vmatpush1.msra.mxu0 0.0
    %7367 = vmatprep.subr.mxu0 0.0
    %7368 = vmatpush1.msra.mxu0 0.0
    %7369 = vmatprep.subr.mxu0 0.0
    %7370 = vmatpush1.msra.mxu0 0.0
    %7371 = vmatprep.subr.mxu0 0.0
    %7372 = vmatpush1.msra.mxu0 0.0
    %7373 = vmatprep.subr.mxu0 0.0
    %7374 = vmatpush1.msra.mxu0 0.0
    %7375 = vmatprep.subr.mxu0 0.0
    %7376 = vmatpush1.msra.mxu0 0.0
    %7377 = vmatprep.subr.mxu0 0.0
    %7378 = vmatpush1.msra.mxu0 0.0
    %7379 = vmatprep.subr.mxu0 0.0
    %7380 = vmatpush1.msra.mxu0 0.0
    %7381 = vmatprep.subr.mxu0 0.0
    %7382 = vmatpush1.msra.mxu0 0.0
    %7383 = vmatprep.subr.mxu0 0.0
    %7384 = vmatpush1.msra.mxu0 0.0
    %7385 = vmatprep.subr.mxu0 0.0
    %7386 = vmatpush1.msra.mxu0 0.0
    %7387 = vmatprep.subr.mxu0 0.0
    %7388 = vmatpush1.msra.mxu0 0.0
    %7389 = vmatprep.subr.mxu0 0.0
    %7390 = vmatpush1.msra.mxu0 0.0
    %7391 = vmatprep.mubr.f32.mxu0 0.0
    %7392 = vmatmul.mubr.f32.gmra.mrb[0].mxu0 %v7325
    %v7393 = vpop.f32.mrb[0].mxu0
    %v7394 = vadd.f32 %v7322, %v7393
    %v7395 = vpop.f32.mrb[0].mxu0
    %7396 = vdwg.mxu0
    %7398 = vrot.lane.b32.xlu0 %v7394, 32
    %v7399 = vpop.permute.xlu0 %7398
    %v7401 = vsel %vm431, %v7312, %v7399
    %vm7402 = vcmask 285696
    %v7403 = vsel %vm7402, %v7401, 0.0
    %7404 = vst [vmem:[%s69] sm:$0x3] %v7403
    // Predicated region
    $region194: #{lcf_bert_only_local_forward.1} parent=1 // pred_check
      _
    $region195: #{lcf_bert_only_local_forward.1} parent=1 // pred_check_branch
      %7406 = sbr.rel (0) target = $region197
    $region196: #{lcf_bert_only_local_forward.1} parent=1 // pred_region
      _
    $region197: #{lcf_bert_only_local_forward.1} parent=1 // pred_fallthru
      _
    // Predicated region
    $region198: #{lcf_bert_only_local_forward.1} parent=1 // pred_check
      _
    $region199: #{lcf_bert_only_local_forward.1} parent=1 // pred_check_branch
      %7408 = sbr.rel (0) target = $region201
    $region200: #{lcf_bert_only_local_forward.1} parent=1 // pred_region
      _
    $region201: #{lcf_bert_only_local_forward.1} parent=1 // pred_fallthru
      _
    %7409 = vsyncpa [#allocation3], 1
    %7410 = vsyncpa [#allocation5], 1
    %7411 = vsyncpa [#allocation8], 1
    %7412 = vsyncpa [#allocation11], 1
    %7413 = vsyncpa [#allocation14], 1
    %7414 = vsyncpa [#allocation17], 1
    %7415 = vsyncpa [#allocation20], 1
    %7416 = vsyncpa [#allocation23], 1

</llo_original>
